<compile_context>
chip_gen: v6e
topology: v6e:2x2x1
jax: 0.10.0
libtpu: 0.0.40
codegen_flags: <defaults>
</compile_context>

<pallas_src>
import jax
import jax.numpy as jnp
from jax.experimental import pallas as pl
from jax.experimental.pallas import tpu as pltpu


KERNEL_SIZE = 5


# ----------------------------- Pallas kernels -----------------------------

def _conv_relu_pool_kernel(cols_ref, w_ref, b_ref, o_ref):
    """cols_ref: (4, M, K) im2col patches, one slab per 2x2 pool-window offset.
    Computes max_j relu(cols[j] @ w + b)  ==  maxpool2x2(relu(conv(x))) for this stage.
    (max commutes with the shared bias add and with ReLU, so this is exact.)"""
    w = w_ref[...]                                            # (K, Cout) f32, in VMEM once
    acc = jnp.dot(cols_ref[0], w, preferred_element_type=jnp.float32)
    for j in range(1, 4):
        acc = jnp.maximum(acc, jnp.dot(cols_ref[j], w,
                                       preferred_element_type=jnp.float32))
    o_ref[...] = jnp.maximum(acc + b_ref[...], 0.0).astype(o_ref.dtype)


def conv_relu_pool(cols4, w2d, b):
    """One fused kernel per conv stage: conv (as im2col matmul) + bias + ReLU + 2x2 max-pool."""
    _, M, K = cols4.shape
    Cout = w2d.shape[1]
    return pl.pallas_call(
        _conv_relu_pool_kernel,
        out_shape=jax.ShapeDtypeStruct((M, Cout), jnp.float32),
        grid=(1,),
        in_specs=[
            pl.BlockSpec((4, M, K), lambda g: (0, 0, 0)),
            pl.BlockSpec((K, Cout), lambda g: (0, 0)),
            pl.BlockSpec((1, Cout), lambda g: (0, 0)),
        ],
        out_specs=pl.BlockSpec((M, Cout), lambda g: (0, 0)),
        compiler_params=pltpu.CompilerParams(dimension_semantics=("arbitrary",)),
    )(cols4, w2d, b.reshape(1, Cout))


def _fc_stack_kernel(x_ref, w0_ref, b0_ref, w1_ref, b1_ref, w2_ref, b2_ref,
                     w3_ref, b3_ref, o_ref):
    """All four Linear layers fused: bf16 weights, f32 MXU accumulation, bias+ReLU in-kernel.
    Intermediate (M, 1024) activations stay in VMEM/vregs; only the final logits hit HBM.
    nn.Dropout(p=0.3) is an identity in eval mode."""

    def layer(h, w_ref, b_ref, relu):
        acc = jnp.dot(h.astype(w_ref.dtype), w_ref[...],
                      preferred_element_type=jnp.float32)
        acc = acc + b_ref[...]                                # (M, N) + (1, N)
        return jnp.maximum(acc, 0.0) if relu else acc

    h = x_ref[...]
    h = layer(h, w0_ref, b0_ref, True)
    h = layer(h, w1_ref, b1_ref, True)
    h = layer(h, w2_ref, b2_ref, True)
    o_ref[...] = layer(h, w3_ref, b3_ref, False).astype(o_ref.dtype)


def fc_stack(x, params):
    """Single pallas_call for the whole FC stack; all (bf16) weights are DMA'd once and stay
    VMEM-resident.  vmem_limit raised to 32 MiB so the default 300x20 LeNet config also fits
    under v5e's 16 MiB scoped default (still well under v7x's 64 MiB physical VMEM)."""
    M = x.shape[0]
    args = [x]
    in_specs = [pl.BlockSpec(tuple(x.shape), lambda g: (0, 0))]
    for i in range(4):
        w = params[f"fc{i}_w"]
        b = params[f"fc{i}_b"].reshape(1, -1)
        args += [w, b]
        in_specs += [pl.BlockSpec(tuple(w.shape), lambda g: (0, 0)),
                     pl.BlockSpec(tuple(b.shape), lambda g: (0, 0))]
    n_out = params["fc3_w"].shape[1]
    return pl.pallas_call(
        _fc_stack_kernel,
        out_shape=jax.ShapeDtypeStruct((M, n_out), jnp.float32),
        grid=(1,),
        in_specs=in_specs,
        out_specs=pl.BlockSpec((M, n_out), lambda g: (0, 0)),
        compiler_params=pltpu.CompilerParams(
            dimension_semantics=("arbitrary",),
            vmem_limit_bytes=32 * 1024 * 1024),
    )(*args)


# ------------------------------- glue (JAX) --------------------------------

def im2col_pool4_nhwc(x_nhwc, k):
    """(N, H, W, C) -> (4, N*PH*PW, C*k*k): im2col patches for each of the 4 positions of every
    2x2/stride-2 pool window over the valid, stride-1 kxk conv output.  Column order (c, kh, kw)
    matches PyTorch's Conv2d weight flatten.  Floor-mode pooling (odd trailing rows/cols dropped),
    matching F.max_pool2d(out, 2)."""
    N, H, W, C = x_nhwc.shape
    OH, OW = H - k + 1, W - k + 1
    PH, PW = OH // 2, OW // 2
    cols = jnp.stack(
        [x_nhwc[:, kh:kh + OH, kw:kw + OW, c]
         for c in range(C) for kh in range(k) for kw in range(k)],
        axis=-1)                                               # (N, OH, OW, C*k*k)
    parts = [cols[:, i:2 * PH:2, j:2 * PW:2, :].reshape(N * PH * PW, C * k * k)
             for (i, j) in ((0, 0), (0, 1), (1, 0), (1, 1))]
    return jnp.stack(parts, axis=0), (N, PH, PW)


# ------------------------------- LeNet model --------------------------------

def fc_shape(in_size, k=KERNEL_SIZE):
    s = int((in_size - k + 1 - 2) / 2 + 1)
    s = int((s - k + 1 - 2) / 2 + 1)
    return s


def init_lenet_params(key, input_size, seq_size, output_size):
    k = KERNEL_SIZE
    f1, f2 = fc_shape(input_size), fc_shape(seq_size)
    fc_in = 16 * f1 * f2
    fc_dims = [(fc_in, 1024), (1024, 1024), (1024, 512), (512, output_size)]
    keys = jax.random.split(key, 4 + 2 * len(fc_dims))

    def u(kk, shape, fan_in):
        bound = 1.0 / jnp.sqrt(jnp.float32(fan_in))
        return jax.random.uniform(kk, shape, jnp.float32, -bound, bound)

    params = {
        "conv1_w": u(keys[0], (6, 1, k, k), 1 * k * k),
        "conv1_b": u(keys[1], (6,), 1 * k * k),
        "conv2_w": u(keys[2], (16, 6, k, k), 6 * k * k),
        "conv2_b": u(keys[3], (16,), 6 * k * k),
    }
    for i, (din, dout) in enumerate(fc_dims):
        # bf16 weights halve the dominant HBM weight stream; accumulation stays f32 in-kernel.
        params[f"fc{i}_w"] = u(keys[4 + 2 * i], (din, dout), din).astype(jnp.bfloat16)
        params[f"fc{i}_b"] = u(keys[5 + 2 * i], (dout,), din)
    return params


def lenet_forward(params, x_nchw):
    N = x_nchw.shape[0]
    x_nhwc = jnp.transpose(x_nchw, (0, 2, 3, 1))

    # stage 1: conv1 -> ReLU -> maxpool(2), one fused kernel
    cols1, (_, ph1, pw1) = im2col_pool4_nhwc(x_nhwc, KERNEL_SIZE)
    w1 = params["conv1_w"].reshape(params["conv1_w"].shape[0], -1).T      # (25, 6)
    out1 = conv_relu_pool(cols1, w1, params["conv1_b"])                   # (N*ph1*pw1, 6)

    # stage 2: conv2 -> ReLU -> maxpool(2), one fused kernel
    act1 = out1.reshape(N, ph1, pw1, 6)
    cols2, (_, ph2, pw2) = im2col_pool4_nhwc(act1, KERNEL_SIZE)
    w2 = params["conv2_w"].reshape(params["conv2_w"].shape[0], -1).T      # (150, 16)
    out2 = conv_relu_pool(cols2, w2, params["conv2_b"])                   # (N*ph2*pw2, 16)

    # flatten in PyTorch NCHW order: out.view(N, -1)
    feat = out2.reshape(N, ph2, pw2, 16).transpose(0, 3, 1, 2).reshape(N, -1)

    # fused FC stack (Linear+ReLU x3, final Linear), bf16 weights / f32 accumulation.
    # TODO(synk): nn.Dropout(p=0.3) is an identity in eval mode; training-mode masking not implemented.
    return fc_stack(feat, params)


if __name__ == "__main__":
    # Small shapes consistent with the module: x is (N, 1, input_size, seq_size).
    batch, input_size, seq_size, output_size = 2, 20, 20, 32

    key = jax.random.PRNGKey(0)
    kx, kp = jax.random.split(key)
    x = jax.random.normal(kx, (batch, 1, input_size, seq_size), jnp.float32)
    params = init_lenet_params(kp, input_size, seq_size, output_size)

    out = jax.jit(lenet_forward)(params, x)
    jax.block_until_ready(out)
    assert out.shape == (batch, output_size), out.shape
    assert out.dtype == jnp.float32
    print("KERNEL_OK")
</pallas_src>

<mosaic_0001>
module attributes {stable_mosaic.version = 11 : i64} {
  func.func @_conv_relu_pool_kernel(%arg0: i32, %arg1: memref<4x128x25xf32, #tpu.memory_space<vmem>>, %arg2: memref<25x6xf32, #tpu.memory_space<vmem>>, %arg3: memref<1x6xf32, #tpu.memory_space<vmem>>, %arg4: memref<128x6xf32, #tpu.memory_space<vmem>>) attributes {dimension_semantics = [#tpu.dimension_semantics<arbitrary>], iteration_bounds = array<i64: 1>, scalar_prefetch = 0 : i64, scratch_operands = 0 : i64, tpu.core_type = #tpu.core_type<tc>, window_params = [{pipeline_mode = #tpu.pipeline_mode<synchronous>, transform_indices = @transform_0, window_bounds = array<i64: 4, 128, 25>}, {pipeline_mode = #tpu.pipeline_mode<synchronous>, transform_indices = @transform_1, window_bounds = array<i64: 25, 6>}, {pipeline_mode = #tpu.pipeline_mode<synchronous>, transform_indices = @transform_2, window_bounds = array<i64: 1, 6>}, {pipeline_mode = #tpu.pipeline_mode<synchronous>, transform_indices = @transform_3, window_bounds = array<i64: 128, 6>}]} {
    %c0 = arith.constant 0 : index
    %c0_0 = arith.constant 0 : index
    %0 = vector.load %arg2[%c0, %c0_0] : memref<25x6xf32, #tpu.memory_space<vmem>>, vector<25x6xf32>
    %c0_1 = arith.constant 0 : index
    %c0_2 = arith.constant 0 : index
    %c0_3 = arith.constant 0 : index
    %1 = vector.load %arg1[%c0_1, %c0_2, %c0_3] : memref<4x128x25xf32, #tpu.memory_space<vmem>>, vector<1x128x25xf32>
    %2 = vector.shape_cast %1 : vector<1x128x25xf32> to vector<128x25xf32>
    %cst = arith.constant dense<0.000000e+00> : vector<128x6xf32>
    %3 = tpu.matmul %2, %0, %cst {dimension_numbers = #tpu.dot_dimension_numbers<[1], [0], [0], [1], [0, 0, 1, 1], [], []>} : vector<128x25xf32>, vector<25x6xf32>, vector<128x6xf32> -> vector<128x6xf32>
    %c1 = arith.constant 1 : index
    %c0_4 = arith.constant 0 : index
    %c0_5 = arith.constant 0 : index
    %4 = vector.load %arg1[%c1, %c0_4, %c0_5] : memref<4x128x25xf32, #tpu.memory_space<vmem>>, vector<1x128x25xf32>
    %5 = vector.shape_cast %4 : vector<1x128x25xf32> to vector<128x25xf32>
    %cst_6 = arith.constant dense<0.000000e+00> : vector<128x6xf32>
    %6 = tpu.matmul %5, %0, %cst_6 {dimension_numbers = #tpu.dot_dimension_numbers<[1], [0], [0], [1], [0, 0, 1, 1], [], []>} : vector<128x25xf32>, vector<25x6xf32>, vector<128x6xf32> -> vector<128x6xf32>
    %7 = arith.maximumf %3, %6 : vector<128x6xf32>
    %c2 = arith.constant 2 : index
    %c0_7 = arith.constant 0 : index
    %c0_8 = arith.constant 0 : index
    %8 = vector.load %arg1[%c2, %c0_7, %c0_8] : memref<4x128x25xf32, #tpu.memory_space<vmem>>, vector<1x128x25xf32>
    %9 = vector.shape_cast %8 : vector<1x128x25xf32> to vector<128x25xf32>
    %cst_9 = arith.constant dense<0.000000e+00> : vector<128x6xf32>
    %10 = tpu.matmul %9, %0, %cst_9 {dimension_numbers = #tpu.dot_dimension_numbers<[1], [0], [0], [1], [0, 0, 1, 1], [], []>} : vector<128x25xf32>, vector<25x6xf32>, vector<128x6xf32> -> vector<128x6xf32>
    %11 = arith.maximumf %7, %10 : vector<128x6xf32>
    %c3 = arith.constant 3 : index
    %c0_10 = arith.constant 0 : index
    %c0_11 = arith.constant 0 : index
    %12 = vector.load %arg1[%c3, %c0_10, %c0_11] : memref<4x128x25xf32, #tpu.memory_space<vmem>>, vector<1x128x25xf32>
    %13 = vector.shape_cast %12 : vector<1x128x25xf32> to vector<128x25xf32>
    %cst_12 = arith.constant dense<0.000000e+00> : vector<128x6xf32>
    %14 = tpu.matmul %13, %0, %cst_12 {dimension_numbers = #tpu.dot_dimension_numbers<[1], [0], [0], [1], [0, 0, 1, 1], [], []>} : vector<128x25xf32>, vector<25x6xf32>, vector<128x6xf32> -> vector<128x6xf32>
    %15 = arith.maximumf %11, %14 : vector<128x6xf32>
    %c0_13 = arith.constant 0 : index
    %c0_14 = arith.constant 0 : index
    %16 = vector.load %arg3[%c0_13, %c0_14] : memref<1x6xf32, #tpu.memory_space<vmem>>, vector<1x6xf32>
    %17 = vector.broadcast %16 : vector<1x6xf32> to vector<128x6xf32>
    %18 = arith.addf %15, %17 : vector<128x6xf32>
    %cst_15 = arith.constant 0.000000e+00 : f32
    %19 = vector.broadcast %cst_15 : f32 to vector<128x6xf32>
    %20 = arith.maximumf %18, %19 : vector<128x6xf32>
    %c0_16 = arith.constant 0 : index
    %c0_17 = arith.constant 0 : index
    %21 = vector.load %arg4[%c0_16, %c0_17] : memref<128x6xf32, #tpu.memory_space<vmem>>, vector<128x6xf32>
    tpu.vector_store %arg4[%c0_16, %c0_17], %20 {strides = array<i32>} : memref<128x6xf32, #tpu.memory_space<vmem>>, vector<128x6xf32>,
    return
  }
  func.func @transform_0(%arg0: i32) -> (i32, i32, i32) {
    %c0_i32 = arith.constant 0 : i32
    %c0_i32_0 = arith.constant 0 : i32
    %c0_i32_1 = arith.constant 0 : i32
    %c0_i32_2 = arith.constant 0 : i32
    return %c0_i32, %c0_i32_0, %c0_i32_1 : i32, i32, i32
  }
  func.func @transform_1(%arg0: i32) -> (i32, i32) {
    %c0_i32 = arith.constant 0 : i32
    %c0_i32_0 = arith.constant 0 : i32
    %c0_i32_1 = arith.constant 0 : i32
    return %c0_i32, %c0_i32_0 : i32, i32
  }
  func.func @transform_2(%arg0: i32) -> (i32, i32) {
    %c0_i32 = arith.constant 0 : i32
    %c0_i32_0 = arith.constant 0 : i32
    %c0_i32_1 = arith.constant 0 : i32
    return %c0_i32, %c0_i32_0 : i32, i32
  }
  func.func @transform_3(%arg0: i32) -> (i32, i32) {
    %c0_i32 = arith.constant 0 : i32
    %c0_i32_0 = arith.constant 0 : i32
    %c0_i32_1 = arith.constant 0 : i32
    return %c0_i32, %c0_i32_0 : i32, i32
  }
}

module attributes {stable_mosaic.version = 11 : i64} {
  func.func @_conv_relu_pool_kernel(%arg0: i32, %arg1: memref<4x8x150xf32, #tpu.memory_space<vmem>>, %arg2: memref<150x16xf32, #tpu.memory_space<vmem>>, %arg3: memref<1x16xf32, #tpu.memory_space<vmem>>, %arg4: memref<8x16xf32, #tpu.memory_space<vmem>>) attributes {dimension_semantics = [#tpu.dimension_semantics<arbitrary>], iteration_bounds = array<i64: 1>, scalar_prefetch = 0 : i64, scratch_operands = 0 : i64, tpu.core_type = #tpu.core_type<tc>, window_params = [{pipeline_mode = #tpu.pipeline_mode<synchronous>, transform_indices = @transform_0, window_bounds = array<i64: 4, 8, 150>}, {pipeline_mode = #tpu.pipeline_mode<synchronous>, transform_indices = @transform_1, window_bounds = array<i64: 150, 16>}, {pipeline_mode = #tpu.pipeline_mode<synchronous>, transform_indices = @transform_2, window_bounds = array<i64: 1, 16>}, {pipeline_mode = #tpu.pipeline_mode<synchronous>, transform_indices = @transform_3, window_bounds = array<i64: 8, 16>}]} {
    %c0 = arith.constant 0 : index
    %c0_0 = arith.constant 0 : index
    %0 = vector.load %arg2[%c0, %c0_0] : memref<150x16xf32, #tpu.memory_space<vmem>>, vector<150x16xf32>
    %c0_1 = arith.constant 0 : index
    %c0_2 = arith.constant 0 : index
    %c0_3 = arith.constant 0 : index
    %1 = vector.load %arg1[%c0_1, %c0_2, %c0_3] : memref<4x8x150xf32, #tpu.memory_space<vmem>>, vector<1x8x150xf32>
    %2 = vector.shape_cast %1 : vector<1x8x150xf32> to vector<8x150xf32>
    %cst = arith.constant dense<0.000000e+00> : vector<8x16xf32>
    %3 = tpu.matmul %2, %0, %cst {dimension_numbers = #tpu.dot_dimension_numbers<[1], [0], [0], [1], [0, 0, 1, 1], [], []>} : vector<8x150xf32>, vector<150x16xf32>, vector<8x16xf32> -> vector<8x16xf32>
    %c1 = arith.constant 1 : index
    %c0_4 = arith.constant 0 : index
    %c0_5 = arith.constant 0 : index
    %4 = vector.load %arg1[%c1, %c0_4, %c0_5] : memref<4x8x150xf32, #tpu.memory_space<vmem>>, vector<1x8x150xf32>
    %5 = vector.shape_cast %4 : vector<1x8x150xf32> to vector<8x150xf32>
    %cst_6 = arith.constant dense<0.000000e+00> : vector<8x16xf32>
    %6 = tpu.matmul %5, %0, %cst_6 {dimension_numbers = #tpu.dot_dimension_numbers<[1], [0], [0], [1], [0, 0, 1, 1], [], []>} : vector<8x150xf32>, vector<150x16xf32>, vector<8x16xf32> -> vector<8x16xf32>
    %7 = arith.maximumf %3, %6 : vector<8x16xf32>
    %c2 = arith.constant 2 : index
    %c0_7 = arith.constant 0 : index
    %c0_8 = arith.constant 0 : index
    %8 = vector.load %arg1[%c2, %c0_7, %c0_8] : memref<4x8x150xf32, #tpu.memory_space<vmem>>, vector<1x8x150xf32>
    %9 = vector.shape_cast %8 : vector<1x8x150xf32> to vector<8x150xf32>
    %cst_9 = arith.constant dense<0.000000e+00> : vector<8x16xf32>
    %10 = tpu.matmul %9, %0, %cst_9 {dimension_numbers = #tpu.dot_dimension_numbers<[1], [0], [0], [1], [0, 0, 1, 1], [], []>} : vector<8x150xf32>, vector<150x16xf32>, vector<8x16xf32> -> vector<8x16xf32>
    %11 = arith.maximumf %7, %10 : vector<8x16xf32>
    %c3 = arith.constant 3 : index
    %c0_10 = arith.constant 0 : index
    %c0_11 = arith.constant 0 : index
    %12 = vector.load %arg1[%c3, %c0_10, %c0_11] : memref<4x8x150xf32, #tpu.memory_space<vmem>>, vector<1x8x150xf32>
    %13 = vector.shape_cast %12 : vector<1x8x150xf32> to vector<8x150xf32>
    %cst_12 = arith.constant dense<0.000000e+00> : vector<8x16xf32>
    %14 = tpu.matmul %13, %0, %cst_12 {dimension_numbers = #tpu.dot_dimension_numbers<[1], [0], [0], [1], [0, 0, 1, 1], [], []>} : vector<8x150xf32>, vector<150x16xf32>, vector<8x16xf32> -> vector<8x16xf32>
    %15 = arith.maximumf %11, %14 : vector<8x16xf32>
    %c0_13 = arith.constant 0 : index
    %c0_14 = arith.constant 0 : index
    %16 = vector.load %arg3[%c0_13, %c0_14] : memref<1x16xf32, #tpu.memory_space<vmem>>, vector<1x16xf32>
    %17 = vector.broadcast %16 : vector<1x16xf32> to vector<8x16xf32>
    %18 = arith.addf %15, %17 : vector<8x16xf32>
    %cst_15 = arith.constant 0.000000e+00 : f32
    %19 = vector.broadcast %cst_15 : f32 to vector<8x16xf32>
    %20 = arith.maximumf %18, %19 : vector<8x16xf32>
    %c0_16 = arith.constant 0 : index
    %c0_17 = arith.constant 0 : index
    %21 = vector.load %arg4[%c0_16, %c0_17] : memref<8x16xf32, #tpu.memory_space<vmem>>, vector<8x16xf32>
    tpu.vector_store %arg4[%c0_16, %c0_17], %20 {strides = array<i32>} : memref<8x16xf32, #tpu.memory_space<vmem>>, vector<8x16xf32>,
    return
  }
  func.func @transform_0(%arg0: i32) -> (i32, i32, i32) {
    %c0_i32 = arith.constant 0 : i32
    %c0_i32_0 = arith.constant 0 : i32
    %c0_i32_1 = arith.constant 0 : i32
    %c0_i32_2 = arith.constant 0 : i32
    return %c0_i32, %c0_i32_0, %c0_i32_1 : i32, i32, i32
  }
  func.func @transform_1(%arg0: i32) -> (i32, i32) {
    %c0_i32 = arith.constant 0 : i32
    %c0_i32_0 = arith.constant 0 : i32
    %c0_i32_1 = arith.constant 0 : i32
    return %c0_i32, %c0_i32_0 : i32, i32
  }
  func.func @transform_2(%arg0: i32) -> (i32, i32) {
    %c0_i32 = arith.constant 0 : i32
    %c0_i32_0 = arith.constant 0 : i32
    %c0_i32_1 = arith.constant 0 : i32
    return %c0_i32, %c0_i32_0 : i32, i32
  }
  func.func @transform_3(%arg0: i32) -> (i32, i32) {
    %c0_i32 = arith.constant 0 : i32
    %c0_i32_0 = arith.constant 0 : i32
    %c0_i32_1 = arith.constant 0 : i32
    return %c0_i32, %c0_i32_0 : i32, i32
  }
}

module attributes {stable_mosaic.version = 11 : i64} {
  func.func @_fc_stack_kernel(%arg0: i32, %arg1: memref<2x64xf32, #tpu.memory_space<vmem>>, %arg2: memref<64x1024xbf16, #tpu.memory_space<vmem>>, %arg3: memref<1x1024xf32, #tpu.memory_space<vmem>>, %arg4: memref<1024x1024xbf16, #tpu.memory_space<vmem>>, %arg5: memref<1x1024xf32, #tpu.memory_space<vmem>>, %arg6: memref<1024x512xbf16, #tpu.memory_space<vmem>>, %arg7: memref<1x512xf32, #tpu.memory_space<vmem>>, %arg8: memref<512x32xbf16, #tpu.memory_space<vmem>>, %arg9: memref<1x32xf32, #tpu.memory_space<vmem>>, %arg10: memref<2x32xf32, #tpu.memory_space<vmem>>) attributes {dimension_semantics = [#tpu.dimension_semantics<arbitrary>], iteration_bounds = array<i64: 1>, scalar_prefetch = 0 : i64, scratch_operands = 0 : i64, tpu.core_type = #tpu.core_type<tc>, window_params = [{pipeline_mode = #tpu.pipeline_mode<synchronous>, transform_indices = @transform_0, window_bounds = array<i64: 2, 64>}, {pipeline_mode = #tpu.pipeline_mode<synchronous>, transform_indices = @transform_1, window_bounds = array<i64: 64, 1024>}, {pipeline_mode = #tpu.pipeline_mode<synchronous>, transform_indices = @transform_2, window_bounds = array<i64: 1, 1024>}, {pipeline_mode = #tpu.pipeline_mode<synchronous>, transform_indices = @transform_3, window_bounds = array<i64: 1024, 1024>}, {pipeline_mode = #tpu.pipeline_mode<synchronous>, transform_indices = @transform_4, window_bounds = array<i64: 1, 1024>}, {pipeline_mode = #tpu.pipeline_mode<synchronous>, transform_indices = @transform_5, window_bounds = array<i64: 1024, 512>}, {pipeline_mode = #tpu.pipeline_mode<synchronous>, transform_indices = @transform_6, window_bounds = array<i64: 1, 512>}, {pipeline_mode = #tpu.pipeline_mode<synchronous>, transform_indices = @transform_7, window_bounds = array<i64: 512, 32>}, {pipeline_mode = #tpu.pipeline_mode<synchronous>, transform_indices = @transform_8, window_bounds = array<i64: 1, 32>}, {pipeline_mode = #tpu.pipeline_mode<synchronous>, transform_indices = @transform_9, window_bounds = array<i64: 2, 32>}]} {
    %c0 = arith.constant 0 : index
    %c0_0 = arith.constant 0 : index
    %0 = vector.load %arg1[%c0, %c0_0] : memref<2x64xf32, #tpu.memory_space<vmem>>, vector<2x64xf32>
    %1 = arith.truncf %0 : vector<2x64xf32> to vector<2x64xbf16>
    %c0_1 = arith.constant 0 : index
    %c0_2 = arith.constant 0 : index
    %2 = vector.load %arg2[%c0_1, %c0_2] : memref<64x1024xbf16, #tpu.memory_space<vmem>>, vector<64x1024xbf16>
    %cst = arith.constant dense<0.000000e+00> : vector<2x1024xf32>
    %3 = tpu.matmul %1, %2, %cst {dimension_numbers = #tpu.dot_dimension_numbers<[1], [0], [0], [1], [0, 0, 1, 1], [], []>} : vector<2x64xbf16>, vector<64x1024xbf16>, vector<2x1024xf32> -> vector<2x1024xf32>
    %c0_3 = arith.constant 0 : index
    %c0_4 = arith.constant 0 : index
    %4 = vector.load %arg3[%c0_3, %c0_4] : memref<1x1024xf32, #tpu.memory_space<vmem>>, vector<1x1024xf32>
    %5 = vector.broadcast %4 : vector<1x1024xf32> to vector<2x1024xf32>
    %6 = arith.addf %3, %5 : vector<2x1024xf32>
    %cst_5 = arith.constant 0.000000e+00 : f32
    %7 = vector.broadcast %cst_5 : f32 to vector<2x1024xf32>
    %8 = arith.maximumf %6, %7 : vector<2x1024xf32>
    %9 = arith.truncf %8 : vector<2x1024xf32> to vector<2x1024xbf16>
    %c0_6 = arith.constant 0 : index
    %c0_7 = arith.constant 0 : index
    %10 = vector.load %arg4[%c0_6, %c0_7] : memref<1024x1024xbf16, #tpu.memory_space<vmem>>, vector<1024x1024xbf16>
    %cst_8 = arith.constant dense<0.000000e+00> : vector<2x1024xf32>
    %11 = tpu.matmul %9, %10, %cst_8 {dimension_numbers = #tpu.dot_dimension_numbers<[1], [0], [0], [1], [0, 0, 1, 1], [], []>} : vector<2x1024xbf16>, vector<1024x1024xbf16>, vector<2x1024xf32> -> vector<2x1024xf32>
    %c0_9 = arith.constant 0 : index
    %c0_10 = arith.constant 0 : index
    %12 = vector.load %arg5[%c0_9, %c0_10] : memref<1x1024xf32, #tpu.memory_space<vmem>>, vector<1x1024xf32>
    %13 = vector.broadcast %12 : vector<1x1024xf32> to vector<2x1024xf32>
    %14 = arith.addf %11, %13 : vector<2x1024xf32>
    %cst_11 = arith.constant 0.000000e+00 : f32
    %15 = vector.broadcast %cst_11 : f32 to vector<2x1024xf32>
    %16 = arith.maximumf %14, %15 : vector<2x1024xf32>
    %17 = arith.truncf %16 : vector<2x1024xf32> to vector<2x1024xbf16>
    %c0_12 = arith.constant 0 : index
    %c0_13 = arith.constant 0 : index
    %18 = vector.load %arg6[%c0_12, %c0_13] : memref<1024x512xbf16, #tpu.memory_space<vmem>>, vector<1024x512xbf16>
    %cst_14 = arith.constant dense<0.000000e+00> : vector<2x512xf32>
    %19 = tpu.matmul %17, %18, %cst_14 {dimension_numbers = #tpu.dot_dimension_numbers<[1], [0], [0], [1], [0, 0, 1, 1], [], []>} : vector<2x1024xbf16>, vector<1024x512xbf16>, vector<2x512xf32> -> vector<2x512xf32>
    %c0_15 = arith.constant 0 : index
    %c0_16 = arith.constant 0 : index
    %20 = vector.load %arg7[%c0_15, %c0_16] : memref<1x512xf32, #tpu.memory_space<vmem>>, vector<1x512xf32>
    %21 = vector.broadcast %20 : vector<1x512xf32> to vector<2x512xf32>
    %22 = arith.addf %19, %21 : vector<2x512xf32>
    %cst_17 = arith.constant 0.000000e+00 : f32
    %23 = vector.broadcast %cst_17 : f32 to vector<2x512xf32>
    %24 = arith.maximumf %22, %23 : vector<2x512xf32>
    %25 = arith.truncf %24 : vector<2x512xf32> to vector<2x512xbf16>
    %c0_18 = arith.constant 0 : index
    %c0_19 = arith.constant 0 : index
    %26 = vector.load %arg8[%c0_18, %c0_19] : memref<512x32xbf16, #tpu.memory_space<vmem>>, vector<512x32xbf16>
    %cst_20 = arith.constant dense<0.000000e+00> : vector<2x32xf32>
    %27 = tpu.matmul %25, %26, %cst_20 {dimension_numbers = #tpu.dot_dimension_numbers<[1], [0], [0], [1], [0, 0, 1, 1], [], []>} : vector<2x512xbf16>, vector<512x32xbf16>, vector<2x32xf32> -> vector<2x32xf32>
    %c0_21 = arith.constant 0 : index
    %c0_22 = arith.constant 0 : index
    %28 = vector.load %arg9[%c0_21, %c0_22] : memref<1x32xf32, #tpu.memory_space<vmem>>, vector<1x32xf32>
    %29 = vector.broadcast %28 : vector<1x32xf32> to vector<2x32xf32>
    %30 = arith.addf %27, %29 : vector<2x32xf32>
    %c0_23 = arith.constant 0 : index
    %c0_24 = arith.constant 0 : index
    %31 = vector.load %arg10[%c0_23, %c0_24] : memref<2x32xf32, #tpu.memory_space<vmem>>, vector<2x32xf32>
    tpu.vector_store %arg10[%c0_23, %c0_24], %30 {strides = array<i32>} : memref<2x32xf32, #tpu.memory_space<vmem>>, vector<2x32xf32>,
    return
  }
  func.func @transform_0(%arg0: i32) -> (i32, i32) {
    %c0_i32 = arith.constant 0 : i32
    %c0_i32_0 = arith.constant 0 : i32
    %c0_i32_1 = arith.constant 0 : i32
    return %c0_i32, %c0_i32_0 : i32, i32
  }
  func.func @transform_1(%arg0: i32) -> (i32, i32) {
    %c0_i32 = arith.constant 0 : i32
    %c0_i32_0 = arith.constant 0 : i32
    %c0_i32_1 = arith.constant 0 : i32
    return %c0_i32, %c0_i32_0 : i32, i32
  }
  func.func @transform_2(%arg0: i32) -> (i32, i32) {
    %c0_i32 = arith.constant 0 : i32
    %c0_i32_0 = arith.constant 0 : i32
    %c0_i32_1 = arith.constant 0 : i32
    return %c0_i32, %c0_i32_0 : i32, i32
  }
  func.func @transform_3(%arg0: i32) -> (i32, i32) {
    %c0_i32 = arith.constant 0 : i32
    %c0_i32_0 = arith.constant 0 : i32
    %c0_i32_1 = arith.constant 0 : i32
    return %c0_i32, %c0_i32_0 : i32, i32
  }
  func.func @transform_4(%arg0: i32) -> (i32, i32) {
    %c0_i32 = arith.constant 0 : i32
    %c0_i32_0 = arith.constant 0 : i32
    %c0_i32_1 = arith.constant 0 : i32
    return %c0_i32, %c0_i32_0 : i32, i32
  }
  func.func @transform_5(%arg0: i32) -> (i32, i32) {
    %c0_i32 = arith.constant 0 : i32
    %c0_i32_0 = arith.constant 0 : i32
    %c0_i32_1 = arith.constant 0 : i32
    return %c0_i32, %c0_i32_0 : i32, i32
  }
  func.func @transform_6(%arg0: i32) -> (i32, i32) {
    %c0_i32 = arith.constant 0 : i32
    %c0_i32_0 = arith.constant 0 : i32
    %c0_i32_1 = arith.constant 0 : i32
    return %c0_i32, %c0_i32_0 : i32, i32
  }
  func.func @transform_7(%arg0: i32) -> (i32, i32) {
    %c0_i32 = arith.constant 0 : i32
    %c0_i32_0 = arith.constant 0 : i32
    %c0_i32_1 = arith.constant 0 : i32
    return %c0_i32, %c0_i32_0 : i32, i32
  }
  func.func @transform_8(%arg0: i32) -> (i32, i32) {
    %c0_i32 = arith.constant 0 : i32
    %c0_i32_0 = arith.constant 0 : i32
    %c0_i32_1 = arith.constant 0 : i32
    return %c0_i32, %c0_i32_0 : i32, i32
  }
  func.func @transform_9(%arg0: i32) -> (i32, i32) {
    %c0_i32 = arith.constant 0 : i32
    %c0_i32_0 = arith.constant 0 : i32
    %c0_i32_1 = arith.constant 0 : i32
    return %c0_i32, %c0_i32_0 : i32, i32
  }
}

</mosaic_0001>

<llo_original>
// kernel: lenet_forward.3
$region0: #{lenet_forward.3}
  #allocation0 [shape = 'u32[]', space=smem, size = 0x4, offset = 0x4, fixed_abs, tag = 'smem constant byte address 0x4 - core index']
  #allocation1 [shape = 'u32[144,128]{1,0:T(1,128)}', space=vmem, size = 0x12000, scoped, tag = 'internal scratch']
  %s0 = inlined_call_operand.vmem [shape: f32[4,128,25], index: 0, kind: input, shape index: {}]
  %s1 = inlined_call_operand.vmem [shape: f32[25,6], index: 1, kind: input, shape index: {}]
  %s2 = inlined_call_operand.vmem [shape: f32[1,6], index: 2, kind: input, shape index: {}]
  %s3 = inlined_call_operand.vmem [shape: f32[128,6], index: 3, kind: output, shape index: {}]
  %s4 = sld [smem:[#allocation0]]
  $region22: #{lenet_forward.3} parent=0
    _
  %s6 = ssub.s32 1, %s4
  %s7 = scalar_select 0, %s6, %s4
  // Predicated region
  $region2: #{lenet_forward.3} parent=0 // pred_check
    _
  $region3: #{lenet_forward.3} parent=0 // pred_check_branch
    %9 = sbr.rel (0) target = $region5
  $region4: #{lenet_forward.3} parent=0 // pred_region
    _
  $region5: #{lenet_forward.3} parent=0 // pred_fallthru
    _
  // Predicated region
  $region6: #{lenet_forward.3} parent=0 // pred_check
    _
  $region7: #{lenet_forward.3} parent=0 // pred_check_branch
    %11 = sbr.rel (0) target = $region9
  $region8: #{lenet_forward.3} parent=0 // pred_region
    _
  $region9: #{lenet_forward.3} parent=0 // pred_fallthru
    _
  // Predicated region
  $region10: #{lenet_forward.3} parent=0 // pred_check
    _
  $region11: #{lenet_forward.3} parent=0 // pred_check_branch
    %13 = sbr.rel (0) target = $region13
  $region12: #{lenet_forward.3} parent=0 // pred_region
    _
  $region13: #{lenet_forward.3} parent=0 // pred_fallthru
    _
  %v14 = vld [vmem:[%s1] sm:$0xff]
  %v15 = vld [vmem:[%s1 + $0x8] sm:$0xff]
  %v16 = vld [vmem:[%s1 + $0x10] sm:$0xff]
  %v17 = vld [vmem:[%s1 + $0x18] sm:$0x1]
  %v18 = vld [vmem:[%s0] sm:$0xff]
  %v19 = vld [vmem:[%s0 + $0x8] sm:$0xff]
  %v20 = vld [vmem:[%s0 + $0x10] sm:$0xff]
  %v21 = vld [vmem:[%s0 + $0x18] sm:$0xff]
  %v22 = vld [vmem:[%s0 + $0x20] sm:$0xff]
  %v23 = vld [vmem:[%s0 + $0x28] sm:$0xff]
  %v24 = vld [vmem:[%s0 + $0x30] sm:$0xff]
  %v25 = vld [vmem:[%s0 + $0x38] sm:$0xff]
  %v26 = vld [vmem:[%s0 + $0x40] sm:$0xff]
  %v27 = vld [vmem:[%s0 + $0x48] sm:$0xff]
  %v28 = vld [vmem:[%s0 + $0x50] sm:$0xff]
  %v29 = vld [vmem:[%s0 + $0x58] sm:$0xff]
  %v30 = vld [vmem:[%s0 + $0x60] sm:$0xff]
  %v31 = vld [vmem:[%s0 + $0x68] sm:$0xff]
  %v32 = vld [vmem:[%s0 + $0x70] sm:$0xff]
  %v33 = vld [vmem:[%s0 + $0x78] sm:$0xff]
  %vm34 = vcmask 203776
  %v36 = vsel %vm34, %v18, 0
  %v39 = vsel %vm34, %v19, 0
  %v42 = vsel %vm34, %v20, 0
  %v45 = vsel %vm34, %v21, 0
  %v48 = vsel %vm34, %v22, 0
  %v51 = vsel %vm34, %v23, 0
  %v54 = vsel %vm34, %v24, 0
  %v57 = vsel %vm34, %v25, 0
  %v60 = vsel %vm34, %v26, 0
  %v63 = vsel %vm34, %v27, 0
  %v66 = vsel %vm34, %v28, 0
  %v69 = vsel %vm34, %v29, 0
  %v72 = vsel %vm34, %v30, 0
  %v75 = vsel %vm34, %v31, 0
  %v78 = vsel %vm34, %v32, 0
  %v81 = vsel %vm34, %v33, 0
  %vm83 = vcmask 1040384
  %v85 = vsel %vm83, %v17, 0
  %87 = vmatprep.subr.mxu0 0.0
  %88 = vmatpush1.msra.mxu0 0.0
  %89 = vmatprep.subr.mxu0 0.0
  %90 = vmatpush1.msra.mxu0 0.0
  %91 = vmatprep.subr.mxu0 0.0
  %92 = vmatpush1.msra.mxu0 0.0
  %93 = vmatprep.subr.mxu0 0.0
  %94 = vmatpush1.msra.mxu0 0.0
  %95 = vmatprep.subr.mxu0 0.0
  %96 = vmatpush1.msra.mxu0 0.0
  %97 = vmatprep.subr.mxu0 0.0
  %98 = vmatpush1.msra.mxu0 0.0
  %99 = vmatprep.subr.mxu0 0.0
  %100 = vmatpush1.msra.mxu0 0.0
  %101 = vmatprep.subr.mxu0 0.0
  %102 = vmatpush1.msra.mxu0 0.0
  %103 = vmatprep.subr.mxu0 0.0
  %104 = vmatpush1.msra.mxu0 0.0
  %105 = vmatprep.subr.mxu0 0.0
  %106 = vmatpush1.msra.mxu0 0.0
  %107 = vmatprep.subr.mxu0 0.0
  %108 = vmatpush1.msra.mxu0 0.0
  %109 = vmatprep.subr.mxu0 0.0
  %110 = vmatpush1.msra.mxu0 0.0
  %111 = vmatprep.subr.mxu0 0.0
  %112 = vmatpush1.msra.mxu0 %v85
  %113 = vmatprep.subr.mxu0 0.0
  %114 = vmatpush1.msra.mxu0 %v16
  %115 = vmatprep.subr.mxu0 0.0
  %116 = vmatpush1.msra.mxu0 %v15
  %117 = vmatprep.subr.mxu0 0.0
  %118 = vmatpush1.msra.mxu0 %v14
  %119 = vmatprep.subr.mxu0 0.0
  %120 = vmatpush2.msra.mxu0 0.0
  %121 = vmatprep.subr.mxu0 0.0
  %122 = vmatpush2.msra.mxu0 0.0
  %123 = vmatprep.subr.mxu0 0.0
  %124 = vmatpush2.msra.mxu0 0.0
  %125 = vmatprep.subr.mxu0 0.0
  %126 = vmatpush2.msra.mxu0 0.0
  %127 = vmatprep.subr.mxu0 0.0
  %128 = vmatpush2.msra.mxu0 0.0
  %129 = vmatprep.subr.mxu0 0.0
  %130 = vmatpush2.msra.mxu0 0.0
  %131 = vmatprep.subr.mxu0 0.0
  %132 = vmatpush2.msra.mxu0 0.0
  %133 = vmatprep.subr.mxu0 0.0
  %134 = vmatpush2.msra.mxu0 0.0
  %135 = vmatprep.subr.mxu0 0.0
  %136 = vmatpush2.msra.mxu0 0.0
  %137 = vmatprep.subr.mxu0 0.0
  %138 = vmatpush2.msra.mxu0 0.0
  %139 = vmatprep.subr.mxu0 0.0
  %140 = vmatpush2.msra.mxu0 0.0
  %141 = vmatprep.subr.mxu0 0.0
  %142 = vmatpush2.msra.mxu0 0.0
  %143 = vmatprep.subr.mxu0 0.0
  %144 = vmatpush2.msra.mxu0 0.0
  %145 = vmatprep.subr.mxu0 0.0
  %146 = vmatpush2.msra.mxu0 0.0
  %147 = vmatprep.subr.mxu0 0.0
  %148 = vmatpush2.msra.mxu0 0.0
  %149 = vmatprep.subr.mxu0 0.0
  %150 = vmatpush2.msra.mxu0 0.0
  %151 = vmatprep.mubr.f32.mxu0 0.0
  %152 = vmatmul.mubr.f32.gmra.mxu0 %v36
  %v153 = vpop.f32.mrf.mxu0
  %v154 = vadd.f32 0.0, %v153
  %v155 = vpop.f32.mrf.mxu0
  %156 = vmatprep.mubr.f32.mxu0 0.0
  %157 = vmatmul.mubr.f32.gmra.mxu0 %v39
  %v158 = vpop.f32.mrf.mxu0
  %v159 = vadd.f32 0.0, %v158
  %v160 = vpop.f32.mrf.mxu0
  %161 = vmatprep.mubr.f32.mxu0 0.0
  %162 = vmatmul.mubr.f32.gmra.mxu0 %v42
  %v163 = vpop.f32.mrf.mxu0
  %v164 = vadd.f32 0.0, %v163
  %v165 = vpop.f32.mrf.mxu0
  %166 = vmatprep.mubr.f32.mxu0 0.0
  %167 = vmatmul.mubr.f32.gmra.mxu0 %v45
  %v168 = vpop.f32.mrf.mxu0
  %v169 = vadd.f32 0.0, %v168
  %v170 = vpop.f32.mrf.mxu0
  %171 = vmatprep.mubr.f32.mxu0 0.0
  %172 = vmatmul.mubr.f32.gmra.mxu0 %v48
  %v173 = vpop.f32.mrf.mxu0
  %v174 = vadd.f32 0.0, %v173
  %v175 = vpop.f32.mrf.mxu0
  %176 = vmatprep.mubr.f32.mxu0 0.0
  %177 = vmatmul.mubr.f32.gmra.mxu0 %v51
  %v178 = vpop.f32.mrf.mxu0
  %v179 = vadd.f32 0.0, %v178
  %v180 = vpop.f32.mrf.mxu0
  %181 = vmatprep.mubr.f32.mxu0 0.0
  %182 = vmatmul.mubr.f32.gmra.mxu0 %v54
  %v183 = vpop.f32.mrf.mxu0
  %v184 = vadd.f32 0.0, %v183
  %v185 = vpop.f32.mrf.mxu0
  %186 = vmatprep.mubr.f32.mxu0 0.0
  %187 = vmatmul.mubr.f32.gmra.mxu0 %v57
  %v188 = vpop.f32.mrf.mxu0
  %v189 = vadd.f32 0.0, %v188
  %v190 = vpop.f32.mrf.mxu0
  %191 = vmatprep.mubr.f32.mxu0 0.0
  %192 = vmatmul.mubr.f32.gmra.mxu0 %v60
  %v193 = vpop.f32.mrf.mxu0
  %v194 = vadd.f32 0.0, %v193
  %v195 = vpop.f32.mrf.mxu0
  %196 = vmatprep.mubr.f32.mxu0 0.0
  %197 = vmatmul.mubr.f32.gmra.mxu0 %v63
  %v198 = vpop.f32.mrf.mxu0
  %v199 = vadd.f32 0.0, %v198
  %v200 = vpop.f32.mrf.mxu0
  %201 = vmatprep.mubr.f32.mxu0 0.0
  %202 = vmatmul.mubr.f32.gmra.mxu0 %v66
  %v203 = vpop.f32.mrf.mxu0
  %v204 = vadd.f32 0.0, %v203
  %v205 = vpop.f32.mrf.mxu0
  %206 = vmatprep.mubr.f32.mxu0 0.0
  %207 = vmatmul.mubr.f32.gmra.mxu0 %v69
  %v208 = vpop.f32.mrf.mxu0
  %v209 = vadd.f32 0.0, %v208
  %v210 = vpop.f32.mrf.mxu0
  %211 = vmatprep.mubr.f32.mxu0 0.0
  %212 = vmatmul.mubr.f32.gmra.mxu0 %v72
  %v213 = vpop.f32.mrf.mxu0
  %v214 = vadd.f32 0.0, %v213
  %v215 = vpop.f32.mrf.mxu0
  %216 = vmatprep.mubr.f32.mxu0 0.0
  %217 = vmatmul.mubr.f32.gmra.mxu0 %v75
  %v218 = vpop.f32.mrf.mxu0
  %v219 = vadd.f32 0.0, %v218
  %v220 = vpop.f32.mrf.mxu0
  %221 = vmatprep.mubr.f32.mxu0 0.0
  %222 = vmatmul.mubr.f32.gmra.mxu0 %v78
  %v223 = vpop.f32.mrf.mxu0
  %v224 = vadd.f32 0.0, %v223
  %v225 = vpop.f32.mrf.mxu0
  %226 = vmatprep.mubr.f32.mxu0 0.0
  %227 = vmatmul.mubr.f32.gmra.mxu0 %v81
  %v228 = vpop.f32.mrf.mxu0
  %v229 = vadd.f32 0.0, %v228
  %v230 = vpop.f32.mrf.mxu0
  %231 = vdwg.mxu0
  %s232 = scalar_lea.vmem %s0, 128
  %v233 = vld [vmem:[%s232] sm:$0xff]
  %v234 = vld [vmem:[%s232 + $0x8] sm:$0xff]
  %v235 = vld [vmem:[%s232 + $0x10] sm:$0xff]
  %v236 = vld [vmem:[%s232 + $0x18] sm:$0xff]
  %v237 = vld [vmem:[%s232 + $0x20] sm:$0xff]
  %v238 = vld [vmem:[%s232 + $0x28] sm:$0xff]
  %v239 = vld [vmem:[%s232 + $0x30] sm:$0xff]
  %v240 = vld [vmem:[%s232 + $0x38] sm:$0xff]
  %v241 = vld [vmem:[%s232 + $0x40] sm:$0xff]
  %v242 = vld [vmem:[%s232 + $0x48] sm:$0xff]
  %v243 = vld [vmem:[%s232 + $0x50] sm:$0xff]
  %v244 = vld [vmem:[%s232 + $0x58] sm:$0xff]
  %v245 = vld [vmem:[%s232 + $0x60] sm:$0xff]
  %v246 = vld [vmem:[%s232 + $0x68] sm:$0xff]
  %v247 = vld [vmem:[%s232 + $0x70] sm:$0xff]
  %v248 = vld [vmem:[%s232 + $0x78] sm:$0xff]
  %v250 = vsel %vm34, %v233, 0
  %v253 = vsel %vm34, %v234, 0
  %v256 = vsel %vm34, %v235, 0
  %v259 = vsel %vm34, %v236, 0
  %v262 = vsel %vm34, %v237, 0
  %v265 = vsel %vm34, %v238, 0
  %v268 = vsel %vm34, %v239, 0
  %v271 = vsel %vm34, %v240, 0
  %v274 = vsel %vm34, %v241, 0
  %v277 = vsel %vm34, %v242, 0
  %v280 = vsel %vm34, %v243, 0
  %v283 = vsel %vm34, %v244, 0
  %v286 = vsel %vm34, %v245, 0
  %v289 = vsel %vm34, %v246, 0
  %v292 = vsel %vm34, %v247, 0
  %v295 = vsel %vm34, %v248, 0
  %297 = vmatprep.subr.mxu0 0.0
  %298 = vmatpush1.msra.mxu0 0.0
  %299 = vmatprep.subr.mxu0 0.0
  %300 = vmatpush1.msra.mxu0 0.0
  %301 = vmatprep.subr.mxu0 0.0
  %302 = vmatpush1.msra.mxu0 0.0
  %303 = vmatprep.subr.mxu0 0.0
  %304 = vmatpush1.msra.mxu0 0.0
  %305 = vmatprep.subr.mxu0 0.0
  %306 = vmatpush1.msra.mxu0 0.0
  %307 = vmatprep.subr.mxu0 0.0
  %308 = vmatpush1.msra.mxu0 0.0
  %309 = vmatprep.subr.mxu0 0.0
  %310 = vmatpush1.msra.mxu0 0.0
  %311 = vmatprep.subr.mxu0 0.0
  %312 = vmatpush1.msra.mxu0 0.0
  %313 = vmatprep.subr.mxu0 0.0
  %314 = vmatpush1.msra.mxu0 0.0
  %315 = vmatprep.subr.mxu0 0.0
  %316 = vmatpush1.msra.mxu0 0.0
  %317 = vmatprep.subr.mxu0 0.0
  %318 = vmatpush1.msra.mxu0 0.0
  %319 = vmatprep.subr.mxu0 0.0
  %320 = vmatpush1.msra.mxu0 0.0
  %321 = vmatprep.subr.mxu0 0.0
  %322 = vmatpush1.msra.mxu0 %v85
  %323 = vmatprep.subr.mxu0 0.0
  %324 = vmatpush1.msra.mxu0 %v16
  %325 = vmatprep.subr.mxu0 0.0
  %326 = vmatpush1.msra.mxu0 %v15
  %327 = vmatprep.subr.mxu0 0.0
  %328 = vmatpush1.msra.mxu0 %v14
  %329 = vmatprep.subr.mxu0 0.0
  %330 = vmatpush2.msra.mxu0 0.0
  %331 = vmatprep.subr.mxu0 0.0
  %332 = vmatpush2.msra.mxu0 0.0
  %333 = vmatprep.subr.mxu0 0.0
  %334 = vmatpush2.msra.mxu0 0.0
  %335 = vmatprep.subr.mxu0 0.0
  %336 = vmatpush2.msra.mxu0 0.0
  %337 = vmatprep.subr.mxu0 0.0
  %338 = vmatpush2.msra.mxu0 0.0
  %339 = vmatprep.subr.mxu0 0.0
  %340 = vmatpush2.msra.mxu0 0.0
  %341 = vmatprep.subr.mxu0 0.0
  %342 = vmatpush2.msra.mxu0 0.0
  %343 = vmatprep.subr.mxu0 0.0
  %344 = vmatpush2.msra.mxu0 0.0
  %345 = vmatprep.subr.mxu0 0.0
  %346 = vmatpush2.msra.mxu0 0.0
  %347 = vmatprep.subr.mxu0 0.0
  %348 = vmatpush2.msra.mxu0 0.0
  %349 = vmatprep.subr.mxu0 0.0
  %350 = vmatpush2.msra.mxu0 0.0
  %351 = vmatprep.subr.mxu0 0.0
  %352 = vmatpush2.msra.mxu0 0.0
  %353 = vmatprep.subr.mxu0 0.0
  %354 = vmatpush2.msra.mxu0 0.0
  %355 = vmatprep.subr.mxu0 0.0
  %356 = vmatpush2.msra.mxu0 0.0
  %357 = vmatprep.subr.mxu0 0.0
  %358 = vmatpush2.msra.mxu0 0.0
  %359 = vmatprep.subr.mxu0 0.0
  %360 = vmatpush2.msra.mxu0 0.0
  %361 = vmatprep.mubr.f32.mxu0 0.0
  %362 = vmatmul.mubr.f32.gmra.mxu0 %v250
  %v363 = vpop.f32.mrf.mxu0
  %v364 = vadd.f32 0.0, %v363
  %v365 = vpop.f32.mrf.mxu0
  %366 = vmatprep.mubr.f32.mxu0 0.0
  %367 = vmatmul.mubr.f32.gmra.mxu0 %v253
  %v368 = vpop.f32.mrf.mxu0
  %v369 = vadd.f32 0.0, %v368
  %v370 = vpop.f32.mrf.mxu0
  %371 = vmatprep.mubr.f32.mxu0 0.0
  %372 = vmatmul.mubr.f32.gmra.mxu0 %v256
  %v373 = vpop.f32.mrf.mxu0
  %v374 = vadd.f32 0.0, %v373
  %v375 = vpop.f32.mrf.mxu0
  %376 = vmatprep.mubr.f32.mxu0 0.0
  %377 = vmatmul.mubr.f32.gmra.mxu0 %v259
  %v378 = vpop.f32.mrf.mxu0
  %v379 = vadd.f32 0.0, %v378
  %v380 = vpop.f32.mrf.mxu0
  %381 = vmatprep.mubr.f32.mxu0 0.0
  %382 = vmatmul.mubr.f32.gmra.mxu0 %v262
  %v383 = vpop.f32.mrf.mxu0
  %v384 = vadd.f32 0.0, %v383
  %v385 = vpop.f32.mrf.mxu0
  %386 = vmatprep.mubr.f32.mxu0 0.0
  %387 = vmatmul.mubr.f32.gmra.mxu0 %v265
  %v388 = vpop.f32.mrf.mxu0
  %v389 = vadd.f32 0.0, %v388
  %v390 = vpop.f32.mrf.mxu0
  %391 = vmatprep.mubr.f32.mxu0 0.0
  %392 = vmatmul.mubr.f32.gmra.mxu0 %v268
  %v393 = vpop.f32.mrf.mxu0
  %v394 = vadd.f32 0.0, %v393
  %v395 = vpop.f32.mrf.mxu0
  %396 = vmatprep.mubr.f32.mxu0 0.0
  %397 = vmatmul.mubr.f32.gmra.mxu0 %v271
  %v398 = vpop.f32.mrf.mxu0
  %v399 = vadd.f32 0.0, %v398
  %v400 = vpop.f32.mrf.mxu0
  %401 = vmatprep.mubr.f32.mxu0 0.0
  %402 = vmatmul.mubr.f32.gmra.mxu0 %v274
  %v403 = vpop.f32.mrf.mxu0
  %v404 = vadd.f32 0.0, %v403
  %v405 = vpop.f32.mrf.mxu0
  %406 = vmatprep.mubr.f32.mxu0 0.0
  %407 = vmatmul.mubr.f32.gmra.mxu0 %v277
  %v408 = vpop.f32.mrf.mxu0
  %v409 = vadd.f32 0.0, %v408
  %v410 = vpop.f32.mrf.mxu0
  %411 = vmatprep.mubr.f32.mxu0 0.0
  %412 = vmatmul.mubr.f32.gmra.mxu0 %v280
  %v413 = vpop.f32.mrf.mxu0
  %v414 = vadd.f32 0.0, %v413
  %v415 = vpop.f32.mrf.mxu0
  %416 = vmatprep.mubr.f32.mxu0 0.0
  %417 = vmatmul.mubr.f32.gmra.mxu0 %v283
  %v418 = vpop.f32.mrf.mxu0
  %v419 = vadd.f32 0.0, %v418
  %v420 = vpop.f32.mrf.mxu0
  %421 = vmatprep.mubr.f32.mxu0 0.0
  %422 = vmatmul.mubr.f32.gmra.mxu0 %v286
  %v423 = vpop.f32.mrf.mxu0
  %v424 = vadd.f32 0.0, %v423
  %v425 = vpop.f32.mrf.mxu0
  %426 = vmatprep.mubr.f32.mxu0 0.0
  %427 = vmatmul.mubr.f32.gmra.mxu0 %v289
  %v428 = vpop.f32.mrf.mxu0
  %v429 = vadd.f32 0.0, %v428
  %v430 = vpop.f32.mrf.mxu0
  %431 = vmatprep.mubr.f32.mxu0 0.0
  %432 = vmatmul.mubr.f32.gmra.mxu0 %v292
  %v433 = vpop.f32.mrf.mxu0
  %v434 = vadd.f32 0.0, %v433
  %v435 = vpop.f32.mrf.mxu0
  %436 = vmatprep.mubr.f32.mxu0 0.0
  %437 = vmatmul.mubr.f32.gmra.mxu0 %v295
  %v438 = vpop.f32.mrf.mxu0
  %v439 = vadd.f32 0.0, %v438
  %v440 = vpop.f32.mrf.mxu0
  %441 = vdwg.mxu0
  %v442 = vmax.f32 %v154, %v364
  %v443 = vmax.f32 %v159, %v369
  %v444 = vmax.f32 %v164, %v374
  %v445 = vmax.f32 %v169, %v379
  %v446 = vmax.f32 %v174, %v384
  %v447 = vmax.f32 %v179, %v389
  %v448 = vmax.f32 %v184, %v394
  %v449 = vmax.f32 %v189, %v399
  %v450 = vmax.f32 %v194, %v404
  %v451 = vmax.f32 %v199, %v409
  %v452 = vmax.f32 %v204, %v414
  %v453 = vmax.f32 %v209, %v419
  %v454 = vmax.f32 %v214, %v424
  %v455 = vmax.f32 %v219, %v429
  %v456 = vmax.f32 %v224, %v434
  %v457 = vmax.f32 %v229, %v439
  %s458 = scalar_lea.vmem %s0, 256
  %v459 = vld [vmem:[%s458] sm:$0xff]
  %v460 = vld [vmem:[%s458 + $0x8] sm:$0xff]
  %v461 = vld [vmem:[%s458 + $0x10] sm:$0xff]
  %v462 = vld [vmem:[%s458 + $0x18] sm:$0xff]
  %v463 = vld [vmem:[%s458 + $0x20] sm:$0xff]
  %v464 = vld [vmem:[%s458 + $0x28] sm:$0xff]
  %v465 = vld [vmem:[%s458 + $0x30] sm:$0xff]
  %v466 = vld [vmem:[%s458 + $0x38] sm:$0xff]
  %v467 = vld [vmem:[%s458 + $0x40] sm:$0xff]
  %v468 = vld [vmem:[%s458 + $0x48] sm:$0xff]
  %v469 = vld [vmem:[%s458 + $0x50] sm:$0xff]
  %v470 = vld [vmem:[%s458 + $0x58] sm:$0xff]
  %v471 = vld [vmem:[%s458 + $0x60] sm:$0xff]
  %v472 = vld [vmem:[%s458 + $0x68] sm:$0xff]
  %v473 = vld [vmem:[%s458 + $0x70] sm:$0xff]
  %v474 = vld [vmem:[%s458 + $0x78] sm:$0xff]
  %v476 = vsel %vm34, %v459, 0
  %v479 = vsel %vm34, %v460, 0
  %v482 = vsel %vm34, %v461, 0
  %v485 = vsel %vm34, %v462, 0
  %v488 = vsel %vm34, %v463, 0
  %v491 = vsel %vm34, %v464, 0
  %v494 = vsel %vm34, %v465, 0
  %v497 = vsel %vm34, %v466, 0
  %v500 = vsel %vm34, %v467, 0
  %v503 = vsel %vm34, %v468, 0
  %v506 = vsel %vm34, %v469, 0
  %v509 = vsel %vm34, %v470, 0
  %v512 = vsel %vm34, %v471, 0
  %v515 = vsel %vm34, %v472, 0
  %v518 = vsel %vm34, %v473, 0
  %v521 = vsel %vm34, %v474, 0
  %523 = vmatprep.subr.mxu0 0.0
  %524 = vmatpush1.msra.mxu0 0.0
  %525 = vmatprep.subr.mxu0 0.0
  %526 = vmatpush1.msra.mxu0 0.0
  %527 = vmatprep.subr.mxu0 0.0
  %528 = vmatpush1.msra.mxu0 0.0
  %529 = vmatprep.subr.mxu0 0.0
  %530 = vmatpush1.msra.mxu0 0.0
  %531 = vmatprep.subr.mxu0 0.0
  %532 = vmatpush1.msra.mxu0 0.0
  %533 = vmatprep.subr.mxu0 0.0
  %534 = vmatpush1.msra.mxu0 0.0
  %535 = vmatprep.subr.mxu0 0.0
  %536 = vmatpush1.msra.mxu0 0.0
  %537 = vmatprep.subr.mxu0 0.0
  %538 = vmatpush1.msra.mxu0 0.0
  %539 = vmatprep.subr.mxu0 0.0
  %540 = vmatpush1.msra.mxu0 0.0
  %541 = vmatprep.subr.mxu0 0.0
  %542 = vmatpush1.msra.mxu0 0.0
  %543 = vmatprep.subr.mxu0 0.0
  %544 = vmatpush1.msra.mxu0 0.0
  %545 = vmatprep.subr.mxu0 0.0
  %546 = vmatpush1.msra.mxu0 0.0
  %547 = vmatprep.subr.mxu0 0.0
  %548 = vmatpush1.msra.mxu0 %v85
  %549 = vmatprep.subr.mxu0 0.0
  %550 = vmatpush1.msra.mxu0 %v16
  %551 = vmatprep.subr.mxu0 0.0
  %552 = vmatpush1.msra.mxu0 %v15
  %553 = vmatprep.subr.mxu0 0.0
  %554 = vmatpush1.msra.mxu0 %v14
  %555 = vmatprep.subr.mxu0 0.0
  %556 = vmatpush2.msra.mxu0 0.0
  %557 = vmatprep.subr.mxu0 0.0
  %558 = vmatpush2.msra.mxu0 0.0
  %559 = vmatprep.subr.mxu0 0.0
  %560 = vmatpush2.msra.mxu0 0.0
  %561 = vmatprep.subr.mxu0 0.0
  %562 = vmatpush2.msra.mxu0 0.0
  %563 = vmatprep.subr.mxu0 0.0
  %564 = vmatpush2.msra.mxu0 0.0
  %565 = vmatprep.subr.mxu0 0.0
  %566 = vmatpush2.msra.mxu0 0.0
  %567 = vmatprep.subr.mxu0 0.0
  %568 = vmatpush2.msra.mxu0 0.0
  %569 = vmatprep.subr.mxu0 0.0
  %570 = vmatpush2.msra.mxu0 0.0
  %571 = vmatprep.subr.mxu0 0.0
  %572 = vmatpush2.msra.mxu0 0.0
  %573 = vmatprep.subr.mxu0 0.0
  %574 = vmatpush2.msra.mxu0 0.0
  %575 = vmatprep.subr.mxu0 0.0
  %576 = vmatpush2.msra.mxu0 0.0
  %577 = vmatprep.subr.mxu0 0.0
  %578 = vmatpush2.msra.mxu0 0.0
  %579 = vmatprep.subr.mxu0 0.0
  %580 = vmatpush2.msra.mxu0 0.0
  %581 = vmatprep.subr.mxu0 0.0
  %582 = vmatpush2.msra.mxu0 0.0
  %583 = vmatprep.subr.mxu0 0.0
  %584 = vmatpush2.msra.mxu0 0.0
  %585 = vmatprep.subr.mxu0 0.0
  %586 = vmatpush2.msra.mxu0 0.0
  %587 = vmatprep.mubr.f32.mxu0 0.0
  %588 = vmatmul.mubr.f32.gmra.mxu0 %v476
  %v589 = vpop.f32.mrf.mxu0
  %v590 = vadd.f32 0.0, %v589
  %v591 = vpop.f32.mrf.mxu0
  %592 = vmatprep.mubr.f32.mxu0 0.0
  %593 = vmatmul.mubr.f32.gmra.mxu0 %v479
  %v594 = vpop.f32.mrf.mxu0
  %v595 = vadd.f32 0.0, %v594
  %v596 = vpop.f32.mrf.mxu0
  %597 = vmatprep.mubr.f32.mxu0 0.0
  %598 = vmatmul.mubr.f32.gmra.mxu0 %v482
  %v599 = vpop.f32.mrf.mxu0
  %v600 = vadd.f32 0.0, %v599
  %v601 = vpop.f32.mrf.mxu0
  %602 = vmatprep.mubr.f32.mxu0 0.0
  %603 = vmatmul.mubr.f32.gmra.mxu0 %v485
  %v604 = vpop.f32.mrf.mxu0
  %v605 = vadd.f32 0.0, %v604
  %v606 = vpop.f32.mrf.mxu0
  %607 = vmatprep.mubr.f32.mxu0 0.0
  %608 = vmatmul.mubr.f32.gmra.mxu0 %v488
  %v609 = vpop.f32.mrf.mxu0
  %v610 = vadd.f32 0.0, %v609
  %v611 = vpop.f32.mrf.mxu0
  %612 = vmatprep.mubr.f32.mxu0 0.0
  %613 = vmatmul.mubr.f32.gmra.mxu0 %v491
  %v614 = vpop.f32.mrf.mxu0
  %v615 = vadd.f32 0.0, %v614
  %v616 = vpop.f32.mrf.mxu0
  %617 = vmatprep.mubr.f32.mxu0 0.0
  %618 = vmatmul.mubr.f32.gmra.mxu0 %v494
  %v619 = vpop.f32.mrf.mxu0
  %v620 = vadd.f32 0.0, %v619
  %v621 = vpop.f32.mrf.mxu0
  %622 = vmatprep.mubr.f32.mxu0 0.0
  %623 = vmatmul.mubr.f32.gmra.mxu0 %v497
  %v624 = vpop.f32.mrf.mxu0
  %v625 = vadd.f32 0.0, %v624
  %v626 = vpop.f32.mrf.mxu0
  %627 = vmatprep.mubr.f32.mxu0 0.0
  %628 = vmatmul.mubr.f32.gmra.mxu0 %v500
  %v629 = vpop.f32.mrf.mxu0
  %v630 = vadd.f32 0.0, %v629
  %v631 = vpop.f32.mrf.mxu0
  %632 = vmatprep.mubr.f32.mxu0 0.0
  %633 = vmatmul.mubr.f32.gmra.mxu0 %v503
  %v634 = vpop.f32.mrf.mxu0
  %v635 = vadd.f32 0.0, %v634
  %v636 = vpop.f32.mrf.mxu0
  %637 = vmatprep.mubr.f32.mxu0 0.0
  %638 = vmatmul.mubr.f32.gmra.mxu0 %v506
  %v639 = vpop.f32.mrf.mxu0
  %v640 = vadd.f32 0.0, %v639
  %v641 = vpop.f32.mrf.mxu0
  %642 = vmatprep.mubr.f32.mxu0 0.0
  %643 = vmatmul.mubr.f32.gmra.mxu0 %v509
  %v644 = vpop.f32.mrf.mxu0
  %v645 = vadd.f32 0.0, %v644
  %v646 = vpop.f32.mrf.mxu0
  %647 = vmatprep.mubr.f32.mxu0 0.0
  %648 = vmatmul.mubr.f32.gmra.mxu0 %v512
  %v649 = vpop.f32.mrf.mxu0
  %v650 = vadd.f32 0.0, %v649
  %v651 = vpop.f32.mrf.mxu0
  %652 = vmatprep.mubr.f32.mxu0 0.0
  %653 = vmatmul.mubr.f32.gmra.mxu0 %v515
  %v654 = vpop.f32.mrf.mxu0
  %v655 = vadd.f32 0.0, %v654
  %v656 = vpop.f32.mrf.mxu0
  %657 = vmatprep.mubr.f32.mxu0 0.0
  %658 = vmatmul.mubr.f32.gmra.mxu0 %v518
  %v659 = vpop.f32.mrf.mxu0
  %v660 = vadd.f32 0.0, %v659
  %v661 = vpop.f32.mrf.mxu0
  %662 = vmatprep.mubr.f32.mxu0 0.0
  %663 = vmatmul.mubr.f32.gmra.mxu0 %v521
  %v664 = vpop.f32.mrf.mxu0
  %v665 = vadd.f32 0.0, %v664
  %v666 = vpop.f32.mrf.mxu0
  %667 = vdwg.mxu0
  %v668 = vmax.f32 %v442, %v590
  %v669 = vmax.f32 %v443, %v595
  %v670 = vmax.f32 %v444, %v600
  %v671 = vmax.f32 %v445, %v605
  %v672 = vmax.f32 %v446, %v610
  %v673 = vmax.f32 %v447, %v615
  %v674 = vmax.f32 %v448, %v620
  %v675 = vmax.f32 %v449, %v625
  %v676 = vmax.f32 %v450, %v630
  %v677 = vmax.f32 %v451, %v635
  %v678 = vmax.f32 %v452, %v640
  %v679 = vmax.f32 %v453, %v645
  %v680 = vmax.f32 %v454, %v650
  %v681 = vmax.f32 %v455, %v655
  %v682 = vmax.f32 %v456, %v660
  %v683 = vmax.f32 %v457, %v665
  %s684 = scalar_lea.vmem %s0, 384
  %v685 = vld [vmem:[%s684] sm:$0xff]
  %v686 = vld [vmem:[%s684 + $0x8] sm:$0xff]
  %v687 = vld [vmem:[%s684 + $0x10] sm:$0xff]
  %v688 = vld [vmem:[%s684 + $0x18] sm:$0xff]
  %v689 = vld [vmem:[%s684 + $0x20] sm:$0xff]
  %v690 = vld [vmem:[%s684 + $0x28] sm:$0xff]
  %v691 = vld [vmem:[%s684 + $0x30] sm:$0xff]
  %v692 = vld [vmem:[%s684 + $0x38] sm:$0xff]
  %v693 = vld [vmem:[%s684 + $0x40] sm:$0xff]
  %v694 = vld [vmem:[%s684 + $0x48] sm:$0xff]
  %v695 = vld [vmem:[%s684 + $0x50] sm:$0xff]
  %v696 = vld [vmem:[%s684 + $0x58] sm:$0xff]
  %v697 = vld [vmem:[%s684 + $0x60] sm:$0xff]
  %v698 = vld [vmem:[%s684 + $0x68] sm:$0xff]
  %v699 = vld [vmem:[%s684 + $0x70] sm:$0xff]
  %v700 = vld [vmem:[%s684 + $0x78] sm:$0xff]
  %v702 = vsel %vm34, %v685, 0
  %v705 = vsel %vm34, %v686, 0
  %v708 = vsel %vm34, %v687, 0
  %v711 = vsel %vm34, %v688, 0
  %v714 = vsel %vm34, %v689, 0
  %v717 = vsel %vm34, %v690, 0
  %v720 = vsel %vm34, %v691, 0
  %v723 = vsel %vm34, %v692, 0
  %v726 = vsel %vm34, %v693, 0
  %v729 = vsel %vm34, %v694, 0
  %v732 = vsel %vm34, %v695, 0
  %v735 = vsel %vm34, %v696, 0
  %v738 = vsel %vm34, %v697, 0
  %v741 = vsel %vm34, %v698, 0
  %v744 = vsel %vm34, %v699, 0
  %v747 = vsel %vm34, %v700, 0
  %749 = vmatprep.subr.mxu0 0.0
  %750 = vmatpush1.msra.mxu0 0.0
  %751 = vmatprep.subr.mxu0 0.0
  %752 = vmatpush1.msra.mxu0 0.0
  %753 = vmatprep.subr.mxu0 0.0
  %754 = vmatpush1.msra.mxu0 0.0
  %755 = vmatprep.subr.mxu0 0.0
  %756 = vmatpush1.msra.mxu0 0.0
  %757 = vmatprep.subr.mxu0 0.0
  %758 = vmatpush1.msra.mxu0 0.0
  %759 = vmatprep.subr.mxu0 0.0
  %760 = vmatpush1.msra.mxu0 0.0
  %761 = vmatprep.subr.mxu0 0.0
  %762 = vmatpush1.msra.mxu0 0.0
  %763 = vmatprep.subr.mxu0 0.0
  %764 = vmatpush1.msra.mxu0 0.0
  %765 = vmatprep.subr.mxu0 0.0
  %766 = vmatpush1.msra.mxu0 0.0
  %767 = vmatprep.subr.mxu0 0.0
  %768 = vmatpush1.msra.mxu0 0.0
  %769 = vmatprep.subr.mxu0 0.0
  %770 = vmatpush1.msra.mxu0 0.0
  %771 = vmatprep.subr.mxu0 0.0
  %772 = vmatpush1.msra.mxu0 0.0
  %773 = vmatprep.subr.mxu0 0.0
  %774 = vmatpush1.msra.mxu0 %v85
  %775 = vmatprep.subr.mxu0 0.0
  %776 = vmatpush1.msra.mxu0 %v16
  %777 = vmatprep.subr.mxu0 0.0
  %778 = vmatpush1.msra.mxu0 %v15
  %779 = vmatprep.subr.mxu0 0.0
  %780 = vmatpush1.msra.mxu0 %v14
  %781 = vmatprep.subr.mxu0 0.0
  %782 = vmatpush2.msra.mxu0 0.0
  %783 = vmatprep.subr.mxu0 0.0
  %784 = vmatpush2.msra.mxu0 0.0
  %785 = vmatprep.subr.mxu0 0.0
  %786 = vmatpush2.msra.mxu0 0.0
  %787 = vmatprep.subr.mxu0 0.0
  %788 = vmatpush2.msra.mxu0 0.0
  %789 = vmatprep.subr.mxu0 0.0
  %790 = vmatpush2.msra.mxu0 0.0
  %791 = vmatprep.subr.mxu0 0.0
  %792 = vmatpush2.msra.mxu0 0.0
  %793 = vmatprep.subr.mxu0 0.0
  %794 = vmatpush2.msra.mxu0 0.0
  %795 = vmatprep.subr.mxu0 0.0
  %796 = vmatpush2.msra.mxu0 0.0
  %797 = vmatprep.subr.mxu0 0.0
  %798 = vmatpush2.msra.mxu0 0.0
  %799 = vmatprep.subr.mxu0 0.0
  %800 = vmatpush2.msra.mxu0 0.0
  %801 = vmatprep.subr.mxu0 0.0
  %802 = vmatpush2.msra.mxu0 0.0
  %803 = vmatprep.subr.mxu0 0.0
  %804 = vmatpush2.msra.mxu0 0.0
  %805 = vmatprep.subr.mxu0 0.0
  %806 = vmatpush2.msra.mxu0 0.0
  %807 = vmatprep.subr.mxu0 0.0
  %808 = vmatpush2.msra.mxu0 0.0
  %809 = vmatprep.subr.mxu0 0.0
  %810 = vmatpush2.msra.mxu0 0.0
  %811 = vmatprep.subr.mxu0 0.0
  %812 = vmatpush2.msra.mxu0 0.0
  %813 = vmatprep.mubr.f32.mxu0 0.0
  %814 = vmatmul.mubr.f32.gmra.mxu0 %v702
  %v815 = vpop.f32.mrf.mxu0
  %v816 = vadd.f32 0.0, %v815
  %v817 = vpop.f32.mrf.mxu0
  %818 = vmatprep.mubr.f32.mxu0 0.0
  %819 = vmatmul.mubr.f32.gmra.mxu0 %v705
  %v820 = vpop.f32.mrf.mxu0
  %v821 = vadd.f32 0.0, %v820
  %v822 = vpop.f32.mrf.mxu0
  %823 = vmatprep.mubr.f32.mxu0 0.0
  %824 = vmatmul.mubr.f32.gmra.mxu0 %v708
  %v825 = vpop.f32.mrf.mxu0
  %v826 = vadd.f32 0.0, %v825
  %v827 = vpop.f32.mrf.mxu0
  %828 = vmatprep.mubr.f32.mxu0 0.0
  %829 = vmatmul.mubr.f32.gmra.mxu0 %v711
  %v830 = vpop.f32.mrf.mxu0
  %v831 = vadd.f32 0.0, %v830
  %v832 = vpop.f32.mrf.mxu0
  %833 = vmatprep.mubr.f32.mxu0 0.0
  %834 = vmatmul.mubr.f32.gmra.mxu0 %v714
  %v835 = vpop.f32.mrf.mxu0
  %v836 = vadd.f32 0.0, %v835
  %v837 = vpop.f32.mrf.mxu0
  %838 = vmatprep.mubr.f32.mxu0 0.0
  %839 = vmatmul.mubr.f32.gmra.mxu0 %v717
  %v840 = vpop.f32.mrf.mxu0
  %v841 = vadd.f32 0.0, %v840
  %v842 = vpop.f32.mrf.mxu0
  %843 = vmatprep.mubr.f32.mxu0 0.0
  %844 = vmatmul.mubr.f32.gmra.mxu0 %v720
  %v845 = vpop.f32.mrf.mxu0
  %v846 = vadd.f32 0.0, %v845
  %v847 = vpop.f32.mrf.mxu0
  %848 = vmatprep.mubr.f32.mxu0 0.0
  %849 = vmatmul.mubr.f32.gmra.mxu0 %v723
  %v850 = vpop.f32.mrf.mxu0
  %v851 = vadd.f32 0.0, %v850
  %v852 = vpop.f32.mrf.mxu0
  %853 = vmatprep.mubr.f32.mxu0 0.0
  %854 = vmatmul.mubr.f32.gmra.mxu0 %v726
  %v855 = vpop.f32.mrf.mxu0
  %v856 = vadd.f32 0.0, %v855
  %v857 = vpop.f32.mrf.mxu0
  %858 = vmatprep.mubr.f32.mxu0 0.0
  %859 = vmatmul.mubr.f32.gmra.mxu0 %v729
  %v860 = vpop.f32.mrf.mxu0
  %v861 = vadd.f32 0.0, %v860
  %v862 = vpop.f32.mrf.mxu0
  %863 = vmatprep.mubr.f32.mxu0 0.0
  %864 = vmatmul.mubr.f32.gmra.mxu0 %v732
  %v865 = vpop.f32.mrf.mxu0
  %v866 = vadd.f32 0.0, %v865
  %v867 = vpop.f32.mrf.mxu0
  %868 = vmatprep.mubr.f32.mxu0 0.0
  %869 = vmatmul.mubr.f32.gmra.mxu0 %v735
  %v870 = vpop.f32.mrf.mxu0
  %v871 = vadd.f32 0.0, %v870
  %v872 = vpop.f32.mrf.mxu0
  %873 = vmatprep.mubr.f32.mxu0 0.0
  %874 = vmatmul.mubr.f32.gmra.mxu0 %v738
  %v875 = vpop.f32.mrf.mxu0
  %v876 = vadd.f32 0.0, %v875
  %v877 = vpop.f32.mrf.mxu0
  %878 = vmatprep.mubr.f32.mxu0 0.0
  %879 = vmatmul.mubr.f32.gmra.mxu0 %v741
  %v880 = vpop.f32.mrf.mxu0
  %v881 = vadd.f32 0.0, %v880
  %v882 = vpop.f32.mrf.mxu0
  %883 = vmatprep.mubr.f32.mxu0 0.0
  %884 = vmatmul.mubr.f32.gmra.mxu0 %v744
  %v885 = vpop.f32.mrf.mxu0
  %v886 = vadd.f32 0.0, %v885
  %v887 = vpop.f32.mrf.mxu0
  %888 = vmatprep.mubr.f32.mxu0 0.0
  %889 = vmatmul.mubr.f32.gmra.mxu0 %v747
  %v890 = vpop.f32.mrf.mxu0
  %v891 = vadd.f32 0.0, %v890
  %v892 = vpop.f32.mrf.mxu0
  %893 = vdwg.mxu0
  %v894 = vmax.f32 %v668, %v816
  %v895 = vmax.f32 %v669, %v821
  %v896 = vmax.f32 %v670, %v826
  %v897 = vmax.f32 %v671, %v831
  %v898 = vmax.f32 %v672, %v836
  %v899 = vmax.f32 %v673, %v841
  %v900 = vmax.f32 %v674, %v846
  %v901 = vmax.f32 %v675, %v851
  %v902 = vmax.f32 %v676, %v856
  %v903 = vmax.f32 %v677, %v861
  %v904 = vmax.f32 %v678, %v866
  %v905 = vmax.f32 %v679, %v871
  %v906 = vmax.f32 %v680, %v876
  %v907 = vmax.f32 %v681, %v881
  %v908 = vmax.f32 %v682, %v886
  %v909 = vmax.f32 %v683, %v891
  %v910 = vld [vmem:[%s2] sm:$0x1]
  %v912 = vlaneseq
  %v913 = vshrl.u32 %v912, 7
  %v914 = vsub.s32 0, %v913
  %v915 = vrot.slane %v910, %v914
  %v917 = vadd.f32 %v894, %v915
  %v918 = vadd.f32 %v895, %v915
  %v919 = vadd.f32 %v896, %v915
  %v920 = vadd.f32 %v897, %v915
  %v921 = vadd.f32 %v898, %v915
  %v922 = vadd.f32 %v899, %v915
  %v923 = vadd.f32 %v900, %v915
  %v924 = vadd.f32 %v901, %v915
  %v925 = vadd.f32 %v902, %v915
  %v926 = vadd.f32 %v903, %v915
  %v927 = vadd.f32 %v904, %v915
  %v928 = vadd.f32 %v905, %v915
  %v929 = vadd.f32 %v906, %v915
  %v930 = vadd.f32 %v907, %v915
  %v931 = vadd.f32 %v908, %v915
  %v932 = vadd.f32 %v909, %v915
  %v933 = vmax.f32 %v917, 0.0
  %v934 = vmax.f32 %v918, 0.0
  %v935 = vmax.f32 %v919, 0.0
  %v936 = vmax.f32 %v920, 0.0
  %v937 = vmax.f32 %v921, 0.0
  %v938 = vmax.f32 %v922, 0.0
  %v939 = vmax.f32 %v923, 0.0
  %v940 = vmax.f32 %v924, 0.0
  %v941 = vmax.f32 %v925, 0.0
  %v942 = vmax.f32 %v926, 0.0
  %v943 = vmax.f32 %v927, 0.0
  %v944 = vmax.f32 %v928, 0.0
  %v945 = vmax.f32 %v929, 0.0
  %v946 = vmax.f32 %v930, 0.0
  %v947 = vmax.f32 %v931, 0.0
  %v948 = vmax.f32 %v932, 0.0
  %vm949 = vcmask 48128
  %950 = vst.msk [vmem:[%s3] sm:$0xff] %vm949, %v933
  %951 = vst.msk [vmem:[%s3 + $0x8] sm:$0xff] %vm949, %v934
  %952 = vst.msk [vmem:[%s3 + $0x10] sm:$0xff] %vm949, %v935
  %953 = vst.msk [vmem:[%s3 + $0x18] sm:$0xff] %vm949, %v936
  %954 = vst.msk [vmem:[%s3 + $0x20] sm:$0xff] %vm949, %v937
  %955 = vst.msk [vmem:[%s3 + $0x28] sm:$0xff] %vm949, %v938
  %956 = vst.msk [vmem:[%s3 + $0x30] sm:$0xff] %vm949, %v939
  %957 = vst.msk [vmem:[%s3 + $0x38] sm:$0xff] %vm949, %v940
  %958 = vst.msk [vmem:[%s3 + $0x40] sm:$0xff] %vm949, %v941
  %959 = vst.msk [vmem:[%s3 + $0x48] sm:$0xff] %vm949, %v942
  %960 = vst.msk [vmem:[%s3 + $0x50] sm:$0xff] %vm949, %v943
  %961 = vst.msk [vmem:[%s3 + $0x58] sm:$0xff] %vm949, %v944
  %962 = vst.msk [vmem:[%s3 + $0x60] sm:$0xff] %vm949, %v945
  %963 = vst.msk [vmem:[%s3 + $0x68] sm:$0xff] %vm949, %v946
  %964 = vst.msk [vmem:[%s3 + $0x70] sm:$0xff] %vm949, %v947
  %965 = vst.msk [vmem:[%s3 + $0x78] sm:$0xff] %vm949, %v948
  // Predicated region
  $region14: #{lenet_forward.3} parent=0 // pred_check
    _
  $region15: #{lenet_forward.3} parent=0 // pred_check_branch
    %967 = sbr.rel (0) target = $region17
  $region16: #{lenet_forward.3} parent=0 // pred_region
    _
  $region17: #{lenet_forward.3} parent=0 // pred_fallthru
    _
  // Predicated region
  $region18: #{lenet_forward.3} parent=0 // pred_check
    _
  $region19: #{lenet_forward.3} parent=0 // pred_check_branch
    %969 = sbr.rel (0) target = $region21
  $region20: #{lenet_forward.3} parent=0 // pred_region
    _
  $region21: #{lenet_forward.3} parent=0 // pred_fallthru
    _

// kernel: lenet_forward.4
$region0: #{lenet_forward.4}
  #allocation0 [shape = 'u32[]', space=smem, size = 0x4, offset = 0x4, fixed_abs, tag = 'smem constant byte address 0x4 - core index']
  #allocation1 [shape = 'u32[144,128]{1,0:T(1,128)}', space=vmem, size = 0x12000, scoped, tag = 'internal scratch']
  %s0 = inlined_call_operand.vmem [shape: f32[4,8,150], index: 0, kind: input, shape index: {}]
  %s1 = inlined_call_operand.vmem [shape: f32[150,16], index: 1, kind: input, shape index: {}]
  %s2 = inlined_call_operand.vmem [shape: f32[1,16], index: 2, kind: input, shape index: {}]
  %s3 = inlined_call_operand.vmem [shape: f32[8,16], index: 3, kind: output, shape index: {}]
  %s4 = sld [smem:[#allocation0]]
  $region22: #{lenet_forward.4} parent=0
    _
  %s6 = ssub.s32 1, %s4
  %s7 = scalar_select 0, %s6, %s4
  // Predicated region
  $region2: #{lenet_forward.4} parent=0 // pred_check
    _
  $region3: #{lenet_forward.4} parent=0 // pred_check_branch
    %9 = sbr.rel (0) target = $region5
  $region4: #{lenet_forward.4} parent=0 // pred_region
    _
  $region5: #{lenet_forward.4} parent=0 // pred_fallthru
    _
  // Predicated region
  $region6: #{lenet_forward.4} parent=0 // pred_check
    _
  $region7: #{lenet_forward.4} parent=0 // pred_check_branch
    %11 = sbr.rel (0) target = $region9
  $region8: #{lenet_forward.4} parent=0 // pred_region
    _
  $region9: #{lenet_forward.4} parent=0 // pred_fallthru
    _
  // Predicated region
  $region10: #{lenet_forward.4} parent=0 // pred_check
    _
  $region11: #{lenet_forward.4} parent=0 // pred_check_branch
    %13 = sbr.rel (0) target = $region13
  $region12: #{lenet_forward.4} parent=0 // pred_region
    _
  $region13: #{lenet_forward.4} parent=0 // pred_fallthru
    _
  %v14 = vld [vmem:[%s1] sm:$0xff]
  %v15 = vld [vmem:[%s1 + $0x8] sm:$0xff]
  %v16 = vld [vmem:[%s1 + $0x10] sm:$0xff]
  %v17 = vld [vmem:[%s1 + $0x18] sm:$0xff]
  %v18 = vld [vmem:[%s1 + $0x20] sm:$0xff]
  %v19 = vld [vmem:[%s1 + $0x28] sm:$0xff]
  %v20 = vld [vmem:[%s1 + $0x30] sm:$0xff]
  %v21 = vld [vmem:[%s1 + $0x38] sm:$0xff]
  %v22 = vld [vmem:[%s1 + $0x40] sm:$0xff]
  %v23 = vld [vmem:[%s1 + $0x48] sm:$0xff]
  %v24 = vld [vmem:[%s1 + $0x50] sm:$0xff]
  %v25 = vld [vmem:[%s1 + $0x58] sm:$0xff]
  %v26 = vld [vmem:[%s1 + $0x60] sm:$0xff]
  %v27 = vld [vmem:[%s1 + $0x68] sm:$0xff]
  %v28 = vld [vmem:[%s1 + $0x70] sm:$0xff]
  %v29 = vld [vmem:[%s1 + $0x78] sm:$0xff]
  %v30 = vld [vmem:[%s1 + $0x80] sm:$0xff]
  %v31 = vld [vmem:[%s1 + $0x88] sm:$0xff]
  %v32 = vld [vmem:[%s1 + $0x90] sm:$0x3f]
  %v33 = vld [vmem:[%s0] sm:$0xff]
  %v34 = vld [vmem:[%s0 + $0x8] sm:$0xff]
  %vm35 = vcmask 179200
  %v37 = vsel %vm35, %v34, 0
  %vm39 = vcmask 1045504
  %v41 = vsel %vm39, %v32, 0
  %43 = vmatprep.subr.mxu0 0.0
  %44 = vmatpush1.msra.mxu0 %v29
  %45 = vmatprep.subr.mxu0 0.0
  %46 = vmatpush1.msra.mxu0 %v28
  %47 = vmatprep.subr.mxu0 0.0
  %48 = vmatpush1.msra.mxu0 %v27
  %49 = vmatprep.subr.mxu0 0.0
  %50 = vmatpush1.msra.mxu0 %v26
  %51 = vmatprep.subr.mxu0 0.0
  %52 = vmatpush1.msra.mxu0 %v25
  %53 = vmatprep.subr.mxu0 0.0
  %54 = vmatpush1.msra.mxu0 %v24
  %55 = vmatprep.subr.mxu0 0.0
  %56 = vmatpush1.msra.mxu0 %v23
  %57 = vmatprep.subr.mxu0 0.0
  %58 = vmatpush1.msra.mxu0 %v22
  %59 = vmatprep.subr.mxu0 0.0
  %60 = vmatpush1.msra.mxu0 %v21
  %61 = vmatprep.subr.mxu0 0.0
  %62 = vmatpush1.msra.mxu0 %v20
  %63 = vmatprep.subr.mxu0 0.0
  %64 = vmatpush1.msra.mxu0 %v19
  %65 = vmatprep.subr.mxu0 0.0
  %66 = vmatpush1.msra.mxu0 %v18
  %67 = vmatprep.subr.mxu0 0.0
  %68 = vmatpush1.msra.mxu0 %v17
  %69 = vmatprep.subr.mxu0 0.0
  %70 = vmatpush1.msra.mxu0 %v16
  %71 = vmatprep.subr.mxu0 0.0
  %72 = vmatpush1.msra.mxu0 %v15
  %73 = vmatprep.subr.mxu0 0.0
  %74 = vmatpush1.msra.mxu0 %v14
  %75 = vmatprep.subr.mxu0 0.0
  %76 = vmatpush2.msra.mxu0 0.0
  %77 = vmatprep.subr.mxu0 0.0
  %78 = vmatpush2.msra.mxu0 0.0
  %79 = vmatprep.subr.mxu0 0.0
  %80 = vmatpush2.msra.mxu0 0.0
  %81 = vmatprep.subr.mxu0 0.0
  %82 = vmatpush2.msra.mxu0 0.0
  %83 = vmatprep.subr.mxu0 0.0
  %84 = vmatpush2.msra.mxu0 0.0
  %85 = vmatprep.subr.mxu0 0.0
  %86 = vmatpush2.msra.mxu0 0.0
  %87 = vmatprep.subr.mxu0 0.0
  %88 = vmatpush2.msra.mxu0 0.0
  %89 = vmatprep.subr.mxu0 0.0
  %90 = vmatpush2.msra.mxu0 0.0
  %91 = vmatprep.subr.mxu0 0.0
  %92 = vmatpush2.msra.mxu0 0.0
  %93 = vmatprep.subr.mxu0 0.0
  %94 = vmatpush2.msra.mxu0 0.0
  %95 = vmatprep.subr.mxu0 0.0
  %96 = vmatpush2.msra.mxu0 0.0
  %97 = vmatprep.subr.mxu0 0.0
  %98 = vmatpush2.msra.mxu0 0.0
  %99 = vmatprep.subr.mxu0 0.0
  %100 = vmatpush2.msra.mxu0 0.0
  %101 = vmatprep.subr.mxu0 0.0
  %102 = vmatpush2.msra.mxu0 %v41
  %103 = vmatprep.subr.mxu0 0.0
  %104 = vmatpush2.msra.mxu0 %v31
  %105 = vmatprep.subr.mxu0 0.0
  %106 = vmatpush2.msra.mxu0 %v30
  %107 = vmatprep.mubr.f32.mxu0 %v37
  %108 = vmatmul.mubr.f32.gmra.mxu0 %v33
  %v109 = vpop.f32.mrf.mxu0
  %v110 = vadd.f32 0.0, %v109
  %v111 = vpop.f32.mrf.mxu0
  %112 = vdwg.mxu0
  %s113 = scalar_lea.vmem %s0, 16
  %v114 = vld [vmem:[%s113] sm:$0xff]
  %v115 = vld [vmem:[%s113 + $0x8] sm:$0xff]
  %v117 = vsel %vm35, %v115, 0
  %119 = vmatprep.subr.mxu0 0.0
  %120 = vmatpush1.msra.mxu0 %v29
  %121 = vmatprep.subr.mxu0 0.0
  %122 = vmatpush1.msra.mxu0 %v28
  %123 = vmatprep.subr.mxu0 0.0
  %124 = vmatpush1.msra.mxu0 %v27
  %125 = vmatprep.subr.mxu0 0.0
  %126 = vmatpush1.msra.mxu0 %v26
  %127 = vmatprep.subr.mxu0 0.0
  %128 = vmatpush1.msra.mxu0 %v25
  %129 = vmatprep.subr.mxu0 0.0
  %130 = vmatpush1.msra.mxu0 %v24
  %131 = vmatprep.subr.mxu0 0.0
  %132 = vmatpush1.msra.mxu0 %v23
  %133 = vmatprep.subr.mxu0 0.0
  %134 = vmatpush1.msra.mxu0 %v22
  %135 = vmatprep.subr.mxu0 0.0
  %136 = vmatpush1.msra.mxu0 %v21
  %137 = vmatprep.subr.mxu0 0.0
  %138 = vmatpush1.msra.mxu0 %v20
  %139 = vmatprep.subr.mxu0 0.0
  %140 = vmatpush1.msra.mxu0 %v19
  %141 = vmatprep.subr.mxu0 0.0
  %142 = vmatpush1.msra.mxu0 %v18
  %143 = vmatprep.subr.mxu0 0.0
  %144 = vmatpush1.msra.mxu0 %v17
  %145 = vmatprep.subr.mxu0 0.0
  %146 = vmatpush1.msra.mxu0 %v16
  %147 = vmatprep.subr.mxu0 0.0
  %148 = vmatpush1.msra.mxu0 %v15
  %149 = vmatprep.subr.mxu0 0.0
  %150 = vmatpush1.msra.mxu0 %v14
  %151 = vmatprep.subr.mxu0 0.0
  %152 = vmatpush2.msra.mxu0 0.0
  %153 = vmatprep.subr.mxu0 0.0
  %154 = vmatpush2.msra.mxu0 0.0
  %155 = vmatprep.subr.mxu0 0.0
  %156 = vmatpush2.msra.mxu0 0.0
  %157 = vmatprep.subr.mxu0 0.0
  %158 = vmatpush2.msra.mxu0 0.0
  %159 = vmatprep.subr.mxu0 0.0
  %160 = vmatpush2.msra.mxu0 0.0
  %161 = vmatprep.subr.mxu0 0.0
  %162 = vmatpush2.msra.mxu0 0.0
  %163 = vmatprep.subr.mxu0 0.0
  %164 = vmatpush2.msra.mxu0 0.0
  %165 = vmatprep.subr.mxu0 0.0
  %166 = vmatpush2.msra.mxu0 0.0
  %167 = vmatprep.subr.mxu0 0.0
  %168 = vmatpush2.msra.mxu0 0.0
  %169 = vmatprep.subr.mxu0 0.0
  %170 = vmatpush2.msra.mxu0 0.0
  %171 = vmatprep.subr.mxu0 0.0
  %172 = vmatpush2.msra.mxu0 0.0
  %173 = vmatprep.subr.mxu0 0.0
  %174 = vmatpush2.msra.mxu0 0.0
  %175 = vmatprep.subr.mxu0 0.0
  %176 = vmatpush2.msra.mxu0 0.0
  %177 = vmatprep.subr.mxu0 0.0
  %178 = vmatpush2.msra.mxu0 %v41
  %179 = vmatprep.subr.mxu0 0.0
  %180 = vmatpush2.msra.mxu0 %v31
  %181 = vmatprep.subr.mxu0 0.0
  %182 = vmatpush2.msra.mxu0 %v30
  %183 = vmatprep.mubr.f32.mxu0 %v117
  %184 = vmatmul.mubr.f32.gmra.mxu0 %v114
  %v185 = vpop.f32.mrf.mxu0
  %v186 = vadd.f32 0.0, %v185
  %v187 = vpop.f32.mrf.mxu0
  %188 = vdwg.mxu0
  %v189 = vmax.f32 %v110, %v186
  %s190 = scalar_lea.vmem %s0, 32
  %v191 = vld [vmem:[%s190] sm:$0xff]
  %v192 = vld [vmem:[%s190 + $0x8] sm:$0xff]
  %v194 = vsel %vm35, %v192, 0
  %196 = vmatprep.subr.mxu0 0.0
  %197 = vmatpush1.msra.mxu0 %v29
  %198 = vmatprep.subr.mxu0 0.0
  %199 = vmatpush1.msra.mxu0 %v28
  %200 = vmatprep.subr.mxu0 0.0
  %201 = vmatpush1.msra.mxu0 %v27
  %202 = vmatprep.subr.mxu0 0.0
  %203 = vmatpush1.msra.mxu0 %v26
  %204 = vmatprep.subr.mxu0 0.0
  %205 = vmatpush1.msra.mxu0 %v25
  %206 = vmatprep.subr.mxu0 0.0
  %207 = vmatpush1.msra.mxu0 %v24
  %208 = vmatprep.subr.mxu0 0.0
  %209 = vmatpush1.msra.mxu0 %v23
  %210 = vmatprep.subr.mxu0 0.0
  %211 = vmatpush1.msra.mxu0 %v22
  %212 = vmatprep.subr.mxu0 0.0
  %213 = vmatpush1.msra.mxu0 %v21
  %214 = vmatprep.subr.mxu0 0.0
  %215 = vmatpush1.msra.mxu0 %v20
  %216 = vmatprep.subr.mxu0 0.0
  %217 = vmatpush1.msra.mxu0 %v19
  %218 = vmatprep.subr.mxu0 0.0
  %219 = vmatpush1.msra.mxu0 %v18
  %220 = vmatprep.subr.mxu0 0.0
  %221 = vmatpush1.msra.mxu0 %v17
  %222 = vmatprep.subr.mxu0 0.0
  %223 = vmatpush1.msra.mxu0 %v16
  %224 = vmatprep.subr.mxu0 0.0
  %225 = vmatpush1.msra.mxu0 %v15
  %226 = vmatprep.subr.mxu0 0.0
  %227 = vmatpush1.msra.mxu0 %v14
  %228 = vmatprep.subr.mxu0 0.0
  %229 = vmatpush2.msra.mxu0 0.0
  %230 = vmatprep.subr.mxu0 0.0
  %231 = vmatpush2.msra.mxu0 0.0
  %232 = vmatprep.subr.mxu0 0.0
  %233 = vmatpush2.msra.mxu0 0.0
  %234 = vmatprep.subr.mxu0 0.0
  %235 = vmatpush2.msra.mxu0 0.0
  %236 = vmatprep.subr.mxu0 0.0
  %237 = vmatpush2.msra.mxu0 0.0
  %238 = vmatprep.subr.mxu0 0.0
  %239 = vmatpush2.msra.mxu0 0.0
  %240 = vmatprep.subr.mxu0 0.0
  %241 = vmatpush2.msra.mxu0 0.0
  %242 = vmatprep.subr.mxu0 0.0
  %243 = vmatpush2.msra.mxu0 0.0
  %244 = vmatprep.subr.mxu0 0.0
  %245 = vmatpush2.msra.mxu0 0.0
  %246 = vmatprep.subr.mxu0 0.0
  %247 = vmatpush2.msra.mxu0 0.0
  %248 = vmatprep.subr.mxu0 0.0
  %249 = vmatpush2.msra.mxu0 0.0
  %250 = vmatprep.subr.mxu0 0.0
  %251 = vmatpush2.msra.mxu0 0.0
  %252 = vmatprep.subr.mxu0 0.0
  %253 = vmatpush2.msra.mxu0 0.0
  %254 = vmatprep.subr.mxu0 0.0
  %255 = vmatpush2.msra.mxu0 %v41
  %256 = vmatprep.subr.mxu0 0.0
  %257 = vmatpush2.msra.mxu0 %v31
  %258 = vmatprep.subr.mxu0 0.0
  %259 = vmatpush2.msra.mxu0 %v30
  %260 = vmatprep.mubr.f32.mxu0 %v194
  %261 = vmatmul.mubr.f32.gmra.mxu0 %v191
  %v262 = vpop.f32.mrf.mxu0
  %v263 = vadd.f32 0.0, %v262
  %v264 = vpop.f32.mrf.mxu0
  %265 = vdwg.mxu0
  %v266 = vmax.f32 %v189, %v263
  %s267 = scalar_lea.vmem %s0, 48
  %v268 = vld [vmem:[%s267] sm:$0xff]
  %v269 = vld [vmem:[%s267 + $0x8] sm:$0xff]
  %v271 = vsel %vm35, %v269, 0
  %273 = vmatprep.subr.mxu0 0.0
  %274 = vmatpush1.msra.mxu0 %v29
  %275 = vmatprep.subr.mxu0 0.0
  %276 = vmatpush1.msra.mxu0 %v28
  %277 = vmatprep.subr.mxu0 0.0
  %278 = vmatpush1.msra.mxu0 %v27
  %279 = vmatprep.subr.mxu0 0.0
  %280 = vmatpush1.msra.mxu0 %v26
  %281 = vmatprep.subr.mxu0 0.0
  %282 = vmatpush1.msra.mxu0 %v25
  %283 = vmatprep.subr.mxu0 0.0
  %284 = vmatpush1.msra.mxu0 %v24
  %285 = vmatprep.subr.mxu0 0.0
  %286 = vmatpush1.msra.mxu0 %v23
  %287 = vmatprep.subr.mxu0 0.0
  %288 = vmatpush1.msra.mxu0 %v22
  %289 = vmatprep.subr.mxu0 0.0
  %290 = vmatpush1.msra.mxu0 %v21
  %291 = vmatprep.subr.mxu0 0.0
  %292 = vmatpush1.msra.mxu0 %v20
  %293 = vmatprep.subr.mxu0 0.0
  %294 = vmatpush1.msra.mxu0 %v19
  %295 = vmatprep.subr.mxu0 0.0
  %296 = vmatpush1.msra.mxu0 %v18
  %297 = vmatprep.subr.mxu0 0.0
  %298 = vmatpush1.msra.mxu0 %v17
  %299 = vmatprep.subr.mxu0 0.0
  %300 = vmatpush1.msra.mxu0 %v16
  %301 = vmatprep.subr.mxu0 0.0
  %302 = vmatpush1.msra.mxu0 %v15
  %303 = vmatprep.subr.mxu0 0.0
  %304 = vmatpush1.msra.mxu0 %v14
  %305 = vmatprep.subr.mxu0 0.0
  %306 = vmatpush2.msra.mxu0 0.0
  %307 = vmatprep.subr.mxu0 0.0
  %308 = vmatpush2.msra.mxu0 0.0
  %309 = vmatprep.subr.mxu0 0.0
  %310 = vmatpush2.msra.mxu0 0.0
  %311 = vmatprep.subr.mxu0 0.0
  %312 = vmatpush2.msra.mxu0 0.0
  %313 = vmatprep.subr.mxu0 0.0
  %314 = vmatpush2.msra.mxu0 0.0
  %315 = vmatprep.subr.mxu0 0.0
  %316 = vmatpush2.msra.mxu0 0.0
  %317 = vmatprep.subr.mxu0 0.0
  %318 = vmatpush2.msra.mxu0 0.0
  %319 = vmatprep.subr.mxu0 0.0
  %320 = vmatpush2.msra.mxu0 0.0
  %321 = vmatprep.subr.mxu0 0.0
  %322 = vmatpush2.msra.mxu0 0.0
  %323 = vmatprep.subr.mxu0 0.0
  %324 = vmatpush2.msra.mxu0 0.0
  %325 = vmatprep.subr.mxu0 0.0
  %326 = vmatpush2.msra.mxu0 0.0
  %327 = vmatprep.subr.mxu0 0.0
  %328 = vmatpush2.msra.mxu0 0.0
  %329 = vmatprep.subr.mxu0 0.0
  %330 = vmatpush2.msra.mxu0 0.0
  %331 = vmatprep.subr.mxu0 0.0
  %332 = vmatpush2.msra.mxu0 %v41
  %333 = vmatprep.subr.mxu0 0.0
  %334 = vmatpush2.msra.mxu0 %v31
  %335 = vmatprep.subr.mxu0 0.0
  %336 = vmatpush2.msra.mxu0 %v30
  %337 = vmatprep.mubr.f32.mxu0 %v271
  %338 = vmatmul.mubr.f32.gmra.mxu0 %v268
  %v339 = vpop.f32.mrf.mxu0
  %v340 = vadd.f32 0.0, %v339
  %v341 = vpop.f32.mrf.mxu0
  %342 = vdwg.mxu0
  %v343 = vmax.f32 %v266, %v340
  %v344 = vld [vmem:[%s2] sm:$0x1]
  %v346 = vlaneseq
  %v347 = vshrl.u32 %v346, 7
  %v348 = vsub.s32 0, %v347
  %v349 = vrot.slane %v344, %v348
  %v351 = vadd.f32 %v343, %v349
  %v352 = vmax.f32 %v351, 0.0
  %vm353 = vcmask 130048
  %354 = vst.msk [vmem:[%s3] sm:$0xff] %vm353, %v352
  // Predicated region
  $region14: #{lenet_forward.4} parent=0 // pred_check
    _
  $region15: #{lenet_forward.4} parent=0 // pred_check_branch
    %356 = sbr.rel (0) target = $region17
  $region16: #{lenet_forward.4} parent=0 // pred_region
    _
  $region17: #{lenet_forward.4} parent=0 // pred_fallthru
    _
  // Predicated region
  $region18: #{lenet_forward.4} parent=0 // pred_check
    _
  $region19: #{lenet_forward.4} parent=0 // pred_check_branch
    %358 = sbr.rel (0) target = $region21
  $region20: #{lenet_forward.4} parent=0 // pred_region
    _
  $region21: #{lenet_forward.4} parent=0 // pred_fallthru
    _

// kernel: lenet_forward.5
$region0: #{lenet_forward.5}
  #allocation0 [shape = 'u32[]', space=smem, size = 0x4, offset = 0x4, fixed_abs, tag = 'smem constant byte address 0x4 - core index']
  #allocation1 [shape = 'u32[144,128]{1,0:T(1,128)}', space=vmem, size = 0x12000, scoped, tag = 'internal scratch']
  %s0 = inlined_call_operand.vmem [shape: f32[2,64], index: 0, kind: input, shape index: {}]
  %s1 = inlined_call_operand.vmem [shape: bf16[64,1024], index: 1, kind: input, shape index: {}]
  %s2 = inlined_call_operand.vmem [shape: f32[1,1024], index: 2, kind: input, shape index: {}]
  %s3 = inlined_call_operand.vmem [shape: bf16[1024,1024], index: 3, kind: input, shape index: {}]
  %s4 = inlined_call_operand.vmem [shape: f32[1,1024], index: 4, kind: input, shape index: {}]
  %s5 = inlined_call_operand.vmem [shape: bf16[1024,512], index: 5, kind: input, shape index: {}]
  %s6 = inlined_call_operand.vmem [shape: f32[1,512], index: 6, kind: input, shape index: {}]
  %s7 = inlined_call_operand.vmem [shape: bf16[512,32], index: 7, kind: input, shape index: {}]
  %s8 = inlined_call_operand.vmem [shape: f32[1,32], index: 8, kind: input, shape index: {}]
  %s9 = inlined_call_operand.hbm [shape: f32[2,32], index: 9, kind: output, shape index: {}]
  %s10 = sld [smem:[#allocation0]]
  $region46: #{lenet_forward.5} parent=0
    _
  %s12 = ssub.s32 1, %s10
  %s13 = scalar_select 0, %s12, %s10
  $region1: #{lenet_forward.5} parent=0
    #allocation2 [shape = 'u8[1024]{0}', space=vmem, size = 0x400, scoped, tag = 'output window, operand 0, single buffered']
    #allocation3 [shape = 's32[1]{0}', space=sflag, size = 0x4, scoped, tag = 'scoped memory for lenet_forward.5']
    %14 = vsyncpa [#allocation3], 0
    // Predicated region
    $region2: #{lenet_forward.5} parent=1 // pred_check
      _
    $region3: #{lenet_forward.5} parent=1 // pred_check_branch
      %16 = sbr.rel (0) target = $region5
    $region4: #{lenet_forward.5} parent=1 // pred_region
      _
    $region5: #{lenet_forward.5} parent=1 // pred_fallthru
      _
    // Predicated region
    $region6: #{lenet_forward.5} parent=1 // pred_check
      _
    $region7: #{lenet_forward.5} parent=1 // pred_check_branch
      %18 = sbr.rel (0) target = $region9
    $region8: #{lenet_forward.5} parent=1 // pred_region
      _
    $region9: #{lenet_forward.5} parent=1 // pred_fallthru
      _
    // Predicated region
    $region10: #{lenet_forward.5} parent=1 // pred_check
      _
    $region11: #{lenet_forward.5} parent=1 // pred_check_branch
      %20 = sbr.rel (0) target = $region13
    $region12: #{lenet_forward.5} parent=1 // pred_region
      _
    $region13: #{lenet_forward.5} parent=1 // pred_fallthru
      _
    // Predicated region
    $region14: #{lenet_forward.5} parent=1 // pred_check
      _
    $region15: #{lenet_forward.5} parent=1 // pred_check_branch
      %22 = sbr.rel (0) target = $region17
    $region16: #{lenet_forward.5} parent=1 // pred_region
      _
    $region17: #{lenet_forward.5} parent=1 // pred_fallthru
      _
    // Predicated region
    $region18: #{lenet_forward.5} parent=1 // pred_check
      _
    $region19: #{lenet_forward.5} parent=1 // pred_check_branch
      %24 = sbr.rel (0) target = $region21
    $region20: #{lenet_forward.5} parent=1 // pred_region
      _
    $region21: #{lenet_forward.5} parent=1 // pred_fallthru
      _
    // Predicated region
    $region22: #{lenet_forward.5} parent=1 // pred_check
      _
    $region23: #{lenet_forward.5} parent=1 // pred_check_branch
      %26 = sbr.rel (0) target = $region25
    $region24: #{lenet_forward.5} parent=1 // pred_region
      _
    $region25: #{lenet_forward.5} parent=1 // pred_fallthru
      _
    // Predicated region
    $region26: #{lenet_forward.5} parent=1 // pred_check
      _
    $region27: #{lenet_forward.5} parent=1 // pred_check_branch
      %28 = sbr.rel (0) target = $region29
    $region28: #{lenet_forward.5} parent=1 // pred_region
      _
    $region29: #{lenet_forward.5} parent=1 // pred_fallthru
      _
    // Predicated region
    $region30: #{lenet_forward.5} parent=1 // pred_check
      _
    $region31: #{lenet_forward.5} parent=1 // pred_check_branch
      %30 = sbr.rel (0) target = $region33
    $region32: #{lenet_forward.5} parent=1 // pred_region
      _
    $region33: #{lenet_forward.5} parent=1 // pred_fallthru
      _
    // Predicated region
    $region34: #{lenet_forward.5} parent=1 // pred_check
      _
    $region35: #{lenet_forward.5} parent=1 // pred_check_branch
      %32 = sbr.rel (0) target = $region37
    $region36: #{lenet_forward.5} parent=1 // pred_region
      _
    $region37: #{lenet_forward.5} parent=1 // pred_fallthru
      _
    %v34 = vld [vmem:[%s0] sm:$0x3]
    %v35 = vpack.c.bf16 %v34, %v34
    %v36 = vld [vmem:[%s1] sm:$0xff]
    %v37 = vld [vmem:[%s1 + $0x8] sm:$0xff]
    %v38 = vld [vmem:[%s1 + $0x10] sm:$0xff]
    %v39 = vld [vmem:[%s1 + $0x18] sm:$0xff]
    %v40 = vld [vmem:[%s1 + $0x20] sm:$0xff]
    %v41 = vld [vmem:[%s1 + $0x28] sm:$0xff]
    %v42 = vld [vmem:[%s1 + $0x30] sm:$0xff]
    %v43 = vld [vmem:[%s1 + $0x38] sm:$0xff]
    %v44 = vld [vmem:[%s1 + $0x40] sm:$0xff]
    %v45 = vld [vmem:[%s1 + $0x48] sm:$0xff]
    %v46 = vld [vmem:[%s1 + $0x50] sm:$0xff]
    %v47 = vld [vmem:[%s1 + $0x58] sm:$0xff]
    %v48 = vld [vmem:[%s1 + $0x60] sm:$0xff]
    %v49 = vld [vmem:[%s1 + $0x68] sm:$0xff]
    %v50 = vld [vmem:[%s1 + $0x70] sm:$0xff]
    %v51 = vld [vmem:[%s1 + $0x78] sm:$0xff]
    %v52 = vld [vmem:[%s1 + $0x80] sm:$0xff]
    %v53 = vld [vmem:[%s1 + $0x88] sm:$0xff]
    %v54 = vld [vmem:[%s1 + $0x90] sm:$0xff]
    %v55 = vld [vmem:[%s1 + $0x98] sm:$0xff]
    %v56 = vld [vmem:[%s1 + $0xa0] sm:$0xff]
    %v57 = vld [vmem:[%s1 + $0xa8] sm:$0xff]
    %v58 = vld [vmem:[%s1 + $0xb0] sm:$0xff]
    %v59 = vld [vmem:[%s1 + $0xb8] sm:$0xff]
    %v60 = vld [vmem:[%s1 + $0xc0] sm:$0xff]
    %v61 = vld [vmem:[%s1 + $0xc8] sm:$0xff]
    %v62 = vld [vmem:[%s1 + $0xd0] sm:$0xff]
    %v63 = vld [vmem:[%s1 + $0xd8] sm:$0xff]
    %v64 = vld [vmem:[%s1 + $0xe0] sm:$0xff]
    %v65 = vld [vmem:[%s1 + $0xe8] sm:$0xff]
    %v66 = vld [vmem:[%s1 + $0xf0] sm:$0xff]
    %v67 = vld [vmem:[%s1 + $0xf8] sm:$0xff]
    %v68 = vld [vmem:[%s2] sm:$0xff]
    %v70 = vlaneseq
    %v71 = vshrl.u32 %v70, 7
    %v72 = vsub.s32 0, %v71
    %v73 = vrot.slane %v68, %v72
    %v74 = vlaneseq
    %v75 = vshrl.u32 %v74, 7
    %v76 = vsub.s32 1, %v75
    %v77 = vrot.slane %v68, %v76
    %v78 = vlaneseq
    %v79 = vshrl.u32 %v78, 7
    %v80 = vsub.s32 2, %v79
    %v81 = vrot.slane %v68, %v80
    %v82 = vlaneseq
    %v83 = vshrl.u32 %v82, 7
    %v84 = vsub.s32 3, %v83
    %v85 = vrot.slane %v68, %v84
    %v86 = vlaneseq
    %v87 = vshrl.u32 %v86, 7
    %v88 = vsub.s32 4, %v87
    %v89 = vrot.slane %v68, %v88
    %v90 = vlaneseq
    %v91 = vshrl.u32 %v90, 7
    %v92 = vsub.s32 5, %v91
    %v93 = vrot.slane %v68, %v92
    %v94 = vlaneseq
    %v95 = vshrl.u32 %v94, 7
    %v96 = vsub.s32 6, %v95
    %v97 = vrot.slane %v68, %v96
    %v98 = vlaneseq
    %v99 = vshrl.u32 %v98, 7
    %v100 = vsub.s32 7, %v99
    %v101 = vrot.slane %v68, %v100
    %v142 = vunpack.c.l.b16 %v36
    %v143 = vunpack.c.h.b16 %v36
    %v144 = vunpack.c.l.b16 %v37
    %v145 = vunpack.c.h.b16 %v37
    %v146 = vunpack.c.l.b16 %v38
    %v147 = vunpack.c.h.b16 %v38
    %v148 = vunpack.c.l.b16 %v39
    %v149 = vunpack.c.h.b16 %v39
    %v150 = vunpack.c.l.b16 %v40
    %v151 = vunpack.c.h.b16 %v40
    %v152 = vunpack.c.l.b16 %v41
    %v153 = vunpack.c.h.b16 %v41
    %v154 = vunpack.c.l.b16 %v42
    %v155 = vunpack.c.h.b16 %v42
    %v156 = vunpack.c.l.b16 %v43
    %v157 = vunpack.c.h.b16 %v43
    %v158 = vunpack.c.l.b16 %v44
    %v159 = vunpack.c.h.b16 %v44
    %v160 = vunpack.c.l.b16 %v45
    %v161 = vunpack.c.h.b16 %v45
    %v162 = vunpack.c.l.b16 %v46
    %v163 = vunpack.c.h.b16 %v46
    %v164 = vunpack.c.l.b16 %v47
    %v165 = vunpack.c.h.b16 %v47
    %v166 = vunpack.c.l.b16 %v48
    %v167 = vunpack.c.h.b16 %v48
    %v168 = vunpack.c.l.b16 %v49
    %v169 = vunpack.c.h.b16 %v49
    %v170 = vunpack.c.l.b16 %v50
    %v171 = vunpack.c.h.b16 %v50
    %v172 = vunpack.c.l.b16 %v51
    %v173 = vunpack.c.h.b16 %v51
    %v174 = vunpack.c.l.b16 %v52
    %v175 = vunpack.c.h.b16 %v52
    %v176 = vunpack.c.l.b16 %v53
    %v177 = vunpack.c.h.b16 %v53
    %v178 = vunpack.c.l.b16 %v54
    %v179 = vunpack.c.h.b16 %v54
    %v180 = vunpack.c.l.b16 %v55
    %v181 = vunpack.c.h.b16 %v55
    %v182 = vunpack.c.l.b16 %v56
    %v183 = vunpack.c.h.b16 %v56
    %v184 = vunpack.c.l.b16 %v57
    %v185 = vunpack.c.h.b16 %v57
    %v186 = vunpack.c.l.b16 %v58
    %v187 = vunpack.c.h.b16 %v58
    %v188 = vunpack.c.l.b16 %v59
    %v189 = vunpack.c.h.b16 %v59
    %v190 = vunpack.c.l.b16 %v60
    %v191 = vunpack.c.h.b16 %v60
    %v192 = vunpack.c.l.b16 %v61
    %v193 = vunpack.c.h.b16 %v61
    %v194 = vunpack.c.l.b16 %v62
    %v195 = vunpack.c.h.b16 %v62
    %v196 = vunpack.c.l.b16 %v63
    %v197 = vunpack.c.h.b16 %v63
    %v198 = vunpack.c.l.b16 %v64
    %v199 = vunpack.c.h.b16 %v64
    %v200 = vunpack.c.l.b16 %v65
    %v201 = vunpack.c.h.b16 %v65
    %v202 = vunpack.c.l.b16 %v66
    %v203 = vunpack.c.h.b16 %v66
    %v204 = vunpack.c.l.b16 %v67
    %v205 = vunpack.c.h.b16 %v67
    %v206 = vpack.c.b16 %v150, %v142
    %v207 = vpack.c.b16 %v151, %v143
    %v208 = vpack.c.b16 %v152, %v144
    %v209 = vpack.c.b16 %v153, %v145
    %v210 = vpack.c.b16 %v154, %v146
    %v211 = vpack.c.b16 %v155, %v147
    %v212 = vpack.c.b16 %v156, %v148
    %v213 = vpack.c.b16 %v157, %v149
    %v214 = vpack.c.b16 %v166, %v158
    %v215 = vpack.c.b16 %v167, %v159
    %v216 = vpack.c.b16 %v168, %v160
    %v217 = vpack.c.b16 %v169, %v161
    %v218 = vpack.c.b16 %v170, %v162
    %v219 = vpack.c.b16 %v171, %v163
    %v220 = vpack.c.b16 %v172, %v164
    %v221 = vpack.c.b16 %v173, %v165
    %v222 = vpack.c.b16 %v182, %v174
    %v223 = vpack.c.b16 %v183, %v175
    %v224 = vpack.c.b16 %v184, %v176
    %v225 = vpack.c.b16 %v185, %v177
    %v226 = vpack.c.b16 %v186, %v178
    %v227 = vpack.c.b16 %v187, %v179
    %v228 = vpack.c.b16 %v188, %v180
    %v229 = vpack.c.b16 %v189, %v181
    %v230 = vpack.c.b16 %v198, %v190
    %v231 = vpack.c.b16 %v199, %v191
    %v232 = vpack.c.b16 %v200, %v192
    %v233 = vpack.c.b16 %v201, %v193
    %v234 = vpack.c.b16 %v202, %v194
    %v235 = vpack.c.b16 %v203, %v195
    %v236 = vpack.c.b16 %v204, %v196
    %v237 = vpack.c.b16 %v205, %v197
    %vm270 = vcmask 523264
    %v272 = vsel %vm270, %v35, 0
    %274 = vmatprep.subr.bf16.mxu0 0
    %275 = vmatpush1.bf16.msra.mxu0 0
    %276 = vmatprep.subr.bf16.mxu0 0
    %277 = vmatpush1.bf16.msra.mxu0 0
    %278 = vmatprep.subr.bf16.mxu0 0
    %279 = vmatpush1.bf16.msra.mxu0 0
    %280 = vmatprep.subr.bf16.mxu0 0
    %281 = vmatpush1.bf16.msra.mxu0 0
    %282 = vmatprep.subr.bf16.mxu0 %v231
    %283 = vmatpush1.bf16.msra.mxu0 %v230
    %284 = vmatprep.subr.bf16.mxu0 %v223
    %285 = vmatpush1.bf16.msra.mxu0 %v222
    %286 = vmatprep.subr.bf16.mxu0 %v215
    %287 = vmatpush1.bf16.msra.mxu0 %v214
    %288 = vmatprep.subr.bf16.mxu0 %v207
    %289 = vmatpush1.bf16.msra.mxu0 %v206
    %290 = vmatprep.subr.bf16.mxu0 0
    %291 = vmatpush2.bf16.msra.mxu0 0
    %292 = vmatprep.subr.bf16.mxu0 0
    %293 = vmatpush2.bf16.msra.mxu0 0
    %294 = vmatprep.subr.bf16.mxu0 0
    %295 = vmatpush2.bf16.msra.mxu0 0
    %296 = vmatprep.subr.bf16.mxu0 0
    %297 = vmatpush2.bf16.msra.mxu0 0
    %298 = vmatprep.subr.bf16.mxu0 0
    %299 = vmatpush2.bf16.msra.mxu0 0
    %300 = vmatprep.subr.bf16.mxu0 0
    %301 = vmatpush2.bf16.msra.mxu0 0
    %302 = vmatprep.subr.bf16.mxu0 0
    %303 = vmatpush2.bf16.msra.mxu0 0
    %304 = vmatprep.subr.bf16.mxu0 0
    %305 = vmatpush2.bf16.msra.mxu0 0
    %306 = vmatprep.mubr.bf16.mxu0 0
    %307 = vmatmul.mubr.bf16.gmra.mxu0 %v272
    %v308 = vpop.f32.mrf.mxu0
    %v309 = vadd.f32 %v73, %v308
    %v310 = vpop.f32.mrf.mxu0
    %v311 = vadd.f32 %v77, %v310
    %v312 = vpop.f32.mrf.mxu0
    %v313 = vpop.f32.mrf.mxu0
    %314 = vdwg.mxu0
    %315 = vmatprep.subr.bf16.mxu0 0
    %316 = vmatpush1.bf16.msra.mxu0 0
    %317 = vmatprep.subr.bf16.mxu0 0
    %318 = vmatpush1.bf16.msra.mxu0 0
    %319 = vmatprep.subr.bf16.mxu0 0
    %320 = vmatpush1.bf16.msra.mxu0 0
    %321 = vmatprep.subr.bf16.mxu0 0
    %322 = vmatpush1.bf16.msra.mxu0 0
    %323 = vmatprep.subr.bf16.mxu0 %v233
    %324 = vmatpush1.bf16.msra.mxu0 %v232
    %325 = vmatprep.subr.bf16.mxu0 %v225
    %326 = vmatpush1.bf16.msra.mxu0 %v224
    %327 = vmatprep.subr.bf16.mxu0 %v217
    %328 = vmatpush1.bf16.msra.mxu0 %v216
    %329 = vmatprep.subr.bf16.mxu0 %v209
    %330 = vmatpush1.bf16.msra.mxu0 %v208
    %331 = vmatprep.subr.bf16.mxu0 0
    %332 = vmatpush2.bf16.msra.mxu0 0
    %333 = vmatprep.subr.bf16.mxu0 0
    %334 = vmatpush2.bf16.msra.mxu0 0
    %335 = vmatprep.subr.bf16.mxu0 0
    %336 = vmatpush2.bf16.msra.mxu0 0
    %337 = vmatprep.subr.bf16.mxu0 0
    %338 = vmatpush2.bf16.msra.mxu0 0
    %339 = vmatprep.subr.bf16.mxu0 0
    %340 = vmatpush2.bf16.msra.mxu0 0
    %341 = vmatprep.subr.bf16.mxu0 0
    %342 = vmatpush2.bf16.msra.mxu0 0
    %343 = vmatprep.subr.bf16.mxu0 0
    %344 = vmatpush2.bf16.msra.mxu0 0
    %345 = vmatprep.subr.bf16.mxu0 0
    %346 = vmatpush2.bf16.msra.mxu0 0
    %347 = vmatprep.mubr.bf16.mxu0 0
    %348 = vmatmul.mubr.bf16.gmra.mxu0 %v272
    %v349 = vpop.f32.mrf.mxu0
    %v350 = vadd.f32 %v81, %v349
    %v351 = vpop.f32.mrf.mxu0
    %v352 = vadd.f32 %v85, %v351
    %v353 = vpop.f32.mrf.mxu0
    %v354 = vpop.f32.mrf.mxu0
    %355 = vdwg.mxu0
    %356 = vmatprep.subr.bf16.mxu0 0
    %357 = vmatpush1.bf16.msra.mxu0 0
    %358 = vmatprep.subr.bf16.mxu0 0
    %359 = vmatpush1.bf16.msra.mxu0 0
    %360 = vmatprep.subr.bf16.mxu0 0
    %361 = vmatpush1.bf16.msra.mxu0 0
    %362 = vmatprep.subr.bf16.mxu0 0
    %363 = vmatpush1.bf16.msra.mxu0 0
    %364 = vmatprep.subr.bf16.mxu0 %v235
    %365 = vmatpush1.bf16.msra.mxu0 %v234
    %366 = vmatprep.subr.bf16.mxu0 %v227
    %367 = vmatpush1.bf16.msra.mxu0 %v226
    %368 = vmatprep.subr.bf16.mxu0 %v219
    %369 = vmatpush1.bf16.msra.mxu0 %v218
    %370 = vmatprep.subr.bf16.mxu0 %v211
    %371 = vmatpush1.bf16.msra.mxu0 %v210
    %372 = vmatprep.subr.bf16.mxu0 0
    %373 = vmatpush2.bf16.msra.mxu0 0
    %374 = vmatprep.subr.bf16.mxu0 0
    %375 = vmatpush2.bf16.msra.mxu0 0
    %376 = vmatprep.subr.bf16.mxu0 0
    %377 = vmatpush2.bf16.msra.mxu0 0
    %378 = vmatprep.subr.bf16.mxu0 0
    %379 = vmatpush2.bf16.msra.mxu0 0
    %380 = vmatprep.subr.bf16.mxu0 0
    %381 = vmatpush2.bf16.msra.mxu0 0
    %382 = vmatprep.subr.bf16.mxu0 0
    %383 = vmatpush2.bf16.msra.mxu0 0
    %384 = vmatprep.subr.bf16.mxu0 0
    %385 = vmatpush2.bf16.msra.mxu0 0
    %386 = vmatprep.subr.bf16.mxu0 0
    %387 = vmatpush2.bf16.msra.mxu0 0
    %388 = vmatprep.mubr.bf16.mxu0 0
    %389 = vmatmul.mubr.bf16.gmra.mxu0 %v272
    %v390 = vpop.f32.mrf.mxu0
    %v391 = vadd.f32 %v89, %v390
    %v392 = vpop.f32.mrf.mxu0
    %v393 = vadd.f32 %v93, %v392
    %v394 = vpop.f32.mrf.mxu0
    %v395 = vpop.f32.mrf.mxu0
    %396 = vdwg.mxu0
    %397 = vmatprep.subr.bf16.mxu0 0
    %398 = vmatpush1.bf16.msra.mxu0 0
    %399 = vmatprep.subr.bf16.mxu0 0
    %400 = vmatpush1.bf16.msra.mxu0 0
    %401 = vmatprep.subr.bf16.mxu0 0
    %402 = vmatpush1.bf16.msra.mxu0 0
    %403 = vmatprep.subr.bf16.mxu0 0
    %404 = vmatpush1.bf16.msra.mxu0 0
    %405 = vmatprep.subr.bf16.mxu0 %v237
    %406 = vmatpush1.bf16.msra.mxu0 %v236
    %407 = vmatprep.subr.bf16.mxu0 %v229
    %408 = vmatpush1.bf16.msra.mxu0 %v228
    %409 = vmatprep.subr.bf16.mxu0 %v221
    %410 = vmatpush1.bf16.msra.mxu0 %v220
    %411 = vmatprep.subr.bf16.mxu0 %v213
    %412 = vmatpush1.bf16.msra.mxu0 %v212
    %413 = vmatprep.subr.bf16.mxu0 0
    %414 = vmatpush2.bf16.msra.mxu0 0
    %415 = vmatprep.subr.bf16.mxu0 0
    %416 = vmatpush2.bf16.msra.mxu0 0
    %417 = vmatprep.subr.bf16.mxu0 0
    %418 = vmatpush2.bf16.msra.mxu0 0
    %419 = vmatprep.subr.bf16.mxu0 0
    %420 = vmatpush2.bf16.msra.mxu0 0
    %421 = vmatprep.subr.bf16.mxu0 0
    %422 = vmatpush2.bf16.msra.mxu0 0
    %423 = vmatprep.subr.bf16.mxu0 0
    %424 = vmatpush2.bf16.msra.mxu0 0
    %425 = vmatprep.subr.bf16.mxu0 0
    %426 = vmatpush2.bf16.msra.mxu0 0
    %427 = vmatprep.subr.bf16.mxu0 0
    %428 = vmatpush2.bf16.msra.mxu0 0
    %429 = vmatprep.mubr.bf16.mxu0 0
    %430 = vmatmul.mubr.bf16.gmra.mxu0 %v272
    %v431 = vpop.f32.mrf.mxu0
    %v432 = vadd.f32 %v97, %v431
    %v433 = vpop.f32.mrf.mxu0
    %v434 = vadd.f32 %v101, %v433
    %v435 = vpop.f32.mrf.mxu0
    %v436 = vpop.f32.mrf.mxu0
    %437 = vdwg.mxu0
    %v438 = vmax.f32 %v309, 0.0
    %v439 = vmax.f32 %v311, 0.0
    %v440 = vmax.f32 %v350, 0.0
    %v441 = vmax.f32 %v352, 0.0
    %v442 = vmax.f32 %v391, 0.0
    %v443 = vmax.f32 %v393, 0.0
    %v444 = vmax.f32 %v432, 0.0
    %v445 = vmax.f32 %v434, 0.0
    %v446 = vpack.c.bf16 %v438, %v438
    %v447 = vpack.c.bf16 %v439, %v439
    %v448 = vpack.c.bf16 %v440, %v440
    %v449 = vpack.c.bf16 %v441, %v441
    %v450 = vpack.c.bf16 %v442, %v442
    %v451 = vpack.c.bf16 %v443, %v443
    %v452 = vpack.c.bf16 %v444, %v444
    %v453 = vpack.c.bf16 %v445, %v445
    %v454 = vld [vmem:[%s3] sm:$0xff]
    %v455 = vld [vmem:[%s3 + $0x8] sm:$0xff]
    %v456 = vld [vmem:[%s3 + $0x10] sm:$0xff]
    %v457 = vld [vmem:[%s3 + $0x18] sm:$0xff]
    %v458 = vld [vmem:[%s3 + $0x20] sm:$0xff]
    %v459 = vld [vmem:[%s3 + $0x28] sm:$0xff]
    %v460 = vld [vmem:[%s3 + $0x30] sm:$0xff]
    %v461 = vld [vmem:[%s3 + $0x38] sm:$0xff]
    %v462 = vld [vmem:[%s3 + $0x40] sm:$0xff]
    %v463 = vld [vmem:[%s3 + $0x48] sm:$0xff]
    %v464 = vld [vmem:[%s3 + $0x50] sm:$0xff]
    %v465 = vld [vmem:[%s3 + $0x58] sm:$0xff]
    %v466 = vld [vmem:[%s3 + $0x60] sm:$0xff]
    %v467 = vld [vmem:[%s3 + $0x68] sm:$0xff]
    %v468 = vld [vmem:[%s3 + $0x70] sm:$0xff]
    %v469 = vld [vmem:[%s3 + $0x78] sm:$0xff]
    %v470 = vld [vmem:[%s3 + $0x80] sm:$0xff]
    %v471 = vld [vmem:[%s3 + $0x88] sm:$0xff]
    %v472 = vld [vmem:[%s3 + $0x90] sm:$0xff]
    %v473 = vld [vmem:[%s3 + $0x98] sm:$0xff]
    %v474 = vld [vmem:[%s3 + $0xa0] sm:$0xff]
    %v475 = vld [vmem:[%s3 + $0xa8] sm:$0xff]
    %v476 = vld [vmem:[%s3 + $0xb0] sm:$0xff]
    %v477 = vld [vmem:[%s3 + $0xb8] sm:$0xff]
    %v478 = vld [vmem:[%s3 + $0xc0] sm:$0xff]
    %v479 = vld [vmem:[%s3 + $0xc8] sm:$0xff]
    %v480 = vld [vmem:[%s3 + $0xd0] sm:$0xff]
    %v481 = vld [vmem:[%s3 + $0xd8] sm:$0xff]
    %v482 = vld [vmem:[%s3 + $0xe0] sm:$0xff]
    %v483 = vld [vmem:[%s3 + $0xe8] sm:$0xff]
    %v484 = vld [vmem:[%s3 + $0xf0] sm:$0xff]
    %v485 = vld [vmem:[%s3 + $0xf8] sm:$0xff]
    %v486 = vld [vmem:[%s3 + $0x100] sm:$0xff]
    %v487 = vld [vmem:[%s3 + $0x108] sm:$0xff]
    %v488 = vld [vmem:[%s3 + $0x110] sm:$0xff]
    %v489 = vld [vmem:[%s3 + $0x118] sm:$0xff]
    %v490 = vld [vmem:[%s3 + $0x120] sm:$0xff]
    %v491 = vld [vmem:[%s3 + $0x128] sm:$0xff]
    %v492 = vld [vmem:[%s3 + $0x130] sm:$0xff]
    %v493 = vld [vmem:[%s3 + $0x138] sm:$0xff]
    %v494 = vld [vmem:[%s3 + $0x140] sm:$0xff]
    %v495 = vld [vmem:[%s3 + $0x148] sm:$0xff]
    %v496 = vld [vmem:[%s3 + $0x150] sm:$0xff]
    %v497 = vld [vmem:[%s3 + $0x158] sm:$0xff]
    %v498 = vld [vmem:[%s3 + $0x160] sm:$0xff]
    %v499 = vld [vmem:[%s3 + $0x168] sm:$0xff]
    %v500 = vld [vmem:[%s3 + $0x170] sm:$0xff]
    %v501 = vld [vmem:[%s3 + $0x178] sm:$0xff]
    %v502 = vld [vmem:[%s3 + $0x180] sm:$0xff]
    %v503 = vld [vmem:[%s3 + $0x188] sm:$0xff]
    %v504 = vld [vmem:[%s3 + $0x190] sm:$0xff]
    %v505 = vld [vmem:[%s3 + $0x198] sm:$0xff]
    %v506 = vld [vmem:[%s3 + $0x1a0] sm:$0xff]
    %v507 = vld [vmem:[%s3 + $0x1a8] sm:$0xff]
    %v508 = vld [vmem:[%s3 + $0x1b0] sm:$0xff]
    %v509 = vld [vmem:[%s3 + $0x1b8] sm:$0xff]
    %v510 = vld [vmem:[%s3 + $0x1c0] sm:$0xff]
    %v511 = vld [vmem:[%s3 + $0x1c8] sm:$0xff]
    %v512 = vld [vmem:[%s3 + $0x1d0] sm:$0xff]
    %v513 = vld [vmem:[%s3 + $0x1d8] sm:$0xff]
    %v514 = vld [vmem:[%s3 + $0x1e0] sm:$0xff]
    %v515 = vld [vmem:[%s3 + $0x1e8] sm:$0xff]
    %v516 = vld [vmem:[%s3 + $0x1f0] sm:$0xff]
    %v517 = vld [vmem:[%s3 + $0x1f8] sm:$0xff]
    %v518 = vld [vmem:[%s3 + $0x200] sm:$0xff]
    %v519 = vld [vmem:[%s3 + $0x208] sm:$0xff]
    %v520 = vld [vmem:[%s3 + $0x210] sm:$0xff]
    %v521 = vld [vmem:[%s3 + $0x218] sm:$0xff]
    %v522 = vld [vmem:[%s3 + $0x220] sm:$0xff]
    %v523 = vld [vmem:[%s3 + $0x228] sm:$0xff]
    %v524 = vld [vmem:[%s3 + $0x230] sm:$0xff]
    %v525 = vld [vmem:[%s3 + $0x238] sm:$0xff]
    %v526 = vld [vmem:[%s3 + $0x240] sm:$0xff]
    %v527 = vld [vmem:[%s3 + $0x248] sm:$0xff]
    %v528 = vld [vmem:[%s3 + $0x250] sm:$0xff]
    %v529 = vld [vmem:[%s3 + $0x258] sm:$0xff]
    %v530 = vld [vmem:[%s3 + $0x260] sm:$0xff]
    %v531 = vld [vmem:[%s3 + $0x268] sm:$0xff]
    %v532 = vld [vmem:[%s3 + $0x270] sm:$0xff]
    %v533 = vld [vmem:[%s3 + $0x278] sm:$0xff]
    %v534 = vld [vmem:[%s3 + $0x280] sm:$0xff]
    %v535 = vld [vmem:[%s3 + $0x288] sm:$0xff]
    %v536 = vld [vmem:[%s3 + $0x290] sm:$0xff]
    %v537 = vld [vmem:[%s3 + $0x298] sm:$0xff]
    %v538 = vld [vmem:[%s3 + $0x2a0] sm:$0xff]
    %v539 = vld [vmem:[%s3 + $0x2a8] sm:$0xff]
    %v540 = vld [vmem:[%s3 + $0x2b0] sm:$0xff]
    %v541 = vld [vmem:[%s3 + $0x2b8] sm:$0xff]
    %v542 = vld [vmem:[%s3 + $0x2c0] sm:$0xff]
    %v543 = vld [vmem:[%s3 + $0x2c8] sm:$0xff]
    %v544 = vld [vmem:[%s3 + $0x2d0] sm:$0xff]
    %v545 = vld [vmem:[%s3 + $0x2d8] sm:$0xff]
    %v546 = vld [vmem:[%s3 + $0x2e0] sm:$0xff]
    %v547 = vld [vmem:[%s3 + $0x2e8] sm:$0xff]
    %v548 = vld [vmem:[%s3 + $0x2f0] sm:$0xff]
    %v549 = vld [vmem:[%s3 + $0x2f8] sm:$0xff]
    %v550 = vld [vmem:[%s3 + $0x300] sm:$0xff]
    %v551 = vld [vmem:[%s3 + $0x308] sm:$0xff]
    %v552 = vld [vmem:[%s3 + $0x310] sm:$0xff]
    %v553 = vld [vmem:[%s3 + $0x318] sm:$0xff]
    %v554 = vld [vmem:[%s3 + $0x320] sm:$0xff]
    %v555 = vld [vmem:[%s3 + $0x328] sm:$0xff]
    %v556 = vld [vmem:[%s3 + $0x330] sm:$0xff]
    %v557 = vld [vmem:[%s3 + $0x338] sm:$0xff]
    %v558 = vld [vmem:[%s3 + $0x340] sm:$0xff]
    %v559 = vld [vmem:[%s3 + $0x348] sm:$0xff]
    %v560 = vld [vmem:[%s3 + $0x350] sm:$0xff]
    %v561 = vld [vmem:[%s3 + $0x358] sm:$0xff]
    %v562 = vld [vmem:[%s3 + $0x360] sm:$0xff]
    %v563 = vld [vmem:[%s3 + $0x368] sm:$0xff]
    %v564 = vld [vmem:[%s3 + $0x370] sm:$0xff]
    %v565 = vld [vmem:[%s3 + $0x378] sm:$0xff]
    %v566 = vld [vmem:[%s3 + $0x380] sm:$0xff]
    %v567 = vld [vmem:[%s3 + $0x388] sm:$0xff]
    %v568 = vld [vmem:[%s3 + $0x390] sm:$0xff]
    %v569 = vld [vmem:[%s3 + $0x398] sm:$0xff]
    %v570 = vld [vmem:[%s3 + $0x3a0] sm:$0xff]
    %v571 = vld [vmem:[%s3 + $0x3a8] sm:$0xff]
    %v572 = vld [vmem:[%s3 + $0x3b0] sm:$0xff]
    %v573 = vld [vmem:[%s3 + $0x3b8] sm:$0xff]
    %v574 = vld [vmem:[%s3 + $0x3c0] sm:$0xff]
    %v575 = vld [vmem:[%s3 + $0x3c8] sm:$0xff]
    %v576 = vld [vmem:[%s3 + $0x3d0] sm:$0xff]
    %v577 = vld [vmem:[%s3 + $0x3d8] sm:$0xff]
    %v578 = vld [vmem:[%s3 + $0x3e0] sm:$0xff]
    %v579 = vld [vmem:[%s3 + $0x3e8] sm:$0xff]
    %v580 = vld [vmem:[%s3 + $0x3f0] sm:$0xff]
    %v581 = vld [vmem:[%s3 + $0x3f8] sm:$0xff]
    %v582 = vld [vmem:[%s3 + $0x400] sm:$0xff]
    %v583 = vld [vmem:[%s3 + $0x408] sm:$0xff]
    %v584 = vld [vmem:[%s3 + $0x410] sm:$0xff]
    %v585 = vld [vmem:[%s3 + $0x418] sm:$0xff]
    %v586 = vld [vmem:[%s3 + $0x420] sm:$0xff]
    %v587 = vld [vmem:[%s3 + $0x428] sm:$0xff]
    %v588 = vld [vmem:[%s3 + $0x430] sm:$0xff]
    %v589 = vld [vmem:[%s3 + $0x438] sm:$0xff]
    %v590 = vld [vmem:[%s3 + $0x440] sm:$0xff]
    %v591 = vld [vmem:[%s3 + $0x448] sm:$0xff]
    %v592 = vld [vmem:[%s3 + $0x450] sm:$0xff]
    %v593 = vld [vmem:[%s3 + $0x458] sm:$0xff]
    %v594 = vld [vmem:[%s3 + $0x460] sm:$0xff]
    %v595 = vld [vmem:[%s3 + $0x468] sm:$0xff]
    %v596 = vld [vmem:[%s3 + $0x470] sm:$0xff]
    %v597 = vld [vmem:[%s3 + $0x478] sm:$0xff]
    %v598 = vld [vmem:[%s3 + $0x480] sm:$0xff]
    %v599 = vld [vmem:[%s3 + $0x488] sm:$0xff]
    %v600 = vld [vmem:[%s3 + $0x490] sm:$0xff]
    %v601 = vld [vmem:[%s3 + $0x498] sm:$0xff]
    %v602 = vld [vmem:[%s3 + $0x4a0] sm:$0xff]
    %v603 = vld [vmem:[%s3 + $0x4a8] sm:$0xff]
    %v604 = vld [vmem:[%s3 + $0x4b0] sm:$0xff]
    %v605 = vld [vmem:[%s3 + $0x4b8] sm:$0xff]
    %v606 = vld [vmem:[%s3 + $0x4c0] sm:$0xff]
    %v607 = vld [vmem:[%s3 + $0x4c8] sm:$0xff]
    %v608 = vld [vmem:[%s3 + $0x4d0] sm:$0xff]
    %v609 = vld [vmem:[%s3 + $0x4d8] sm:$0xff]
    %v610 = vld [vmem:[%s3 + $0x4e0] sm:$0xff]
    %v611 = vld [vmem:[%s3 + $0x4e8] sm:$0xff]
    %v612 = vld [vmem:[%s3 + $0x4f0] sm:$0xff]
    %v613 = vld [vmem:[%s3 + $0x4f8] sm:$0xff]
    %v614 = vld [vmem:[%s3 + $0x500] sm:$0xff]
    %v615 = vld [vmem:[%s3 + $0x508] sm:$0xff]
    %v616 = vld [vmem:[%s3 + $0x510] sm:$0xff]
    %v617 = vld [vmem:[%s3 + $0x518] sm:$0xff]
    %v618 = vld [vmem:[%s3 + $0x520] sm:$0xff]
    %v619 = vld [vmem:[%s3 + $0x528] sm:$0xff]
    %v620 = vld [vmem:[%s3 + $0x530] sm:$0xff]
    %v621 = vld [vmem:[%s3 + $0x538] sm:$0xff]
    %v622 = vld [vmem:[%s3 + $0x540] sm:$0xff]
    %v623 = vld [vmem:[%s3 + $0x548] sm:$0xff]
    %v624 = vld [vmem:[%s3 + $0x550] sm:$0xff]
    %v625 = vld [vmem:[%s3 + $0x558] sm:$0xff]
    %v626 = vld [vmem:[%s3 + $0x560] sm:$0xff]
    %v627 = vld [vmem:[%s3 + $0x568] sm:$0xff]
    %v628 = vld [vmem:[%s3 + $0x570] sm:$0xff]
    %v629 = vld [vmem:[%s3 + $0x578] sm:$0xff]
    %v630 = vld [vmem:[%s3 + $0x580] sm:$0xff]
    %v631 = vld [vmem:[%s3 + $0x588] sm:$0xff]
    %v632 = vld [vmem:[%s3 + $0x590] sm:$0xff]
    %v633 = vld [vmem:[%s3 + $0x598] sm:$0xff]
    %v634 = vld [vmem:[%s3 + $0x5a0] sm:$0xff]
    %v635 = vld [vmem:[%s3 + $0x5a8] sm:$0xff]
    %v636 = vld [vmem:[%s3 + $0x5b0] sm:$0xff]
    %v637 = vld [vmem:[%s3 + $0x5b8] sm:$0xff]
    %v638 = vld [vmem:[%s3 + $0x5c0] sm:$0xff]
    %v639 = vld [vmem:[%s3 + $0x5c8] sm:$0xff]
    %v640 = vld [vmem:[%s3 + $0x5d0] sm:$0xff]
    %v641 = vld [vmem:[%s3 + $0x5d8] sm:$0xff]
    %v642 = vld [vmem:[%s3 + $0x5e0] sm:$0xff]
    %v643 = vld [vmem:[%s3 + $0x5e8] sm:$0xff]
    %v644 = vld [vmem:[%s3 + $0x5f0] sm:$0xff]
    %v645 = vld [vmem:[%s3 + $0x5f8] sm:$0xff]
    %v646 = vld [vmem:[%s3 + $0x600] sm:$0xff]
    %v647 = vld [vmem:[%s3 + $0x608] sm:$0xff]
    %v648 = vld [vmem:[%s3 + $0x610] sm:$0xff]
    %v649 = vld [vmem:[%s3 + $0x618] sm:$0xff]
    %v650 = vld [vmem:[%s3 + $0x620] sm:$0xff]
    %v651 = vld [vmem:[%s3 + $0x628] sm:$0xff]
    %v652 = vld [vmem:[%s3 + $0x630] sm:$0xff]
    %v653 = vld [vmem:[%s3 + $0x638] sm:$0xff]
    %v654 = vld [vmem:[%s3 + $0x640] sm:$0xff]
    %v655 = vld [vmem:[%s3 + $0x648] sm:$0xff]
    %v656 = vld [vmem:[%s3 + $0x650] sm:$0xff]
    %v657 = vld [vmem:[%s3 + $0x658] sm:$0xff]
    %v658 = vld [vmem:[%s3 + $0x660] sm:$0xff]
    %v659 = vld [vmem:[%s3 + $0x668] sm:$0xff]
    %v660 = vld [vmem:[%s3 + $0x670] sm:$0xff]
    %v661 = vld [vmem:[%s3 + $0x678] sm:$0xff]
    %v662 = vld [vmem:[%s3 + $0x680] sm:$0xff]
    %v663 = vld [vmem:[%s3 + $0x688] sm:$0xff]
    %v664 = vld [vmem:[%s3 + $0x690] sm:$0xff]
    %v665 = vld [vmem:[%s3 + $0x698] sm:$0xff]
    %v666 = vld [vmem:[%s3 + $0x6a0] sm:$0xff]
    %v667 = vld [vmem:[%s3 + $0x6a8] sm:$0xff]
    %v668 = vld [vmem:[%s3 + $0x6b0] sm:$0xff]
    %v669 = vld [vmem:[%s3 + $0x6b8] sm:$0xff]
    %v670 = vld [vmem:[%s3 + $0x6c0] sm:$0xff]
    %v671 = vld [vmem:[%s3 + $0x6c8] sm:$0xff]
    %v672 = vld [vmem:[%s3 + $0x6d0] sm:$0xff]
    %v673 = vld [vmem:[%s3 + $0x6d8] sm:$0xff]
    %v674 = vld [vmem:[%s3 + $0x6e0] sm:$0xff]
    %v675 = vld [vmem:[%s3 + $0x6e8] sm:$0xff]
    %v676 = vld [vmem:[%s3 + $0x6f0] sm:$0xff]
    %v677 = vld [vmem:[%s3 + $0x6f8] sm:$0xff]
    %v678 = vld [vmem:[%s3 + $0x700] sm:$0xff]
    %v679 = vld [vmem:[%s3 + $0x708] sm:$0xff]
    %v680 = vld [vmem:[%s3 + $0x710] sm:$0xff]
    %v681 = vld [vmem:[%s3 + $0x718] sm:$0xff]
    %v682 = vld [vmem:[%s3 + $0x720] sm:$0xff]
    %v683 = vld [vmem:[%s3 + $0x728] sm:$0xff]
    %v684 = vld [vmem:[%s3 + $0x730] sm:$0xff]
    %v685 = vld [vmem:[%s3 + $0x738] sm:$0xff]
    %v686 = vld [vmem:[%s3 + $0x740] sm:$0xff]
    %v687 = vld [vmem:[%s3 + $0x748] sm:$0xff]
    %v688 = vld [vmem:[%s3 + $0x750] sm:$0xff]
    %v689 = vld [vmem:[%s3 + $0x758] sm:$0xff]
    %v690 = vld [vmem:[%s3 + $0x760] sm:$0xff]
    %v691 = vld [vmem:[%s3 + $0x768] sm:$0xff]
    %v692 = vld [vmem:[%s3 + $0x770] sm:$0xff]
    %v693 = vld [vmem:[%s3 + $0x778] sm:$0xff]
    %v694 = vld [vmem:[%s3 + $0x780] sm:$0xff]
    %v695 = vld [vmem:[%s3 + $0x788] sm:$0xff]
    %v696 = vld [vmem:[%s3 + $0x790] sm:$0xff]
    %v697 = vld [vmem:[%s3 + $0x798] sm:$0xff]
    %v698 = vld [vmem:[%s3 + $0x7a0] sm:$0xff]
    %v699 = vld [vmem:[%s3 + $0x7a8] sm:$0xff]
    %v700 = vld [vmem:[%s3 + $0x7b0] sm:$0xff]
    %v701 = vld [vmem:[%s3 + $0x7b8] sm:$0xff]
    %v702 = vld [vmem:[%s3 + $0x7c0] sm:$0xff]
    %v703 = vld [vmem:[%s3 + $0x7c8] sm:$0xff]
    %v704 = vld [vmem:[%s3 + $0x7d0] sm:$0xff]
    %v705 = vld [vmem:[%s3 + $0x7d8] sm:$0xff]
    %v706 = vld [vmem:[%s3 + $0x7e0] sm:$0xff]
    %v707 = vld [vmem:[%s3 + $0x7e8] sm:$0xff]
    %v708 = vld [vmem:[%s3 + $0x7f0] sm:$0xff]
    %v709 = vld [vmem:[%s3 + $0x7f8] sm:$0xff]
    %v710 = vld [vmem:[%s3 + $0x800] sm:$0xff]
    %v711 = vld [vmem:[%s3 + $0x808] sm:$0xff]
    %v712 = vld [vmem:[%s3 + $0x810] sm:$0xff]
    %v713 = vld [vmem:[%s3 + $0x818] sm:$0xff]
    %v714 = vld [vmem:[%s3 + $0x820] sm:$0xff]
    %v715 = vld [vmem:[%s3 + $0x828] sm:$0xff]
    %v716 = vld [vmem:[%s3 + $0x830] sm:$0xff]
    %v717 = vld [vmem:[%s3 + $0x838] sm:$0xff]
    %v718 = vld [vmem:[%s3 + $0x840] sm:$0xff]
    %v719 = vld [vmem:[%s3 + $0x848] sm:$0xff]
    %v720 = vld [vmem:[%s3 + $0x850] sm:$0xff]
    %v721 = vld [vmem:[%s3 + $0x858] sm:$0xff]
    %v722 = vld [vmem:[%s3 + $0x860] sm:$0xff]
    %v723 = vld [vmem:[%s3 + $0x868] sm:$0xff]
    %v724 = vld [vmem:[%s3 + $0x870] sm:$0xff]
    %v725 = vld [vmem:[%s3 + $0x878] sm:$0xff]
    %v726 = vld [vmem:[%s3 + $0x880] sm:$0xff]
    %v727 = vld [vmem:[%s3 + $0x888] sm:$0xff]
    %v728 = vld [vmem:[%s3 + $0x890] sm:$0xff]
    %v729 = vld [vmem:[%s3 + $0x898] sm:$0xff]
    %v730 = vld [vmem:[%s3 + $0x8a0] sm:$0xff]
    %v731 = vld [vmem:[%s3 + $0x8a8] sm:$0xff]
    %v732 = vld [vmem:[%s3 + $0x8b0] sm:$0xff]
    %v733 = vld [vmem:[%s3 + $0x8b8] sm:$0xff]
    %v734 = vld [vmem:[%s3 + $0x8c0] sm:$0xff]
    %v735 = vld [vmem:[%s3 + $0x8c8] sm:$0xff]
    %v736 = vld [vmem:[%s3 + $0x8d0] sm:$0xff]
    %v737 = vld [vmem:[%s3 + $0x8d8] sm:$0xff]
    %v738 = vld [vmem:[%s3 + $0x8e0] sm:$0xff]
    %v739 = vld [vmem:[%s3 + $0x8e8] sm:$0xff]
    %v740 = vld [vmem:[%s3 + $0x8f0] sm:$0xff]
    %v741 = vld [vmem:[%s3 + $0x8f8] sm:$0xff]
    %v742 = vld [vmem:[%s3 + $0x900] sm:$0xff]
    %v743 = vld [vmem:[%s3 + $0x908] sm:$0xff]
    %v744 = vld [vmem:[%s3 + $0x910] sm:$0xff]
    %v745 = vld [vmem:[%s3 + $0x918] sm:$0xff]
    %v746 = vld [vmem:[%s3 + $0x920] sm:$0xff]
    %v747 = vld [vmem:[%s3 + $0x928] sm:$0xff]
    %v748 = vld [vmem:[%s3 + $0x930] sm:$0xff]
    %v749 = vld [vmem:[%s3 + $0x938] sm:$0xff]
    %v750 = vld [vmem:[%s3 + $0x940] sm:$0xff]
    %v751 = vld [vmem:[%s3 + $0x948] sm:$0xff]
    %v752 = vld [vmem:[%s3 + $0x950] sm:$0xff]
    %v753 = vld [vmem:[%s3 + $0x958] sm:$0xff]
    %v754 = vld [vmem:[%s3 + $0x960] sm:$0xff]
    %v755 = vld [vmem:[%s3 + $0x968] sm:$0xff]
    %v756 = vld [vmem:[%s3 + $0x970] sm:$0xff]
    %v757 = vld [vmem:[%s3 + $0x978] sm:$0xff]
    %v758 = vld [vmem:[%s3 + $0x980] sm:$0xff]
    %v759 = vld [vmem:[%s3 + $0x988] sm:$0xff]
    %v760 = vld [vmem:[%s3 + $0x990] sm:$0xff]
    %v761 = vld [vmem:[%s3 + $0x998] sm:$0xff]
    %v762 = vld [vmem:[%s3 + $0x9a0] sm:$0xff]
    %v763 = vld [vmem:[%s3 + $0x9a8] sm:$0xff]
    %v764 = vld [vmem:[%s3 + $0x9b0] sm:$0xff]
    %v765 = vld [vmem:[%s3 + $0x9b8] sm:$0xff]
    %v766 = vld [vmem:[%s3 + $0x9c0] sm:$0xff]
    %v767 = vld [vmem:[%s3 + $0x9c8] sm:$0xff]
    %v768 = vld [vmem:[%s3 + $0x9d0] sm:$0xff]
    %v769 = vld [vmem:[%s3 + $0x9d8] sm:$0xff]
    %v770 = vld [vmem:[%s3 + $0x9e0] sm:$0xff]
    %v771 = vld [vmem:[%s3 + $0x9e8] sm:$0xff]
    %v772 = vld [vmem:[%s3 + $0x9f0] sm:$0xff]
    %v773 = vld [vmem:[%s3 + $0x9f8] sm:$0xff]
    %v774 = vld [vmem:[%s3 + $0xa00] sm:$0xff]
    %v775 = vld [vmem:[%s3 + $0xa08] sm:$0xff]
    %v776 = vld [vmem:[%s3 + $0xa10] sm:$0xff]
    %v777 = vld [vmem:[%s3 + $0xa18] sm:$0xff]
    %v778 = vld [vmem:[%s3 + $0xa20] sm:$0xff]
    %v779 = vld [vmem:[%s3 + $0xa28] sm:$0xff]
    %v780 = vld [vmem:[%s3 + $0xa30] sm:$0xff]
    %v781 = vld [vmem:[%s3 + $0xa38] sm:$0xff]
    %v782 = vld [vmem:[%s3 + $0xa40] sm:$0xff]
    %v783 = vld [vmem:[%s3 + $0xa48] sm:$0xff]
    %v784 = vld [vmem:[%s3 + $0xa50] sm:$0xff]
    %v785 = vld [vmem:[%s3 + $0xa58] sm:$0xff]
    %v786 = vld [vmem:[%s3 + $0xa60] sm:$0xff]
    %v787 = vld [vmem:[%s3 + $0xa68] sm:$0xff]
    %v788 = vld [vmem:[%s3 + $0xa70] sm:$0xff]
    %v789 = vld [vmem:[%s3 + $0xa78] sm:$0xff]
    %v790 = vld [vmem:[%s3 + $0xa80] sm:$0xff]
    %v791 = vld [vmem:[%s3 + $0xa88] sm:$0xff]
    %v792 = vld [vmem:[%s3 + $0xa90] sm:$0xff]
    %v793 = vld [vmem:[%s3 + $0xa98] sm:$0xff]
    %v794 = vld [vmem:[%s3 + $0xaa0] sm:$0xff]
    %v795 = vld [vmem:[%s3 + $0xaa8] sm:$0xff]
    %v796 = vld [vmem:[%s3 + $0xab0] sm:$0xff]
    %v797 = vld [vmem:[%s3 + $0xab8] sm:$0xff]
    %v798 = vld [vmem:[%s3 + $0xac0] sm:$0xff]
    %v799 = vld [vmem:[%s3 + $0xac8] sm:$0xff]
    %v800 = vld [vmem:[%s3 + $0xad0] sm:$0xff]
    %v801 = vld [vmem:[%s3 + $0xad8] sm:$0xff]
    %v802 = vld [vmem:[%s3 + $0xae0] sm:$0xff]
    %v803 = vld [vmem:[%s3 + $0xae8] sm:$0xff]
    %v804 = vld [vmem:[%s3 + $0xaf0] sm:$0xff]
    %v805 = vld [vmem:[%s3 + $0xaf8] sm:$0xff]
    %v806 = vld [vmem:[%s3 + $0xb00] sm:$0xff]
    %v807 = vld [vmem:[%s3 + $0xb08] sm:$0xff]
    %v808 = vld [vmem:[%s3 + $0xb10] sm:$0xff]
    %v809 = vld [vmem:[%s3 + $0xb18] sm:$0xff]
    %v810 = vld [vmem:[%s3 + $0xb20] sm:$0xff]
    %v811 = vld [vmem:[%s3 + $0xb28] sm:$0xff]
    %v812 = vld [vmem:[%s3 + $0xb30] sm:$0xff]
    %v813 = vld [vmem:[%s3 + $0xb38] sm:$0xff]
    %v814 = vld [vmem:[%s3 + $0xb40] sm:$0xff]
    %v815 = vld [vmem:[%s3 + $0xb48] sm:$0xff]
    %v816 = vld [vmem:[%s3 + $0xb50] sm:$0xff]
    %v817 = vld [vmem:[%s3 + $0xb58] sm:$0xff]
    %v818 = vld [vmem:[%s3 + $0xb60] sm:$0xff]
    %v819 = vld [vmem:[%s3 + $0xb68] sm:$0xff]
    %v820 = vld [vmem:[%s3 + $0xb70] sm:$0xff]
    %v821 = vld [vmem:[%s3 + $0xb78] sm:$0xff]
    %v822 = vld [vmem:[%s3 + $0xb80] sm:$0xff]
    %v823 = vld [vmem:[%s3 + $0xb88] sm:$0xff]
    %v824 = vld [vmem:[%s3 + $0xb90] sm:$0xff]
    %v825 = vld [vmem:[%s3 + $0xb98] sm:$0xff]
    %v826 = vld [vmem:[%s3 + $0xba0] sm:$0xff]
    %v827 = vld [vmem:[%s3 + $0xba8] sm:$0xff]
    %v828 = vld [vmem:[%s3 + $0xbb0] sm:$0xff]
    %v829 = vld [vmem:[%s3 + $0xbb8] sm:$0xff]
    %v830 = vld [vmem:[%s3 + $0xbc0] sm:$0xff]
    %v831 = vld [vmem:[%s3 + $0xbc8] sm:$0xff]
    %v832 = vld [vmem:[%s3 + $0xbd0] sm:$0xff]
    %v833 = vld [vmem:[%s3 + $0xbd8] sm:$0xff]
    %v834 = vld [vmem:[%s3 + $0xbe0] sm:$0xff]
    %v835 = vld [vmem:[%s3 + $0xbe8] sm:$0xff]
    %v836 = vld [vmem:[%s3 + $0xbf0] sm:$0xff]
    %v837 = vld [vmem:[%s3 + $0xbf8] sm:$0xff]
    %v838 = vld [vmem:[%s3 + $0xc00] sm:$0xff]
    %v839 = vld [vmem:[%s3 + $0xc08] sm:$0xff]
    %v840 = vld [vmem:[%s3 + $0xc10] sm:$0xff]
    %v841 = vld [vmem:[%s3 + $0xc18] sm:$0xff]
    %v842 = vld [vmem:[%s3 + $0xc20] sm:$0xff]
    %v843 = vld [vmem:[%s3 + $0xc28] sm:$0xff]
    %v844 = vld [vmem:[%s3 + $0xc30] sm:$0xff]
    %v845 = vld [vmem:[%s3 + $0xc38] sm:$0xff]
    %v846 = vld [vmem:[%s3 + $0xc40] sm:$0xff]
    %v847 = vld [vmem:[%s3 + $0xc48] sm:$0xff]
    %v848 = vld [vmem:[%s3 + $0xc50] sm:$0xff]
    %v849 = vld [vmem:[%s3 + $0xc58] sm:$0xff]
    %v850 = vld [vmem:[%s3 + $0xc60] sm:$0xff]
    %v851 = vld [vmem:[%s3 + $0xc68] sm:$0xff]
    %v852 = vld [vmem:[%s3 + $0xc70] sm:$0xff]
    %v853 = vld [vmem:[%s3 + $0xc78] sm:$0xff]
    %v854 = vld [vmem:[%s3 + $0xc80] sm:$0xff]
    %v855 = vld [vmem:[%s3 + $0xc88] sm:$0xff]
    %v856 = vld [vmem:[%s3 + $0xc90] sm:$0xff]
    %v857 = vld [vmem:[%s3 + $0xc98] sm:$0xff]
    %v858 = vld [vmem:[%s3 + $0xca0] sm:$0xff]
    %v859 = vld [vmem:[%s3 + $0xca8] sm:$0xff]
    %v860 = vld [vmem:[%s3 + $0xcb0] sm:$0xff]
    %v861 = vld [vmem:[%s3 + $0xcb8] sm:$0xff]
    %v862 = vld [vmem:[%s3 + $0xcc0] sm:$0xff]
    %v863 = vld [vmem:[%s3 + $0xcc8] sm:$0xff]
    %v864 = vld [vmem:[%s3 + $0xcd0] sm:$0xff]
    %v865 = vld [vmem:[%s3 + $0xcd8] sm:$0xff]
    %v866 = vld [vmem:[%s3 + $0xce0] sm:$0xff]
    %v867 = vld [vmem:[%s3 + $0xce8] sm:$0xff]
    %v868 = vld [vmem:[%s3 + $0xcf0] sm:$0xff]
    %v869 = vld [vmem:[%s3 + $0xcf8] sm:$0xff]
    %v870 = vld [vmem:[%s3 + $0xd00] sm:$0xff]
    %v871 = vld [vmem:[%s3 + $0xd08] sm:$0xff]
    %v872 = vld [vmem:[%s3 + $0xd10] sm:$0xff]
    %v873 = vld [vmem:[%s3 + $0xd18] sm:$0xff]
    %v874 = vld [vmem:[%s3 + $0xd20] sm:$0xff]
    %v875 = vld [vmem:[%s3 + $0xd28] sm:$0xff]
    %v876 = vld [vmem:[%s3 + $0xd30] sm:$0xff]
    %v877 = vld [vmem:[%s3 + $0xd38] sm:$0xff]
    %v878 = vld [vmem:[%s3 + $0xd40] sm:$0xff]
    %v879 = vld [vmem:[%s3 + $0xd48] sm:$0xff]
    %v880 = vld [vmem:[%s3 + $0xd50] sm:$0xff]
    %v881 = vld [vmem:[%s3 + $0xd58] sm:$0xff]
    %v882 = vld [vmem:[%s3 + $0xd60] sm:$0xff]
    %v883 = vld [vmem:[%s3 + $0xd68] sm:$0xff]
    %v884 = vld [vmem:[%s3 + $0xd70] sm:$0xff]
    %v885 = vld [vmem:[%s3 + $0xd78] sm:$0xff]
    %v886 = vld [vmem:[%s3 + $0xd80] sm:$0xff]
    %v887 = vld [vmem:[%s3 + $0xd88] sm:$0xff]
    %v888 = vld [vmem:[%s3 + $0xd90] sm:$0xff]
    %v889 = vld [vmem:[%s3 + $0xd98] sm:$0xff]
    %v890 = vld [vmem:[%s3 + $0xda0] sm:$0xff]
    %v891 = vld [vmem:[%s3 + $0xda8] sm:$0xff]
    %v892 = vld [vmem:[%s3 + $0xdb0] sm:$0xff]
    %v893 = vld [vmem:[%s3 + $0xdb8] sm:$0xff]
    %v894 = vld [vmem:[%s3 + $0xdc0] sm:$0xff]
    %v895 = vld [vmem:[%s3 + $0xdc8] sm:$0xff]
    %v896 = vld [vmem:[%s3 + $0xdd0] sm:$0xff]
    %v897 = vld [vmem:[%s3 + $0xdd8] sm:$0xff]
    %v898 = vld [vmem:[%s3 + $0xde0] sm:$0xff]
    %v899 = vld [vmem:[%s3 + $0xde8] sm:$0xff]
    %v900 = vld [vmem:[%s3 + $0xdf0] sm:$0xff]
    %v901 = vld [vmem:[%s3 + $0xdf8] sm:$0xff]
    %v902 = vld [vmem:[%s3 + $0xe00] sm:$0xff]
    %v903 = vld [vmem:[%s3 + $0xe08] sm:$0xff]
    %v904 = vld [vmem:[%s3 + $0xe10] sm:$0xff]
    %v905 = vld [vmem:[%s3 + $0xe18] sm:$0xff]
    %v906 = vld [vmem:[%s3 + $0xe20] sm:$0xff]
    %v907 = vld [vmem:[%s3 + $0xe28] sm:$0xff]
    %v908 = vld [vmem:[%s3 + $0xe30] sm:$0xff]
    %v909 = vld [vmem:[%s3 + $0xe38] sm:$0xff]
    %v910 = vld [vmem:[%s3 + $0xe40] sm:$0xff]
    %v911 = vld [vmem:[%s3 + $0xe48] sm:$0xff]
    %v912 = vld [vmem:[%s3 + $0xe50] sm:$0xff]
    %v913 = vld [vmem:[%s3 + $0xe58] sm:$0xff]
    %v914 = vld [vmem:[%s3 + $0xe60] sm:$0xff]
    %v915 = vld [vmem:[%s3 + $0xe68] sm:$0xff]
    %v916 = vld [vmem:[%s3 + $0xe70] sm:$0xff]
    %v917 = vld [vmem:[%s3 + $0xe78] sm:$0xff]
    %v918 = vld [vmem:[%s3 + $0xe80] sm:$0xff]
    %v919 = vld [vmem:[%s3 + $0xe88] sm:$0xff]
    %v920 = vld [vmem:[%s3 + $0xe90] sm:$0xff]
    %v921 = vld [vmem:[%s3 + $0xe98] sm:$0xff]
    %v922 = vld [vmem:[%s3 + $0xea0] sm:$0xff]
    %v923 = vld [vmem:[%s3 + $0xea8] sm:$0xff]
    %v924 = vld [vmem:[%s3 + $0xeb0] sm:$0xff]
    %v925 = vld [vmem:[%s3 + $0xeb8] sm:$0xff]
    %v926 = vld [vmem:[%s3 + $0xec0] sm:$0xff]
    %v927 = vld [vmem:[%s3 + $0xec8] sm:$0xff]
    %v928 = vld [vmem:[%s3 + $0xed0] sm:$0xff]
    %v929 = vld [vmem:[%s3 + $0xed8] sm:$0xff]
    %v930 = vld [vmem:[%s3 + $0xee0] sm:$0xff]
    %v931 = vld [vmem:[%s3 + $0xee8] sm:$0xff]
    %v932 = vld [vmem:[%s3 + $0xef0] sm:$0xff]
    %v933 = vld [vmem:[%s3 + $0xef8] sm:$0xff]
    %v934 = vld [vmem:[%s3 + $0xf00] sm:$0xff]
    %v935 = vld [vmem:[%s3 + $0xf08] sm:$0xff]
    %v936 = vld [vmem:[%s3 + $0xf10] sm:$0xff]
    %v937 = vld [vmem:[%s3 + $0xf18] sm:$0xff]
    %v938 = vld [vmem:[%s3 + $0xf20] sm:$0xff]
    %v939 = vld [vmem:[%s3 + $0xf28] sm:$0xff]
    %v940 = vld [vmem:[%s3 + $0xf30] sm:$0xff]
    %v941 = vld [vmem:[%s3 + $0xf38] sm:$0xff]
    %v942 = vld [vmem:[%s3 + $0xf40] sm:$0xff]
    %v943 = vld [vmem:[%s3 + $0xf48] sm:$0xff]
    %v944 = vld [vmem:[%s3 + $0xf50] sm:$0xff]
    %v945 = vld [vmem:[%s3 + $0xf58] sm:$0xff]
    %v946 = vld [vmem:[%s3 + $0xf60] sm:$0xff]
    %v947 = vld [vmem:[%s3 + $0xf68] sm:$0xff]
    %v948 = vld [vmem:[%s3 + $0xf70] sm:$0xff]
    %v949 = vld [vmem:[%s3 + $0xf78] sm:$0xff]
    %v950 = vld [vmem:[%s3 + $0xf80] sm:$0xff]
    %v951 = vld [vmem:[%s3 + $0xf88] sm:$0xff]
    %v952 = vld [vmem:[%s3 + $0xf90] sm:$0xff]
    %v953 = vld [vmem:[%s3 + $0xf98] sm:$0xff]
    %v954 = vld [vmem:[%s3 + $0xfa0] sm:$0xff]
    %v955 = vld [vmem:[%s3 + $0xfa8] sm:$0xff]
    %v956 = vld [vmem:[%s3 + $0xfb0] sm:$0xff]
    %v957 = vld [vmem:[%s3 + $0xfb8] sm:$0xff]
    %v958 = vld [vmem:[%s3 + $0xfc0] sm:$0xff]
    %v959 = vld [vmem:[%s3 + $0xfc8] sm:$0xff]
    %v960 = vld [vmem:[%s3 + $0xfd0] sm:$0xff]
    %v961 = vld [vmem:[%s3 + $0xfd8] sm:$0xff]
    %v962 = vld [vmem:[%s3 + $0xfe0] sm:$0xff]
    %v963 = vld [vmem:[%s3 + $0xfe8] sm:$0xff]
    %v964 = vld [vmem:[%s3 + $0xff0] sm:$0xff]
    %v965 = vld [vmem:[%s3 + $0xff8] sm:$0xff]
    %v966 = vld [vmem:[%s4] sm:$0xff]
    %v968 = vlaneseq
    %v969 = vshrl.u32 %v968, 7
    %v970 = vsub.s32 0, %v969
    %v971 = vrot.slane %v966, %v970
    %v972 = vlaneseq
    %v973 = vshrl.u32 %v972, 7
    %v974 = vsub.s32 1, %v973
    %v975 = vrot.slane %v966, %v974
    %v976 = vlaneseq
    %v977 = vshrl.u32 %v976, 7
    %v978 = vsub.s32 2, %v977
    %v979 = vrot.slane %v966, %v978
    %v980 = vlaneseq
    %v981 = vshrl.u32 %v980, 7
    %v982 = vsub.s32 3, %v981
    %v983 = vrot.slane %v966, %v982
    %v984 = vlaneseq
    %v985 = vshrl.u32 %v984, 7
    %v986 = vsub.s32 4, %v985
    %v987 = vrot.slane %v966, %v986
    %v988 = vlaneseq
    %v989 = vshrl.u32 %v988, 7
    %v990 = vsub.s32 5, %v989
    %v991 = vrot.slane %v966, %v990
    %v992 = vlaneseq
    %v993 = vshrl.u32 %v992, 7
    %v994 = vsub.s32 6, %v993
    %v995 = vrot.slane %v966, %v994
    %v996 = vlaneseq
    %v997 = vshrl.u32 %v996, 7
    %v998 = vsub.s32 7, %v997
    %v999 = vrot.slane %v966, %v998
    %v1520 = vunpack.c.l.b16 %v454
    %v1521 = vunpack.c.h.b16 %v454
    %v1522 = vunpack.c.l.b16 %v455
    %v1523 = vunpack.c.h.b16 %v455
    %v1524 = vunpack.c.l.b16 %v456
    %v1525 = vunpack.c.h.b16 %v456
    %v1526 = vunpack.c.l.b16 %v457
    %v1527 = vunpack.c.h.b16 %v457
    %v1528 = vunpack.c.l.b16 %v458
    %v1529 = vunpack.c.h.b16 %v458
    %v1530 = vunpack.c.l.b16 %v459
    %v1531 = vunpack.c.h.b16 %v459
    %v1532 = vunpack.c.l.b16 %v460
    %v1533 = vunpack.c.h.b16 %v460
    %v1534 = vunpack.c.l.b16 %v461
    %v1535 = vunpack.c.h.b16 %v461
    %v1536 = vunpack.c.l.b16 %v462
    %v1537 = vunpack.c.h.b16 %v462
    %v1538 = vunpack.c.l.b16 %v463
    %v1539 = vunpack.c.h.b16 %v463
    %v1540 = vunpack.c.l.b16 %v464
    %v1541 = vunpack.c.h.b16 %v464
    %v1542 = vunpack.c.l.b16 %v465
    %v1543 = vunpack.c.h.b16 %v465
    %v1544 = vunpack.c.l.b16 %v466
    %v1545 = vunpack.c.h.b16 %v466
    %v1546 = vunpack.c.l.b16 %v467
    %v1547 = vunpack.c.h.b16 %v467
    %v1548 = vunpack.c.l.b16 %v468
    %v1549 = vunpack.c.h.b16 %v468
    %v1550 = vunpack.c.l.b16 %v469
    %v1551 = vunpack.c.h.b16 %v469
    %v1552 = vunpack.c.l.b16 %v470
    %v1553 = vunpack.c.h.b16 %v470
    %v1554 = vunpack.c.l.b16 %v471
    %v1555 = vunpack.c.h.b16 %v471
    %v1556 = vunpack.c.l.b16 %v472
    %v1557 = vunpack.c.h.b16 %v472
    %v1558 = vunpack.c.l.b16 %v473
    %v1559 = vunpack.c.h.b16 %v473
    %v1560 = vunpack.c.l.b16 %v474
    %v1561 = vunpack.c.h.b16 %v474
    %v1562 = vunpack.c.l.b16 %v475
    %v1563 = vunpack.c.h.b16 %v475
    %v1564 = vunpack.c.l.b16 %v476
    %v1565 = vunpack.c.h.b16 %v476
    %v1566 = vunpack.c.l.b16 %v477
    %v1567 = vunpack.c.h.b16 %v477
    %v1568 = vunpack.c.l.b16 %v478
    %v1569 = vunpack.c.h.b16 %v478
    %v1570 = vunpack.c.l.b16 %v479
    %v1571 = vunpack.c.h.b16 %v479
    %v1572 = vunpack.c.l.b16 %v480
    %v1573 = vunpack.c.h.b16 %v480
    %v1574 = vunpack.c.l.b16 %v481
    %v1575 = vunpack.c.h.b16 %v481
    %v1576 = vunpack.c.l.b16 %v482
    %v1577 = vunpack.c.h.b16 %v482
    %v1578 = vunpack.c.l.b16 %v483
    %v1579 = vunpack.c.h.b16 %v483
    %v1580 = vunpack.c.l.b16 %v484
    %v1581 = vunpack.c.h.b16 %v484
    %v1582 = vunpack.c.l.b16 %v485
    %v1583 = vunpack.c.h.b16 %v485
    %v1584 = vunpack.c.l.b16 %v486
    %v1585 = vunpack.c.h.b16 %v486
    %v1586 = vunpack.c.l.b16 %v487
    %v1587 = vunpack.c.h.b16 %v487
    %v1588 = vunpack.c.l.b16 %v488
    %v1589 = vunpack.c.h.b16 %v488
    %v1590 = vunpack.c.l.b16 %v489
    %v1591 = vunpack.c.h.b16 %v489
    %v1592 = vunpack.c.l.b16 %v490
    %v1593 = vunpack.c.h.b16 %v490
    %v1594 = vunpack.c.l.b16 %v491
    %v1595 = vunpack.c.h.b16 %v491
    %v1596 = vunpack.c.l.b16 %v492
    %v1597 = vunpack.c.h.b16 %v492
    %v1598 = vunpack.c.l.b16 %v493
    %v1599 = vunpack.c.h.b16 %v493
    %v1600 = vunpack.c.l.b16 %v494
    %v1601 = vunpack.c.h.b16 %v494
    %v1602 = vunpack.c.l.b16 %v495
    %v1603 = vunpack.c.h.b16 %v495
    %v1604 = vunpack.c.l.b16 %v496
    %v1605 = vunpack.c.h.b16 %v496
    %v1606 = vunpack.c.l.b16 %v497
    %v1607 = vunpack.c.h.b16 %v497
    %v1608 = vunpack.c.l.b16 %v498
    %v1609 = vunpack.c.h.b16 %v498
    %v1610 = vunpack.c.l.b16 %v499
    %v1611 = vunpack.c.h.b16 %v499
    %v1612 = vunpack.c.l.b16 %v500
    %v1613 = vunpack.c.h.b16 %v500
    %v1614 = vunpack.c.l.b16 %v501
    %v1615 = vunpack.c.h.b16 %v501
    %v1616 = vunpack.c.l.b16 %v502
    %v1617 = vunpack.c.h.b16 %v502
    %v1618 = vunpack.c.l.b16 %v503
    %v1619 = vunpack.c.h.b16 %v503
    %v1620 = vunpack.c.l.b16 %v504
    %v1621 = vunpack.c.h.b16 %v504
    %v1622 = vunpack.c.l.b16 %v505
    %v1623 = vunpack.c.h.b16 %v505
    %v1624 = vunpack.c.l.b16 %v506
    %v1625 = vunpack.c.h.b16 %v506
    %v1626 = vunpack.c.l.b16 %v507
    %v1627 = vunpack.c.h.b16 %v507
    %v1628 = vunpack.c.l.b16 %v508
    %v1629 = vunpack.c.h.b16 %v508
    %v1630 = vunpack.c.l.b16 %v509
    %v1631 = vunpack.c.h.b16 %v509
    %v1632 = vunpack.c.l.b16 %v510
    %v1633 = vunpack.c.h.b16 %v510
    %v1634 = vunpack.c.l.b16 %v511
    %v1635 = vunpack.c.h.b16 %v511
    %v1636 = vunpack.c.l.b16 %v512
    %v1637 = vunpack.c.h.b16 %v512
    %v1638 = vunpack.c.l.b16 %v513
    %v1639 = vunpack.c.h.b16 %v513
    %v1640 = vunpack.c.l.b16 %v514
    %v1641 = vunpack.c.h.b16 %v514
    %v1642 = vunpack.c.l.b16 %v515
    %v1643 = vunpack.c.h.b16 %v515
    %v1644 = vunpack.c.l.b16 %v516
    %v1645 = vunpack.c.h.b16 %v516
    %v1646 = vunpack.c.l.b16 %v517
    %v1647 = vunpack.c.h.b16 %v517
    %v1648 = vunpack.c.l.b16 %v518
    %v1649 = vunpack.c.h.b16 %v518
    %v1650 = vunpack.c.l.b16 %v519
    %v1651 = vunpack.c.h.b16 %v519
    %v1652 = vunpack.c.l.b16 %v520
    %v1653 = vunpack.c.h.b16 %v520
    %v1654 = vunpack.c.l.b16 %v521
    %v1655 = vunpack.c.h.b16 %v521
    %v1656 = vunpack.c.l.b16 %v522
    %v1657 = vunpack.c.h.b16 %v522
    %v1658 = vunpack.c.l.b16 %v523
    %v1659 = vunpack.c.h.b16 %v523
    %v1660 = vunpack.c.l.b16 %v524
    %v1661 = vunpack.c.h.b16 %v524
    %v1662 = vunpack.c.l.b16 %v525
    %v1663 = vunpack.c.h.b16 %v525
    %v1664 = vunpack.c.l.b16 %v526
    %v1665 = vunpack.c.h.b16 %v526
    %v1666 = vunpack.c.l.b16 %v527
    %v1667 = vunpack.c.h.b16 %v527
    %v1668 = vunpack.c.l.b16 %v528
    %v1669 = vunpack.c.h.b16 %v528
    %v1670 = vunpack.c.l.b16 %v529
    %v1671 = vunpack.c.h.b16 %v529
    %v1672 = vunpack.c.l.b16 %v530
    %v1673 = vunpack.c.h.b16 %v530
    %v1674 = vunpack.c.l.b16 %v531
    %v1675 = vunpack.c.h.b16 %v531
    %v1676 = vunpack.c.l.b16 %v532
    %v1677 = vunpack.c.h.b16 %v532
    %v1678 = vunpack.c.l.b16 %v533
    %v1679 = vunpack.c.h.b16 %v533
    %v1680 = vunpack.c.l.b16 %v534
    %v1681 = vunpack.c.h.b16 %v534
    %v1682 = vunpack.c.l.b16 %v535
    %v1683 = vunpack.c.h.b16 %v535
    %v1684 = vunpack.c.l.b16 %v536
    %v1685 = vunpack.c.h.b16 %v536
    %v1686 = vunpack.c.l.b16 %v537
    %v1687 = vunpack.c.h.b16 %v537
    %v1688 = vunpack.c.l.b16 %v538
    %v1689 = vunpack.c.h.b16 %v538
    %v1690 = vunpack.c.l.b16 %v539
    %v1691 = vunpack.c.h.b16 %v539
    %v1692 = vunpack.c.l.b16 %v540
    %v1693 = vunpack.c.h.b16 %v540
    %v1694 = vunpack.c.l.b16 %v541
    %v1695 = vunpack.c.h.b16 %v541
    %v1696 = vunpack.c.l.b16 %v542
    %v1697 = vunpack.c.h.b16 %v542
    %v1698 = vunpack.c.l.b16 %v543
    %v1699 = vunpack.c.h.b16 %v543
    %v1700 = vunpack.c.l.b16 %v544
    %v1701 = vunpack.c.h.b16 %v544
    %v1702 = vunpack.c.l.b16 %v545
    %v1703 = vunpack.c.h.b16 %v545
    %v1704 = vunpack.c.l.b16 %v546
    %v1705 = vunpack.c.h.b16 %v546
    %v1706 = vunpack.c.l.b16 %v547
    %v1707 = vunpack.c.h.b16 %v547
    %v1708 = vunpack.c.l.b16 %v548
    %v1709 = vunpack.c.h.b16 %v548
    %v1710 = vunpack.c.l.b16 %v549
    %v1711 = vunpack.c.h.b16 %v549
    %v1712 = vunpack.c.l.b16 %v550
    %v1713 = vunpack.c.h.b16 %v550
    %v1714 = vunpack.c.l.b16 %v551
    %v1715 = vunpack.c.h.b16 %v551
    %v1716 = vunpack.c.l.b16 %v552
    %v1717 = vunpack.c.h.b16 %v552
    %v1718 = vunpack.c.l.b16 %v553
    %v1719 = vunpack.c.h.b16 %v553
    %v1720 = vunpack.c.l.b16 %v554
    %v1721 = vunpack.c.h.b16 %v554
    %v1722 = vunpack.c.l.b16 %v555
    %v1723 = vunpack.c.h.b16 %v555
    %v1724 = vunpack.c.l.b16 %v556
    %v1725 = vunpack.c.h.b16 %v556
    %v1726 = vunpack.c.l.b16 %v557
    %v1727 = vunpack.c.h.b16 %v557
    %v1728 = vunpack.c.l.b16 %v558
    %v1729 = vunpack.c.h.b16 %v558
    %v1730 = vunpack.c.l.b16 %v559
    %v1731 = vunpack.c.h.b16 %v559
    %v1732 = vunpack.c.l.b16 %v560
    %v1733 = vunpack.c.h.b16 %v560
    %v1734 = vunpack.c.l.b16 %v561
    %v1735 = vunpack.c.h.b16 %v561
    %v1736 = vunpack.c.l.b16 %v562
    %v1737 = vunpack.c.h.b16 %v562
    %v1738 = vunpack.c.l.b16 %v563
    %v1739 = vunpack.c.h.b16 %v563
    %v1740 = vunpack.c.l.b16 %v564
    %v1741 = vunpack.c.h.b16 %v564
    %v1742 = vunpack.c.l.b16 %v565
    %v1743 = vunpack.c.h.b16 %v565
    %v1744 = vunpack.c.l.b16 %v566
    %v1745 = vunpack.c.h.b16 %v566
    %v1746 = vunpack.c.l.b16 %v567
    %v1747 = vunpack.c.h.b16 %v567
    %v1748 = vunpack.c.l.b16 %v568
    %v1749 = vunpack.c.h.b16 %v568
    %v1750 = vunpack.c.l.b16 %v569
    %v1751 = vunpack.c.h.b16 %v569
    %v1752 = vunpack.c.l.b16 %v570
    %v1753 = vunpack.c.h.b16 %v570
    %v1754 = vunpack.c.l.b16 %v571
    %v1755 = vunpack.c.h.b16 %v571
    %v1756 = vunpack.c.l.b16 %v572
    %v1757 = vunpack.c.h.b16 %v572
    %v1758 = vunpack.c.l.b16 %v573
    %v1759 = vunpack.c.h.b16 %v573
    %v1760 = vunpack.c.l.b16 %v574
    %v1761 = vunpack.c.h.b16 %v574
    %v1762 = vunpack.c.l.b16 %v575
    %v1763 = vunpack.c.h.b16 %v575
    %v1764 = vunpack.c.l.b16 %v576
    %v1765 = vunpack.c.h.b16 %v576
    %v1766 = vunpack.c.l.b16 %v577
    %v1767 = vunpack.c.h.b16 %v577
    %v1768 = vunpack.c.l.b16 %v578
    %v1769 = vunpack.c.h.b16 %v578
    %v1770 = vunpack.c.l.b16 %v579
    %v1771 = vunpack.c.h.b16 %v579
    %v1772 = vunpack.c.l.b16 %v580
    %v1773 = vunpack.c.h.b16 %v580
    %v1774 = vunpack.c.l.b16 %v581
    %v1775 = vunpack.c.h.b16 %v581
    %v1776 = vunpack.c.l.b16 %v582
    %v1777 = vunpack.c.h.b16 %v582
    %v1778 = vunpack.c.l.b16 %v583
    %v1779 = vunpack.c.h.b16 %v583
    %v1780 = vunpack.c.l.b16 %v584
    %v1781 = vunpack.c.h.b16 %v584
    %v1782 = vunpack.c.l.b16 %v585
    %v1783 = vunpack.c.h.b16 %v585
    %v1784 = vunpack.c.l.b16 %v586
    %v1785 = vunpack.c.h.b16 %v586
    %v1786 = vunpack.c.l.b16 %v587
    %v1787 = vunpack.c.h.b16 %v587
    %v1788 = vunpack.c.l.b16 %v588
    %v1789 = vunpack.c.h.b16 %v588
    %v1790 = vunpack.c.l.b16 %v589
    %v1791 = vunpack.c.h.b16 %v589
    %v1792 = vunpack.c.l.b16 %v590
    %v1793 = vunpack.c.h.b16 %v590
    %v1794 = vunpack.c.l.b16 %v591
    %v1795 = vunpack.c.h.b16 %v591
    %v1796 = vunpack.c.l.b16 %v592
    %v1797 = vunpack.c.h.b16 %v592
    %v1798 = vunpack.c.l.b16 %v593
    %v1799 = vunpack.c.h.b16 %v593
    %v1800 = vunpack.c.l.b16 %v594
    %v1801 = vunpack.c.h.b16 %v594
    %v1802 = vunpack.c.l.b16 %v595
    %v1803 = vunpack.c.h.b16 %v595
    %v1804 = vunpack.c.l.b16 %v596
    %v1805 = vunpack.c.h.b16 %v596
    %v1806 = vunpack.c.l.b16 %v597
    %v1807 = vunpack.c.h.b16 %v597
    %v1808 = vunpack.c.l.b16 %v598
    %v1809 = vunpack.c.h.b16 %v598
    %v1810 = vunpack.c.l.b16 %v599
    %v1811 = vunpack.c.h.b16 %v599
    %v1812 = vunpack.c.l.b16 %v600
    %v1813 = vunpack.c.h.b16 %v600
    %v1814 = vunpack.c.l.b16 %v601
    %v1815 = vunpack.c.h.b16 %v601
    %v1816 = vunpack.c.l.b16 %v602
    %v1817 = vunpack.c.h.b16 %v602
    %v1818 = vunpack.c.l.b16 %v603
    %v1819 = vunpack.c.h.b16 %v603
    %v1820 = vunpack.c.l.b16 %v604
    %v1821 = vunpack.c.h.b16 %v604
    %v1822 = vunpack.c.l.b16 %v605
    %v1823 = vunpack.c.h.b16 %v605
    %v1824 = vunpack.c.l.b16 %v606
    %v1825 = vunpack.c.h.b16 %v606
    %v1826 = vunpack.c.l.b16 %v607
    %v1827 = vunpack.c.h.b16 %v607
    %v1828 = vunpack.c.l.b16 %v608
    %v1829 = vunpack.c.h.b16 %v608
    %v1830 = vunpack.c.l.b16 %v609
    %v1831 = vunpack.c.h.b16 %v609
    %v1832 = vunpack.c.l.b16 %v610
    %v1833 = vunpack.c.h.b16 %v610
    %v1834 = vunpack.c.l.b16 %v611
    %v1835 = vunpack.c.h.b16 %v611
    %v1836 = vunpack.c.l.b16 %v612
    %v1837 = vunpack.c.h.b16 %v612
    %v1838 = vunpack.c.l.b16 %v613
    %v1839 = vunpack.c.h.b16 %v613
    %v1840 = vunpack.c.l.b16 %v614
    %v1841 = vunpack.c.h.b16 %v614
    %v1842 = vunpack.c.l.b16 %v615
    %v1843 = vunpack.c.h.b16 %v615
    %v1844 = vunpack.c.l.b16 %v616
    %v1845 = vunpack.c.h.b16 %v616
    %v1846 = vunpack.c.l.b16 %v617
    %v1847 = vunpack.c.h.b16 %v617
    %v1848 = vunpack.c.l.b16 %v618
    %v1849 = vunpack.c.h.b16 %v618
    %v1850 = vunpack.c.l.b16 %v619
    %v1851 = vunpack.c.h.b16 %v619
    %v1852 = vunpack.c.l.b16 %v620
    %v1853 = vunpack.c.h.b16 %v620
    %v1854 = vunpack.c.l.b16 %v621
    %v1855 = vunpack.c.h.b16 %v621
    %v1856 = vunpack.c.l.b16 %v622
    %v1857 = vunpack.c.h.b16 %v622
    %v1858 = vunpack.c.l.b16 %v623
    %v1859 = vunpack.c.h.b16 %v623
    %v1860 = vunpack.c.l.b16 %v624
    %v1861 = vunpack.c.h.b16 %v624
    %v1862 = vunpack.c.l.b16 %v625
    %v1863 = vunpack.c.h.b16 %v625
    %v1864 = vunpack.c.l.b16 %v626
    %v1865 = vunpack.c.h.b16 %v626
    %v1866 = vunpack.c.l.b16 %v627
    %v1867 = vunpack.c.h.b16 %v627
    %v1868 = vunpack.c.l.b16 %v628
    %v1869 = vunpack.c.h.b16 %v628
    %v1870 = vunpack.c.l.b16 %v629
    %v1871 = vunpack.c.h.b16 %v629
    %v1872 = vunpack.c.l.b16 %v630
    %v1873 = vunpack.c.h.b16 %v630
    %v1874 = vunpack.c.l.b16 %v631
    %v1875 = vunpack.c.h.b16 %v631
    %v1876 = vunpack.c.l.b16 %v632
    %v1877 = vunpack.c.h.b16 %v632
    %v1878 = vunpack.c.l.b16 %v633
    %v1879 = vunpack.c.h.b16 %v633
    %v1880 = vunpack.c.l.b16 %v634
    %v1881 = vunpack.c.h.b16 %v634
    %v1882 = vunpack.c.l.b16 %v635
    %v1883 = vunpack.c.h.b16 %v635
    %v1884 = vunpack.c.l.b16 %v636
    %v1885 = vunpack.c.h.b16 %v636
    %v1886 = vunpack.c.l.b16 %v637
    %v1887 = vunpack.c.h.b16 %v637
    %v1888 = vunpack.c.l.b16 %v638
    %v1889 = vunpack.c.h.b16 %v638
    %v1890 = vunpack.c.l.b16 %v639
    %v1891 = vunpack.c.h.b16 %v639
    %v1892 = vunpack.c.l.b16 %v640
    %v1893 = vunpack.c.h.b16 %v640
    %v1894 = vunpack.c.l.b16 %v641
    %v1895 = vunpack.c.h.b16 %v641
    %v1896 = vunpack.c.l.b16 %v642
    %v1897 = vunpack.c.h.b16 %v642
    %v1898 = vunpack.c.l.b16 %v643
    %v1899 = vunpack.c.h.b16 %v643
    %v1900 = vunpack.c.l.b16 %v644
    %v1901 = vunpack.c.h.b16 %v644
    %v1902 = vunpack.c.l.b16 %v645
    %v1903 = vunpack.c.h.b16 %v645
    %v1904 = vunpack.c.l.b16 %v646
    %v1905 = vunpack.c.h.b16 %v646
    %v1906 = vunpack.c.l.b16 %v647
    %v1907 = vunpack.c.h.b16 %v647
    %v1908 = vunpack.c.l.b16 %v648
    %v1909 = vunpack.c.h.b16 %v648
    %v1910 = vunpack.c.l.b16 %v649
    %v1911 = vunpack.c.h.b16 %v649
    %v1912 = vunpack.c.l.b16 %v650
    %v1913 = vunpack.c.h.b16 %v650
    %v1914 = vunpack.c.l.b16 %v651
    %v1915 = vunpack.c.h.b16 %v651
    %v1916 = vunpack.c.l.b16 %v652
    %v1917 = vunpack.c.h.b16 %v652
    %v1918 = vunpack.c.l.b16 %v653
    %v1919 = vunpack.c.h.b16 %v653
    %v1920 = vunpack.c.l.b16 %v654
    %v1921 = vunpack.c.h.b16 %v654
    %v1922 = vunpack.c.l.b16 %v655
    %v1923 = vunpack.c.h.b16 %v655
    %v1924 = vunpack.c.l.b16 %v656
    %v1925 = vunpack.c.h.b16 %v656
    %v1926 = vunpack.c.l.b16 %v657
    %v1927 = vunpack.c.h.b16 %v657
    %v1928 = vunpack.c.l.b16 %v658
    %v1929 = vunpack.c.h.b16 %v658
    %v1930 = vunpack.c.l.b16 %v659
    %v1931 = vunpack.c.h.b16 %v659
    %v1932 = vunpack.c.l.b16 %v660
    %v1933 = vunpack.c.h.b16 %v660
    %v1934 = vunpack.c.l.b16 %v661
    %v1935 = vunpack.c.h.b16 %v661
    %v1936 = vunpack.c.l.b16 %v662
    %v1937 = vunpack.c.h.b16 %v662
    %v1938 = vunpack.c.l.b16 %v663
    %v1939 = vunpack.c.h.b16 %v663
    %v1940 = vunpack.c.l.b16 %v664
    %v1941 = vunpack.c.h.b16 %v664
    %v1942 = vunpack.c.l.b16 %v665
    %v1943 = vunpack.c.h.b16 %v665
    %v1944 = vunpack.c.l.b16 %v666
    %v1945 = vunpack.c.h.b16 %v666
    %v1946 = vunpack.c.l.b16 %v667
    %v1947 = vunpack.c.h.b16 %v667
    %v1948 = vunpack.c.l.b16 %v668
    %v1949 = vunpack.c.h.b16 %v668
    %v1950 = vunpack.c.l.b16 %v669
    %v1951 = vunpack.c.h.b16 %v669
    %v1952 = vunpack.c.l.b16 %v670
    %v1953 = vunpack.c.h.b16 %v670
    %v1954 = vunpack.c.l.b16 %v671
    %v1955 = vunpack.c.h.b16 %v671
    %v1956 = vunpack.c.l.b16 %v672
    %v1957 = vunpack.c.h.b16 %v672
    %v1958 = vunpack.c.l.b16 %v673
    %v1959 = vunpack.c.h.b16 %v673
    %v1960 = vunpack.c.l.b16 %v674
    %v1961 = vunpack.c.h.b16 %v674
    %v1962 = vunpack.c.l.b16 %v675
    %v1963 = vunpack.c.h.b16 %v675
    %v1964 = vunpack.c.l.b16 %v676
    %v1965 = vunpack.c.h.b16 %v676
    %v1966 = vunpack.c.l.b16 %v677
    %v1967 = vunpack.c.h.b16 %v677
    %v1968 = vunpack.c.l.b16 %v678
    %v1969 = vunpack.c.h.b16 %v678
    %v1970 = vunpack.c.l.b16 %v679
    %v1971 = vunpack.c.h.b16 %v679
    %v1972 = vunpack.c.l.b16 %v680
    %v1973 = vunpack.c.h.b16 %v680
    %v1974 = vunpack.c.l.b16 %v681
    %v1975 = vunpack.c.h.b16 %v681
    %v1976 = vunpack.c.l.b16 %v682
    %v1977 = vunpack.c.h.b16 %v682
    %v1978 = vunpack.c.l.b16 %v683
    %v1979 = vunpack.c.h.b16 %v683
    %v1980 = vunpack.c.l.b16 %v684
    %v1981 = vunpack.c.h.b16 %v684
    %v1982 = vunpack.c.l.b16 %v685
    %v1983 = vunpack.c.h.b16 %v685
    %v1984 = vunpack.c.l.b16 %v686
    %v1985 = vunpack.c.h.b16 %v686
    %v1986 = vunpack.c.l.b16 %v687
    %v1987 = vunpack.c.h.b16 %v687
    %v1988 = vunpack.c.l.b16 %v688
    %v1989 = vunpack.c.h.b16 %v688
    %v1990 = vunpack.c.l.b16 %v689
    %v1991 = vunpack.c.h.b16 %v689
    %v1992 = vunpack.c.l.b16 %v690
    %v1993 = vunpack.c.h.b16 %v690
    %v1994 = vunpack.c.l.b16 %v691
    %v1995 = vunpack.c.h.b16 %v691
    %v1996 = vunpack.c.l.b16 %v692
    %v1997 = vunpack.c.h.b16 %v692
    %v1998 = vunpack.c.l.b16 %v693
    %v1999 = vunpack.c.h.b16 %v693
    %v2000 = vunpack.c.l.b16 %v694
    %v2001 = vunpack.c.h.b16 %v694
    %v2002 = vunpack.c.l.b16 %v695
    %v2003 = vunpack.c.h.b16 %v695
    %v2004 = vunpack.c.l.b16 %v696
    %v2005 = vunpack.c.h.b16 %v696
    %v2006 = vunpack.c.l.b16 %v697
    %v2007 = vunpack.c.h.b16 %v697
    %v2008 = vunpack.c.l.b16 %v698
    %v2009 = vunpack.c.h.b16 %v698
    %v2010 = vunpack.c.l.b16 %v699
    %v2011 = vunpack.c.h.b16 %v699
    %v2012 = vunpack.c.l.b16 %v700
    %v2013 = vunpack.c.h.b16 %v700
    %v2014 = vunpack.c.l.b16 %v701
    %v2015 = vunpack.c.h.b16 %v701
    %v2016 = vunpack.c.l.b16 %v702
    %v2017 = vunpack.c.h.b16 %v702
    %v2018 = vunpack.c.l.b16 %v703
    %v2019 = vunpack.c.h.b16 %v703
    %v2020 = vunpack.c.l.b16 %v704
    %v2021 = vunpack.c.h.b16 %v704
    %v2022 = vunpack.c.l.b16 %v705
    %v2023 = vunpack.c.h.b16 %v705
    %v2024 = vunpack.c.l.b16 %v706
    %v2025 = vunpack.c.h.b16 %v706
    %v2026 = vunpack.c.l.b16 %v707
    %v2027 = vunpack.c.h.b16 %v707
    %v2028 = vunpack.c.l.b16 %v708
    %v2029 = vunpack.c.h.b16 %v708
    %v2030 = vunpack.c.l.b16 %v709
    %v2031 = vunpack.c.h.b16 %v709
    %v2032 = vunpack.c.l.b16 %v710
    %v2033 = vunpack.c.h.b16 %v710
    %v2034 = vunpack.c.l.b16 %v711
    %v2035 = vunpack.c.h.b16 %v711
    %v2036 = vunpack.c.l.b16 %v712
    %v2037 = vunpack.c.h.b16 %v712
    %v2038 = vunpack.c.l.b16 %v713
    %v2039 = vunpack.c.h.b16 %v713
    %v2040 = vunpack.c.l.b16 %v714
    %v2041 = vunpack.c.h.b16 %v714
    %v2042 = vunpack.c.l.b16 %v715
    %v2043 = vunpack.c.h.b16 %v715
    %v2044 = vunpack.c.l.b16 %v716
    %v2045 = vunpack.c.h.b16 %v716
    %v2046 = vunpack.c.l.b16 %v717
    %v2047 = vunpack.c.h.b16 %v717
    %v2048 = vunpack.c.l.b16 %v718
    %v2049 = vunpack.c.h.b16 %v718
    %v2050 = vunpack.c.l.b16 %v719
    %v2051 = vunpack.c.h.b16 %v719
    %v2052 = vunpack.c.l.b16 %v720
    %v2053 = vunpack.c.h.b16 %v720
    %v2054 = vunpack.c.l.b16 %v721
    %v2055 = vunpack.c.h.b16 %v721
    %v2056 = vunpack.c.l.b16 %v722
    %v2057 = vunpack.c.h.b16 %v722
    %v2058 = vunpack.c.l.b16 %v723
    %v2059 = vunpack.c.h.b16 %v723
    %v2060 = vunpack.c.l.b16 %v724
    %v2061 = vunpack.c.h.b16 %v724
    %v2062 = vunpack.c.l.b16 %v725
    %v2063 = vunpack.c.h.b16 %v725
    %v2064 = vunpack.c.l.b16 %v726
    %v2065 = vunpack.c.h.b16 %v726
    %v2066 = vunpack.c.l.b16 %v727
    %v2067 = vunpack.c.h.b16 %v727
    %v2068 = vunpack.c.l.b16 %v728
    %v2069 = vunpack.c.h.b16 %v728
    %v2070 = vunpack.c.l.b16 %v729
    %v2071 = vunpack.c.h.b16 %v729
    %v2072 = vunpack.c.l.b16 %v730
    %v2073 = vunpack.c.h.b16 %v730
    %v2074 = vunpack.c.l.b16 %v731
    %v2075 = vunpack.c.h.b16 %v731
    %v2076 = vunpack.c.l.b16 %v732
    %v2077 = vunpack.c.h.b16 %v732
    %v2078 = vunpack.c.l.b16 %v733
    %v2079 = vunpack.c.h.b16 %v733
    %v2080 = vunpack.c.l.b16 %v734
    %v2081 = vunpack.c.h.b16 %v734
    %v2082 = vunpack.c.l.b16 %v735
    %v2083 = vunpack.c.h.b16 %v735
    %v2084 = vunpack.c.l.b16 %v736
    %v2085 = vunpack.c.h.b16 %v736
    %v2086 = vunpack.c.l.b16 %v737
    %v2087 = vunpack.c.h.b16 %v737
    %v2088 = vunpack.c.l.b16 %v738
    %v2089 = vunpack.c.h.b16 %v738
    %v2090 = vunpack.c.l.b16 %v739
    %v2091 = vunpack.c.h.b16 %v739
    %v2092 = vunpack.c.l.b16 %v740
    %v2093 = vunpack.c.h.b16 %v740
    %v2094 = vunpack.c.l.b16 %v741
    %v2095 = vunpack.c.h.b16 %v741
    %v2096 = vunpack.c.l.b16 %v742
    %v2097 = vunpack.c.h.b16 %v742
    %v2098 = vunpack.c.l.b16 %v743
    %v2099 = vunpack.c.h.b16 %v743
    %v2100 = vunpack.c.l.b16 %v744
    %v2101 = vunpack.c.h.b16 %v744
    %v2102 = vunpack.c.l.b16 %v745
    %v2103 = vunpack.c.h.b16 %v745
    %v2104 = vunpack.c.l.b16 %v746
    %v2105 = vunpack.c.h.b16 %v746
    %v2106 = vunpack.c.l.b16 %v747
    %v2107 = vunpack.c.h.b16 %v747
    %v2108 = vunpack.c.l.b16 %v748
    %v2109 = vunpack.c.h.b16 %v748
    %v2110 = vunpack.c.l.b16 %v749
    %v2111 = vunpack.c.h.b16 %v749
    %v2112 = vunpack.c.l.b16 %v750
    %v2113 = vunpack.c.h.b16 %v750
    %v2114 = vunpack.c.l.b16 %v751
    %v2115 = vunpack.c.h.b16 %v751
    %v2116 = vunpack.c.l.b16 %v752
    %v2117 = vunpack.c.h.b16 %v752
    %v2118 = vunpack.c.l.b16 %v753
    %v2119 = vunpack.c.h.b16 %v753
    %v2120 = vunpack.c.l.b16 %v754
    %v2121 = vunpack.c.h.b16 %v754
    %v2122 = vunpack.c.l.b16 %v755
    %v2123 = vunpack.c.h.b16 %v755
    %v2124 = vunpack.c.l.b16 %v756
    %v2125 = vunpack.c.h.b16 %v756
    %v2126 = vunpack.c.l.b16 %v757
    %v2127 = vunpack.c.h.b16 %v757
    %v2128 = vunpack.c.l.b16 %v758
    %v2129 = vunpack.c.h.b16 %v758
    %v2130 = vunpack.c.l.b16 %v759
    %v2131 = vunpack.c.h.b16 %v759
    %v2132 = vunpack.c.l.b16 %v760
    %v2133 = vunpack.c.h.b16 %v760
    %v2134 = vunpack.c.l.b16 %v761
    %v2135 = vunpack.c.h.b16 %v761
    %v2136 = vunpack.c.l.b16 %v762
    %v2137 = vunpack.c.h.b16 %v762
    %v2138 = vunpack.c.l.b16 %v763
    %v2139 = vunpack.c.h.b16 %v763
    %v2140 = vunpack.c.l.b16 %v764
    %v2141 = vunpack.c.h.b16 %v764
    %v2142 = vunpack.c.l.b16 %v765
    %v2143 = vunpack.c.h.b16 %v765
    %v2144 = vunpack.c.l.b16 %v766
    %v2145 = vunpack.c.h.b16 %v766
    %v2146 = vunpack.c.l.b16 %v767
    %v2147 = vunpack.c.h.b16 %v767
    %v2148 = vunpack.c.l.b16 %v768
    %v2149 = vunpack.c.h.b16 %v768
    %v2150 = vunpack.c.l.b16 %v769
    %v2151 = vunpack.c.h.b16 %v769
    %v2152 = vunpack.c.l.b16 %v770
    %v2153 = vunpack.c.h.b16 %v770
    %v2154 = vunpack.c.l.b16 %v771
    %v2155 = vunpack.c.h.b16 %v771
    %v2156 = vunpack.c.l.b16 %v772
    %v2157 = vunpack.c.h.b16 %v772
    %v2158 = vunpack.c.l.b16 %v773
    %v2159 = vunpack.c.h.b16 %v773
    %v2160 = vunpack.c.l.b16 %v774
    %v2161 = vunpack.c.h.b16 %v774
    %v2162 = vunpack.c.l.b16 %v775
    %v2163 = vunpack.c.h.b16 %v775
    %v2164 = vunpack.c.l.b16 %v776
    %v2165 = vunpack.c.h.b16 %v776
    %v2166 = vunpack.c.l.b16 %v777
    %v2167 = vunpack.c.h.b16 %v777
    %v2168 = vunpack.c.l.b16 %v778
    %v2169 = vunpack.c.h.b16 %v778
    %v2170 = vunpack.c.l.b16 %v779
    %v2171 = vunpack.c.h.b16 %v779
    %v2172 = vunpack.c.l.b16 %v780
    %v2173 = vunpack.c.h.b16 %v780
    %v2174 = vunpack.c.l.b16 %v781
    %v2175 = vunpack.c.h.b16 %v781
    %v2176 = vunpack.c.l.b16 %v782
    %v2177 = vunpack.c.h.b16 %v782
    %v2178 = vunpack.c.l.b16 %v783
    %v2179 = vunpack.c.h.b16 %v783
    %v2180 = vunpack.c.l.b16 %v784
    %v2181 = vunpack.c.h.b16 %v784
    %v2182 = vunpack.c.l.b16 %v785
    %v2183 = vunpack.c.h.b16 %v785
    %v2184 = vunpack.c.l.b16 %v786
    %v2185 = vunpack.c.h.b16 %v786
    %v2186 = vunpack.c.l.b16 %v787
    %v2187 = vunpack.c.h.b16 %v787
    %v2188 = vunpack.c.l.b16 %v788
    %v2189 = vunpack.c.h.b16 %v788
    %v2190 = vunpack.c.l.b16 %v789
    %v2191 = vunpack.c.h.b16 %v789
    %v2192 = vunpack.c.l.b16 %v790
    %v2193 = vunpack.c.h.b16 %v790
    %v2194 = vunpack.c.l.b16 %v791
    %v2195 = vunpack.c.h.b16 %v791
    %v2196 = vunpack.c.l.b16 %v792
    %v2197 = vunpack.c.h.b16 %v792
    %v2198 = vunpack.c.l.b16 %v793
    %v2199 = vunpack.c.h.b16 %v793
    %v2200 = vunpack.c.l.b16 %v794
    %v2201 = vunpack.c.h.b16 %v794
    %v2202 = vunpack.c.l.b16 %v795
    %v2203 = vunpack.c.h.b16 %v795
    %v2204 = vunpack.c.l.b16 %v796
    %v2205 = vunpack.c.h.b16 %v796
    %v2206 = vunpack.c.l.b16 %v797
    %v2207 = vunpack.c.h.b16 %v797
    %v2208 = vunpack.c.l.b16 %v798
    %v2209 = vunpack.c.h.b16 %v798
    %v2210 = vunpack.c.l.b16 %v799
    %v2211 = vunpack.c.h.b16 %v799
    %v2212 = vunpack.c.l.b16 %v800
    %v2213 = vunpack.c.h.b16 %v800
    %v2214 = vunpack.c.l.b16 %v801
    %v2215 = vunpack.c.h.b16 %v801
    %v2216 = vunpack.c.l.b16 %v802
    %v2217 = vunpack.c.h.b16 %v802
    %v2218 = vunpack.c.l.b16 %v803
    %v2219 = vunpack.c.h.b16 %v803
    %v2220 = vunpack.c.l.b16 %v804
    %v2221 = vunpack.c.h.b16 %v804
    %v2222 = vunpack.c.l.b16 %v805
    %v2223 = vunpack.c.h.b16 %v805
    %v2224 = vunpack.c.l.b16 %v806
    %v2225 = vunpack.c.h.b16 %v806
    %v2226 = vunpack.c.l.b16 %v807
    %v2227 = vunpack.c.h.b16 %v807
    %v2228 = vunpack.c.l.b16 %v808
    %v2229 = vunpack.c.h.b16 %v808
    %v2230 = vunpack.c.l.b16 %v809
    %v2231 = vunpack.c.h.b16 %v809
    %v2232 = vunpack.c.l.b16 %v810
    %v2233 = vunpack.c.h.b16 %v810
    %v2234 = vunpack.c.l.b16 %v811
    %v2235 = vunpack.c.h.b16 %v811
    %v2236 = vunpack.c.l.b16 %v812
    %v2237 = vunpack.c.h.b16 %v812
    %v2238 = vunpack.c.l.b16 %v813
    %v2239 = vunpack.c.h.b16 %v813
    %v2240 = vunpack.c.l.b16 %v814
    %v2241 = vunpack.c.h.b16 %v814
    %v2242 = vunpack.c.l.b16 %v815
    %v2243 = vunpack.c.h.b16 %v815
    %v2244 = vunpack.c.l.b16 %v816
    %v2245 = vunpack.c.h.b16 %v816
    %v2246 = vunpack.c.l.b16 %v817
    %v2247 = vunpack.c.h.b16 %v817
    %v2248 = vunpack.c.l.b16 %v818
    %v2249 = vunpack.c.h.b16 %v818
    %v2250 = vunpack.c.l.b16 %v819
    %v2251 = vunpack.c.h.b16 %v819
    %v2252 = vunpack.c.l.b16 %v820
    %v2253 = vunpack.c.h.b16 %v820
    %v2254 = vunpack.c.l.b16 %v821
    %v2255 = vunpack.c.h.b16 %v821
    %v2256 = vunpack.c.l.b16 %v822
    %v2257 = vunpack.c.h.b16 %v822
    %v2258 = vunpack.c.l.b16 %v823
    %v2259 = vunpack.c.h.b16 %v823
    %v2260 = vunpack.c.l.b16 %v824
    %v2261 = vunpack.c.h.b16 %v824
    %v2262 = vunpack.c.l.b16 %v825
    %v2263 = vunpack.c.h.b16 %v825
    %v2264 = vunpack.c.l.b16 %v826
    %v2265 = vunpack.c.h.b16 %v826
    %v2266 = vunpack.c.l.b16 %v827
    %v2267 = vunpack.c.h.b16 %v827
    %v2268 = vunpack.c.l.b16 %v828
    %v2269 = vunpack.c.h.b16 %v828
    %v2270 = vunpack.c.l.b16 %v829
    %v2271 = vunpack.c.h.b16 %v829
    %v2272 = vunpack.c.l.b16 %v830
    %v2273 = vunpack.c.h.b16 %v830
    %v2274 = vunpack.c.l.b16 %v831
    %v2275 = vunpack.c.h.b16 %v831
    %v2276 = vunpack.c.l.b16 %v832
    %v2277 = vunpack.c.h.b16 %v832
    %v2278 = vunpack.c.l.b16 %v833
    %v2279 = vunpack.c.h.b16 %v833
    %v2280 = vunpack.c.l.b16 %v834
    %v2281 = vunpack.c.h.b16 %v834
    %v2282 = vunpack.c.l.b16 %v835
    %v2283 = vunpack.c.h.b16 %v835
    %v2284 = vunpack.c.l.b16 %v836
    %v2285 = vunpack.c.h.b16 %v836
    %v2286 = vunpack.c.l.b16 %v837
    %v2287 = vunpack.c.h.b16 %v837
    %v2288 = vunpack.c.l.b16 %v838
    %v2289 = vunpack.c.h.b16 %v838
    %v2290 = vunpack.c.l.b16 %v839
    %v2291 = vunpack.c.h.b16 %v839
    %v2292 = vunpack.c.l.b16 %v840
    %v2293 = vunpack.c.h.b16 %v840
    %v2294 = vunpack.c.l.b16 %v841
    %v2295 = vunpack.c.h.b16 %v841
    %v2296 = vunpack.c.l.b16 %v842
    %v2297 = vunpack.c.h.b16 %v842
    %v2298 = vunpack.c.l.b16 %v843
    %v2299 = vunpack.c.h.b16 %v843
    %v2300 = vunpack.c.l.b16 %v844
    %v2301 = vunpack.c.h.b16 %v844
    %v2302 = vunpack.c.l.b16 %v845
    %v2303 = vunpack.c.h.b16 %v845
    %v2304 = vunpack.c.l.b16 %v846
    %v2305 = vunpack.c.h.b16 %v846
    %v2306 = vunpack.c.l.b16 %v847
    %v2307 = vunpack.c.h.b16 %v847
    %v2308 = vunpack.c.l.b16 %v848
    %v2309 = vunpack.c.h.b16 %v848
    %v2310 = vunpack.c.l.b16 %v849
    %v2311 = vunpack.c.h.b16 %v849
    %v2312 = vunpack.c.l.b16 %v850
    %v2313 = vunpack.c.h.b16 %v850
    %v2314 = vunpack.c.l.b16 %v851
    %v2315 = vunpack.c.h.b16 %v851
    %v2316 = vunpack.c.l.b16 %v852
    %v2317 = vunpack.c.h.b16 %v852
    %v2318 = vunpack.c.l.b16 %v853
    %v2319 = vunpack.c.h.b16 %v853
    %v2320 = vunpack.c.l.b16 %v854
    %v2321 = vunpack.c.h.b16 %v854
    %v2322 = vunpack.c.l.b16 %v855
    %v2323 = vunpack.c.h.b16 %v855
    %v2324 = vunpack.c.l.b16 %v856
    %v2325 = vunpack.c.h.b16 %v856
    %v2326 = vunpack.c.l.b16 %v857
    %v2327 = vunpack.c.h.b16 %v857
    %v2328 = vunpack.c.l.b16 %v858
    %v2329 = vunpack.c.h.b16 %v858
    %v2330 = vunpack.c.l.b16 %v859
    %v2331 = vunpack.c.h.b16 %v859
    %v2332 = vunpack.c.l.b16 %v860
    %v2333 = vunpack.c.h.b16 %v860
    %v2334 = vunpack.c.l.b16 %v861
    %v2335 = vunpack.c.h.b16 %v861
    %v2336 = vunpack.c.l.b16 %v862
    %v2337 = vunpack.c.h.b16 %v862
    %v2338 = vunpack.c.l.b16 %v863
    %v2339 = vunpack.c.h.b16 %v863
    %v2340 = vunpack.c.l.b16 %v864
    %v2341 = vunpack.c.h.b16 %v864
    %v2342 = vunpack.c.l.b16 %v865
    %v2343 = vunpack.c.h.b16 %v865
    %v2344 = vunpack.c.l.b16 %v866
    %v2345 = vunpack.c.h.b16 %v866
    %v2346 = vunpack.c.l.b16 %v867
    %v2347 = vunpack.c.h.b16 %v867
    %v2348 = vunpack.c.l.b16 %v868
    %v2349 = vunpack.c.h.b16 %v868
    %v2350 = vunpack.c.l.b16 %v869
    %v2351 = vunpack.c.h.b16 %v869
    %v2352 = vunpack.c.l.b16 %v870
    %v2353 = vunpack.c.h.b16 %v870
    %v2354 = vunpack.c.l.b16 %v871
    %v2355 = vunpack.c.h.b16 %v871
    %v2356 = vunpack.c.l.b16 %v872
    %v2357 = vunpack.c.h.b16 %v872
    %v2358 = vunpack.c.l.b16 %v873
    %v2359 = vunpack.c.h.b16 %v873
    %v2360 = vunpack.c.l.b16 %v874
    %v2361 = vunpack.c.h.b16 %v874
    %v2362 = vunpack.c.l.b16 %v875
    %v2363 = vunpack.c.h.b16 %v875
    %v2364 = vunpack.c.l.b16 %v876
    %v2365 = vunpack.c.h.b16 %v876
    %v2366 = vunpack.c.l.b16 %v877
    %v2367 = vunpack.c.h.b16 %v877
    %v2368 = vunpack.c.l.b16 %v878
    %v2369 = vunpack.c.h.b16 %v878
    %v2370 = vunpack.c.l.b16 %v879
    %v2371 = vunpack.c.h.b16 %v879
    %v2372 = vunpack.c.l.b16 %v880
    %v2373 = vunpack.c.h.b16 %v880
    %v2374 = vunpack.c.l.b16 %v881
    %v2375 = vunpack.c.h.b16 %v881
    %v2376 = vunpack.c.l.b16 %v882
    %v2377 = vunpack.c.h.b16 %v882
    %v2378 = vunpack.c.l.b16 %v883
    %v2379 = vunpack.c.h.b16 %v883
    %v2380 = vunpack.c.l.b16 %v884
    %v2381 = vunpack.c.h.b16 %v884
    %v2382 = vunpack.c.l.b16 %v885
    %v2383 = vunpack.c.h.b16 %v885
    %v2384 = vunpack.c.l.b16 %v886
    %v2385 = vunpack.c.h.b16 %v886
    %v2386 = vunpack.c.l.b16 %v887
    %v2387 = vunpack.c.h.b16 %v887
    %v2388 = vunpack.c.l.b16 %v888
    %v2389 = vunpack.c.h.b16 %v888
    %v2390 = vunpack.c.l.b16 %v889
    %v2391 = vunpack.c.h.b16 %v889
    %v2392 = vunpack.c.l.b16 %v890
    %v2393 = vunpack.c.h.b16 %v890
    %v2394 = vunpack.c.l.b16 %v891
    %v2395 = vunpack.c.h.b16 %v891
    %v2396 = vunpack.c.l.b16 %v892
    %v2397 = vunpack.c.h.b16 %v892
    %v2398 = vunpack.c.l.b16 %v893
    %v2399 = vunpack.c.h.b16 %v893
    %v2400 = vunpack.c.l.b16 %v894
    %v2401 = vunpack.c.h.b16 %v894
    %v2402 = vunpack.c.l.b16 %v895
    %v2403 = vunpack.c.h.b16 %v895
    %v2404 = vunpack.c.l.b16 %v896
    %v2405 = vunpack.c.h.b16 %v896
    %v2406 = vunpack.c.l.b16 %v897
    %v2407 = vunpack.c.h.b16 %v897
    %v2408 = vunpack.c.l.b16 %v898
    %v2409 = vunpack.c.h.b16 %v898
    %v2410 = vunpack.c.l.b16 %v899
    %v2411 = vunpack.c.h.b16 %v899
    %v2412 = vunpack.c.l.b16 %v900
    %v2413 = vunpack.c.h.b16 %v900
    %v2414 = vunpack.c.l.b16 %v901
    %v2415 = vunpack.c.h.b16 %v901
    %v2416 = vunpack.c.l.b16 %v902
    %v2417 = vunpack.c.h.b16 %v902
    %v2418 = vunpack.c.l.b16 %v903
    %v2419 = vunpack.c.h.b16 %v903
    %v2420 = vunpack.c.l.b16 %v904
    %v2421 = vunpack.c.h.b16 %v904
    %v2422 = vunpack.c.l.b16 %v905
    %v2423 = vunpack.c.h.b16 %v905
    %v2424 = vunpack.c.l.b16 %v906
    %v2425 = vunpack.c.h.b16 %v906
    %v2426 = vunpack.c.l.b16 %v907
    %v2427 = vunpack.c.h.b16 %v907
    %v2428 = vunpack.c.l.b16 %v908
    %v2429 = vunpack.c.h.b16 %v908
    %v2430 = vunpack.c.l.b16 %v909
    %v2431 = vunpack.c.h.b16 %v909
    %v2432 = vunpack.c.l.b16 %v910
    %v2433 = vunpack.c.h.b16 %v910
    %v2434 = vunpack.c.l.b16 %v911
    %v2435 = vunpack.c.h.b16 %v911
    %v2436 = vunpack.c.l.b16 %v912
    %v2437 = vunpack.c.h.b16 %v912
    %v2438 = vunpack.c.l.b16 %v913
    %v2439 = vunpack.c.h.b16 %v913
    %v2440 = vunpack.c.l.b16 %v914
    %v2441 = vunpack.c.h.b16 %v914
    %v2442 = vunpack.c.l.b16 %v915
    %v2443 = vunpack.c.h.b16 %v915
    %v2444 = vunpack.c.l.b16 %v916
    %v2445 = vunpack.c.h.b16 %v916
    %v2446 = vunpack.c.l.b16 %v917
    %v2447 = vunpack.c.h.b16 %v917
    %v2448 = vunpack.c.l.b16 %v918
    %v2449 = vunpack.c.h.b16 %v918
    %v2450 = vunpack.c.l.b16 %v919
    %v2451 = vunpack.c.h.b16 %v919
    %v2452 = vunpack.c.l.b16 %v920
    %v2453 = vunpack.c.h.b16 %v920
    %v2454 = vunpack.c.l.b16 %v921
    %v2455 = vunpack.c.h.b16 %v921
    %v2456 = vunpack.c.l.b16 %v922
    %v2457 = vunpack.c.h.b16 %v922
    %v2458 = vunpack.c.l.b16 %v923
    %v2459 = vunpack.c.h.b16 %v923
    %v2460 = vunpack.c.l.b16 %v924
    %v2461 = vunpack.c.h.b16 %v924
    %v2462 = vunpack.c.l.b16 %v925
    %v2463 = vunpack.c.h.b16 %v925
    %v2464 = vunpack.c.l.b16 %v926
    %v2465 = vunpack.c.h.b16 %v926
    %v2466 = vunpack.c.l.b16 %v927
    %v2467 = vunpack.c.h.b16 %v927
    %v2468 = vunpack.c.l.b16 %v928
    %v2469 = vunpack.c.h.b16 %v928
    %v2470 = vunpack.c.l.b16 %v929
    %v2471 = vunpack.c.h.b16 %v929
    %v2472 = vunpack.c.l.b16 %v930
    %v2473 = vunpack.c.h.b16 %v930
    %v2474 = vunpack.c.l.b16 %v931
    %v2475 = vunpack.c.h.b16 %v931
    %v2476 = vunpack.c.l.b16 %v932
    %v2477 = vunpack.c.h.b16 %v932
    %v2478 = vunpack.c.l.b16 %v933
    %v2479 = vunpack.c.h.b16 %v933
    %v2480 = vunpack.c.l.b16 %v934
    %v2481 = vunpack.c.h.b16 %v934
    %v2482 = vunpack.c.l.b16 %v935
    %v2483 = vunpack.c.h.b16 %v935
    %v2484 = vunpack.c.l.b16 %v936
    %v2485 = vunpack.c.h.b16 %v936
    %v2486 = vunpack.c.l.b16 %v937
    %v2487 = vunpack.c.h.b16 %v937
    %v2488 = vunpack.c.l.b16 %v938
    %v2489 = vunpack.c.h.b16 %v938
    %v2490 = vunpack.c.l.b16 %v939
    %v2491 = vunpack.c.h.b16 %v939
    %v2492 = vunpack.c.l.b16 %v940
    %v2493 = vunpack.c.h.b16 %v940
    %v2494 = vunpack.c.l.b16 %v941
    %v2495 = vunpack.c.h.b16 %v941
    %v2496 = vunpack.c.l.b16 %v942
    %v2497 = vunpack.c.h.b16 %v942
    %v2498 = vunpack.c.l.b16 %v943
    %v2499 = vunpack.c.h.b16 %v943
    %v2500 = vunpack.c.l.b16 %v944
    %v2501 = vunpack.c.h.b16 %v944
    %v2502 = vunpack.c.l.b16 %v945
    %v2503 = vunpack.c.h.b16 %v945
    %v2504 = vunpack.c.l.b16 %v946
    %v2505 = vunpack.c.h.b16 %v946
    %v2506 = vunpack.c.l.b16 %v947
    %v2507 = vunpack.c.h.b16 %v947
    %v2508 = vunpack.c.l.b16 %v948
    %v2509 = vunpack.c.h.b16 %v948
    %v2510 = vunpack.c.l.b16 %v949
    %v2511 = vunpack.c.h.b16 %v949
    %v2512 = vunpack.c.l.b16 %v950
    %v2513 = vunpack.c.h.b16 %v950
    %v2514 = vunpack.c.l.b16 %v951
    %v2515 = vunpack.c.h.b16 %v951
    %v2516 = vunpack.c.l.b16 %v952
    %v2517 = vunpack.c.h.b16 %v952
    %v2518 = vunpack.c.l.b16 %v953
    %v2519 = vunpack.c.h.b16 %v953
    %v2520 = vunpack.c.l.b16 %v954
    %v2521 = vunpack.c.h.b16 %v954
    %v2522 = vunpack.c.l.b16 %v955
    %v2523 = vunpack.c.h.b16 %v955
    %v2524 = vunpack.c.l.b16 %v956
    %v2525 = vunpack.c.h.b16 %v956
    %v2526 = vunpack.c.l.b16 %v957
    %v2527 = vunpack.c.h.b16 %v957
    %v2528 = vunpack.c.l.b16 %v958
    %v2529 = vunpack.c.h.b16 %v958
    %v2530 = vunpack.c.l.b16 %v959
    %v2531 = vunpack.c.h.b16 %v959
    %v2532 = vunpack.c.l.b16 %v960
    %v2533 = vunpack.c.h.b16 %v960
    %v2534 = vunpack.c.l.b16 %v961
    %v2535 = vunpack.c.h.b16 %v961
    %v2536 = vunpack.c.l.b16 %v962
    %v2537 = vunpack.c.h.b16 %v962
    %v2538 = vunpack.c.l.b16 %v963
    %v2539 = vunpack.c.h.b16 %v963
    %v2540 = vunpack.c.l.b16 %v964
    %v2541 = vunpack.c.h.b16 %v964
    %v2542 = vunpack.c.l.b16 %v965
    %v2543 = vunpack.c.h.b16 %v965
    %v2544 = vpack.c.b16 %v1528, %v1520
    %v2545 = vpack.c.b16 %v1529, %v1521
    %v2546 = vpack.c.b16 %v1530, %v1522
    %v2547 = vpack.c.b16 %v1531, %v1523
    %v2548 = vpack.c.b16 %v1532, %v1524
    %v2549 = vpack.c.b16 %v1533, %v1525
    %v2550 = vpack.c.b16 %v1534, %v1526
    %v2551 = vpack.c.b16 %v1535, %v1527
    %v2552 = vpack.c.b16 %v1544, %v1536
    %v2553 = vpack.c.b16 %v1545, %v1537
    %v2554 = vpack.c.b16 %v1546, %v1538
    %v2555 = vpack.c.b16 %v1547, %v1539
    %v2556 = vpack.c.b16 %v1548, %v1540
    %v2557 = vpack.c.b16 %v1549, %v1541
    %v2558 = vpack.c.b16 %v1550, %v1542
    %v2559 = vpack.c.b16 %v1551, %v1543
    %v2560 = vpack.c.b16 %v1560, %v1552
    %v2561 = vpack.c.b16 %v1561, %v1553
    %v2562 = vpack.c.b16 %v1562, %v1554
    %v2563 = vpack.c.b16 %v1563, %v1555
    %v2564 = vpack.c.b16 %v1564, %v1556
    %v2565 = vpack.c.b16 %v1565, %v1557
    %v2566 = vpack.c.b16 %v1566, %v1558
    %v2567 = vpack.c.b16 %v1567, %v1559
    %v2568 = vpack.c.b16 %v1576, %v1568
    %v2569 = vpack.c.b16 %v1577, %v1569
    %v2570 = vpack.c.b16 %v1578, %v1570
    %v2571 = vpack.c.b16 %v1579, %v1571
    %v2572 = vpack.c.b16 %v1580, %v1572
    %v2573 = vpack.c.b16 %v1581, %v1573
    %v2574 = vpack.c.b16 %v1582, %v1574
    %v2575 = vpack.c.b16 %v1583, %v1575
    %v2576 = vpack.c.b16 %v1592, %v1584
    %v2577 = vpack.c.b16 %v1593, %v1585
    %v2578 = vpack.c.b16 %v1594, %v1586
    %v2579 = vpack.c.b16 %v1595, %v1587
    %v2580 = vpack.c.b16 %v1596, %v1588
    %v2581 = vpack.c.b16 %v1597, %v1589
    %v2582 = vpack.c.b16 %v1598, %v1590
    %v2583 = vpack.c.b16 %v1599, %v1591
    %v2584 = vpack.c.b16 %v1608, %v1600
    %v2585 = vpack.c.b16 %v1609, %v1601
    %v2586 = vpack.c.b16 %v1610, %v1602
    %v2587 = vpack.c.b16 %v1611, %v1603
    %v2588 = vpack.c.b16 %v1612, %v1604
    %v2589 = vpack.c.b16 %v1613, %v1605
    %v2590 = vpack.c.b16 %v1614, %v1606
    %v2591 = vpack.c.b16 %v1615, %v1607
    %v2592 = vpack.c.b16 %v1624, %v1616
    %v2593 = vpack.c.b16 %v1625, %v1617
    %v2594 = vpack.c.b16 %v1626, %v1618
    %v2595 = vpack.c.b16 %v1627, %v1619
    %v2596 = vpack.c.b16 %v1628, %v1620
    %v2597 = vpack.c.b16 %v1629, %v1621
    %v2598 = vpack.c.b16 %v1630, %v1622
    %v2599 = vpack.c.b16 %v1631, %v1623
    %v2600 = vpack.c.b16 %v1640, %v1632
    %v2601 = vpack.c.b16 %v1641, %v1633
    %v2602 = vpack.c.b16 %v1642, %v1634
    %v2603 = vpack.c.b16 %v1643, %v1635
    %v2604 = vpack.c.b16 %v1644, %v1636
    %v2605 = vpack.c.b16 %v1645, %v1637
    %v2606 = vpack.c.b16 %v1646, %v1638
    %v2607 = vpack.c.b16 %v1647, %v1639
    %v2608 = vpack.c.b16 %v1656, %v1648
    %v2609 = vpack.c.b16 %v1657, %v1649
    %v2610 = vpack.c.b16 %v1658, %v1650
    %v2611 = vpack.c.b16 %v1659, %v1651
    %v2612 = vpack.c.b16 %v1660, %v1652
    %v2613 = vpack.c.b16 %v1661, %v1653
    %v2614 = vpack.c.b16 %v1662, %v1654
    %v2615 = vpack.c.b16 %v1663, %v1655
    %v2616 = vpack.c.b16 %v1672, %v1664
    %v2617 = vpack.c.b16 %v1673, %v1665
    %v2618 = vpack.c.b16 %v1674, %v1666
    %v2619 = vpack.c.b16 %v1675, %v1667
    %v2620 = vpack.c.b16 %v1676, %v1668
    %v2621 = vpack.c.b16 %v1677, %v1669
    %v2622 = vpack.c.b16 %v1678, %v1670
    %v2623 = vpack.c.b16 %v1679, %v1671
    %v2624 = vpack.c.b16 %v1688, %v1680
    %v2625 = vpack.c.b16 %v1689, %v1681
    %v2626 = vpack.c.b16 %v1690, %v1682
    %v2627 = vpack.c.b16 %v1691, %v1683
    %v2628 = vpack.c.b16 %v1692, %v1684
    %v2629 = vpack.c.b16 %v1693, %v1685
    %v2630 = vpack.c.b16 %v1694, %v1686
    %v2631 = vpack.c.b16 %v1695, %v1687
    %v2632 = vpack.c.b16 %v1704, %v1696
    %v2633 = vpack.c.b16 %v1705, %v1697
    %v2634 = vpack.c.b16 %v1706, %v1698
    %v2635 = vpack.c.b16 %v1707, %v1699
    %v2636 = vpack.c.b16 %v1708, %v1700
    %v2637 = vpack.c.b16 %v1709, %v1701
    %v2638 = vpack.c.b16 %v1710, %v1702
    %v2639 = vpack.c.b16 %v1711, %v1703
    %v2640 = vpack.c.b16 %v1720, %v1712
    %v2641 = vpack.c.b16 %v1721, %v1713
    %v2642 = vpack.c.b16 %v1722, %v1714
    %v2643 = vpack.c.b16 %v1723, %v1715
    %v2644 = vpack.c.b16 %v1724, %v1716
    %v2645 = vpack.c.b16 %v1725, %v1717
    %v2646 = vpack.c.b16 %v1726, %v1718
    %v2647 = vpack.c.b16 %v1727, %v1719
    %v2648 = vpack.c.b16 %v1736, %v1728
    %v2649 = vpack.c.b16 %v1737, %v1729
    %v2650 = vpack.c.b16 %v1738, %v1730
    %v2651 = vpack.c.b16 %v1739, %v1731
    %v2652 = vpack.c.b16 %v1740, %v1732
    %v2653 = vpack.c.b16 %v1741, %v1733
    %v2654 = vpack.c.b16 %v1742, %v1734
    %v2655 = vpack.c.b16 %v1743, %v1735
    %v2656 = vpack.c.b16 %v1752, %v1744
    %v2657 = vpack.c.b16 %v1753, %v1745
    %v2658 = vpack.c.b16 %v1754, %v1746
    %v2659 = vpack.c.b16 %v1755, %v1747
    %v2660 = vpack.c.b16 %v1756, %v1748
    %v2661 = vpack.c.b16 %v1757, %v1749
    %v2662 = vpack.c.b16 %v1758, %v1750
    %v2663 = vpack.c.b16 %v1759, %v1751
    %v2664 = vpack.c.b16 %v1768, %v1760
    %v2665 = vpack.c.b16 %v1769, %v1761
    %v2666 = vpack.c.b16 %v1770, %v1762
    %v2667 = vpack.c.b16 %v1771, %v1763
    %v2668 = vpack.c.b16 %v1772, %v1764
    %v2669 = vpack.c.b16 %v1773, %v1765
    %v2670 = vpack.c.b16 %v1774, %v1766
    %v2671 = vpack.c.b16 %v1775, %v1767
    %v2672 = vpack.c.b16 %v1784, %v1776
    %v2673 = vpack.c.b16 %v1785, %v1777
    %v2674 = vpack.c.b16 %v1786, %v1778
    %v2675 = vpack.c.b16 %v1787, %v1779
    %v2676 = vpack.c.b16 %v1788, %v1780
    %v2677 = vpack.c.b16 %v1789, %v1781
    %v2678 = vpack.c.b16 %v1790, %v1782
    %v2679 = vpack.c.b16 %v1791, %v1783
    %v2680 = vpack.c.b16 %v1800, %v1792
    %v2681 = vpack.c.b16 %v1801, %v1793
    %v2682 = vpack.c.b16 %v1802, %v1794
    %v2683 = vpack.c.b16 %v1803, %v1795
    %v2684 = vpack.c.b16 %v1804, %v1796
    %v2685 = vpack.c.b16 %v1805, %v1797
    %v2686 = vpack.c.b16 %v1806, %v1798
    %v2687 = vpack.c.b16 %v1807, %v1799
    %v2688 = vpack.c.b16 %v1816, %v1808
    %v2689 = vpack.c.b16 %v1817, %v1809
    %v2690 = vpack.c.b16 %v1818, %v1810
    %v2691 = vpack.c.b16 %v1819, %v1811
    %v2692 = vpack.c.b16 %v1820, %v1812
    %v2693 = vpack.c.b16 %v1821, %v1813
    %v2694 = vpack.c.b16 %v1822, %v1814
    %v2695 = vpack.c.b16 %v1823, %v1815
    %v2696 = vpack.c.b16 %v1832, %v1824
    %v2697 = vpack.c.b16 %v1833, %v1825
    %v2698 = vpack.c.b16 %v1834, %v1826
    %v2699 = vpack.c.b16 %v1835, %v1827
    %v2700 = vpack.c.b16 %v1836, %v1828
    %v2701 = vpack.c.b16 %v1837, %v1829
    %v2702 = vpack.c.b16 %v1838, %v1830
    %v2703 = vpack.c.b16 %v1839, %v1831
    %v2704 = vpack.c.b16 %v1848, %v1840
    %v2705 = vpack.c.b16 %v1849, %v1841
    %v2706 = vpack.c.b16 %v1850, %v1842
    %v2707 = vpack.c.b16 %v1851, %v1843
    %v2708 = vpack.c.b16 %v1852, %v1844
    %v2709 = vpack.c.b16 %v1853, %v1845
    %v2710 = vpack.c.b16 %v1854, %v1846
    %v2711 = vpack.c.b16 %v1855, %v1847
    %v2712 = vpack.c.b16 %v1864, %v1856
    %v2713 = vpack.c.b16 %v1865, %v1857
    %v2714 = vpack.c.b16 %v1866, %v1858
    %v2715 = vpack.c.b16 %v1867, %v1859
    %v2716 = vpack.c.b16 %v1868, %v1860
    %v2717 = vpack.c.b16 %v1869, %v1861
    %v2718 = vpack.c.b16 %v1870, %v1862
    %v2719 = vpack.c.b16 %v1871, %v1863
    %v2720 = vpack.c.b16 %v1880, %v1872
    %v2721 = vpack.c.b16 %v1881, %v1873
    %v2722 = vpack.c.b16 %v1882, %v1874
    %v2723 = vpack.c.b16 %v1883, %v1875
    %v2724 = vpack.c.b16 %v1884, %v1876
    %v2725 = vpack.c.b16 %v1885, %v1877
    %v2726 = vpack.c.b16 %v1886, %v1878
    %v2727 = vpack.c.b16 %v1887, %v1879
    %v2728 = vpack.c.b16 %v1896, %v1888
    %v2729 = vpack.c.b16 %v1897, %v1889
    %v2730 = vpack.c.b16 %v1898, %v1890
    %v2731 = vpack.c.b16 %v1899, %v1891
    %v2732 = vpack.c.b16 %v1900, %v1892
    %v2733 = vpack.c.b16 %v1901, %v1893
    %v2734 = vpack.c.b16 %v1902, %v1894
    %v2735 = vpack.c.b16 %v1903, %v1895
    %v2736 = vpack.c.b16 %v1912, %v1904
    %v2737 = vpack.c.b16 %v1913, %v1905
    %v2738 = vpack.c.b16 %v1914, %v1906
    %v2739 = vpack.c.b16 %v1915, %v1907
    %v2740 = vpack.c.b16 %v1916, %v1908
    %v2741 = vpack.c.b16 %v1917, %v1909
    %v2742 = vpack.c.b16 %v1918, %v1910
    %v2743 = vpack.c.b16 %v1919, %v1911
    %v2744 = vpack.c.b16 %v1928, %v1920
    %v2745 = vpack.c.b16 %v1929, %v1921
    %v2746 = vpack.c.b16 %v1930, %v1922
    %v2747 = vpack.c.b16 %v1931, %v1923
    %v2748 = vpack.c.b16 %v1932, %v1924
    %v2749 = vpack.c.b16 %v1933, %v1925
    %v2750 = vpack.c.b16 %v1934, %v1926
    %v2751 = vpack.c.b16 %v1935, %v1927
    %v2752 = vpack.c.b16 %v1944, %v1936
    %v2753 = vpack.c.b16 %v1945, %v1937
    %v2754 = vpack.c.b16 %v1946, %v1938
    %v2755 = vpack.c.b16 %v1947, %v1939
    %v2756 = vpack.c.b16 %v1948, %v1940
    %v2757 = vpack.c.b16 %v1949, %v1941
    %v2758 = vpack.c.b16 %v1950, %v1942
    %v2759 = vpack.c.b16 %v1951, %v1943
    %v2760 = vpack.c.b16 %v1960, %v1952
    %v2761 = vpack.c.b16 %v1961, %v1953
    %v2762 = vpack.c.b16 %v1962, %v1954
    %v2763 = vpack.c.b16 %v1963, %v1955
    %v2764 = vpack.c.b16 %v1964, %v1956
    %v2765 = vpack.c.b16 %v1965, %v1957
    %v2766 = vpack.c.b16 %v1966, %v1958
    %v2767 = vpack.c.b16 %v1967, %v1959
    %v2768 = vpack.c.b16 %v1976, %v1968
    %v2769 = vpack.c.b16 %v1977, %v1969
    %v2770 = vpack.c.b16 %v1978, %v1970
    %v2771 = vpack.c.b16 %v1979, %v1971
    %v2772 = vpack.c.b16 %v1980, %v1972
    %v2773 = vpack.c.b16 %v1981, %v1973
    %v2774 = vpack.c.b16 %v1982, %v1974
    %v2775 = vpack.c.b16 %v1983, %v1975
    %v2776 = vpack.c.b16 %v1992, %v1984
    %v2777 = vpack.c.b16 %v1993, %v1985
    %v2778 = vpack.c.b16 %v1994, %v1986
    %v2779 = vpack.c.b16 %v1995, %v1987
    %v2780 = vpack.c.b16 %v1996, %v1988
    %v2781 = vpack.c.b16 %v1997, %v1989
    %v2782 = vpack.c.b16 %v1998, %v1990
    %v2783 = vpack.c.b16 %v1999, %v1991
    %v2784 = vpack.c.b16 %v2008, %v2000
    %v2785 = vpack.c.b16 %v2009, %v2001
    %v2786 = vpack.c.b16 %v2010, %v2002
    %v2787 = vpack.c.b16 %v2011, %v2003
    %v2788 = vpack.c.b16 %v2012, %v2004
    %v2789 = vpack.c.b16 %v2013, %v2005
    %v2790 = vpack.c.b16 %v2014, %v2006
    %v2791 = vpack.c.b16 %v2015, %v2007
    %v2792 = vpack.c.b16 %v2024, %v2016
    %v2793 = vpack.c.b16 %v2025, %v2017
    %v2794 = vpack.c.b16 %v2026, %v2018
    %v2795 = vpack.c.b16 %v2027, %v2019
    %v2796 = vpack.c.b16 %v2028, %v2020
    %v2797 = vpack.c.b16 %v2029, %v2021
    %v2798 = vpack.c.b16 %v2030, %v2022
    %v2799 = vpack.c.b16 %v2031, %v2023
    %v2800 = vpack.c.b16 %v2040, %v2032
    %v2801 = vpack.c.b16 %v2041, %v2033
    %v2802 = vpack.c.b16 %v2042, %v2034
    %v2803 = vpack.c.b16 %v2043, %v2035
    %v2804 = vpack.c.b16 %v2044, %v2036
    %v2805 = vpack.c.b16 %v2045, %v2037
    %v2806 = vpack.c.b16 %v2046, %v2038
    %v2807 = vpack.c.b16 %v2047, %v2039
    %v2808 = vpack.c.b16 %v2056, %v2048
    %v2809 = vpack.c.b16 %v2057, %v2049
    %v2810 = vpack.c.b16 %v2058, %v2050
    %v2811 = vpack.c.b16 %v2059, %v2051
    %v2812 = vpack.c.b16 %v2060, %v2052
    %v2813 = vpack.c.b16 %v2061, %v2053
    %v2814 = vpack.c.b16 %v2062, %v2054
    %v2815 = vpack.c.b16 %v2063, %v2055
    %v2816 = vpack.c.b16 %v2072, %v2064
    %v2817 = vpack.c.b16 %v2073, %v2065
    %v2818 = vpack.c.b16 %v2074, %v2066
    %v2819 = vpack.c.b16 %v2075, %v2067
    %v2820 = vpack.c.b16 %v2076, %v2068
    %v2821 = vpack.c.b16 %v2077, %v2069
    %v2822 = vpack.c.b16 %v2078, %v2070
    %v2823 = vpack.c.b16 %v2079, %v2071
    %v2824 = vpack.c.b16 %v2088, %v2080
    %v2825 = vpack.c.b16 %v2089, %v2081
    %v2826 = vpack.c.b16 %v2090, %v2082
    %v2827 = vpack.c.b16 %v2091, %v2083
    %v2828 = vpack.c.b16 %v2092, %v2084
    %v2829 = vpack.c.b16 %v2093, %v2085
    %v2830 = vpack.c.b16 %v2094, %v2086
    %v2831 = vpack.c.b16 %v2095, %v2087
    %v2832 = vpack.c.b16 %v2104, %v2096
    %v2833 = vpack.c.b16 %v2105, %v2097
    %v2834 = vpack.c.b16 %v2106, %v2098
    %v2835 = vpack.c.b16 %v2107, %v2099
    %v2836 = vpack.c.b16 %v2108, %v2100
    %v2837 = vpack.c.b16 %v2109, %v2101
    %v2838 = vpack.c.b16 %v2110, %v2102
    %v2839 = vpack.c.b16 %v2111, %v2103
    %v2840 = vpack.c.b16 %v2120, %v2112
    %v2841 = vpack.c.b16 %v2121, %v2113
    %v2842 = vpack.c.b16 %v2122, %v2114
    %v2843 = vpack.c.b16 %v2123, %v2115
    %v2844 = vpack.c.b16 %v2124, %v2116
    %v2845 = vpack.c.b16 %v2125, %v2117
    %v2846 = vpack.c.b16 %v2126, %v2118
    %v2847 = vpack.c.b16 %v2127, %v2119
    %v2848 = vpack.c.b16 %v2136, %v2128
    %v2849 = vpack.c.b16 %v2137, %v2129
    %v2850 = vpack.c.b16 %v2138, %v2130
    %v2851 = vpack.c.b16 %v2139, %v2131
    %v2852 = vpack.c.b16 %v2140, %v2132
    %v2853 = vpack.c.b16 %v2141, %v2133
    %v2854 = vpack.c.b16 %v2142, %v2134
    %v2855 = vpack.c.b16 %v2143, %v2135
    %v2856 = vpack.c.b16 %v2152, %v2144
    %v2857 = vpack.c.b16 %v2153, %v2145
    %v2858 = vpack.c.b16 %v2154, %v2146
    %v2859 = vpack.c.b16 %v2155, %v2147
    %v2860 = vpack.c.b16 %v2156, %v2148
    %v2861 = vpack.c.b16 %v2157, %v2149
    %v2862 = vpack.c.b16 %v2158, %v2150
    %v2863 = vpack.c.b16 %v2159, %v2151
    %v2864 = vpack.c.b16 %v2168, %v2160
    %v2865 = vpack.c.b16 %v2169, %v2161
    %v2866 = vpack.c.b16 %v2170, %v2162
    %v2867 = vpack.c.b16 %v2171, %v2163
    %v2868 = vpack.c.b16 %v2172, %v2164
    %v2869 = vpack.c.b16 %v2173, %v2165
    %v2870 = vpack.c.b16 %v2174, %v2166
    %v2871 = vpack.c.b16 %v2175, %v2167
    %v2872 = vpack.c.b16 %v2184, %v2176
    %v2873 = vpack.c.b16 %v2185, %v2177
    %v2874 = vpack.c.b16 %v2186, %v2178
    %v2875 = vpack.c.b16 %v2187, %v2179
    %v2876 = vpack.c.b16 %v2188, %v2180
    %v2877 = vpack.c.b16 %v2189, %v2181
    %v2878 = vpack.c.b16 %v2190, %v2182
    %v2879 = vpack.c.b16 %v2191, %v2183
    %v2880 = vpack.c.b16 %v2200, %v2192
    %v2881 = vpack.c.b16 %v2201, %v2193
    %v2882 = vpack.c.b16 %v2202, %v2194
    %v2883 = vpack.c.b16 %v2203, %v2195
    %v2884 = vpack.c.b16 %v2204, %v2196
    %v2885 = vpack.c.b16 %v2205, %v2197
    %v2886 = vpack.c.b16 %v2206, %v2198
    %v2887 = vpack.c.b16 %v2207, %v2199
    %v2888 = vpack.c.b16 %v2216, %v2208
    %v2889 = vpack.c.b16 %v2217, %v2209
    %v2890 = vpack.c.b16 %v2218, %v2210
    %v2891 = vpack.c.b16 %v2219, %v2211
    %v2892 = vpack.c.b16 %v2220, %v2212
    %v2893 = vpack.c.b16 %v2221, %v2213
    %v2894 = vpack.c.b16 %v2222, %v2214
    %v2895 = vpack.c.b16 %v2223, %v2215
    %v2896 = vpack.c.b16 %v2232, %v2224
    %v2897 = vpack.c.b16 %v2233, %v2225
    %v2898 = vpack.c.b16 %v2234, %v2226
    %v2899 = vpack.c.b16 %v2235, %v2227
    %v2900 = vpack.c.b16 %v2236, %v2228
    %v2901 = vpack.c.b16 %v2237, %v2229
    %v2902 = vpack.c.b16 %v2238, %v2230
    %v2903 = vpack.c.b16 %v2239, %v2231
    %v2904 = vpack.c.b16 %v2248, %v2240
    %v2905 = vpack.c.b16 %v2249, %v2241
    %v2906 = vpack.c.b16 %v2250, %v2242
    %v2907 = vpack.c.b16 %v2251, %v2243
    %v2908 = vpack.c.b16 %v2252, %v2244
    %v2909 = vpack.c.b16 %v2253, %v2245
    %v2910 = vpack.c.b16 %v2254, %v2246
    %v2911 = vpack.c.b16 %v2255, %v2247
    %v2912 = vpack.c.b16 %v2264, %v2256
    %v2913 = vpack.c.b16 %v2265, %v2257
    %v2914 = vpack.c.b16 %v2266, %v2258
    %v2915 = vpack.c.b16 %v2267, %v2259
    %v2916 = vpack.c.b16 %v2268, %v2260
    %v2917 = vpack.c.b16 %v2269, %v2261
    %v2918 = vpack.c.b16 %v2270, %v2262
    %v2919 = vpack.c.b16 %v2271, %v2263
    %v2920 = vpack.c.b16 %v2280, %v2272
    %v2921 = vpack.c.b16 %v2281, %v2273
    %v2922 = vpack.c.b16 %v2282, %v2274
    %v2923 = vpack.c.b16 %v2283, %v2275
    %v2924 = vpack.c.b16 %v2284, %v2276
    %v2925 = vpack.c.b16 %v2285, %v2277
    %v2926 = vpack.c.b16 %v2286, %v2278
    %v2927 = vpack.c.b16 %v2287, %v2279
    %v2928 = vpack.c.b16 %v2296, %v2288
    %v2929 = vpack.c.b16 %v2297, %v2289
    %v2930 = vpack.c.b16 %v2298, %v2290
    %v2931 = vpack.c.b16 %v2299, %v2291
    %v2932 = vpack.c.b16 %v2300, %v2292
    %v2933 = vpack.c.b16 %v2301, %v2293
    %v2934 = vpack.c.b16 %v2302, %v2294
    %v2935 = vpack.c.b16 %v2303, %v2295
    %v2936 = vpack.c.b16 %v2312, %v2304
    %v2937 = vpack.c.b16 %v2313, %v2305
    %v2938 = vpack.c.b16 %v2314, %v2306
    %v2939 = vpack.c.b16 %v2315, %v2307
    %v2940 = vpack.c.b16 %v2316, %v2308
    %v2941 = vpack.c.b16 %v2317, %v2309
    %v2942 = vpack.c.b16 %v2318, %v2310
    %v2943 = vpack.c.b16 %v2319, %v2311
    %v2944 = vpack.c.b16 %v2328, %v2320
    %v2945 = vpack.c.b16 %v2329, %v2321
    %v2946 = vpack.c.b16 %v2330, %v2322
    %v2947 = vpack.c.b16 %v2331, %v2323
    %v2948 = vpack.c.b16 %v2332, %v2324
    %v2949 = vpack.c.b16 %v2333, %v2325
    %v2950 = vpack.c.b16 %v2334, %v2326
    %v2951 = vpack.c.b16 %v2335, %v2327
    %v2952 = vpack.c.b16 %v2344, %v2336
    %v2953 = vpack.c.b16 %v2345, %v2337
    %v2954 = vpack.c.b16 %v2346, %v2338
    %v2955 = vpack.c.b16 %v2347, %v2339
    %v2956 = vpack.c.b16 %v2348, %v2340
    %v2957 = vpack.c.b16 %v2349, %v2341
    %v2958 = vpack.c.b16 %v2350, %v2342
    %v2959 = vpack.c.b16 %v2351, %v2343
    %v2960 = vpack.c.b16 %v2360, %v2352
    %v2961 = vpack.c.b16 %v2361, %v2353
    %v2962 = vpack.c.b16 %v2362, %v2354
    %v2963 = vpack.c.b16 %v2363, %v2355
    %v2964 = vpack.c.b16 %v2364, %v2356
    %v2965 = vpack.c.b16 %v2365, %v2357
    %v2966 = vpack.c.b16 %v2366, %v2358
    %v2967 = vpack.c.b16 %v2367, %v2359
    %v2968 = vpack.c.b16 %v2376, %v2368
    %v2969 = vpack.c.b16 %v2377, %v2369
    %v2970 = vpack.c.b16 %v2378, %v2370
    %v2971 = vpack.c.b16 %v2379, %v2371
    %v2972 = vpack.c.b16 %v2380, %v2372
    %v2973 = vpack.c.b16 %v2381, %v2373
    %v2974 = vpack.c.b16 %v2382, %v2374
    %v2975 = vpack.c.b16 %v2383, %v2375
    %v2976 = vpack.c.b16 %v2392, %v2384
    %v2977 = vpack.c.b16 %v2393, %v2385
    %v2978 = vpack.c.b16 %v2394, %v2386
    %v2979 = vpack.c.b16 %v2395, %v2387
    %v2980 = vpack.c.b16 %v2396, %v2388
    %v2981 = vpack.c.b16 %v2397, %v2389
    %v2982 = vpack.c.b16 %v2398, %v2390
    %v2983 = vpack.c.b16 %v2399, %v2391
    %v2984 = vpack.c.b16 %v2408, %v2400
    %v2985 = vpack.c.b16 %v2409, %v2401
    %v2986 = vpack.c.b16 %v2410, %v2402
    %v2987 = vpack.c.b16 %v2411, %v2403
    %v2988 = vpack.c.b16 %v2412, %v2404
    %v2989 = vpack.c.b16 %v2413, %v2405
    %v2990 = vpack.c.b16 %v2414, %v2406
    %v2991 = vpack.c.b16 %v2415, %v2407
    %v2992 = vpack.c.b16 %v2424, %v2416
    %v2993 = vpack.c.b16 %v2425, %v2417
    %v2994 = vpack.c.b16 %v2426, %v2418
    %v2995 = vpack.c.b16 %v2427, %v2419
    %v2996 = vpack.c.b16 %v2428, %v2420
    %v2997 = vpack.c.b16 %v2429, %v2421
    %v2998 = vpack.c.b16 %v2430, %v2422
    %v2999 = vpack.c.b16 %v2431, %v2423
    %v3000 = vpack.c.b16 %v2440, %v2432
    %v3001 = vpack.c.b16 %v2441, %v2433
    %v3002 = vpack.c.b16 %v2442, %v2434
    %v3003 = vpack.c.b16 %v2443, %v2435
    %v3004 = vpack.c.b16 %v2444, %v2436
    %v3005 = vpack.c.b16 %v2445, %v2437
    %v3006 = vpack.c.b16 %v2446, %v2438
    %v3007 = vpack.c.b16 %v2447, %v2439
    %v3008 = vpack.c.b16 %v2456, %v2448
    %v3009 = vpack.c.b16 %v2457, %v2449
    %v3010 = vpack.c.b16 %v2458, %v2450
    %v3011 = vpack.c.b16 %v2459, %v2451
    %v3012 = vpack.c.b16 %v2460, %v2452
    %v3013 = vpack.c.b16 %v2461, %v2453
    %v3014 = vpack.c.b16 %v2462, %v2454
    %v3015 = vpack.c.b16 %v2463, %v2455
    %v3016 = vpack.c.b16 %v2472, %v2464
    %v3017 = vpack.c.b16 %v2473, %v2465
    %v3018 = vpack.c.b16 %v2474, %v2466
    %v3019 = vpack.c.b16 %v2475, %v2467
    %v3020 = vpack.c.b16 %v2476, %v2468
    %v3021 = vpack.c.b16 %v2477, %v2469
    %v3022 = vpack.c.b16 %v2478, %v2470
    %v3023 = vpack.c.b16 %v2479, %v2471
    %v3024 = vpack.c.b16 %v2488, %v2480
    %v3025 = vpack.c.b16 %v2489, %v2481
    %v3026 = vpack.c.b16 %v2490, %v2482
    %v3027 = vpack.c.b16 %v2491, %v2483
    %v3028 = vpack.c.b16 %v2492, %v2484
    %v3029 = vpack.c.b16 %v2493, %v2485
    %v3030 = vpack.c.b16 %v2494, %v2486
    %v3031 = vpack.c.b16 %v2495, %v2487
    %v3032 = vpack.c.b16 %v2504, %v2496
    %v3033 = vpack.c.b16 %v2505, %v2497
    %v3034 = vpack.c.b16 %v2506, %v2498
    %v3035 = vpack.c.b16 %v2507, %v2499
    %v3036 = vpack.c.b16 %v2508, %v2500
    %v3037 = vpack.c.b16 %v2509, %v2501
    %v3038 = vpack.c.b16 %v2510, %v2502
    %v3039 = vpack.c.b16 %v2511, %v2503
    %v3040 = vpack.c.b16 %v2520, %v2512
    %v3041 = vpack.c.b16 %v2521, %v2513
    %v3042 = vpack.c.b16 %v2522, %v2514
    %v3043 = vpack.c.b16 %v2523, %v2515
    %v3044 = vpack.c.b16 %v2524, %v2516
    %v3045 = vpack.c.b16 %v2525, %v2517
    %v3046 = vpack.c.b16 %v2526, %v2518
    %v3047 = vpack.c.b16 %v2527, %v2519
    %v3048 = vpack.c.b16 %v2536, %v2528
    %v3049 = vpack.c.b16 %v2537, %v2529
    %v3050 = vpack.c.b16 %v2538, %v2530
    %v3051 = vpack.c.b16 %v2539, %v2531
    %v3052 = vpack.c.b16 %v2540, %v2532
    %v3053 = vpack.c.b16 %v2541, %v2533
    %v3054 = vpack.c.b16 %v2542, %v2534
    %v3055 = vpack.c.b16 %v2543, %v2535
    %3568 = vmatprep.subr.bf16.mxu0 %v2601
    %3569 = vmatpush1.bf16.msra.mxu0 %v2600
    %3570 = vmatprep.subr.bf16.mxu0 %v2593
    %3571 = vmatpush1.bf16.msra.mxu0 %v2592
    %3572 = vmatprep.subr.bf16.mxu0 %v2585
    %3573 = vmatpush1.bf16.msra.mxu0 %v2584
    %3574 = vmatprep.subr.bf16.mxu0 %v2577
    %3575 = vmatpush1.bf16.msra.mxu0 %v2576
    %3576 = vmatprep.subr.bf16.mxu0 %v2569
    %3577 = vmatpush1.bf16.msra.mxu0 %v2568
    %3578 = vmatprep.subr.bf16.mxu0 %v2561
    %3579 = vmatpush1.bf16.msra.mxu0 %v2560
    %3580 = vmatprep.subr.bf16.mxu0 %v2553
    %3581 = vmatpush1.bf16.msra.mxu0 %v2552
    %3582 = vmatprep.subr.bf16.mxu0 %v2545
    %3583 = vmatpush1.bf16.msra.mxu0 %v2544
    %3584 = vmatprep.subr.bf16.mxu0 %v2665
    %3585 = vmatpush2.bf16.msra.mxu0 %v2664
    %3586 = vmatprep.subr.bf16.mxu0 %v2657
    %3587 = vmatpush2.bf16.msra.mxu0 %v2656
    %3588 = vmatprep.subr.bf16.mxu0 %v2649
    %3589 = vmatpush2.bf16.msra.mxu0 %v2648
    %3590 = vmatprep.subr.bf16.mxu0 %v2641
    %3591 = vmatpush2.bf16.msra.mxu0 %v2640
    %3592 = vmatprep.subr.bf16.mxu0 %v2633
    %3593 = vmatpush2.bf16.msra.mxu0 %v2632
    %3594 = vmatprep.subr.bf16.mxu0 %v2625
    %3595 = vmatpush2.bf16.msra.mxu0 %v2624
    %3596 = vmatprep.subr.bf16.mxu0 %v2617
    %3597 = vmatpush2.bf16.msra.mxu0 %v2616
    %3598 = vmatprep.subr.bf16.mxu0 %v2609
    %3599 = vmatpush2.bf16.msra.mxu0 %v2608
    %3600 = vmatprep.mubr.bf16.mxu0 %v447
    %3601 = vmatmul.mubr.bf16.gmra.mxu0 %v446
    %v3602 = vpop.f32.mrf.mxu0
    %v3603 = vadd.f32 %v971, %v3602
    %v3604 = vpop.f32.mrf.mxu0
    %v3605 = vadd.f32 %v975, %v3604
    %v3606 = vpop.f32.mrf.mxu0
    %v3607 = vpop.f32.mrf.mxu0
    %3608 = vdwg.mxu0
    %3609 = vmatprep.subr.bf16.mxu0 %v2729
    %3610 = vmatpush1.bf16.msra.mxu0 %v2728
    %3611 = vmatprep.subr.bf16.mxu0 %v2721
    %3612 = vmatpush1.bf16.msra.mxu0 %v2720
    %3613 = vmatprep.subr.bf16.mxu0 %v2713
    %3614 = vmatpush1.bf16.msra.mxu0 %v2712
    %3615 = vmatprep.subr.bf16.mxu0 %v2705
    %3616 = vmatpush1.bf16.msra.mxu0 %v2704
    %3617 = vmatprep.subr.bf16.mxu0 %v2697
    %3618 = vmatpush1.bf16.msra.mxu0 %v2696
    %3619 = vmatprep.subr.bf16.mxu0 %v2689
    %3620 = vmatpush1.bf16.msra.mxu0 %v2688
    %3621 = vmatprep.subr.bf16.mxu0 %v2681
    %3622 = vmatpush1.bf16.msra.mxu0 %v2680
    %3623 = vmatprep.subr.bf16.mxu0 %v2673
    %3624 = vmatpush1.bf16.msra.mxu0 %v2672
    %3625 = vmatprep.subr.bf16.mxu0 %v2793
    %3626 = vmatpush2.bf16.msra.mxu0 %v2792
    %3627 = vmatprep.subr.bf16.mxu0 %v2785
    %3628 = vmatpush2.bf16.msra.mxu0 %v2784
    %3629 = vmatprep.subr.bf16.mxu0 %v2777
    %3630 = vmatpush2.bf16.msra.mxu0 %v2776
    %3631 = vmatprep.subr.bf16.mxu0 %v2769
    %3632 = vmatpush2.bf16.msra.mxu0 %v2768
    %3633 = vmatprep.subr.bf16.mxu0 %v2761
    %3634 = vmatpush2.bf16.msra.mxu0 %v2760
    %3635 = vmatprep.subr.bf16.mxu0 %v2753
    %3636 = vmatpush2.bf16.msra.mxu0 %v2752
    %3637 = vmatprep.subr.bf16.mxu0 %v2745
    %3638 = vmatpush2.bf16.msra.mxu0 %v2744
    %3639 = vmatprep.subr.bf16.mxu0 %v2737
    %3640 = vmatpush2.bf16.msra.mxu0 %v2736
    %3641 = vmatprep.mubr.bf16.mxu0 %v449
    %3642 = vmatmul.mubr.bf16.gmra.mxu0 %v448
    %v3643 = vpop.f32.mrf.mxu0
    %v3644 = vadd.f32 %v3603, %v3643
    %v3645 = vpop.f32.mrf.mxu0
    %v3646 = vadd.f32 %v3605, %v3645
    %v3647 = vpop.f32.mrf.mxu0
    %v3648 = vpop.f32.mrf.mxu0
    %3649 = vdwg.mxu0
    %3650 = vmatprep.subr.bf16.mxu0 %v2857
    %3651 = vmatpush1.bf16.msra.mxu0 %v2856
    %3652 = vmatprep.subr.bf16.mxu0 %v2849
    %3653 = vmatpush1.bf16.msra.mxu0 %v2848
    %3654 = vmatprep.subr.bf16.mxu0 %v2841
    %3655 = vmatpush1.bf16.msra.mxu0 %v2840
    %3656 = vmatprep.subr.bf16.mxu0 %v2833
    %3657 = vmatpush1.bf16.msra.mxu0 %v2832
    %3658 = vmatprep.subr.bf16.mxu0 %v2825
    %3659 = vmatpush1.bf16.msra.mxu0 %v2824
    %3660 = vmatprep.subr.bf16.mxu0 %v2817
    %3661 = vmatpush1.bf16.msra.mxu0 %v2816
    %3662 = vmatprep.subr.bf16.mxu0 %v2809
    %3663 = vmatpush1.bf16.msra.mxu0 %v2808
    %3664 = vmatprep.subr.bf16.mxu0 %v2801
    %3665 = vmatpush1.bf16.msra.mxu0 %v2800
    %3666 = vmatprep.subr.bf16.mxu0 %v2921
    %3667 = vmatpush2.bf16.msra.mxu0 %v2920
    %3668 = vmatprep.subr.bf16.mxu0 %v2913
    %3669 = vmatpush2.bf16.msra.mxu0 %v2912
    %3670 = vmatprep.subr.bf16.mxu0 %v2905
    %3671 = vmatpush2.bf16.msra.mxu0 %v2904
    %3672 = vmatprep.subr.bf16.mxu0 %v2897
    %3673 = vmatpush2.bf16.msra.mxu0 %v2896
    %3674 = vmatprep.subr.bf16.mxu0 %v2889
    %3675 = vmatpush2.bf16.msra.mxu0 %v2888
    %3676 = vmatprep.subr.bf16.mxu0 %v2881
    %3677 = vmatpush2.bf16.msra.mxu0 %v2880
    %3678 = vmatprep.subr.bf16.mxu0 %v2873
    %3679 = vmatpush2.bf16.msra.mxu0 %v2872
    %3680 = vmatprep.subr.bf16.mxu0 %v2865
    %3681 = vmatpush2.bf16.msra.mxu0 %v2864
    %3682 = vmatprep.mubr.bf16.mxu0 %v451
    %3683 = vmatmul.mubr.bf16.gmra.mxu0 %v450
    %v3684 = vpop.f32.mrf.mxu0
    %v3685 = vadd.f32 %v3644, %v3684
    %v3686 = vpop.f32.mrf.mxu0
    %v3687 = vadd.f32 %v3646, %v3686
    %v3688 = vpop.f32.mrf.mxu0
    %v3689 = vpop.f32.mrf.mxu0
    %3690 = vdwg.mxu0
    %3691 = vmatprep.subr.bf16.mxu0 %v2985
    %3692 = vmatpush1.bf16.msra.mxu0 %v2984
    %3693 = vmatprep.subr.bf16.mxu0 %v2977
    %3694 = vmatpush1.bf16.msra.mxu0 %v2976
    %3695 = vmatprep.subr.bf16.mxu0 %v2969
    %3696 = vmatpush1.bf16.msra.mxu0 %v2968
    %3697 = vmatprep.subr.bf16.mxu0 %v2961
    %3698 = vmatpush1.bf16.msra.mxu0 %v2960
    %3699 = vmatprep.subr.bf16.mxu0 %v2953
    %3700 = vmatpush1.bf16.msra.mxu0 %v2952
    %3701 = vmatprep.subr.bf16.mxu0 %v2945
    %3702 = vmatpush1.bf16.msra.mxu0 %v2944
    %3703 = vmatprep.subr.bf16.mxu0 %v2937
    %3704 = vmatpush1.bf16.msra.mxu0 %v2936
    %3705 = vmatprep.subr.bf16.mxu0 %v2929
    %3706 = vmatpush1.bf16.msra.mxu0 %v2928
    %3707 = vmatprep.subr.bf16.mxu0 %v3049
    %3708 = vmatpush2.bf16.msra.mxu0 %v3048
    %3709 = vmatprep.subr.bf16.mxu0 %v3041
    %3710 = vmatpush2.bf16.msra.mxu0 %v3040
    %3711 = vmatprep.subr.bf16.mxu0 %v3033
    %3712 = vmatpush2.bf16.msra.mxu0 %v3032
    %3713 = vmatprep.subr.bf16.mxu0 %v3025
    %3714 = vmatpush2.bf16.msra.mxu0 %v3024
    %3715 = vmatprep.subr.bf16.mxu0 %v3017
    %3716 = vmatpush2.bf16.msra.mxu0 %v3016
    %3717 = vmatprep.subr.bf16.mxu0 %v3009
    %3718 = vmatpush2.bf16.msra.mxu0 %v3008
    %3719 = vmatprep.subr.bf16.mxu0 %v3001
    %3720 = vmatpush2.bf16.msra.mxu0 %v3000
    %3721 = vmatprep.subr.bf16.mxu0 %v2993
    %3722 = vmatpush2.bf16.msra.mxu0 %v2992
    %3723 = vmatprep.mubr.bf16.mxu0 %v453
    %3724 = vmatmul.mubr.bf16.gmra.mxu0 %v452
    %v3725 = vpop.f32.mrf.mxu0
    %v3726 = vadd.f32 %v3685, %v3725
    %v3727 = vpop.f32.mrf.mxu0
    %v3728 = vadd.f32 %v3687, %v3727
    %v3729 = vpop.f32.mrf.mxu0
    %v3730 = vpop.f32.mrf.mxu0
    %3731 = vdwg.mxu0
    %3732 = vmatprep.subr.bf16.mxu0 %v2603
    %3733 = vmatpush1.bf16.msra.mxu0 %v2602
    %3734 = vmatprep.subr.bf16.mxu0 %v2595
    %3735 = vmatpush1.bf16.msra.mxu0 %v2594
    %3736 = vmatprep.subr.bf16.mxu0 %v2587
    %3737 = vmatpush1.bf16.msra.mxu0 %v2586
    %3738 = vmatprep.subr.bf16.mxu0 %v2579
    %3739 = vmatpush1.bf16.msra.mxu0 %v2578
    %3740 = vmatprep.subr.bf16.mxu0 %v2571
    %3741 = vmatpush1.bf16.msra.mxu0 %v2570
    %3742 = vmatprep.subr.bf16.mxu0 %v2563
    %3743 = vmatpush1.bf16.msra.mxu0 %v2562
    %3744 = vmatprep.subr.bf16.mxu0 %v2555
    %3745 = vmatpush1.bf16.msra.mxu0 %v2554
    %3746 = vmatprep.subr.bf16.mxu0 %v2547
    %3747 = vmatpush1.bf16.msra.mxu0 %v2546
    %3748 = vmatprep.subr.bf16.mxu0 %v2667
    %3749 = vmatpush2.bf16.msra.mxu0 %v2666
    %3750 = vmatprep.subr.bf16.mxu0 %v2659
    %3751 = vmatpush2.bf16.msra.mxu0 %v2658
    %3752 = vmatprep.subr.bf16.mxu0 %v2651
    %3753 = vmatpush2.bf16.msra.mxu0 %v2650
    %3754 = vmatprep.subr.bf16.mxu0 %v2643
    %3755 = vmatpush2.bf16.msra.mxu0 %v2642
    %3756 = vmatprep.subr.bf16.mxu0 %v2635
    %3757 = vmatpush2.bf16.msra.mxu0 %v2634
    %3758 = vmatprep.subr.bf16.mxu0 %v2627
    %3759 = vmatpush2.bf16.msra.mxu0 %v2626
    %3760 = vmatprep.subr.bf16.mxu0 %v2619
    %3761 = vmatpush2.bf16.msra.mxu0 %v2618
    %3762 = vmatprep.subr.bf16.mxu0 %v2611
    %3763 = vmatpush2.bf16.msra.mxu0 %v2610
    %3764 = vmatprep.mubr.bf16.mxu0 %v447
    %3765 = vmatmul.mubr.bf16.gmra.mxu0 %v446
    %v3766 = vpop.f32.mrf.mxu0
    %v3767 = vadd.f32 %v979, %v3766
    %v3768 = vpop.f32.mrf.mxu0
    %v3769 = vadd.f32 %v983, %v3768
    %v3770 = vpop.f32.mrf.mxu0
    %v3771 = vpop.f32.mrf.mxu0
    %3772 = vdwg.mxu0
    %3773 = vmatprep.subr.bf16.mxu0 %v2731
    %3774 = vmatpush1.bf16.msra.mxu0 %v2730
    %3775 = vmatprep.subr.bf16.mxu0 %v2723
    %3776 = vmatpush1.bf16.msra.mxu0 %v2722
    %3777 = vmatprep.subr.bf16.mxu0 %v2715
    %3778 = vmatpush1.bf16.msra.mxu0 %v2714
    %3779 = vmatprep.subr.bf16.mxu0 %v2707
    %3780 = vmatpush1.bf16.msra.mxu0 %v2706
    %3781 = vmatprep.subr.bf16.mxu0 %v2699
    %3782 = vmatpush1.bf16.msra.mxu0 %v2698
    %3783 = vmatprep.subr.bf16.mxu0 %v2691
    %3784 = vmatpush1.bf16.msra.mxu0 %v2690
    %3785 = vmatprep.subr.bf16.mxu0 %v2683
    %3786 = vmatpush1.bf16.msra.mxu0 %v2682
    %3787 = vmatprep.subr.bf16.mxu0 %v2675
    %3788 = vmatpush1.bf16.msra.mxu0 %v2674
    %3789 = vmatprep.subr.bf16.mxu0 %v2795
    %3790 = vmatpush2.bf16.msra.mxu0 %v2794
    %3791 = vmatprep.subr.bf16.mxu0 %v2787
    %3792 = vmatpush2.bf16.msra.mxu0 %v2786
    %3793 = vmatprep.subr.bf16.mxu0 %v2779
    %3794 = vmatpush2.bf16.msra.mxu0 %v2778
    %3795 = vmatprep.subr.bf16.mxu0 %v2771
    %3796 = vmatpush2.bf16.msra.mxu0 %v2770
    %3797 = vmatprep.subr.bf16.mxu0 %v2763
    %3798 = vmatpush2.bf16.msra.mxu0 %v2762
    %3799 = vmatprep.subr.bf16.mxu0 %v2755
    %3800 = vmatpush2.bf16.msra.mxu0 %v2754
    %3801 = vmatprep.subr.bf16.mxu0 %v2747
    %3802 = vmatpush2.bf16.msra.mxu0 %v2746
    %3803 = vmatprep.subr.bf16.mxu0 %v2739
    %3804 = vmatpush2.bf16.msra.mxu0 %v2738
    %3805 = vmatprep.mubr.bf16.mxu0 %v449
    %3806 = vmatmul.mubr.bf16.gmra.mxu0 %v448
    %v3807 = vpop.f32.mrf.mxu0
    %v3808 = vadd.f32 %v3767, %v3807
    %v3809 = vpop.f32.mrf.mxu0
    %v3810 = vadd.f32 %v3769, %v3809
    %v3811 = vpop.f32.mrf.mxu0
    %v3812 = vpop.f32.mrf.mxu0
    %3813 = vdwg.mxu0
    %3814 = vmatprep.subr.bf16.mxu0 %v2859
    %3815 = vmatpush1.bf16.msra.mxu0 %v2858
    %3816 = vmatprep.subr.bf16.mxu0 %v2851
    %3817 = vmatpush1.bf16.msra.mxu0 %v2850
    %3818 = vmatprep.subr.bf16.mxu0 %v2843
    %3819 = vmatpush1.bf16.msra.mxu0 %v2842
    %3820 = vmatprep.subr.bf16.mxu0 %v2835
    %3821 = vmatpush1.bf16.msra.mxu0 %v2834
    %3822 = vmatprep.subr.bf16.mxu0 %v2827
    %3823 = vmatpush1.bf16.msra.mxu0 %v2826
    %3824 = vmatprep.subr.bf16.mxu0 %v2819
    %3825 = vmatpush1.bf16.msra.mxu0 %v2818
    %3826 = vmatprep.subr.bf16.mxu0 %v2811
    %3827 = vmatpush1.bf16.msra.mxu0 %v2810
    %3828 = vmatprep.subr.bf16.mxu0 %v2803
    %3829 = vmatpush1.bf16.msra.mxu0 %v2802
    %3830 = vmatprep.subr.bf16.mxu0 %v2923
    %3831 = vmatpush2.bf16.msra.mxu0 %v2922
    %3832 = vmatprep.subr.bf16.mxu0 %v2915
    %3833 = vmatpush2.bf16.msra.mxu0 %v2914
    %3834 = vmatprep.subr.bf16.mxu0 %v2907
    %3835 = vmatpush2.bf16.msra.mxu0 %v2906
    %3836 = vmatprep.subr.bf16.mxu0 %v2899
    %3837 = vmatpush2.bf16.msra.mxu0 %v2898
    %3838 = vmatprep.subr.bf16.mxu0 %v2891
    %3839 = vmatpush2.bf16.msra.mxu0 %v2890
    %3840 = vmatprep.subr.bf16.mxu0 %v2883
    %3841 = vmatpush2.bf16.msra.mxu0 %v2882
    %3842 = vmatprep.subr.bf16.mxu0 %v2875
    %3843 = vmatpush2.bf16.msra.mxu0 %v2874
    %3844 = vmatprep.subr.bf16.mxu0 %v2867
    %3845 = vmatpush2.bf16.msra.mxu0 %v2866
    %3846 = vmatprep.mubr.bf16.mxu0 %v451
    %3847 = vmatmul.mubr.bf16.gmra.mxu0 %v450
    %v3848 = vpop.f32.mrf.mxu0
    %v3849 = vadd.f32 %v3808, %v3848
    %v3850 = vpop.f32.mrf.mxu0
    %v3851 = vadd.f32 %v3810, %v3850
    %v3852 = vpop.f32.mrf.mxu0
    %v3853 = vpop.f32.mrf.mxu0
    %3854 = vdwg.mxu0
    %3855 = vmatprep.subr.bf16.mxu0 %v2987
    %3856 = vmatpush1.bf16.msra.mxu0 %v2986
    %3857 = vmatprep.subr.bf16.mxu0 %v2979
    %3858 = vmatpush1.bf16.msra.mxu0 %v2978
    %3859 = vmatprep.subr.bf16.mxu0 %v2971
    %3860 = vmatpush1.bf16.msra.mxu0 %v2970
    %3861 = vmatprep.subr.bf16.mxu0 %v2963
    %3862 = vmatpush1.bf16.msra.mxu0 %v2962
    %3863 = vmatprep.subr.bf16.mxu0 %v2955
    %3864 = vmatpush1.bf16.msra.mxu0 %v2954
    %3865 = vmatprep.subr.bf16.mxu0 %v2947
    %3866 = vmatpush1.bf16.msra.mxu0 %v2946
    %3867 = vmatprep.subr.bf16.mxu0 %v2939
    %3868 = vmatpush1.bf16.msra.mxu0 %v2938
    %3869 = vmatprep.subr.bf16.mxu0 %v2931
    %3870 = vmatpush1.bf16.msra.mxu0 %v2930
    %3871 = vmatprep.subr.bf16.mxu0 %v3051
    %3872 = vmatpush2.bf16.msra.mxu0 %v3050
    %3873 = vmatprep.subr.bf16.mxu0 %v3043
    %3874 = vmatpush2.bf16.msra.mxu0 %v3042
    %3875 = vmatprep.subr.bf16.mxu0 %v3035
    %3876 = vmatpush2.bf16.msra.mxu0 %v3034
    %3877 = vmatprep.subr.bf16.mxu0 %v3027
    %3878 = vmatpush2.bf16.msra.mxu0 %v3026
    %3879 = vmatprep.subr.bf16.mxu0 %v3019
    %3880 = vmatpush2.bf16.msra.mxu0 %v3018
    %3881 = vmatprep.subr.bf16.mxu0 %v3011
    %3882 = vmatpush2.bf16.msra.mxu0 %v3010
    %3883 = vmatprep.subr.bf16.mxu0 %v3003
    %3884 = vmatpush2.bf16.msra.mxu0 %v3002
    %3885 = vmatprep.subr.bf16.mxu0 %v2995
    %3886 = vmatpush2.bf16.msra.mxu0 %v2994
    %3887 = vmatprep.mubr.bf16.mxu0 %v453
    %3888 = vmatmul.mubr.bf16.gmra.mxu0 %v452
    %v3889 = vpop.f32.mrf.mxu0
    %v3890 = vadd.f32 %v3849, %v3889
    %v3891 = vpop.f32.mrf.mxu0
    %v3892 = vadd.f32 %v3851, %v3891
    %v3893 = vpop.f32.mrf.mxu0
    %v3894 = vpop.f32.mrf.mxu0
    %3895 = vdwg.mxu0
    %3896 = vmatprep.subr.bf16.mxu0 %v2605
    %3897 = vmatpush1.bf16.msra.mxu0 %v2604
    %3898 = vmatprep.subr.bf16.mxu0 %v2597
    %3899 = vmatpush1.bf16.msra.mxu0 %v2596
    %3900 = vmatprep.subr.bf16.mxu0 %v2589
    %3901 = vmatpush1.bf16.msra.mxu0 %v2588
    %3902 = vmatprep.subr.bf16.mxu0 %v2581
    %3903 = vmatpush1.bf16.msra.mxu0 %v2580
    %3904 = vmatprep.subr.bf16.mxu0 %v2573
    %3905 = vmatpush1.bf16.msra.mxu0 %v2572
    %3906 = vmatprep.subr.bf16.mxu0 %v2565
    %3907 = vmatpush1.bf16.msra.mxu0 %v2564
    %3908 = vmatprep.subr.bf16.mxu0 %v2557
    %3909 = vmatpush1.bf16.msra.mxu0 %v2556
    %3910 = vmatprep.subr.bf16.mxu0 %v2549
    %3911 = vmatpush1.bf16.msra.mxu0 %v2548
    %3912 = vmatprep.subr.bf16.mxu0 %v2669
    %3913 = vmatpush2.bf16.msra.mxu0 %v2668
    %3914 = vmatprep.subr.bf16.mxu0 %v2661
    %3915 = vmatpush2.bf16.msra.mxu0 %v2660
    %3916 = vmatprep.subr.bf16.mxu0 %v2653
    %3917 = vmatpush2.bf16.msra.mxu0 %v2652
    %3918 = vmatprep.subr.bf16.mxu0 %v2645
    %3919 = vmatpush2.bf16.msra.mxu0 %v2644
    %3920 = vmatprep.subr.bf16.mxu0 %v2637
    %3921 = vmatpush2.bf16.msra.mxu0 %v2636
    %3922 = vmatprep.subr.bf16.mxu0 %v2629
    %3923 = vmatpush2.bf16.msra.mxu0 %v2628
    %3924 = vmatprep.subr.bf16.mxu0 %v2621
    %3925 = vmatpush2.bf16.msra.mxu0 %v2620
    %3926 = vmatprep.subr.bf16.mxu0 %v2613
    %3927 = vmatpush2.bf16.msra.mxu0 %v2612
    %3928 = vmatprep.mubr.bf16.mxu0 %v447
    %3929 = vmatmul.mubr.bf16.gmra.mxu0 %v446
    %v3930 = vpop.f32.mrf.mxu0
    %v3931 = vadd.f32 %v987, %v3930
    %v3932 = vpop.f32.mrf.mxu0
    %v3933 = vadd.f32 %v991, %v3932
    %v3934 = vpop.f32.mrf.mxu0
    %v3935 = vpop.f32.mrf.mxu0
    %3936 = vdwg.mxu0
    %3937 = vmatprep.subr.bf16.mxu0 %v2733
    %3938 = vmatpush1.bf16.msra.mxu0 %v2732
    %3939 = vmatprep.subr.bf16.mxu0 %v2725
    %3940 = vmatpush1.bf16.msra.mxu0 %v2724
    %3941 = vmatprep.subr.bf16.mxu0 %v2717
    %3942 = vmatpush1.bf16.msra.mxu0 %v2716
    %3943 = vmatprep.subr.bf16.mxu0 %v2709
    %3944 = vmatpush1.bf16.msra.mxu0 %v2708
    %3945 = vmatprep.subr.bf16.mxu0 %v2701
    %3946 = vmatpush1.bf16.msra.mxu0 %v2700
    %3947 = vmatprep.subr.bf16.mxu0 %v2693
    %3948 = vmatpush1.bf16.msra.mxu0 %v2692
    %3949 = vmatprep.subr.bf16.mxu0 %v2685
    %3950 = vmatpush1.bf16.msra.mxu0 %v2684
    %3951 = vmatprep.subr.bf16.mxu0 %v2677
    %3952 = vmatpush1.bf16.msra.mxu0 %v2676
    %3953 = vmatprep.subr.bf16.mxu0 %v2797
    %3954 = vmatpush2.bf16.msra.mxu0 %v2796
    %3955 = vmatprep.subr.bf16.mxu0 %v2789
    %3956 = vmatpush2.bf16.msra.mxu0 %v2788
    %3957 = vmatprep.subr.bf16.mxu0 %v2781
    %3958 = vmatpush2.bf16.msra.mxu0 %v2780
    %3959 = vmatprep.subr.bf16.mxu0 %v2773
    %3960 = vmatpush2.bf16.msra.mxu0 %v2772
    %3961 = vmatprep.subr.bf16.mxu0 %v2765
    %3962 = vmatpush2.bf16.msra.mxu0 %v2764
    %3963 = vmatprep.subr.bf16.mxu0 %v2757
    %3964 = vmatpush2.bf16.msra.mxu0 %v2756
    %3965 = vmatprep.subr.bf16.mxu0 %v2749
    %3966 = vmatpush2.bf16.msra.mxu0 %v2748
    %3967 = vmatprep.subr.bf16.mxu0 %v2741
    %3968 = vmatpush2.bf16.msra.mxu0 %v2740
    %3969 = vmatprep.mubr.bf16.mxu0 %v449
    %3970 = vmatmul.mubr.bf16.gmra.mxu0 %v448
    %v3971 = vpop.f32.mrf.mxu0
    %v3972 = vadd.f32 %v3931, %v3971
    %v3973 = vpop.f32.mrf.mxu0
    %v3974 = vadd.f32 %v3933, %v3973
    %v3975 = vpop.f32.mrf.mxu0
    %v3976 = vpop.f32.mrf.mxu0
    %3977 = vdwg.mxu0
    %3978 = vmatprep.subr.bf16.mxu0 %v2861
    %3979 = vmatpush1.bf16.msra.mxu0 %v2860
    %3980 = vmatprep.subr.bf16.mxu0 %v2853
    %3981 = vmatpush1.bf16.msra.mxu0 %v2852
    %3982 = vmatprep.subr.bf16.mxu0 %v2845
    %3983 = vmatpush1.bf16.msra.mxu0 %v2844
    %3984 = vmatprep.subr.bf16.mxu0 %v2837
    %3985 = vmatpush1.bf16.msra.mxu0 %v2836
    %3986 = vmatprep.subr.bf16.mxu0 %v2829
    %3987 = vmatpush1.bf16.msra.mxu0 %v2828
    %3988 = vmatprep.subr.bf16.mxu0 %v2821
    %3989 = vmatpush1.bf16.msra.mxu0 %v2820
    %3990 = vmatprep.subr.bf16.mxu0 %v2813
    %3991 = vmatpush1.bf16.msra.mxu0 %v2812
    %3992 = vmatprep.subr.bf16.mxu0 %v2805
    %3993 = vmatpush1.bf16.msra.mxu0 %v2804
    %3994 = vmatprep.subr.bf16.mxu0 %v2925
    %3995 = vmatpush2.bf16.msra.mxu0 %v2924
    %3996 = vmatprep.subr.bf16.mxu0 %v2917
    %3997 = vmatpush2.bf16.msra.mxu0 %v2916
    %3998 = vmatprep.subr.bf16.mxu0 %v2909
    %3999 = vmatpush2.bf16.msra.mxu0 %v2908
    %4000 = vmatprep.subr.bf16.mxu0 %v2901
    %4001 = vmatpush2.bf16.msra.mxu0 %v2900
    %4002 = vmatprep.subr.bf16.mxu0 %v2893
    %4003 = vmatpush2.bf16.msra.mxu0 %v2892
    %4004 = vmatprep.subr.bf16.mxu0 %v2885
    %4005 = vmatpush2.bf16.msra.mxu0 %v2884
    %4006 = vmatprep.subr.bf16.mxu0 %v2877
    %4007 = vmatpush2.bf16.msra.mxu0 %v2876
    %4008 = vmatprep.subr.bf16.mxu0 %v2869
    %4009 = vmatpush2.bf16.msra.mxu0 %v2868
    %4010 = vmatprep.mubr.bf16.mxu0 %v451
    %4011 = vmatmul.mubr.bf16.gmra.mxu0 %v450
    %v4012 = vpop.f32.mrf.mxu0
    %v4013 = vadd.f32 %v3972, %v4012
    %v4014 = vpop.f32.mrf.mxu0
    %v4015 = vadd.f32 %v3974, %v4014
    %v4016 = vpop.f32.mrf.mxu0
    %v4017 = vpop.f32.mrf.mxu0
    %4018 = vdwg.mxu0
    %4019 = vmatprep.subr.bf16.mxu0 %v2989
    %4020 = vmatpush1.bf16.msra.mxu0 %v2988
    %4021 = vmatprep.subr.bf16.mxu0 %v2981
    %4022 = vmatpush1.bf16.msra.mxu0 %v2980
    %4023 = vmatprep.subr.bf16.mxu0 %v2973
    %4024 = vmatpush1.bf16.msra.mxu0 %v2972
    %4025 = vmatprep.subr.bf16.mxu0 %v2965
    %4026 = vmatpush1.bf16.msra.mxu0 %v2964
    %4027 = vmatprep.subr.bf16.mxu0 %v2957
    %4028 = vmatpush1.bf16.msra.mxu0 %v2956
    %4029 = vmatprep.subr.bf16.mxu0 %v2949
    %4030 = vmatpush1.bf16.msra.mxu0 %v2948
    %4031 = vmatprep.subr.bf16.mxu0 %v2941
    %4032 = vmatpush1.bf16.msra.mxu0 %v2940
    %4033 = vmatprep.subr.bf16.mxu0 %v2933
    %4034 = vmatpush1.bf16.msra.mxu0 %v2932
    %4035 = vmatprep.subr.bf16.mxu0 %v3053
    %4036 = vmatpush2.bf16.msra.mxu0 %v3052
    %4037 = vmatprep.subr.bf16.mxu0 %v3045
    %4038 = vmatpush2.bf16.msra.mxu0 %v3044
    %4039 = vmatprep.subr.bf16.mxu0 %v3037
    %4040 = vmatpush2.bf16.msra.mxu0 %v3036
    %4041 = vmatprep.subr.bf16.mxu0 %v3029
    %4042 = vmatpush2.bf16.msra.mxu0 %v3028
    %4043 = vmatprep.subr.bf16.mxu0 %v3021
    %4044 = vmatpush2.bf16.msra.mxu0 %v3020
    %4045 = vmatprep.subr.bf16.mxu0 %v3013
    %4046 = vmatpush2.bf16.msra.mxu0 %v3012
    %4047 = vmatprep.subr.bf16.mxu0 %v3005
    %4048 = vmatpush2.bf16.msra.mxu0 %v3004
    %4049 = vmatprep.subr.bf16.mxu0 %v2997
    %4050 = vmatpush2.bf16.msra.mxu0 %v2996
    %4051 = vmatprep.mubr.bf16.mxu0 %v453
    %4052 = vmatmul.mubr.bf16.gmra.mxu0 %v452
    %v4053 = vpop.f32.mrf.mxu0
    %v4054 = vadd.f32 %v4013, %v4053
    %v4055 = vpop.f32.mrf.mxu0
    %v4056 = vadd.f32 %v4015, %v4055
    %v4057 = vpop.f32.mrf.mxu0
    %v4058 = vpop.f32.mrf.mxu0
    %4059 = vdwg.mxu0
    %4060 = vmatprep.subr.bf16.mxu0 %v2607
    %4061 = vmatpush1.bf16.msra.mxu0 %v2606
    %4062 = vmatprep.subr.bf16.mxu0 %v2599
    %4063 = vmatpush1.bf16.msra.mxu0 %v2598
    %4064 = vmatprep.subr.bf16.mxu0 %v2591
    %4065 = vmatpush1.bf16.msra.mxu0 %v2590
    %4066 = vmatprep.subr.bf16.mxu0 %v2583
    %4067 = vmatpush1.bf16.msra.mxu0 %v2582
    %4068 = vmatprep.subr.bf16.mxu0 %v2575
    %4069 = vmatpush1.bf16.msra.mxu0 %v2574
    %4070 = vmatprep.subr.bf16.mxu0 %v2567
    %4071 = vmatpush1.bf16.msra.mxu0 %v2566
    %4072 = vmatprep.subr.bf16.mxu0 %v2559
    %4073 = vmatpush1.bf16.msra.mxu0 %v2558
    %4074 = vmatprep.subr.bf16.mxu0 %v2551
    %4075 = vmatpush1.bf16.msra.mxu0 %v2550
    %4076 = vmatprep.subr.bf16.mxu0 %v2671
    %4077 = vmatpush2.bf16.msra.mxu0 %v2670
    %4078 = vmatprep.subr.bf16.mxu0 %v2663
    %4079 = vmatpush2.bf16.msra.mxu0 %v2662
    %4080 = vmatprep.subr.bf16.mxu0 %v2655
    %4081 = vmatpush2.bf16.msra.mxu0 %v2654
    %4082 = vmatprep.subr.bf16.mxu0 %v2647
    %4083 = vmatpush2.bf16.msra.mxu0 %v2646
    %4084 = vmatprep.subr.bf16.mxu0 %v2639
    %4085 = vmatpush2.bf16.msra.mxu0 %v2638
    %4086 = vmatprep.subr.bf16.mxu0 %v2631
    %4087 = vmatpush2.bf16.msra.mxu0 %v2630
    %4088 = vmatprep.subr.bf16.mxu0 %v2623
    %4089 = vmatpush2.bf16.msra.mxu0 %v2622
    %4090 = vmatprep.subr.bf16.mxu0 %v2615
    %4091 = vmatpush2.bf16.msra.mxu0 %v2614
    %4092 = vmatprep.mubr.bf16.mxu0 %v447
    %4093 = vmatmul.mubr.bf16.gmra.mxu0 %v446
    %v4094 = vpop.f32.mrf.mxu0
    %v4095 = vadd.f32 %v995, %v4094
    %v4096 = vpop.f32.mrf.mxu0
    %v4097 = vadd.f32 %v999, %v4096
    %v4098 = vpop.f32.mrf.mxu0
    %v4099 = vpop.f32.mrf.mxu0
    %4100 = vdwg.mxu0
    %4101 = vmatprep.subr.bf16.mxu0 %v2735
    %4102 = vmatpush1.bf16.msra.mxu0 %v2734
    %4103 = vmatprep.subr.bf16.mxu0 %v2727
    %4104 = vmatpush1.bf16.msra.mxu0 %v2726
    %4105 = vmatprep.subr.bf16.mxu0 %v2719
    %4106 = vmatpush1.bf16.msra.mxu0 %v2718
    %4107 = vmatprep.subr.bf16.mxu0 %v2711
    %4108 = vmatpush1.bf16.msra.mxu0 %v2710
    %4109 = vmatprep.subr.bf16.mxu0 %v2703
    %4110 = vmatpush1.bf16.msra.mxu0 %v2702
    %4111 = vmatprep.subr.bf16.mxu0 %v2695
    %4112 = vmatpush1.bf16.msra.mxu0 %v2694
    %4113 = vmatprep.subr.bf16.mxu0 %v2687
    %4114 = vmatpush1.bf16.msra.mxu0 %v2686
    %4115 = vmatprep.subr.bf16.mxu0 %v2679
    %4116 = vmatpush1.bf16.msra.mxu0 %v2678
    %4117 = vmatprep.subr.bf16.mxu0 %v2799
    %4118 = vmatpush2.bf16.msra.mxu0 %v2798
    %4119 = vmatprep.subr.bf16.mxu0 %v2791
    %4120 = vmatpush2.bf16.msra.mxu0 %v2790
    %4121 = vmatprep.subr.bf16.mxu0 %v2783
    %4122 = vmatpush2.bf16.msra.mxu0 %v2782
    %4123 = vmatprep.subr.bf16.mxu0 %v2775
    %4124 = vmatpush2.bf16.msra.mxu0 %v2774
    %4125 = vmatprep.subr.bf16.mxu0 %v2767
    %4126 = vmatpush2.bf16.msra.mxu0 %v2766
    %4127 = vmatprep.subr.bf16.mxu0 %v2759
    %4128 = vmatpush2.bf16.msra.mxu0 %v2758
    %4129 = vmatprep.subr.bf16.mxu0 %v2751
    %4130 = vmatpush2.bf16.msra.mxu0 %v2750
    %4131 = vmatprep.subr.bf16.mxu0 %v2743
    %4132 = vmatpush2.bf16.msra.mxu0 %v2742
    %4133 = vmatprep.mubr.bf16.mxu0 %v449
    %4134 = vmatmul.mubr.bf16.gmra.mxu0 %v448
    %v4135 = vpop.f32.mrf.mxu0
    %v4136 = vadd.f32 %v4095, %v4135
    %v4137 = vpop.f32.mrf.mxu0
    %v4138 = vadd.f32 %v4097, %v4137
    %v4139 = vpop.f32.mrf.mxu0
    %v4140 = vpop.f32.mrf.mxu0
    %4141 = vdwg.mxu0
    %4142 = vmatprep.subr.bf16.mxu0 %v2863
    %4143 = vmatpush1.bf16.msra.mxu0 %v2862
    %4144 = vmatprep.subr.bf16.mxu0 %v2855
    %4145 = vmatpush1.bf16.msra.mxu0 %v2854
    %4146 = vmatprep.subr.bf16.mxu0 %v2847
    %4147 = vmatpush1.bf16.msra.mxu0 %v2846
    %4148 = vmatprep.subr.bf16.mxu0 %v2839
    %4149 = vmatpush1.bf16.msra.mxu0 %v2838
    %4150 = vmatprep.subr.bf16.mxu0 %v2831
    %4151 = vmatpush1.bf16.msra.mxu0 %v2830
    %4152 = vmatprep.subr.bf16.mxu0 %v2823
    %4153 = vmatpush1.bf16.msra.mxu0 %v2822
    %4154 = vmatprep.subr.bf16.mxu0 %v2815
    %4155 = vmatpush1.bf16.msra.mxu0 %v2814
    %4156 = vmatprep.subr.bf16.mxu0 %v2807
    %4157 = vmatpush1.bf16.msra.mxu0 %v2806
    %4158 = vmatprep.subr.bf16.mxu0 %v2927
    %4159 = vmatpush2.bf16.msra.mxu0 %v2926
    %4160 = vmatprep.subr.bf16.mxu0 %v2919
    %4161 = vmatpush2.bf16.msra.mxu0 %v2918
    %4162 = vmatprep.subr.bf16.mxu0 %v2911
    %4163 = vmatpush2.bf16.msra.mxu0 %v2910
    %4164 = vmatprep.subr.bf16.mxu0 %v2903
    %4165 = vmatpush2.bf16.msra.mxu0 %v2902
    %4166 = vmatprep.subr.bf16.mxu0 %v2895
    %4167 = vmatpush2.bf16.msra.mxu0 %v2894
    %4168 = vmatprep.subr.bf16.mxu0 %v2887
    %4169 = vmatpush2.bf16.msra.mxu0 %v2886
    %4170 = vmatprep.subr.bf16.mxu0 %v2879
    %4171 = vmatpush2.bf16.msra.mxu0 %v2878
    %4172 = vmatprep.subr.bf16.mxu0 %v2871
    %4173 = vmatpush2.bf16.msra.mxu0 %v2870
    %4174 = vmatprep.mubr.bf16.mxu0 %v451
    %4175 = vmatmul.mubr.bf16.gmra.mxu0 %v450
    %v4176 = vpop.f32.mrf.mxu0
    %v4177 = vadd.f32 %v4136, %v4176
    %v4178 = vpop.f32.mrf.mxu0
    %v4179 = vadd.f32 %v4138, %v4178
    %v4180 = vpop.f32.mrf.mxu0
    %v4181 = vpop.f32.mrf.mxu0
    %4182 = vdwg.mxu0
    %4183 = vmatprep.subr.bf16.mxu0 %v2991
    %4184 = vmatpush1.bf16.msra.mxu0 %v2990
    %4185 = vmatprep.subr.bf16.mxu0 %v2983
    %4186 = vmatpush1.bf16.msra.mxu0 %v2982
    %4187 = vmatprep.subr.bf16.mxu0 %v2975
    %4188 = vmatpush1.bf16.msra.mxu0 %v2974
    %4189 = vmatprep.subr.bf16.mxu0 %v2967
    %4190 = vmatpush1.bf16.msra.mxu0 %v2966
    %4191 = vmatprep.subr.bf16.mxu0 %v2959
    %4192 = vmatpush1.bf16.msra.mxu0 %v2958
    %4193 = vmatprep.subr.bf16.mxu0 %v2951
    %4194 = vmatpush1.bf16.msra.mxu0 %v2950
    %4195 = vmatprep.subr.bf16.mxu0 %v2943
    %4196 = vmatpush1.bf16.msra.mxu0 %v2942
    %4197 = vmatprep.subr.bf16.mxu0 %v2935
    %4198 = vmatpush1.bf16.msra.mxu0 %v2934
    %4199 = vmatprep.subr.bf16.mxu0 %v3055
    %4200 = vmatpush2.bf16.msra.mxu0 %v3054
    %4201 = vmatprep.subr.bf16.mxu0 %v3047
    %4202 = vmatpush2.bf16.msra.mxu0 %v3046
    %4203 = vmatprep.subr.bf16.mxu0 %v3039
    %4204 = vmatpush2.bf16.msra.mxu0 %v3038
    %4205 = vmatprep.subr.bf16.mxu0 %v3031
    %4206 = vmatpush2.bf16.msra.mxu0 %v3030
    %4207 = vmatprep.subr.bf16.mxu0 %v3023
    %4208 = vmatpush2.bf16.msra.mxu0 %v3022
    %4209 = vmatprep.subr.bf16.mxu0 %v3015
    %4210 = vmatpush2.bf16.msra.mxu0 %v3014
    %4211 = vmatprep.subr.bf16.mxu0 %v3007
    %4212 = vmatpush2.bf16.msra.mxu0 %v3006
    %4213 = vmatprep.subr.bf16.mxu0 %v2999
    %4214 = vmatpush2.bf16.msra.mxu0 %v2998
    %4215 = vmatprep.mubr.bf16.mxu0 %v453
    %4216 = vmatmul.mubr.bf16.gmra.mxu0 %v452
    %v4217 = vpop.f32.mrf.mxu0
    %v4218 = vadd.f32 %v4177, %v4217
    %v4219 = vpop.f32.mrf.mxu0
    %v4220 = vadd.f32 %v4179, %v4219
    %v4221 = vpop.f32.mrf.mxu0
    %v4222 = vpop.f32.mrf.mxu0
    %4223 = vdwg.mxu0
    %v4224 = vmax.f32 %v3726, 0.0
    %v4225 = vmax.f32 %v3728, 0.0
    %v4226 = vmax.f32 %v3890, 0.0
    %v4227 = vmax.f32 %v3892, 0.0
    %v4228 = vmax.f32 %v4054, 0.0
    %v4229 = vmax.f32 %v4056, 0.0
    %v4230 = vmax.f32 %v4218, 0.0
    %v4231 = vmax.f32 %v4220, 0.0
    %v4232 = vpack.c.bf16 %v4224, %v4224
    %v4233 = vpack.c.bf16 %v4225, %v4225
    %v4234 = vpack.c.bf16 %v4226, %v4226
    %v4235 = vpack.c.bf16 %v4227, %v4227
    %v4236 = vpack.c.bf16 %v4228, %v4228
    %v4237 = vpack.c.bf16 %v4229, %v4229
    %v4238 = vpack.c.bf16 %v4230, %v4230
    %v4239 = vpack.c.bf16 %v4231, %v4231
    %v4240 = vld [vmem:[%s5] sm:$0xff]
    %v4241 = vld [vmem:[%s5 + $0x8] sm:$0xff]
    %v4242 = vld [vmem:[%s5 + $0x10] sm:$0xff]
    %v4243 = vld [vmem:[%s5 + $0x18] sm:$0xff]
    %v4244 = vld [vmem:[%s5 + $0x20] sm:$0xff]
    %v4245 = vld [vmem:[%s5 + $0x28] sm:$0xff]
    %v4246 = vld [vmem:[%s5 + $0x30] sm:$0xff]
    %v4247 = vld [vmem:[%s5 + $0x38] sm:$0xff]
    %v4248 = vld [vmem:[%s5 + $0x40] sm:$0xff]
    %v4249 = vld [vmem:[%s5 + $0x48] sm:$0xff]
    %v4250 = vld [vmem:[%s5 + $0x50] sm:$0xff]
    %v4251 = vld [vmem:[%s5 + $0x58] sm:$0xff]
    %v4252 = vld [vmem:[%s5 + $0x60] sm:$0xff]
    %v4253 = vld [vmem:[%s5 + $0x68] sm:$0xff]
    %v4254 = vld [vmem:[%s5 + $0x70] sm:$0xff]
    %v4255 = vld [vmem:[%s5 + $0x78] sm:$0xff]
    %v4256 = vld [vmem:[%s5 + $0x80] sm:$0xff]
    %v4257 = vld [vmem:[%s5 + $0x88] sm:$0xff]
    %v4258 = vld [vmem:[%s5 + $0x90] sm:$0xff]
    %v4259 = vld [vmem:[%s5 + $0x98] sm:$0xff]
    %v4260 = vld [vmem:[%s5 + $0xa0] sm:$0xff]
    %v4261 = vld [vmem:[%s5 + $0xa8] sm:$0xff]
    %v4262 = vld [vmem:[%s5 + $0xb0] sm:$0xff]
    %v4263 = vld [vmem:[%s5 + $0xb8] sm:$0xff]
    %v4264 = vld [vmem:[%s5 + $0xc0] sm:$0xff]
    %v4265 = vld [vmem:[%s5 + $0xc8] sm:$0xff]
    %v4266 = vld [vmem:[%s5 + $0xd0] sm:$0xff]
    %v4267 = vld [vmem:[%s5 + $0xd8] sm:$0xff]
    %v4268 = vld [vmem:[%s5 + $0xe0] sm:$0xff]
    %v4269 = vld [vmem:[%s5 + $0xe8] sm:$0xff]
    %v4270 = vld [vmem:[%s5 + $0xf0] sm:$0xff]
    %v4271 = vld [vmem:[%s5 + $0xf8] sm:$0xff]
    %v4272 = vld [vmem:[%s5 + $0x100] sm:$0xff]
    %v4273 = vld [vmem:[%s5 + $0x108] sm:$0xff]
    %v4274 = vld [vmem:[%s5 + $0x110] sm:$0xff]
    %v4275 = vld [vmem:[%s5 + $0x118] sm:$0xff]
    %v4276 = vld [vmem:[%s5 + $0x120] sm:$0xff]
    %v4277 = vld [vmem:[%s5 + $0x128] sm:$0xff]
    %v4278 = vld [vmem:[%s5 + $0x130] sm:$0xff]
    %v4279 = vld [vmem:[%s5 + $0x138] sm:$0xff]
    %v4280 = vld [vmem:[%s5 + $0x140] sm:$0xff]
    %v4281 = vld [vmem:[%s5 + $0x148] sm:$0xff]
    %v4282 = vld [vmem:[%s5 + $0x150] sm:$0xff]
    %v4283 = vld [vmem:[%s5 + $0x158] sm:$0xff]
    %v4284 = vld [vmem:[%s5 + $0x160] sm:$0xff]
    %v4285 = vld [vmem:[%s5 + $0x168] sm:$0xff]
    %v4286 = vld [vmem:[%s5 + $0x170] sm:$0xff]
    %v4287 = vld [vmem:[%s5 + $0x178] sm:$0xff]
    %v4288 = vld [vmem:[%s5 + $0x180] sm:$0xff]
    %v4289 = vld [vmem:[%s5 + $0x188] sm:$0xff]
    %v4290 = vld [vmem:[%s5 + $0x190] sm:$0xff]
    %v4291 = vld [vmem:[%s5 + $0x198] sm:$0xff]
    %v4292 = vld [vmem:[%s5 + $0x1a0] sm:$0xff]
    %v4293 = vld [vmem:[%s5 + $0x1a8] sm:$0xff]
    %v4294 = vld [vmem:[%s5 + $0x1b0] sm:$0xff]
    %v4295 = vld [vmem:[%s5 + $0x1b8] sm:$0xff]
    %v4296 = vld [vmem:[%s5 + $0x1c0] sm:$0xff]
    %v4297 = vld [vmem:[%s5 + $0x1c8] sm:$0xff]
    %v4298 = vld [vmem:[%s5 + $0x1d0] sm:$0xff]
    %v4299 = vld [vmem:[%s5 + $0x1d8] sm:$0xff]
    %v4300 = vld [vmem:[%s5 + $0x1e0] sm:$0xff]
    %v4301 = vld [vmem:[%s5 + $0x1e8] sm:$0xff]
    %v4302 = vld [vmem:[%s5 + $0x1f0] sm:$0xff]
    %v4303 = vld [vmem:[%s5 + $0x1f8] sm:$0xff]
    %v4304 = vld [vmem:[%s5 + $0x200] sm:$0xff]
    %v4305 = vld [vmem:[%s5 + $0x208] sm:$0xff]
    %v4306 = vld [vmem:[%s5 + $0x210] sm:$0xff]
    %v4307 = vld [vmem:[%s5 + $0x218] sm:$0xff]
    %v4308 = vld [vmem:[%s5 + $0x220] sm:$0xff]
    %v4309 = vld [vmem:[%s5 + $0x228] sm:$0xff]
    %v4310 = vld [vmem:[%s5 + $0x230] sm:$0xff]
    %v4311 = vld [vmem:[%s5 + $0x238] sm:$0xff]
    %v4312 = vld [vmem:[%s5 + $0x240] sm:$0xff]
    %v4313 = vld [vmem:[%s5 + $0x248] sm:$0xff]
    %v4314 = vld [vmem:[%s5 + $0x250] sm:$0xff]
    %v4315 = vld [vmem:[%s5 + $0x258] sm:$0xff]
    %v4316 = vld [vmem:[%s5 + $0x260] sm:$0xff]
    %v4317 = vld [vmem:[%s5 + $0x268] sm:$0xff]
    %v4318 = vld [vmem:[%s5 + $0x270] sm:$0xff]
    %v4319 = vld [vmem:[%s5 + $0x278] sm:$0xff]
    %v4320 = vld [vmem:[%s5 + $0x280] sm:$0xff]
    %v4321 = vld [vmem:[%s5 + $0x288] sm:$0xff]
    %v4322 = vld [vmem:[%s5 + $0x290] sm:$0xff]
    %v4323 = vld [vmem:[%s5 + $0x298] sm:$0xff]
    %v4324 = vld [vmem:[%s5 + $0x2a0] sm:$0xff]
    %v4325 = vld [vmem:[%s5 + $0x2a8] sm:$0xff]
    %v4326 = vld [vmem:[%s5 + $0x2b0] sm:$0xff]
    %v4327 = vld [vmem:[%s5 + $0x2b8] sm:$0xff]
    %v4328 = vld [vmem:[%s5 + $0x2c0] sm:$0xff]
    %v4329 = vld [vmem:[%s5 + $0x2c8] sm:$0xff]
    %v4330 = vld [vmem:[%s5 + $0x2d0] sm:$0xff]
    %v4331 = vld [vmem:[%s5 + $0x2d8] sm:$0xff]
    %v4332 = vld [vmem:[%s5 + $0x2e0] sm:$0xff]
    %v4333 = vld [vmem:[%s5 + $0x2e8] sm:$0xff]
    %v4334 = vld [vmem:[%s5 + $0x2f0] sm:$0xff]
    %v4335 = vld [vmem:[%s5 + $0x2f8] sm:$0xff]
    %v4336 = vld [vmem:[%s5 + $0x300] sm:$0xff]
    %v4337 = vld [vmem:[%s5 + $0x308] sm:$0xff]
    %v4338 = vld [vmem:[%s5 + $0x310] sm:$0xff]
    %v4339 = vld [vmem:[%s5 + $0x318] sm:$0xff]
    %v4340 = vld [vmem:[%s5 + $0x320] sm:$0xff]
    %v4341 = vld [vmem:[%s5 + $0x328] sm:$0xff]
    %v4342 = vld [vmem:[%s5 + $0x330] sm:$0xff]
    %v4343 = vld [vmem:[%s5 + $0x338] sm:$0xff]
    %v4344 = vld [vmem:[%s5 + $0x340] sm:$0xff]
    %v4345 = vld [vmem:[%s5 + $0x348] sm:$0xff]
    %v4346 = vld [vmem:[%s5 + $0x350] sm:$0xff]
    %v4347 = vld [vmem:[%s5 + $0x358] sm:$0xff]
    %v4348 = vld [vmem:[%s5 + $0x360] sm:$0xff]
    %v4349 = vld [vmem:[%s5 + $0x368] sm:$0xff]
    %v4350 = vld [vmem:[%s5 + $0x370] sm:$0xff]
    %v4351 = vld [vmem:[%s5 + $0x378] sm:$0xff]
    %v4352 = vld [vmem:[%s5 + $0x380] sm:$0xff]
    %v4353 = vld [vmem:[%s5 + $0x388] sm:$0xff]
    %v4354 = vld [vmem:[%s5 + $0x390] sm:$0xff]
    %v4355 = vld [vmem:[%s5 + $0x398] sm:$0xff]
    %v4356 = vld [vmem:[%s5 + $0x3a0] sm:$0xff]
    %v4357 = vld [vmem:[%s5 + $0x3a8] sm:$0xff]
    %v4358 = vld [vmem:[%s5 + $0x3b0] sm:$0xff]
    %v4359 = vld [vmem:[%s5 + $0x3b8] sm:$0xff]
    %v4360 = vld [vmem:[%s5 + $0x3c0] sm:$0xff]
    %v4361 = vld [vmem:[%s5 + $0x3c8] sm:$0xff]
    %v4362 = vld [vmem:[%s5 + $0x3d0] sm:$0xff]
    %v4363 = vld [vmem:[%s5 + $0x3d8] sm:$0xff]
    %v4364 = vld [vmem:[%s5 + $0x3e0] sm:$0xff]
    %v4365 = vld [vmem:[%s5 + $0x3e8] sm:$0xff]
    %v4366 = vld [vmem:[%s5 + $0x3f0] sm:$0xff]
    %v4367 = vld [vmem:[%s5 + $0x3f8] sm:$0xff]
    %v4368 = vld [vmem:[%s5 + $0x400] sm:$0xff]
    %v4369 = vld [vmem:[%s5 + $0x408] sm:$0xff]
    %v4370 = vld [vmem:[%s5 + $0x410] sm:$0xff]
    %v4371 = vld [vmem:[%s5 + $0x418] sm:$0xff]
    %v4372 = vld [vmem:[%s5 + $0x420] sm:$0xff]
    %v4373 = vld [vmem:[%s5 + $0x428] sm:$0xff]
    %v4374 = vld [vmem:[%s5 + $0x430] sm:$0xff]
    %v4375 = vld [vmem:[%s5 + $0x438] sm:$0xff]
    %v4376 = vld [vmem:[%s5 + $0x440] sm:$0xff]
    %v4377 = vld [vmem:[%s5 + $0x448] sm:$0xff]
    %v4378 = vld [vmem:[%s5 + $0x450] sm:$0xff]
    %v4379 = vld [vmem:[%s5 + $0x458] sm:$0xff]
    %v4380 = vld [vmem:[%s5 + $0x460] sm:$0xff]
    %v4381 = vld [vmem:[%s5 + $0x468] sm:$0xff]
    %v4382 = vld [vmem:[%s5 + $0x470] sm:$0xff]
    %v4383 = vld [vmem:[%s5 + $0x478] sm:$0xff]
    %v4384 = vld [vmem:[%s5 + $0x480] sm:$0xff]
    %v4385 = vld [vmem:[%s5 + $0x488] sm:$0xff]
    %v4386 = vld [vmem:[%s5 + $0x490] sm:$0xff]
    %v4387 = vld [vmem:[%s5 + $0x498] sm:$0xff]
    %v4388 = vld [vmem:[%s5 + $0x4a0] sm:$0xff]
    %v4389 = vld [vmem:[%s5 + $0x4a8] sm:$0xff]
    %v4390 = vld [vmem:[%s5 + $0x4b0] sm:$0xff]
    %v4391 = vld [vmem:[%s5 + $0x4b8] sm:$0xff]
    %v4392 = vld [vmem:[%s5 + $0x4c0] sm:$0xff]
    %v4393 = vld [vmem:[%s5 + $0x4c8] sm:$0xff]
    %v4394 = vld [vmem:[%s5 + $0x4d0] sm:$0xff]
    %v4395 = vld [vmem:[%s5 + $0x4d8] sm:$0xff]
    %v4396 = vld [vmem:[%s5 + $0x4e0] sm:$0xff]
    %v4397 = vld [vmem:[%s5 + $0x4e8] sm:$0xff]
    %v4398 = vld [vmem:[%s5 + $0x4f0] sm:$0xff]
    %v4399 = vld [vmem:[%s5 + $0x4f8] sm:$0xff]
    %v4400 = vld [vmem:[%s5 + $0x500] sm:$0xff]
    %v4401 = vld [vmem:[%s5 + $0x508] sm:$0xff]
    %v4402 = vld [vmem:[%s5 + $0x510] sm:$0xff]
    %v4403 = vld [vmem:[%s5 + $0x518] sm:$0xff]
    %v4404 = vld [vmem:[%s5 + $0x520] sm:$0xff]
    %v4405 = vld [vmem:[%s5 + $0x528] sm:$0xff]
    %v4406 = vld [vmem:[%s5 + $0x530] sm:$0xff]
    %v4407 = vld [vmem:[%s5 + $0x538] sm:$0xff]
    %v4408 = vld [vmem:[%s5 + $0x540] sm:$0xff]
    %v4409 = vld [vmem:[%s5 + $0x548] sm:$0xff]
    %v4410 = vld [vmem:[%s5 + $0x550] sm:$0xff]
    %v4411 = vld [vmem:[%s5 + $0x558] sm:$0xff]
    %v4412 = vld [vmem:[%s5 + $0x560] sm:$0xff]
    %v4413 = vld [vmem:[%s5 + $0x568] sm:$0xff]
    %v4414 = vld [vmem:[%s5 + $0x570] sm:$0xff]
    %v4415 = vld [vmem:[%s5 + $0x578] sm:$0xff]
    %v4416 = vld [vmem:[%s5 + $0x580] sm:$0xff]
    %v4417 = vld [vmem:[%s5 + $0x588] sm:$0xff]
    %v4418 = vld [vmem:[%s5 + $0x590] sm:$0xff]
    %v4419 = vld [vmem:[%s5 + $0x598] sm:$0xff]
    %v4420 = vld [vmem:[%s5 + $0x5a0] sm:$0xff]
    %v4421 = vld [vmem:[%s5 + $0x5a8] sm:$0xff]
    %v4422 = vld [vmem:[%s5 + $0x5b0] sm:$0xff]
    %v4423 = vld [vmem:[%s5 + $0x5b8] sm:$0xff]
    %v4424 = vld [vmem:[%s5 + $0x5c0] sm:$0xff]
    %v4425 = vld [vmem:[%s5 + $0x5c8] sm:$0xff]
    %v4426 = vld [vmem:[%s5 + $0x5d0] sm:$0xff]
    %v4427 = vld [vmem:[%s5 + $0x5d8] sm:$0xff]
    %v4428 = vld [vmem:[%s5 + $0x5e0] sm:$0xff]
    %v4429 = vld [vmem:[%s5 + $0x5e8] sm:$0xff]
    %v4430 = vld [vmem:[%s5 + $0x5f0] sm:$0xff]
    %v4431 = vld [vmem:[%s5 + $0x5f8] sm:$0xff]
    %v4432 = vld [vmem:[%s5 + $0x600] sm:$0xff]
    %v4433 = vld [vmem:[%s5 + $0x608] sm:$0xff]
    %v4434 = vld [vmem:[%s5 + $0x610] sm:$0xff]
    %v4435 = vld [vmem:[%s5 + $0x618] sm:$0xff]
    %v4436 = vld [vmem:[%s5 + $0x620] sm:$0xff]
    %v4437 = vld [vmem:[%s5 + $0x628] sm:$0xff]
    %v4438 = vld [vmem:[%s5 + $0x630] sm:$0xff]
    %v4439 = vld [vmem:[%s5 + $0x638] sm:$0xff]
    %v4440 = vld [vmem:[%s5 + $0x640] sm:$0xff]
    %v4441 = vld [vmem:[%s5 + $0x648] sm:$0xff]
    %v4442 = vld [vmem:[%s5 + $0x650] sm:$0xff]
    %v4443 = vld [vmem:[%s5 + $0x658] sm:$0xff]
    %v4444 = vld [vmem:[%s5 + $0x660] sm:$0xff]
    %v4445 = vld [vmem:[%s5 + $0x668] sm:$0xff]
    %v4446 = vld [vmem:[%s5 + $0x670] sm:$0xff]
    %v4447 = vld [vmem:[%s5 + $0x678] sm:$0xff]
    %v4448 = vld [vmem:[%s5 + $0x680] sm:$0xff]
    %v4449 = vld [vmem:[%s5 + $0x688] sm:$0xff]
    %v4450 = vld [vmem:[%s5 + $0x690] sm:$0xff]
    %v4451 = vld [vmem:[%s5 + $0x698] sm:$0xff]
    %v4452 = vld [vmem:[%s5 + $0x6a0] sm:$0xff]
    %v4453 = vld [vmem:[%s5 + $0x6a8] sm:$0xff]
    %v4454 = vld [vmem:[%s5 + $0x6b0] sm:$0xff]
    %v4455 = vld [vmem:[%s5 + $0x6b8] sm:$0xff]
    %v4456 = vld [vmem:[%s5 + $0x6c0] sm:$0xff]
    %v4457 = vld [vmem:[%s5 + $0x6c8] sm:$0xff]
    %v4458 = vld [vmem:[%s5 + $0x6d0] sm:$0xff]
    %v4459 = vld [vmem:[%s5 + $0x6d8] sm:$0xff]
    %v4460 = vld [vmem:[%s5 + $0x6e0] sm:$0xff]
    %v4461 = vld [vmem:[%s5 + $0x6e8] sm:$0xff]
    %v4462 = vld [vmem:[%s5 + $0x6f0] sm:$0xff]
    %v4463 = vld [vmem:[%s5 + $0x6f8] sm:$0xff]
    %v4464 = vld [vmem:[%s5 + $0x700] sm:$0xff]
    %v4465 = vld [vmem:[%s5 + $0x708] sm:$0xff]
    %v4466 = vld [vmem:[%s5 + $0x710] sm:$0xff]
    %v4467 = vld [vmem:[%s5 + $0x718] sm:$0xff]
    %v4468 = vld [vmem:[%s5 + $0x720] sm:$0xff]
    %v4469 = vld [vmem:[%s5 + $0x728] sm:$0xff]
    %v4470 = vld [vmem:[%s5 + $0x730] sm:$0xff]
    %v4471 = vld [vmem:[%s5 + $0x738] sm:$0xff]
    %v4472 = vld [vmem:[%s5 + $0x740] sm:$0xff]
    %v4473 = vld [vmem:[%s5 + $0x748] sm:$0xff]
    %v4474 = vld [vmem:[%s5 + $0x750] sm:$0xff]
    %v4475 = vld [vmem:[%s5 + $0x758] sm:$0xff]
    %v4476 = vld [vmem:[%s5 + $0x760] sm:$0xff]
    %v4477 = vld [vmem:[%s5 + $0x768] sm:$0xff]
    %v4478 = vld [vmem:[%s5 + $0x770] sm:$0xff]
    %v4479 = vld [vmem:[%s5 + $0x778] sm:$0xff]
    %v4480 = vld [vmem:[%s5 + $0x780] sm:$0xff]
    %v4481 = vld [vmem:[%s5 + $0x788] sm:$0xff]
    %v4482 = vld [vmem:[%s5 + $0x790] sm:$0xff]
    %v4483 = vld [vmem:[%s5 + $0x798] sm:$0xff]
    %v4484 = vld [vmem:[%s5 + $0x7a0] sm:$0xff]
    %v4485 = vld [vmem:[%s5 + $0x7a8] sm:$0xff]
    %v4486 = vld [vmem:[%s5 + $0x7b0] sm:$0xff]
    %v4487 = vld [vmem:[%s5 + $0x7b8] sm:$0xff]
    %v4488 = vld [vmem:[%s5 + $0x7c0] sm:$0xff]
    %v4489 = vld [vmem:[%s5 + $0x7c8] sm:$0xff]
    %v4490 = vld [vmem:[%s5 + $0x7d0] sm:$0xff]
    %v4491 = vld [vmem:[%s5 + $0x7d8] sm:$0xff]
    %v4492 = vld [vmem:[%s5 + $0x7e0] sm:$0xff]
    %v4493 = vld [vmem:[%s5 + $0x7e8] sm:$0xff]
    %v4494 = vld [vmem:[%s5 + $0x7f0] sm:$0xff]
    %v4495 = vld [vmem:[%s5 + $0x7f8] sm:$0xff]
    %v4496 = vld [vmem:[%s6] sm:$0xf]
    %v4498 = vlaneseq
    %v4499 = vshrl.u32 %v4498, 7
    %v4500 = vsub.s32 0, %v4499
    %v4501 = vrot.slane %v4496, %v4500
    %v4502 = vlaneseq
    %v4503 = vshrl.u32 %v4502, 7
    %v4504 = vsub.s32 1, %v4503
    %v4505 = vrot.slane %v4496, %v4504
    %v4506 = vlaneseq
    %v4507 = vshrl.u32 %v4506, 7
    %v4508 = vsub.s32 2, %v4507
    %v4509 = vrot.slane %v4496, %v4508
    %v4510 = vlaneseq
    %v4511 = vshrl.u32 %v4510, 7
    %v4512 = vsub.s32 3, %v4511
    %v4513 = vrot.slane %v4496, %v4512
    %v4774 = vunpack.c.l.b16 %v4240
    %v4775 = vunpack.c.h.b16 %v4240
    %v4776 = vunpack.c.l.b16 %v4241
    %v4777 = vunpack.c.h.b16 %v4241
    %v4778 = vunpack.c.l.b16 %v4242
    %v4779 = vunpack.c.h.b16 %v4242
    %v4780 = vunpack.c.l.b16 %v4243
    %v4781 = vunpack.c.h.b16 %v4243
    %v4782 = vunpack.c.l.b16 %v4244
    %v4783 = vunpack.c.h.b16 %v4244
    %v4784 = vunpack.c.l.b16 %v4245
    %v4785 = vunpack.c.h.b16 %v4245
    %v4786 = vunpack.c.l.b16 %v4246
    %v4787 = vunpack.c.h.b16 %v4246
    %v4788 = vunpack.c.l.b16 %v4247
    %v4789 = vunpack.c.h.b16 %v4247
    %v4790 = vunpack.c.l.b16 %v4248
    %v4791 = vunpack.c.h.b16 %v4248
    %v4792 = vunpack.c.l.b16 %v4249
    %v4793 = vunpack.c.h.b16 %v4249
    %v4794 = vunpack.c.l.b16 %v4250
    %v4795 = vunpack.c.h.b16 %v4250
    %v4796 = vunpack.c.l.b16 %v4251
    %v4797 = vunpack.c.h.b16 %v4251
    %v4798 = vunpack.c.l.b16 %v4252
    %v4799 = vunpack.c.h.b16 %v4252
    %v4800 = vunpack.c.l.b16 %v4253
    %v4801 = vunpack.c.h.b16 %v4253
    %v4802 = vunpack.c.l.b16 %v4254
    %v4803 = vunpack.c.h.b16 %v4254
    %v4804 = vunpack.c.l.b16 %v4255
    %v4805 = vunpack.c.h.b16 %v4255
    %v4806 = vunpack.c.l.b16 %v4256
    %v4807 = vunpack.c.h.b16 %v4256
    %v4808 = vunpack.c.l.b16 %v4257
    %v4809 = vunpack.c.h.b16 %v4257
    %v4810 = vunpack.c.l.b16 %v4258
    %v4811 = vunpack.c.h.b16 %v4258
    %v4812 = vunpack.c.l.b16 %v4259
    %v4813 = vunpack.c.h.b16 %v4259
    %v4814 = vunpack.c.l.b16 %v4260
    %v4815 = vunpack.c.h.b16 %v4260
    %v4816 = vunpack.c.l.b16 %v4261
    %v4817 = vunpack.c.h.b16 %v4261
    %v4818 = vunpack.c.l.b16 %v4262
    %v4819 = vunpack.c.h.b16 %v4262
    %v4820 = vunpack.c.l.b16 %v4263
    %v4821 = vunpack.c.h.b16 %v4263
    %v4822 = vunpack.c.l.b16 %v4264
    %v4823 = vunpack.c.h.b16 %v4264
    %v4824 = vunpack.c.l.b16 %v4265
    %v4825 = vunpack.c.h.b16 %v4265
    %v4826 = vunpack.c.l.b16 %v4266
    %v4827 = vunpack.c.h.b16 %v4266
    %v4828 = vunpack.c.l.b16 %v4267
    %v4829 = vunpack.c.h.b16 %v4267
    %v4830 = vunpack.c.l.b16 %v4268
    %v4831 = vunpack.c.h.b16 %v4268
    %v4832 = vunpack.c.l.b16 %v4269
    %v4833 = vunpack.c.h.b16 %v4269
    %v4834 = vunpack.c.l.b16 %v4270
    %v4835 = vunpack.c.h.b16 %v4270
    %v4836 = vunpack.c.l.b16 %v4271
    %v4837 = vunpack.c.h.b16 %v4271
    %v4838 = vunpack.c.l.b16 %v4272
    %v4839 = vunpack.c.h.b16 %v4272
    %v4840 = vunpack.c.l.b16 %v4273
    %v4841 = vunpack.c.h.b16 %v4273
    %v4842 = vunpack.c.l.b16 %v4274
    %v4843 = vunpack.c.h.b16 %v4274
    %v4844 = vunpack.c.l.b16 %v4275
    %v4845 = vunpack.c.h.b16 %v4275
    %v4846 = vunpack.c.l.b16 %v4276
    %v4847 = vunpack.c.h.b16 %v4276
    %v4848 = vunpack.c.l.b16 %v4277
    %v4849 = vunpack.c.h.b16 %v4277
    %v4850 = vunpack.c.l.b16 %v4278
    %v4851 = vunpack.c.h.b16 %v4278
    %v4852 = vunpack.c.l.b16 %v4279
    %v4853 = vunpack.c.h.b16 %v4279
    %v4854 = vunpack.c.l.b16 %v4280
    %v4855 = vunpack.c.h.b16 %v4280
    %v4856 = vunpack.c.l.b16 %v4281
    %v4857 = vunpack.c.h.b16 %v4281
    %v4858 = vunpack.c.l.b16 %v4282
    %v4859 = vunpack.c.h.b16 %v4282
    %v4860 = vunpack.c.l.b16 %v4283
    %v4861 = vunpack.c.h.b16 %v4283
    %v4862 = vunpack.c.l.b16 %v4284
    %v4863 = vunpack.c.h.b16 %v4284
    %v4864 = vunpack.c.l.b16 %v4285
    %v4865 = vunpack.c.h.b16 %v4285
    %v4866 = vunpack.c.l.b16 %v4286
    %v4867 = vunpack.c.h.b16 %v4286
    %v4868 = vunpack.c.l.b16 %v4287
    %v4869 = vunpack.c.h.b16 %v4287
    %v4870 = vunpack.c.l.b16 %v4288
    %v4871 = vunpack.c.h.b16 %v4288
    %v4872 = vunpack.c.l.b16 %v4289
    %v4873 = vunpack.c.h.b16 %v4289
    %v4874 = vunpack.c.l.b16 %v4290
    %v4875 = vunpack.c.h.b16 %v4290
    %v4876 = vunpack.c.l.b16 %v4291
    %v4877 = vunpack.c.h.b16 %v4291
    %v4878 = vunpack.c.l.b16 %v4292
    %v4879 = vunpack.c.h.b16 %v4292
    %v4880 = vunpack.c.l.b16 %v4293
    %v4881 = vunpack.c.h.b16 %v4293
    %v4882 = vunpack.c.l.b16 %v4294
    %v4883 = vunpack.c.h.b16 %v4294
    %v4884 = vunpack.c.l.b16 %v4295
    %v4885 = vunpack.c.h.b16 %v4295
    %v4886 = vunpack.c.l.b16 %v4296
    %v4887 = vunpack.c.h.b16 %v4296
    %v4888 = vunpack.c.l.b16 %v4297
    %v4889 = vunpack.c.h.b16 %v4297
    %v4890 = vunpack.c.l.b16 %v4298
    %v4891 = vunpack.c.h.b16 %v4298
    %v4892 = vunpack.c.l.b16 %v4299
    %v4893 = vunpack.c.h.b16 %v4299
    %v4894 = vunpack.c.l.b16 %v4300
    %v4895 = vunpack.c.h.b16 %v4300
    %v4896 = vunpack.c.l.b16 %v4301
    %v4897 = vunpack.c.h.b16 %v4301
    %v4898 = vunpack.c.l.b16 %v4302
    %v4899 = vunpack.c.h.b16 %v4302
    %v4900 = vunpack.c.l.b16 %v4303
    %v4901 = vunpack.c.h.b16 %v4303
    %v4902 = vunpack.c.l.b16 %v4304
    %v4903 = vunpack.c.h.b16 %v4304
    %v4904 = vunpack.c.l.b16 %v4305
    %v4905 = vunpack.c.h.b16 %v4305
    %v4906 = vunpack.c.l.b16 %v4306
    %v4907 = vunpack.c.h.b16 %v4306
    %v4908 = vunpack.c.l.b16 %v4307
    %v4909 = vunpack.c.h.b16 %v4307
    %v4910 = vunpack.c.l.b16 %v4308
    %v4911 = vunpack.c.h.b16 %v4308
    %v4912 = vunpack.c.l.b16 %v4309
    %v4913 = vunpack.c.h.b16 %v4309
    %v4914 = vunpack.c.l.b16 %v4310
    %v4915 = vunpack.c.h.b16 %v4310
    %v4916 = vunpack.c.l.b16 %v4311
    %v4917 = vunpack.c.h.b16 %v4311
    %v4918 = vunpack.c.l.b16 %v4312
    %v4919 = vunpack.c.h.b16 %v4312
    %v4920 = vunpack.c.l.b16 %v4313
    %v4921 = vunpack.c.h.b16 %v4313
    %v4922 = vunpack.c.l.b16 %v4314
    %v4923 = vunpack.c.h.b16 %v4314
    %v4924 = vunpack.c.l.b16 %v4315
    %v4925 = vunpack.c.h.b16 %v4315
    %v4926 = vunpack.c.l.b16 %v4316
    %v4927 = vunpack.c.h.b16 %v4316
    %v4928 = vunpack.c.l.b16 %v4317
    %v4929 = vunpack.c.h.b16 %v4317
    %v4930 = vunpack.c.l.b16 %v4318
    %v4931 = vunpack.c.h.b16 %v4318
    %v4932 = vunpack.c.l.b16 %v4319
    %v4933 = vunpack.c.h.b16 %v4319
    %v4934 = vunpack.c.l.b16 %v4320
    %v4935 = vunpack.c.h.b16 %v4320
    %v4936 = vunpack.c.l.b16 %v4321
    %v4937 = vunpack.c.h.b16 %v4321
    %v4938 = vunpack.c.l.b16 %v4322
    %v4939 = vunpack.c.h.b16 %v4322
    %v4940 = vunpack.c.l.b16 %v4323
    %v4941 = vunpack.c.h.b16 %v4323
    %v4942 = vunpack.c.l.b16 %v4324
    %v4943 = vunpack.c.h.b16 %v4324
    %v4944 = vunpack.c.l.b16 %v4325
    %v4945 = vunpack.c.h.b16 %v4325
    %v4946 = vunpack.c.l.b16 %v4326
    %v4947 = vunpack.c.h.b16 %v4326
    %v4948 = vunpack.c.l.b16 %v4327
    %v4949 = vunpack.c.h.b16 %v4327
    %v4950 = vunpack.c.l.b16 %v4328
    %v4951 = vunpack.c.h.b16 %v4328
    %v4952 = vunpack.c.l.b16 %v4329
    %v4953 = vunpack.c.h.b16 %v4329
    %v4954 = vunpack.c.l.b16 %v4330
    %v4955 = vunpack.c.h.b16 %v4330
    %v4956 = vunpack.c.l.b16 %v4331
    %v4957 = vunpack.c.h.b16 %v4331
    %v4958 = vunpack.c.l.b16 %v4332
    %v4959 = vunpack.c.h.b16 %v4332
    %v4960 = vunpack.c.l.b16 %v4333
    %v4961 = vunpack.c.h.b16 %v4333
    %v4962 = vunpack.c.l.b16 %v4334
    %v4963 = vunpack.c.h.b16 %v4334
    %v4964 = vunpack.c.l.b16 %v4335
    %v4965 = vunpack.c.h.b16 %v4335
    %v4966 = vunpack.c.l.b16 %v4336
    %v4967 = vunpack.c.h.b16 %v4336
    %v4968 = vunpack.c.l.b16 %v4337
    %v4969 = vunpack.c.h.b16 %v4337
    %v4970 = vunpack.c.l.b16 %v4338
    %v4971 = vunpack.c.h.b16 %v4338
    %v4972 = vunpack.c.l.b16 %v4339
    %v4973 = vunpack.c.h.b16 %v4339
    %v4974 = vunpack.c.l.b16 %v4340
    %v4975 = vunpack.c.h.b16 %v4340
    %v4976 = vunpack.c.l.b16 %v4341
    %v4977 = vunpack.c.h.b16 %v4341
    %v4978 = vunpack.c.l.b16 %v4342
    %v4979 = vunpack.c.h.b16 %v4342
    %v4980 = vunpack.c.l.b16 %v4343
    %v4981 = vunpack.c.h.b16 %v4343
    %v4982 = vunpack.c.l.b16 %v4344
    %v4983 = vunpack.c.h.b16 %v4344
    %v4984 = vunpack.c.l.b16 %v4345
    %v4985 = vunpack.c.h.b16 %v4345
    %v4986 = vunpack.c.l.b16 %v4346
    %v4987 = vunpack.c.h.b16 %v4346
    %v4988 = vunpack.c.l.b16 %v4347
    %v4989 = vunpack.c.h.b16 %v4347
    %v4990 = vunpack.c.l.b16 %v4348
    %v4991 = vunpack.c.h.b16 %v4348
    %v4992 = vunpack.c.l.b16 %v4349
    %v4993 = vunpack.c.h.b16 %v4349
    %v4994 = vunpack.c.l.b16 %v4350
    %v4995 = vunpack.c.h.b16 %v4350
    %v4996 = vunpack.c.l.b16 %v4351
    %v4997 = vunpack.c.h.b16 %v4351
    %v4998 = vunpack.c.l.b16 %v4352
    %v4999 = vunpack.c.h.b16 %v4352
    %v5000 = vunpack.c.l.b16 %v4353
    %v5001 = vunpack.c.h.b16 %v4353
    %v5002 = vunpack.c.l.b16 %v4354
    %v5003 = vunpack.c.h.b16 %v4354
    %v5004 = vunpack.c.l.b16 %v4355
    %v5005 = vunpack.c.h.b16 %v4355
    %v5006 = vunpack.c.l.b16 %v4356
    %v5007 = vunpack.c.h.b16 %v4356
    %v5008 = vunpack.c.l.b16 %v4357
    %v5009 = vunpack.c.h.b16 %v4357
    %v5010 = vunpack.c.l.b16 %v4358
    %v5011 = vunpack.c.h.b16 %v4358
    %v5012 = vunpack.c.l.b16 %v4359
    %v5013 = vunpack.c.h.b16 %v4359
    %v5014 = vunpack.c.l.b16 %v4360
    %v5015 = vunpack.c.h.b16 %v4360
    %v5016 = vunpack.c.l.b16 %v4361
    %v5017 = vunpack.c.h.b16 %v4361
    %v5018 = vunpack.c.l.b16 %v4362
    %v5019 = vunpack.c.h.b16 %v4362
    %v5020 = vunpack.c.l.b16 %v4363
    %v5021 = vunpack.c.h.b16 %v4363
    %v5022 = vunpack.c.l.b16 %v4364
    %v5023 = vunpack.c.h.b16 %v4364
    %v5024 = vunpack.c.l.b16 %v4365
    %v5025 = vunpack.c.h.b16 %v4365
    %v5026 = vunpack.c.l.b16 %v4366
    %v5027 = vunpack.c.h.b16 %v4366
    %v5028 = vunpack.c.l.b16 %v4367
    %v5029 = vunpack.c.h.b16 %v4367
    %v5030 = vunpack.c.l.b16 %v4368
    %v5031 = vunpack.c.h.b16 %v4368
    %v5032 = vunpack.c.l.b16 %v4369
    %v5033 = vunpack.c.h.b16 %v4369
    %v5034 = vunpack.c.l.b16 %v4370
    %v5035 = vunpack.c.h.b16 %v4370
    %v5036 = vunpack.c.l.b16 %v4371
    %v5037 = vunpack.c.h.b16 %v4371
    %v5038 = vunpack.c.l.b16 %v4372
    %v5039 = vunpack.c.h.b16 %v4372
    %v5040 = vunpack.c.l.b16 %v4373
    %v5041 = vunpack.c.h.b16 %v4373
    %v5042 = vunpack.c.l.b16 %v4374
    %v5043 = vunpack.c.h.b16 %v4374
    %v5044 = vunpack.c.l.b16 %v4375
    %v5045 = vunpack.c.h.b16 %v4375
    %v5046 = vunpack.c.l.b16 %v4376
    %v5047 = vunpack.c.h.b16 %v4376
    %v5048 = vunpack.c.l.b16 %v4377
    %v5049 = vunpack.c.h.b16 %v4377
    %v5050 = vunpack.c.l.b16 %v4378
    %v5051 = vunpack.c.h.b16 %v4378
    %v5052 = vunpack.c.l.b16 %v4379
    %v5053 = vunpack.c.h.b16 %v4379
    %v5054 = vunpack.c.l.b16 %v4380
    %v5055 = vunpack.c.h.b16 %v4380
    %v5056 = vunpack.c.l.b16 %v4381
    %v5057 = vunpack.c.h.b16 %v4381
    %v5058 = vunpack.c.l.b16 %v4382
    %v5059 = vunpack.c.h.b16 %v4382
    %v5060 = vunpack.c.l.b16 %v4383
    %v5061 = vunpack.c.h.b16 %v4383
    %v5062 = vunpack.c.l.b16 %v4384
    %v5063 = vunpack.c.h.b16 %v4384
    %v5064 = vunpack.c.l.b16 %v4385
    %v5065 = vunpack.c.h.b16 %v4385
    %v5066 = vunpack.c.l.b16 %v4386
    %v5067 = vunpack.c.h.b16 %v4386
    %v5068 = vunpack.c.l.b16 %v4387
    %v5069 = vunpack.c.h.b16 %v4387
    %v5070 = vunpack.c.l.b16 %v4388
    %v5071 = vunpack.c.h.b16 %v4388
    %v5072 = vunpack.c.l.b16 %v4389
    %v5073 = vunpack.c.h.b16 %v4389
    %v5074 = vunpack.c.l.b16 %v4390
    %v5075 = vunpack.c.h.b16 %v4390
    %v5076 = vunpack.c.l.b16 %v4391
    %v5077 = vunpack.c.h.b16 %v4391
    %v5078 = vunpack.c.l.b16 %v4392
    %v5079 = vunpack.c.h.b16 %v4392
    %v5080 = vunpack.c.l.b16 %v4393
    %v5081 = vunpack.c.h.b16 %v4393
    %v5082 = vunpack.c.l.b16 %v4394
    %v5083 = vunpack.c.h.b16 %v4394
    %v5084 = vunpack.c.l.b16 %v4395
    %v5085 = vunpack.c.h.b16 %v4395
    %v5086 = vunpack.c.l.b16 %v4396
    %v5087 = vunpack.c.h.b16 %v4396
    %v5088 = vunpack.c.l.b16 %v4397
    %v5089 = vunpack.c.h.b16 %v4397
    %v5090 = vunpack.c.l.b16 %v4398
    %v5091 = vunpack.c.h.b16 %v4398
    %v5092 = vunpack.c.l.b16 %v4399
    %v5093 = vunpack.c.h.b16 %v4399
    %v5094 = vunpack.c.l.b16 %v4400
    %v5095 = vunpack.c.h.b16 %v4400
    %v5096 = vunpack.c.l.b16 %v4401
    %v5097 = vunpack.c.h.b16 %v4401
    %v5098 = vunpack.c.l.b16 %v4402
    %v5099 = vunpack.c.h.b16 %v4402
    %v5100 = vunpack.c.l.b16 %v4403
    %v5101 = vunpack.c.h.b16 %v4403
    %v5102 = vunpack.c.l.b16 %v4404
    %v5103 = vunpack.c.h.b16 %v4404
    %v5104 = vunpack.c.l.b16 %v4405
    %v5105 = vunpack.c.h.b16 %v4405
    %v5106 = vunpack.c.l.b16 %v4406
    %v5107 = vunpack.c.h.b16 %v4406
    %v5108 = vunpack.c.l.b16 %v4407
    %v5109 = vunpack.c.h.b16 %v4407
    %v5110 = vunpack.c.l.b16 %v4408
    %v5111 = vunpack.c.h.b16 %v4408
    %v5112 = vunpack.c.l.b16 %v4409
    %v5113 = vunpack.c.h.b16 %v4409
    %v5114 = vunpack.c.l.b16 %v4410
    %v5115 = vunpack.c.h.b16 %v4410
    %v5116 = vunpack.c.l.b16 %v4411
    %v5117 = vunpack.c.h.b16 %v4411
    %v5118 = vunpack.c.l.b16 %v4412
    %v5119 = vunpack.c.h.b16 %v4412
    %v5120 = vunpack.c.l.b16 %v4413
    %v5121 = vunpack.c.h.b16 %v4413
    %v5122 = vunpack.c.l.b16 %v4414
    %v5123 = vunpack.c.h.b16 %v4414
    %v5124 = vunpack.c.l.b16 %v4415
    %v5125 = vunpack.c.h.b16 %v4415
    %v5126 = vunpack.c.l.b16 %v4416
    %v5127 = vunpack.c.h.b16 %v4416
    %v5128 = vunpack.c.l.b16 %v4417
    %v5129 = vunpack.c.h.b16 %v4417
    %v5130 = vunpack.c.l.b16 %v4418
    %v5131 = vunpack.c.h.b16 %v4418
    %v5132 = vunpack.c.l.b16 %v4419
    %v5133 = vunpack.c.h.b16 %v4419
    %v5134 = vunpack.c.l.b16 %v4420
    %v5135 = vunpack.c.h.b16 %v4420
    %v5136 = vunpack.c.l.b16 %v4421
    %v5137 = vunpack.c.h.b16 %v4421
    %v5138 = vunpack.c.l.b16 %v4422
    %v5139 = vunpack.c.h.b16 %v4422
    %v5140 = vunpack.c.l.b16 %v4423
    %v5141 = vunpack.c.h.b16 %v4423
    %v5142 = vunpack.c.l.b16 %v4424
    %v5143 = vunpack.c.h.b16 %v4424
    %v5144 = vunpack.c.l.b16 %v4425
    %v5145 = vunpack.c.h.b16 %v4425
    %v5146 = vunpack.c.l.b16 %v4426
    %v5147 = vunpack.c.h.b16 %v4426
    %v5148 = vunpack.c.l.b16 %v4427
    %v5149 = vunpack.c.h.b16 %v4427
    %v5150 = vunpack.c.l.b16 %v4428
    %v5151 = vunpack.c.h.b16 %v4428
    %v5152 = vunpack.c.l.b16 %v4429
    %v5153 = vunpack.c.h.b16 %v4429
    %v5154 = vunpack.c.l.b16 %v4430
    %v5155 = vunpack.c.h.b16 %v4430
    %v5156 = vunpack.c.l.b16 %v4431
    %v5157 = vunpack.c.h.b16 %v4431
    %v5158 = vunpack.c.l.b16 %v4432
    %v5159 = vunpack.c.h.b16 %v4432
    %v5160 = vunpack.c.l.b16 %v4433
    %v5161 = vunpack.c.h.b16 %v4433
    %v5162 = vunpack.c.l.b16 %v4434
    %v5163 = vunpack.c.h.b16 %v4434
    %v5164 = vunpack.c.l.b16 %v4435
    %v5165 = vunpack.c.h.b16 %v4435
    %v5166 = vunpack.c.l.b16 %v4436
    %v5167 = vunpack.c.h.b16 %v4436
    %v5168 = vunpack.c.l.b16 %v4437
    %v5169 = vunpack.c.h.b16 %v4437
    %v5170 = vunpack.c.l.b16 %v4438
    %v5171 = vunpack.c.h.b16 %v4438
    %v5172 = vunpack.c.l.b16 %v4439
    %v5173 = vunpack.c.h.b16 %v4439
    %v5174 = vunpack.c.l.b16 %v4440
    %v5175 = vunpack.c.h.b16 %v4440
    %v5176 = vunpack.c.l.b16 %v4441
    %v5177 = vunpack.c.h.b16 %v4441
    %v5178 = vunpack.c.l.b16 %v4442
    %v5179 = vunpack.c.h.b16 %v4442
    %v5180 = vunpack.c.l.b16 %v4443
    %v5181 = vunpack.c.h.b16 %v4443
    %v5182 = vunpack.c.l.b16 %v4444
    %v5183 = vunpack.c.h.b16 %v4444
    %v5184 = vunpack.c.l.b16 %v4445
    %v5185 = vunpack.c.h.b16 %v4445
    %v5186 = vunpack.c.l.b16 %v4446
    %v5187 = vunpack.c.h.b16 %v4446
    %v5188 = vunpack.c.l.b16 %v4447
    %v5189 = vunpack.c.h.b16 %v4447
    %v5190 = vunpack.c.l.b16 %v4448
    %v5191 = vunpack.c.h.b16 %v4448
    %v5192 = vunpack.c.l.b16 %v4449
    %v5193 = vunpack.c.h.b16 %v4449
    %v5194 = vunpack.c.l.b16 %v4450
    %v5195 = vunpack.c.h.b16 %v4450
    %v5196 = vunpack.c.l.b16 %v4451
    %v5197 = vunpack.c.h.b16 %v4451
    %v5198 = vunpack.c.l.b16 %v4452
    %v5199 = vunpack.c.h.b16 %v4452
    %v5200 = vunpack.c.l.b16 %v4453
    %v5201 = vunpack.c.h.b16 %v4453
    %v5202 = vunpack.c.l.b16 %v4454
    %v5203 = vunpack.c.h.b16 %v4454
    %v5204 = vunpack.c.l.b16 %v4455
    %v5205 = vunpack.c.h.b16 %v4455
    %v5206 = vunpack.c.l.b16 %v4456
    %v5207 = vunpack.c.h.b16 %v4456
    %v5208 = vunpack.c.l.b16 %v4457
    %v5209 = vunpack.c.h.b16 %v4457
    %v5210 = vunpack.c.l.b16 %v4458
    %v5211 = vunpack.c.h.b16 %v4458
    %v5212 = vunpack.c.l.b16 %v4459
    %v5213 = vunpack.c.h.b16 %v4459
    %v5214 = vunpack.c.l.b16 %v4460
    %v5215 = vunpack.c.h.b16 %v4460
    %v5216 = vunpack.c.l.b16 %v4461
    %v5217 = vunpack.c.h.b16 %v4461
    %v5218 = vunpack.c.l.b16 %v4462
    %v5219 = vunpack.c.h.b16 %v4462
    %v5220 = vunpack.c.l.b16 %v4463
    %v5221 = vunpack.c.h.b16 %v4463
    %v5222 = vunpack.c.l.b16 %v4464
    %v5223 = vunpack.c.h.b16 %v4464
    %v5224 = vunpack.c.l.b16 %v4465
    %v5225 = vunpack.c.h.b16 %v4465
    %v5226 = vunpack.c.l.b16 %v4466
    %v5227 = vunpack.c.h.b16 %v4466
    %v5228 = vunpack.c.l.b16 %v4467
    %v5229 = vunpack.c.h.b16 %v4467
    %v5230 = vunpack.c.l.b16 %v4468
    %v5231 = vunpack.c.h.b16 %v4468
    %v5232 = vunpack.c.l.b16 %v4469
    %v5233 = vunpack.c.h.b16 %v4469
    %v5234 = vunpack.c.l.b16 %v4470
    %v5235 = vunpack.c.h.b16 %v4470
    %v5236 = vunpack.c.l.b16 %v4471
    %v5237 = vunpack.c.h.b16 %v4471
    %v5238 = vunpack.c.l.b16 %v4472
    %v5239 = vunpack.c.h.b16 %v4472
    %v5240 = vunpack.c.l.b16 %v4473
    %v5241 = vunpack.c.h.b16 %v4473
    %v5242 = vunpack.c.l.b16 %v4474
    %v5243 = vunpack.c.h.b16 %v4474
    %v5244 = vunpack.c.l.b16 %v4475
    %v5245 = vunpack.c.h.b16 %v4475
    %v5246 = vunpack.c.l.b16 %v4476
    %v5247 = vunpack.c.h.b16 %v4476
    %v5248 = vunpack.c.l.b16 %v4477
    %v5249 = vunpack.c.h.b16 %v4477
    %v5250 = vunpack.c.l.b16 %v4478
    %v5251 = vunpack.c.h.b16 %v4478
    %v5252 = vunpack.c.l.b16 %v4479
    %v5253 = vunpack.c.h.b16 %v4479
    %v5254 = vunpack.c.l.b16 %v4480
    %v5255 = vunpack.c.h.b16 %v4480
    %v5256 = vunpack.c.l.b16 %v4481
    %v5257 = vunpack.c.h.b16 %v4481
    %v5258 = vunpack.c.l.b16 %v4482
    %v5259 = vunpack.c.h.b16 %v4482
    %v5260 = vunpack.c.l.b16 %v4483
    %v5261 = vunpack.c.h.b16 %v4483
    %v5262 = vunpack.c.l.b16 %v4484
    %v5263 = vunpack.c.h.b16 %v4484
    %v5264 = vunpack.c.l.b16 %v4485
    %v5265 = vunpack.c.h.b16 %v4485
    %v5266 = vunpack.c.l.b16 %v4486
    %v5267 = vunpack.c.h.b16 %v4486
    %v5268 = vunpack.c.l.b16 %v4487
    %v5269 = vunpack.c.h.b16 %v4487
    %v5270 = vunpack.c.l.b16 %v4488
    %v5271 = vunpack.c.h.b16 %v4488
    %v5272 = vunpack.c.l.b16 %v4489
    %v5273 = vunpack.c.h.b16 %v4489
    %v5274 = vunpack.c.l.b16 %v4490
    %v5275 = vunpack.c.h.b16 %v4490
    %v5276 = vunpack.c.l.b16 %v4491
    %v5277 = vunpack.c.h.b16 %v4491
    %v5278 = vunpack.c.l.b16 %v4492
    %v5279 = vunpack.c.h.b16 %v4492
    %v5280 = vunpack.c.l.b16 %v4493
    %v5281 = vunpack.c.h.b16 %v4493
    %v5282 = vunpack.c.l.b16 %v4494
    %v5283 = vunpack.c.h.b16 %v4494
    %v5284 = vunpack.c.l.b16 %v4495
    %v5285 = vunpack.c.h.b16 %v4495
    %v5286 = vpack.c.b16 %v4778, %v4774
    %v5287 = vpack.c.b16 %v4779, %v4775
    %v5288 = vpack.c.b16 %v4780, %v4776
    %v5289 = vpack.c.b16 %v4781, %v4777
    %v5290 = vpack.c.b16 %v4786, %v4782
    %v5291 = vpack.c.b16 %v4787, %v4783
    %v5292 = vpack.c.b16 %v4788, %v4784
    %v5293 = vpack.c.b16 %v4789, %v4785
    %v5294 = vpack.c.b16 %v4794, %v4790
    %v5295 = vpack.c.b16 %v4795, %v4791
    %v5296 = vpack.c.b16 %v4796, %v4792
    %v5297 = vpack.c.b16 %v4797, %v4793
    %v5298 = vpack.c.b16 %v4802, %v4798
    %v5299 = vpack.c.b16 %v4803, %v4799
    %v5300 = vpack.c.b16 %v4804, %v4800
    %v5301 = vpack.c.b16 %v4805, %v4801
    %v5302 = vpack.c.b16 %v4810, %v4806
    %v5303 = vpack.c.b16 %v4811, %v4807
    %v5304 = vpack.c.b16 %v4812, %v4808
    %v5305 = vpack.c.b16 %v4813, %v4809
    %v5306 = vpack.c.b16 %v4818, %v4814
    %v5307 = vpack.c.b16 %v4819, %v4815
    %v5308 = vpack.c.b16 %v4820, %v4816
    %v5309 = vpack.c.b16 %v4821, %v4817
    %v5310 = vpack.c.b16 %v4826, %v4822
    %v5311 = vpack.c.b16 %v4827, %v4823
    %v5312 = vpack.c.b16 %v4828, %v4824
    %v5313 = vpack.c.b16 %v4829, %v4825
    %v5314 = vpack.c.b16 %v4834, %v4830
    %v5315 = vpack.c.b16 %v4835, %v4831
    %v5316 = vpack.c.b16 %v4836, %v4832
    %v5317 = vpack.c.b16 %v4837, %v4833
    %v5318 = vpack.c.b16 %v4842, %v4838
    %v5319 = vpack.c.b16 %v4843, %v4839
    %v5320 = vpack.c.b16 %v4844, %v4840
    %v5321 = vpack.c.b16 %v4845, %v4841
    %v5322 = vpack.c.b16 %v4850, %v4846
    %v5323 = vpack.c.b16 %v4851, %v4847
    %v5324 = vpack.c.b16 %v4852, %v4848
    %v5325 = vpack.c.b16 %v4853, %v4849
    %v5326 = vpack.c.b16 %v4858, %v4854
    %v5327 = vpack.c.b16 %v4859, %v4855
    %v5328 = vpack.c.b16 %v4860, %v4856
    %v5329 = vpack.c.b16 %v4861, %v4857
    %v5330 = vpack.c.b16 %v4866, %v4862
    %v5331 = vpack.c.b16 %v4867, %v4863
    %v5332 = vpack.c.b16 %v4868, %v4864
    %v5333 = vpack.c.b16 %v4869, %v4865
    %v5334 = vpack.c.b16 %v4874, %v4870
    %v5335 = vpack.c.b16 %v4875, %v4871
    %v5336 = vpack.c.b16 %v4876, %v4872
    %v5337 = vpack.c.b16 %v4877, %v4873
    %v5338 = vpack.c.b16 %v4882, %v4878
    %v5339 = vpack.c.b16 %v4883, %v4879
    %v5340 = vpack.c.b16 %v4884, %v4880
    %v5341 = vpack.c.b16 %v4885, %v4881
    %v5342 = vpack.c.b16 %v4890, %v4886
    %v5343 = vpack.c.b16 %v4891, %v4887
    %v5344 = vpack.c.b16 %v4892, %v4888
    %v5345 = vpack.c.b16 %v4893, %v4889
    %v5346 = vpack.c.b16 %v4898, %v4894
    %v5347 = vpack.c.b16 %v4899, %v4895
    %v5348 = vpack.c.b16 %v4900, %v4896
    %v5349 = vpack.c.b16 %v4901, %v4897
    %v5350 = vpack.c.b16 %v4906, %v4902
    %v5351 = vpack.c.b16 %v4907, %v4903
    %v5352 = vpack.c.b16 %v4908, %v4904
    %v5353 = vpack.c.b16 %v4909, %v4905
    %v5354 = vpack.c.b16 %v4914, %v4910
    %v5355 = vpack.c.b16 %v4915, %v4911
    %v5356 = vpack.c.b16 %v4916, %v4912
    %v5357 = vpack.c.b16 %v4917, %v4913
    %v5358 = vpack.c.b16 %v4922, %v4918
    %v5359 = vpack.c.b16 %v4923, %v4919
    %v5360 = vpack.c.b16 %v4924, %v4920
    %v5361 = vpack.c.b16 %v4925, %v4921
    %v5362 = vpack.c.b16 %v4930, %v4926
    %v5363 = vpack.c.b16 %v4931, %v4927
    %v5364 = vpack.c.b16 %v4932, %v4928
    %v5365 = vpack.c.b16 %v4933, %v4929
    %v5366 = vpack.c.b16 %v4938, %v4934
    %v5367 = vpack.c.b16 %v4939, %v4935
    %v5368 = vpack.c.b16 %v4940, %v4936
    %v5369 = vpack.c.b16 %v4941, %v4937
    %v5370 = vpack.c.b16 %v4946, %v4942
    %v5371 = vpack.c.b16 %v4947, %v4943
    %v5372 = vpack.c.b16 %v4948, %v4944
    %v5373 = vpack.c.b16 %v4949, %v4945
    %v5374 = vpack.c.b16 %v4954, %v4950
    %v5375 = vpack.c.b16 %v4955, %v4951
    %v5376 = vpack.c.b16 %v4956, %v4952
    %v5377 = vpack.c.b16 %v4957, %v4953
    %v5378 = vpack.c.b16 %v4962, %v4958
    %v5379 = vpack.c.b16 %v4963, %v4959
    %v5380 = vpack.c.b16 %v4964, %v4960
    %v5381 = vpack.c.b16 %v4965, %v4961
    %v5382 = vpack.c.b16 %v4970, %v4966
    %v5383 = vpack.c.b16 %v4971, %v4967
    %v5384 = vpack.c.b16 %v4972, %v4968
    %v5385 = vpack.c.b16 %v4973, %v4969
    %v5386 = vpack.c.b16 %v4978, %v4974
    %v5387 = vpack.c.b16 %v4979, %v4975
    %v5388 = vpack.c.b16 %v4980, %v4976
    %v5389 = vpack.c.b16 %v4981, %v4977
    %v5390 = vpack.c.b16 %v4986, %v4982
    %v5391 = vpack.c.b16 %v4987, %v4983
    %v5392 = vpack.c.b16 %v4988, %v4984
    %v5393 = vpack.c.b16 %v4989, %v4985
    %v5394 = vpack.c.b16 %v4994, %v4990
    %v5395 = vpack.c.b16 %v4995, %v4991
    %v5396 = vpack.c.b16 %v4996, %v4992
    %v5397 = vpack.c.b16 %v4997, %v4993
    %v5398 = vpack.c.b16 %v5002, %v4998
    %v5399 = vpack.c.b16 %v5003, %v4999
    %v5400 = vpack.c.b16 %v5004, %v5000
    %v5401 = vpack.c.b16 %v5005, %v5001
    %v5402 = vpack.c.b16 %v5010, %v5006
    %v5403 = vpack.c.b16 %v5011, %v5007
    %v5404 = vpack.c.b16 %v5012, %v5008
    %v5405 = vpack.c.b16 %v5013, %v5009
    %v5406 = vpack.c.b16 %v5018, %v5014
    %v5407 = vpack.c.b16 %v5019, %v5015
    %v5408 = vpack.c.b16 %v5020, %v5016
    %v5409 = vpack.c.b16 %v5021, %v5017
    %v5410 = vpack.c.b16 %v5026, %v5022
    %v5411 = vpack.c.b16 %v5027, %v5023
    %v5412 = vpack.c.b16 %v5028, %v5024
    %v5413 = vpack.c.b16 %v5029, %v5025
    %v5414 = vpack.c.b16 %v5034, %v5030
    %v5415 = vpack.c.b16 %v5035, %v5031
    %v5416 = vpack.c.b16 %v5036, %v5032
    %v5417 = vpack.c.b16 %v5037, %v5033
    %v5418 = vpack.c.b16 %v5042, %v5038
    %v5419 = vpack.c.b16 %v5043, %v5039
    %v5420 = vpack.c.b16 %v5044, %v5040
    %v5421 = vpack.c.b16 %v5045, %v5041
    %v5422 = vpack.c.b16 %v5050, %v5046
    %v5423 = vpack.c.b16 %v5051, %v5047
    %v5424 = vpack.c.b16 %v5052, %v5048
    %v5425 = vpack.c.b16 %v5053, %v5049
    %v5426 = vpack.c.b16 %v5058, %v5054
    %v5427 = vpack.c.b16 %v5059, %v5055
    %v5428 = vpack.c.b16 %v5060, %v5056
    %v5429 = vpack.c.b16 %v5061, %v5057
    %v5430 = vpack.c.b16 %v5066, %v5062
    %v5431 = vpack.c.b16 %v5067, %v5063
    %v5432 = vpack.c.b16 %v5068, %v5064
    %v5433 = vpack.c.b16 %v5069, %v5065
    %v5434 = vpack.c.b16 %v5074, %v5070
    %v5435 = vpack.c.b16 %v5075, %v5071
    %v5436 = vpack.c.b16 %v5076, %v5072
    %v5437 = vpack.c.b16 %v5077, %v5073
    %v5438 = vpack.c.b16 %v5082, %v5078
    %v5439 = vpack.c.b16 %v5083, %v5079
    %v5440 = vpack.c.b16 %v5084, %v5080
    %v5441 = vpack.c.b16 %v5085, %v5081
    %v5442 = vpack.c.b16 %v5090, %v5086
    %v5443 = vpack.c.b16 %v5091, %v5087
    %v5444 = vpack.c.b16 %v5092, %v5088
    %v5445 = vpack.c.b16 %v5093, %v5089
    %v5446 = vpack.c.b16 %v5098, %v5094
    %v5447 = vpack.c.b16 %v5099, %v5095
    %v5448 = vpack.c.b16 %v5100, %v5096
    %v5449 = vpack.c.b16 %v5101, %v5097
    %v5450 = vpack.c.b16 %v5106, %v5102
    %v5451 = vpack.c.b16 %v5107, %v5103
    %v5452 = vpack.c.b16 %v5108, %v5104
    %v5453 = vpack.c.b16 %v5109, %v5105
    %v5454 = vpack.c.b16 %v5114, %v5110
    %v5455 = vpack.c.b16 %v5115, %v5111
    %v5456 = vpack.c.b16 %v5116, %v5112
    %v5457 = vpack.c.b16 %v5117, %v5113
    %v5458 = vpack.c.b16 %v5122, %v5118
    %v5459 = vpack.c.b16 %v5123, %v5119
    %v5460 = vpack.c.b16 %v5124, %v5120
    %v5461 = vpack.c.b16 %v5125, %v5121
    %v5462 = vpack.c.b16 %v5130, %v5126
    %v5463 = vpack.c.b16 %v5131, %v5127
    %v5464 = vpack.c.b16 %v5132, %v5128
    %v5465 = vpack.c.b16 %v5133, %v5129
    %v5466 = vpack.c.b16 %v5138, %v5134
    %v5467 = vpack.c.b16 %v5139, %v5135
    %v5468 = vpack.c.b16 %v5140, %v5136
    %v5469 = vpack.c.b16 %v5141, %v5137
    %v5470 = vpack.c.b16 %v5146, %v5142
    %v5471 = vpack.c.b16 %v5147, %v5143
    %v5472 = vpack.c.b16 %v5148, %v5144
    %v5473 = vpack.c.b16 %v5149, %v5145
    %v5474 = vpack.c.b16 %v5154, %v5150
    %v5475 = vpack.c.b16 %v5155, %v5151
    %v5476 = vpack.c.b16 %v5156, %v5152
    %v5477 = vpack.c.b16 %v5157, %v5153
    %v5478 = vpack.c.b16 %v5162, %v5158
    %v5479 = vpack.c.b16 %v5163, %v5159
    %v5480 = vpack.c.b16 %v5164, %v5160
    %v5481 = vpack.c.b16 %v5165, %v5161
    %v5482 = vpack.c.b16 %v5170, %v5166
    %v5483 = vpack.c.b16 %v5171, %v5167
    %v5484 = vpack.c.b16 %v5172, %v5168
    %v5485 = vpack.c.b16 %v5173, %v5169
    %v5486 = vpack.c.b16 %v5178, %v5174
    %v5487 = vpack.c.b16 %v5179, %v5175
    %v5488 = vpack.c.b16 %v5180, %v5176
    %v5489 = vpack.c.b16 %v5181, %v5177
    %v5490 = vpack.c.b16 %v5186, %v5182
    %v5491 = vpack.c.b16 %v5187, %v5183
    %v5492 = vpack.c.b16 %v5188, %v5184
    %v5493 = vpack.c.b16 %v5189, %v5185
    %v5494 = vpack.c.b16 %v5194, %v5190
    %v5495 = vpack.c.b16 %v5195, %v5191
    %v5496 = vpack.c.b16 %v5196, %v5192
    %v5497 = vpack.c.b16 %v5197, %v5193
    %v5498 = vpack.c.b16 %v5202, %v5198
    %v5499 = vpack.c.b16 %v5203, %v5199
    %v5500 = vpack.c.b16 %v5204, %v5200
    %v5501 = vpack.c.b16 %v5205, %v5201
    %v5502 = vpack.c.b16 %v5210, %v5206
    %v5503 = vpack.c.b16 %v5211, %v5207
    %v5504 = vpack.c.b16 %v5212, %v5208
    %v5505 = vpack.c.b16 %v5213, %v5209
    %v5506 = vpack.c.b16 %v5218, %v5214
    %v5507 = vpack.c.b16 %v5219, %v5215
    %v5508 = vpack.c.b16 %v5220, %v5216
    %v5509 = vpack.c.b16 %v5221, %v5217
    %v5510 = vpack.c.b16 %v5226, %v5222
    %v5511 = vpack.c.b16 %v5227, %v5223
    %v5512 = vpack.c.b16 %v5228, %v5224
    %v5513 = vpack.c.b16 %v5229, %v5225
    %v5514 = vpack.c.b16 %v5234, %v5230
    %v5515 = vpack.c.b16 %v5235, %v5231
    %v5516 = vpack.c.b16 %v5236, %v5232
    %v5517 = vpack.c.b16 %v5237, %v5233
    %v5518 = vpack.c.b16 %v5242, %v5238
    %v5519 = vpack.c.b16 %v5243, %v5239
    %v5520 = vpack.c.b16 %v5244, %v5240
    %v5521 = vpack.c.b16 %v5245, %v5241
    %v5522 = vpack.c.b16 %v5250, %v5246
    %v5523 = vpack.c.b16 %v5251, %v5247
    %v5524 = vpack.c.b16 %v5252, %v5248
    %v5525 = vpack.c.b16 %v5253, %v5249
    %v5526 = vpack.c.b16 %v5258, %v5254
    %v5527 = vpack.c.b16 %v5259, %v5255
    %v5528 = vpack.c.b16 %v5260, %v5256
    %v5529 = vpack.c.b16 %v5261, %v5257
    %v5530 = vpack.c.b16 %v5266, %v5262
    %v5531 = vpack.c.b16 %v5267, %v5263
    %v5532 = vpack.c.b16 %v5268, %v5264
    %v5533 = vpack.c.b16 %v5269, %v5265
    %v5534 = vpack.c.b16 %v5274, %v5270
    %v5535 = vpack.c.b16 %v5275, %v5271
    %v5536 = vpack.c.b16 %v5276, %v5272
    %v5537 = vpack.c.b16 %v5277, %v5273
    %v5538 = vpack.c.b16 %v5282, %v5278
    %v5539 = vpack.c.b16 %v5283, %v5279
    %v5540 = vpack.c.b16 %v5284, %v5280
    %v5541 = vpack.c.b16 %v5285, %v5281
    %5798 = vmatprep.subr.bf16.mxu0 %v5315
    %5799 = vmatpush1.bf16.msra.mxu0 %v5314
    %5800 = vmatprep.subr.bf16.mxu0 %v5311
    %5801 = vmatpush1.bf16.msra.mxu0 %v5310
    %5802 = vmatprep.subr.bf16.mxu0 %v5307
    %5803 = vmatpush1.bf16.msra.mxu0 %v5306
    %5804 = vmatprep.subr.bf16.mxu0 %v5303
    %5805 = vmatpush1.bf16.msra.mxu0 %v5302
    %5806 = vmatprep.subr.bf16.mxu0 %v5299
    %5807 = vmatpush1.bf16.msra.mxu0 %v5298
    %5808 = vmatprep.subr.bf16.mxu0 %v5295
    %5809 = vmatpush1.bf16.msra.mxu0 %v5294
    %5810 = vmatprep.subr.bf16.mxu0 %v5291
    %5811 = vmatpush1.bf16.msra.mxu0 %v5290
    %5812 = vmatprep.subr.bf16.mxu0 %v5287
    %5813 = vmatpush1.bf16.msra.mxu0 %v5286
    %5814 = vmatprep.subr.bf16.mxu0 %v5347
    %5815 = vmatpush2.bf16.msra.mxu0 %v5346
    %5816 = vmatprep.subr.bf16.mxu0 %v5343
    %5817 = vmatpush2.bf16.msra.mxu0 %v5342
    %5818 = vmatprep.subr.bf16.mxu0 %v5339
    %5819 = vmatpush2.bf16.msra.mxu0 %v5338
    %5820 = vmatprep.subr.bf16.mxu0 %v5335
    %5821 = vmatpush2.bf16.msra.mxu0 %v5334
    %5822 = vmatprep.subr.bf16.mxu0 %v5331
    %5823 = vmatpush2.bf16.msra.mxu0 %v5330
    %5824 = vmatprep.subr.bf16.mxu0 %v5327
    %5825 = vmatpush2.bf16.msra.mxu0 %v5326
    %5826 = vmatprep.subr.bf16.mxu0 %v5323
    %5827 = vmatpush2.bf16.msra.mxu0 %v5322
    %5828 = vmatprep.subr.bf16.mxu0 %v5319
    %5829 = vmatpush2.bf16.msra.mxu0 %v5318
    %5830 = vmatprep.mubr.bf16.mxu0 %v4233
    %5831 = vmatmul.mubr.bf16.gmra.mxu0 %v4232
    %v5832 = vpop.f32.mrf.mxu0
    %v5833 = vadd.f32 %v4501, %v5832
    %v5834 = vpop.f32.mrf.mxu0
    %v5835 = vadd.f32 %v4505, %v5834
    %v5836 = vpop.f32.mrf.mxu0
    %v5837 = vpop.f32.mrf.mxu0
    %5838 = vdwg.mxu0
    %5839 = vmatprep.subr.bf16.mxu0 %v5379
    %5840 = vmatpush1.bf16.msra.mxu0 %v5378
    %5841 = vmatprep.subr.bf16.mxu0 %v5375
    %5842 = vmatpush1.bf16.msra.mxu0 %v5374
    %5843 = vmatprep.subr.bf16.mxu0 %v5371
    %5844 = vmatpush1.bf16.msra.mxu0 %v5370
    %5845 = vmatprep.subr.bf16.mxu0 %v5367
    %5846 = vmatpush1.bf16.msra.mxu0 %v5366
    %5847 = vmatprep.subr.bf16.mxu0 %v5363
    %5848 = vmatpush1.bf16.msra.mxu0 %v5362
    %5849 = vmatprep.subr.bf16.mxu0 %v5359
    %5850 = vmatpush1.bf16.msra.mxu0 %v5358
    %5851 = vmatprep.subr.bf16.mxu0 %v5355
    %5852 = vmatpush1.bf16.msra.mxu0 %v5354
    %5853 = vmatprep.subr.bf16.mxu0 %v5351
    %5854 = vmatpush1.bf16.msra.mxu0 %v5350
    %5855 = vmatprep.subr.bf16.mxu0 %v5411
    %5856 = vmatpush2.bf16.msra.mxu0 %v5410
    %5857 = vmatprep.subr.bf16.mxu0 %v5407
    %5858 = vmatpush2.bf16.msra.mxu0 %v5406
    %5859 = vmatprep.subr.bf16.mxu0 %v5403
    %5860 = vmatpush2.bf16.msra.mxu0 %v5402
    %5861 = vmatprep.subr.bf16.mxu0 %v5399
    %5862 = vmatpush2.bf16.msra.mxu0 %v5398
    %5863 = vmatprep.subr.bf16.mxu0 %v5395
    %5864 = vmatpush2.bf16.msra.mxu0 %v5394
    %5865 = vmatprep.subr.bf16.mxu0 %v5391
    %5866 = vmatpush2.bf16.msra.mxu0 %v5390
    %5867 = vmatprep.subr.bf16.mxu0 %v5387
    %5868 = vmatpush2.bf16.msra.mxu0 %v5386
    %5869 = vmatprep.subr.bf16.mxu0 %v5383
    %5870 = vmatpush2.bf16.msra.mxu0 %v5382
    %5871 = vmatprep.mubr.bf16.mxu0 %v4235
    %5872 = vmatmul.mubr.bf16.gmra.mxu0 %v4234
    %v5873 = vpop.f32.mrf.mxu0
    %v5874 = vadd.f32 %v5833, %v5873
    %v5875 = vpop.f32.mrf.mxu0
    %v5876 = vadd.f32 %v5835, %v5875
    %v5877 = vpop.f32.mrf.mxu0
    %v5878 = vpop.f32.mrf.mxu0
    %5879 = vdwg.mxu0
    %5880 = vmatprep.subr.bf16.mxu0 %v5443
    %5881 = vmatpush1.bf16.msra.mxu0 %v5442
    %5882 = vmatprep.subr.bf16.mxu0 %v5439
    %5883 = vmatpush1.bf16.msra.mxu0 %v5438
    %5884 = vmatprep.subr.bf16.mxu0 %v5435
    %5885 = vmatpush1.bf16.msra.mxu0 %v5434
    %5886 = vmatprep.subr.bf16.mxu0 %v5431
    %5887 = vmatpush1.bf16.msra.mxu0 %v5430
    %5888 = vmatprep.subr.bf16.mxu0 %v5427
    %5889 = vmatpush1.bf16.msra.mxu0 %v5426
    %5890 = vmatprep.subr.bf16.mxu0 %v5423
    %5891 = vmatpush1.bf16.msra.mxu0 %v5422
    %5892 = vmatprep.subr.bf16.mxu0 %v5419
    %5893 = vmatpush1.bf16.msra.mxu0 %v5418
    %5894 = vmatprep.subr.bf16.mxu0 %v5415
    %5895 = vmatpush1.bf16.msra.mxu0 %v5414
    %5896 = vmatprep.subr.bf16.mxu0 %v5475
    %5897 = vmatpush2.bf16.msra.mxu0 %v5474
    %5898 = vmatprep.subr.bf16.mxu0 %v5471
    %5899 = vmatpush2.bf16.msra.mxu0 %v5470
    %5900 = vmatprep.subr.bf16.mxu0 %v5467
    %5901 = vmatpush2.bf16.msra.mxu0 %v5466
    %5902 = vmatprep.subr.bf16.mxu0 %v5463
    %5903 = vmatpush2.bf16.msra.mxu0 %v5462
    %5904 = vmatprep.subr.bf16.mxu0 %v5459
    %5905 = vmatpush2.bf16.msra.mxu0 %v5458
    %5906 = vmatprep.subr.bf16.mxu0 %v5455
    %5907 = vmatpush2.bf16.msra.mxu0 %v5454
    %5908 = vmatprep.subr.bf16.mxu0 %v5451
    %5909 = vmatpush2.bf16.msra.mxu0 %v5450
    %5910 = vmatprep.subr.bf16.mxu0 %v5447
    %5911 = vmatpush2.bf16.msra.mxu0 %v5446
    %5912 = vmatprep.mubr.bf16.mxu0 %v4237
    %5913 = vmatmul.mubr.bf16.gmra.mxu0 %v4236
    %v5914 = vpop.f32.mrf.mxu0
    %v5915 = vadd.f32 %v5874, %v5914
    %v5916 = vpop.f32.mrf.mxu0
    %v5917 = vadd.f32 %v5876, %v5916
    %v5918 = vpop.f32.mrf.mxu0
    %v5919 = vpop.f32.mrf.mxu0
    %5920 = vdwg.mxu0
    %5921 = vmatprep.subr.bf16.mxu0 %v5507
    %5922 = vmatpush1.bf16.msra.mxu0 %v5506
    %5923 = vmatprep.subr.bf16.mxu0 %v5503
    %5924 = vmatpush1.bf16.msra.mxu0 %v5502
    %5925 = vmatprep.subr.bf16.mxu0 %v5499
    %5926 = vmatpush1.bf16.msra.mxu0 %v5498
    %5927 = vmatprep.subr.bf16.mxu0 %v5495
    %5928 = vmatpush1.bf16.msra.mxu0 %v5494
    %5929 = vmatprep.subr.bf16.mxu0 %v5491
    %5930 = vmatpush1.bf16.msra.mxu0 %v5490
    %5931 = vmatprep.subr.bf16.mxu0 %v5487
    %5932 = vmatpush1.bf16.msra.mxu0 %v5486
    %5933 = vmatprep.subr.bf16.mxu0 %v5483
    %5934 = vmatpush1.bf16.msra.mxu0 %v5482
    %5935 = vmatprep.subr.bf16.mxu0 %v5479
    %5936 = vmatpush1.bf16.msra.mxu0 %v5478
    %5937 = vmatprep.subr.bf16.mxu0 %v5539
    %5938 = vmatpush2.bf16.msra.mxu0 %v5538
    %5939 = vmatprep.subr.bf16.mxu0 %v5535
    %5940 = vmatpush2.bf16.msra.mxu0 %v5534
    %5941 = vmatprep.subr.bf16.mxu0 %v5531
    %5942 = vmatpush2.bf16.msra.mxu0 %v5530
    %5943 = vmatprep.subr.bf16.mxu0 %v5527
    %5944 = vmatpush2.bf16.msra.mxu0 %v5526
    %5945 = vmatprep.subr.bf16.mxu0 %v5523
    %5946 = vmatpush2.bf16.msra.mxu0 %v5522
    %5947 = vmatprep.subr.bf16.mxu0 %v5519
    %5948 = vmatpush2.bf16.msra.mxu0 %v5518
    %5949 = vmatprep.subr.bf16.mxu0 %v5515
    %5950 = vmatpush2.bf16.msra.mxu0 %v5514
    %5951 = vmatprep.subr.bf16.mxu0 %v5511
    %5952 = vmatpush2.bf16.msra.mxu0 %v5510
    %5953 = vmatprep.mubr.bf16.mxu0 %v4239
    %5954 = vmatmul.mubr.bf16.gmra.mxu0 %v4238
    %v5955 = vpop.f32.mrf.mxu0
    %v5956 = vadd.f32 %v5915, %v5955
    %v5957 = vpop.f32.mrf.mxu0
    %v5958 = vadd.f32 %v5917, %v5957
    %v5959 = vpop.f32.mrf.mxu0
    %v5960 = vpop.f32.mrf.mxu0
    %5961 = vdwg.mxu0
    %5962 = vmatprep.subr.bf16.mxu0 %v5317
    %5963 = vmatpush1.bf16.msra.mxu0 %v5316
    %5964 = vmatprep.subr.bf16.mxu0 %v5313
    %5965 = vmatpush1.bf16.msra.mxu0 %v5312
    %5966 = vmatprep.subr.bf16.mxu0 %v5309
    %5967 = vmatpush1.bf16.msra.mxu0 %v5308
    %5968 = vmatprep.subr.bf16.mxu0 %v5305
    %5969 = vmatpush1.bf16.msra.mxu0 %v5304
    %5970 = vmatprep.subr.bf16.mxu0 %v5301
    %5971 = vmatpush1.bf16.msra.mxu0 %v5300
    %5972 = vmatprep.subr.bf16.mxu0 %v5297
    %5973 = vmatpush1.bf16.msra.mxu0 %v5296
    %5974 = vmatprep.subr.bf16.mxu0 %v5293
    %5975 = vmatpush1.bf16.msra.mxu0 %v5292
    %5976 = vmatprep.subr.bf16.mxu0 %v5289
    %5977 = vmatpush1.bf16.msra.mxu0 %v5288
    %5978 = vmatprep.subr.bf16.mxu0 %v5349
    %5979 = vmatpush2.bf16.msra.mxu0 %v5348
    %5980 = vmatprep.subr.bf16.mxu0 %v5345
    %5981 = vmatpush2.bf16.msra.mxu0 %v5344
    %5982 = vmatprep.subr.bf16.mxu0 %v5341
    %5983 = vmatpush2.bf16.msra.mxu0 %v5340
    %5984 = vmatprep.subr.bf16.mxu0 %v5337
    %5985 = vmatpush2.bf16.msra.mxu0 %v5336
    %5986 = vmatprep.subr.bf16.mxu0 %v5333
    %5987 = vmatpush2.bf16.msra.mxu0 %v5332
    %5988 = vmatprep.subr.bf16.mxu0 %v5329
    %5989 = vmatpush2.bf16.msra.mxu0 %v5328
    %5990 = vmatprep.subr.bf16.mxu0 %v5325
    %5991 = vmatpush2.bf16.msra.mxu0 %v5324
    %5992 = vmatprep.subr.bf16.mxu0 %v5321
    %5993 = vmatpush2.bf16.msra.mxu0 %v5320
    %5994 = vmatprep.mubr.bf16.mxu0 %v4233
    %5995 = vmatmul.mubr.bf16.gmra.mxu0 %v4232
    %v5996 = vpop.f32.mrf.mxu0
    %v5997 = vadd.f32 %v4509, %v5996
    %v5998 = vpop.f32.mrf.mxu0
    %v5999 = vadd.f32 %v4513, %v5998
    %v6000 = vpop.f32.mrf.mxu0
    %v6001 = vpop.f32.mrf.mxu0
    %6002 = vdwg.mxu0
    %6003 = vmatprep.subr.bf16.mxu0 %v5381
    %6004 = vmatpush1.bf16.msra.mxu0 %v5380
    %6005 = vmatprep.subr.bf16.mxu0 %v5377
    %6006 = vmatpush1.bf16.msra.mxu0 %v5376
    %6007 = vmatprep.subr.bf16.mxu0 %v5373
    %6008 = vmatpush1.bf16.msra.mxu0 %v5372
    %6009 = vmatprep.subr.bf16.mxu0 %v5369
    %6010 = vmatpush1.bf16.msra.mxu0 %v5368
    %6011 = vmatprep.subr.bf16.mxu0 %v5365
    %6012 = vmatpush1.bf16.msra.mxu0 %v5364
    %6013 = vmatprep.subr.bf16.mxu0 %v5361
    %6014 = vmatpush1.bf16.msra.mxu0 %v5360
    %6015 = vmatprep.subr.bf16.mxu0 %v5357
    %6016 = vmatpush1.bf16.msra.mxu0 %v5356
    %6017 = vmatprep.subr.bf16.mxu0 %v5353
    %6018 = vmatpush1.bf16.msra.mxu0 %v5352
    %6019 = vmatprep.subr.bf16.mxu0 %v5413
    %6020 = vmatpush2.bf16.msra.mxu0 %v5412
    %6021 = vmatprep.subr.bf16.mxu0 %v5409
    %6022 = vmatpush2.bf16.msra.mxu0 %v5408
    %6023 = vmatprep.subr.bf16.mxu0 %v5405
    %6024 = vmatpush2.bf16.msra.mxu0 %v5404
    %6025 = vmatprep.subr.bf16.mxu0 %v5401
    %6026 = vmatpush2.bf16.msra.mxu0 %v5400
    %6027 = vmatprep.subr.bf16.mxu0 %v5397
    %6028 = vmatpush2.bf16.msra.mxu0 %v5396
    %6029 = vmatprep.subr.bf16.mxu0 %v5393
    %6030 = vmatpush2.bf16.msra.mxu0 %v5392
    %6031 = vmatprep.subr.bf16.mxu0 %v5389
    %6032 = vmatpush2.bf16.msra.mxu0 %v5388
    %6033 = vmatprep.subr.bf16.mxu0 %v5385
    %6034 = vmatpush2.bf16.msra.mxu0 %v5384
    %6035 = vmatprep.mubr.bf16.mxu0 %v4235
    %6036 = vmatmul.mubr.bf16.gmra.mxu0 %v4234
    %v6037 = vpop.f32.mrf.mxu0
    %v6038 = vadd.f32 %v5997, %v6037
    %v6039 = vpop.f32.mrf.mxu0
    %v6040 = vadd.f32 %v5999, %v6039
    %v6041 = vpop.f32.mrf.mxu0
    %v6042 = vpop.f32.mrf.mxu0
    %6043 = vdwg.mxu0
    %6044 = vmatprep.subr.bf16.mxu0 %v5445
    %6045 = vmatpush1.bf16.msra.mxu0 %v5444
    %6046 = vmatprep.subr.bf16.mxu0 %v5441
    %6047 = vmatpush1.bf16.msra.mxu0 %v5440
    %6048 = vmatprep.subr.bf16.mxu0 %v5437
    %6049 = vmatpush1.bf16.msra.mxu0 %v5436
    %6050 = vmatprep.subr.bf16.mxu0 %v5433
    %6051 = vmatpush1.bf16.msra.mxu0 %v5432
    %6052 = vmatprep.subr.bf16.mxu0 %v5429
    %6053 = vmatpush1.bf16.msra.mxu0 %v5428
    %6054 = vmatprep.subr.bf16.mxu0 %v5425
    %6055 = vmatpush1.bf16.msra.mxu0 %v5424
    %6056 = vmatprep.subr.bf16.mxu0 %v5421
    %6057 = vmatpush1.bf16.msra.mxu0 %v5420
    %6058 = vmatprep.subr.bf16.mxu0 %v5417
    %6059 = vmatpush1.bf16.msra.mxu0 %v5416
    %6060 = vmatprep.subr.bf16.mxu0 %v5477
    %6061 = vmatpush2.bf16.msra.mxu0 %v5476
    %6062 = vmatprep.subr.bf16.mxu0 %v5473
    %6063 = vmatpush2.bf16.msra.mxu0 %v5472
    %6064 = vmatprep.subr.bf16.mxu0 %v5469
    %6065 = vmatpush2.bf16.msra.mxu0 %v5468
    %6066 = vmatprep.subr.bf16.mxu0 %v5465
    %6067 = vmatpush2.bf16.msra.mxu0 %v5464
    %6068 = vmatprep.subr.bf16.mxu0 %v5461
    %6069 = vmatpush2.bf16.msra.mxu0 %v5460
    %6070 = vmatprep.subr.bf16.mxu0 %v5457
    %6071 = vmatpush2.bf16.msra.mxu0 %v5456
    %6072 = vmatprep.subr.bf16.mxu0 %v5453
    %6073 = vmatpush2.bf16.msra.mxu0 %v5452
    %6074 = vmatprep.subr.bf16.mxu0 %v5449
    %6075 = vmatpush2.bf16.msra.mxu0 %v5448
    %6076 = vmatprep.mubr.bf16.mxu0 %v4237
    %6077 = vmatmul.mubr.bf16.gmra.mxu0 %v4236
    %v6078 = vpop.f32.mrf.mxu0
    %v6079 = vadd.f32 %v6038, %v6078
    %v6080 = vpop.f32.mrf.mxu0
    %v6081 = vadd.f32 %v6040, %v6080
    %v6082 = vpop.f32.mrf.mxu0
    %v6083 = vpop.f32.mrf.mxu0
    %6084 = vdwg.mxu0
    %6085 = vmatprep.subr.bf16.mxu0 %v5509
    %6086 = vmatpush1.bf16.msra.mxu0 %v5508
    %6087 = vmatprep.subr.bf16.mxu0 %v5505
    %6088 = vmatpush1.bf16.msra.mxu0 %v5504
    %6089 = vmatprep.subr.bf16.mxu0 %v5501
    %6090 = vmatpush1.bf16.msra.mxu0 %v5500
    %6091 = vmatprep.subr.bf16.mxu0 %v5497
    %6092 = vmatpush1.bf16.msra.mxu0 %v5496
    %6093 = vmatprep.subr.bf16.mxu0 %v5493
    %6094 = vmatpush1.bf16.msra.mxu0 %v5492
    %6095 = vmatprep.subr.bf16.mxu0 %v5489
    %6096 = vmatpush1.bf16.msra.mxu0 %v5488
    %6097 = vmatprep.subr.bf16.mxu0 %v5485
    %6098 = vmatpush1.bf16.msra.mxu0 %v5484
    %6099 = vmatprep.subr.bf16.mxu0 %v5481
    %6100 = vmatpush1.bf16.msra.mxu0 %v5480
    %6101 = vmatprep.subr.bf16.mxu0 %v5541
    %6102 = vmatpush2.bf16.msra.mxu0 %v5540
    %6103 = vmatprep.subr.bf16.mxu0 %v5537
    %6104 = vmatpush2.bf16.msra.mxu0 %v5536
    %6105 = vmatprep.subr.bf16.mxu0 %v5533
    %6106 = vmatpush2.bf16.msra.mxu0 %v5532
    %6107 = vmatprep.subr.bf16.mxu0 %v5529
    %6108 = vmatpush2.bf16.msra.mxu0 %v5528
    %6109 = vmatprep.subr.bf16.mxu0 %v5525
    %6110 = vmatpush2.bf16.msra.mxu0 %v5524
    %6111 = vmatprep.subr.bf16.mxu0 %v5521
    %6112 = vmatpush2.bf16.msra.mxu0 %v5520
    %6113 = vmatprep.subr.bf16.mxu0 %v5517
    %6114 = vmatpush2.bf16.msra.mxu0 %v5516
    %6115 = vmatprep.subr.bf16.mxu0 %v5513
    %6116 = vmatpush2.bf16.msra.mxu0 %v5512
    %6117 = vmatprep.mubr.bf16.mxu0 %v4239
    %6118 = vmatmul.mubr.bf16.gmra.mxu0 %v4238
    %v6119 = vpop.f32.mrf.mxu0
    %v6120 = vadd.f32 %v6079, %v6119
    %v6121 = vpop.f32.mrf.mxu0
    %v6122 = vadd.f32 %v6081, %v6121
    %v6123 = vpop.f32.mrf.mxu0
    %v6124 = vpop.f32.mrf.mxu0
    %6125 = vdwg.mxu0
    %v6126 = vmax.f32 %v5956, 0.0
    %v6127 = vmax.f32 %v5958, 0.0
    %v6128 = vmax.f32 %v6120, 0.0
    %v6129 = vmax.f32 %v6122, 0.0
    %v6130 = vpack.c.bf16 %v6126, %v6126
    %v6131 = vpack.c.bf16 %v6127, %v6127
    %v6132 = vpack.c.bf16 %v6128, %v6128
    %v6133 = vpack.c.bf16 %v6129, %v6129
    %v6134 = vld [vmem:[%s7] sm:$0xf]
    %v6135 = vld [vmem:[%s7 + $0x4] sm:$0xf]
    %v6136 = vld [vmem:[%s7 + $0x8] sm:$0xf]
    %v6137 = vld [vmem:[%s7 + $0xc] sm:$0xf]
    %v6138 = vld [vmem:[%s7 + $0x10] sm:$0xf]
    %v6139 = vld [vmem:[%s7 + $0x14] sm:$0xf]
    %v6140 = vld [vmem:[%s7 + $0x18] sm:$0xf]
    %v6141 = vld [vmem:[%s7 + $0x1c] sm:$0xf]
    %v6142 = vld [vmem:[%s7 + $0x20] sm:$0xf]
    %v6143 = vld [vmem:[%s7 + $0x24] sm:$0xf]
    %v6144 = vld [vmem:[%s7 + $0x28] sm:$0xf]
    %v6145 = vld [vmem:[%s7 + $0x2c] sm:$0xf]
    %v6146 = vld [vmem:[%s7 + $0x30] sm:$0xf]
    %v6147 = vld [vmem:[%s7 + $0x34] sm:$0xf]
    %v6148 = vld [vmem:[%s7 + $0x38] sm:$0xf]
    %v6149 = vld [vmem:[%s7 + $0x3c] sm:$0xf]
    %v6150 = vld [vmem:[%s7 + $0x40] sm:$0xf]
    %v6151 = vld [vmem:[%s7 + $0x44] sm:$0xf]
    %v6152 = vld [vmem:[%s7 + $0x48] sm:$0xf]
    %v6153 = vld [vmem:[%s7 + $0x4c] sm:$0xf]
    %v6154 = vld [vmem:[%s7 + $0x50] sm:$0xf]
    %v6155 = vld [vmem:[%s7 + $0x54] sm:$0xf]
    %v6156 = vld [vmem:[%s7 + $0x58] sm:$0xf]
    %v6157 = vld [vmem:[%s7 + $0x5c] sm:$0xf]
    %v6158 = vld [vmem:[%s7 + $0x60] sm:$0xf]
    %v6159 = vld [vmem:[%s7 + $0x64] sm:$0xf]
    %v6160 = vld [vmem:[%s7 + $0x68] sm:$0xf]
    %v6161 = vld [vmem:[%s7 + $0x6c] sm:$0xf]
    %v6162 = vld [vmem:[%s7 + $0x70] sm:$0xf]
    %v6163 = vld [vmem:[%s7 + $0x74] sm:$0xf]
    %v6164 = vld [vmem:[%s7 + $0x78] sm:$0xf]
    %v6165 = vld [vmem:[%s7 + $0x7c] sm:$0xf]
    %v6166 = vld [vmem:[%s7 + $0x80] sm:$0xf]
    %v6167 = vld [vmem:[%s7 + $0x84] sm:$0xf]
    %v6168 = vld [vmem:[%s7 + $0x88] sm:$0xf]
    %v6169 = vld [vmem:[%s7 + $0x8c] sm:$0xf]
    %v6170 = vld [vmem:[%s7 + $0x90] sm:$0xf]
    %v6171 = vld [vmem:[%s7 + $0x94] sm:$0xf]
    %v6172 = vld [vmem:[%s7 + $0x98] sm:$0xf]
    %v6173 = vld [vmem:[%s7 + $0x9c] sm:$0xf]
    %v6174 = vld [vmem:[%s7 + $0xa0] sm:$0xf]
    %v6175 = vld [vmem:[%s7 + $0xa4] sm:$0xf]
    %v6176 = vld [vmem:[%s7 + $0xa8] sm:$0xf]
    %v6177 = vld [vmem:[%s7 + $0xac] sm:$0xf]
    %v6178 = vld [vmem:[%s7 + $0xb0] sm:$0xf]
    %v6179 = vld [vmem:[%s7 + $0xb4] sm:$0xf]
    %v6180 = vld [vmem:[%s7 + $0xb8] sm:$0xf]
    %v6181 = vld [vmem:[%s7 + $0xbc] sm:$0xf]
    %v6182 = vld [vmem:[%s7 + $0xc0] sm:$0xf]
    %v6183 = vld [vmem:[%s7 + $0xc4] sm:$0xf]
    %v6184 = vld [vmem:[%s7 + $0xc8] sm:$0xf]
    %v6185 = vld [vmem:[%s7 + $0xcc] sm:$0xf]
    %v6186 = vld [vmem:[%s7 + $0xd0] sm:$0xf]
    %v6187 = vld [vmem:[%s7 + $0xd4] sm:$0xf]
    %v6188 = vld [vmem:[%s7 + $0xd8] sm:$0xf]
    %v6189 = vld [vmem:[%s7 + $0xdc] sm:$0xf]
    %v6190 = vld [vmem:[%s7 + $0xe0] sm:$0xf]
    %v6191 = vld [vmem:[%s7 + $0xe4] sm:$0xf]
    %v6192 = vld [vmem:[%s7 + $0xe8] sm:$0xf]
    %v6193 = vld [vmem:[%s7 + $0xec] sm:$0xf]
    %v6194 = vld [vmem:[%s7 + $0xf0] sm:$0xf]
    %v6195 = vld [vmem:[%s7 + $0xf4] sm:$0xf]
    %v6196 = vld [vmem:[%s7 + $0xf8] sm:$0xf]
    %v6197 = vld [vmem:[%s7 + $0xfc] sm:$0xf]
    %v6198 = vld [vmem:[%s8] sm:$0x1]
    %v6200 = vlaneseq
    %v6201 = vshrl.u32 %v6200, 7
    %v6202 = vsub.s32 0, %v6201
    %v6203 = vrot.slane %v6198, %v6202
    %v6269 = vunpack.c.l.b16 %v6134
    %v6270 = vunpack.c.l.b16 %v6135
    %v6271 = vunpack.c.l.b16 %v6136
    %v6272 = vunpack.c.l.b16 %v6137
    %v6273 = vunpack.c.l.b16 %v6138
    %v6274 = vunpack.c.l.b16 %v6139
    %v6275 = vunpack.c.l.b16 %v6140
    %v6276 = vunpack.c.l.b16 %v6141
    %v6277 = vunpack.c.l.b16 %v6142
    %v6278 = vunpack.c.l.b16 %v6143
    %v6279 = vunpack.c.l.b16 %v6144
    %v6280 = vunpack.c.l.b16 %v6145
    %v6281 = vunpack.c.l.b16 %v6146
    %v6282 = vunpack.c.l.b16 %v6147
    %v6283 = vunpack.c.l.b16 %v6148
    %v6284 = vunpack.c.l.b16 %v6149
    %v6285 = vunpack.c.l.b16 %v6150
    %v6286 = vunpack.c.l.b16 %v6151
    %v6287 = vunpack.c.l.b16 %v6152
    %v6288 = vunpack.c.l.b16 %v6153
    %v6289 = vunpack.c.l.b16 %v6154
    %v6290 = vunpack.c.l.b16 %v6155
    %v6291 = vunpack.c.l.b16 %v6156
    %v6292 = vunpack.c.l.b16 %v6157
    %v6293 = vunpack.c.l.b16 %v6158
    %v6294 = vunpack.c.l.b16 %v6159
    %v6295 = vunpack.c.l.b16 %v6160
    %v6296 = vunpack.c.l.b16 %v6161
    %v6297 = vunpack.c.l.b16 %v6162
    %v6298 = vunpack.c.l.b16 %v6163
    %v6299 = vunpack.c.l.b16 %v6164
    %v6300 = vunpack.c.l.b16 %v6165
    %v6301 = vunpack.c.l.b16 %v6166
    %v6302 = vunpack.c.l.b16 %v6167
    %v6303 = vunpack.c.l.b16 %v6168
    %v6304 = vunpack.c.l.b16 %v6169
    %v6305 = vunpack.c.l.b16 %v6170
    %v6306 = vunpack.c.l.b16 %v6171
    %v6307 = vunpack.c.l.b16 %v6172
    %v6308 = vunpack.c.l.b16 %v6173
    %v6309 = vunpack.c.l.b16 %v6174
    %v6310 = vunpack.c.l.b16 %v6175
    %v6311 = vunpack.c.l.b16 %v6176
    %v6312 = vunpack.c.l.b16 %v6177
    %v6313 = vunpack.c.l.b16 %v6178
    %v6314 = vunpack.c.l.b16 %v6179
    %v6315 = vunpack.c.l.b16 %v6180
    %v6316 = vunpack.c.l.b16 %v6181
    %v6317 = vunpack.c.l.b16 %v6182
    %v6318 = vunpack.c.l.b16 %v6183
    %v6319 = vunpack.c.l.b16 %v6184
    %v6320 = vunpack.c.l.b16 %v6185
    %v6321 = vunpack.c.l.b16 %v6186
    %v6322 = vunpack.c.l.b16 %v6187
    %v6323 = vunpack.c.l.b16 %v6188
    %v6324 = vunpack.c.l.b16 %v6189
    %v6325 = vunpack.c.l.b16 %v6190
    %v6326 = vunpack.c.l.b16 %v6191
    %v6327 = vunpack.c.l.b16 %v6192
    %v6328 = vunpack.c.l.b16 %v6193
    %v6329 = vunpack.c.l.b16 %v6194
    %v6330 = vunpack.c.l.b16 %v6195
    %v6331 = vunpack.c.l.b16 %v6196
    %v6332 = vunpack.c.l.b16 %v6197
    %v6333 = vpack.c.b16 %v6270, %v6269
    %v6334 = vpack.c.b16 %v6272, %v6271
    %v6335 = vpack.c.b16 %v6274, %v6273
    %v6336 = vpack.c.b16 %v6276, %v6275
    %v6337 = vpack.c.b16 %v6278, %v6277
    %v6338 = vpack.c.b16 %v6280, %v6279
    %v6339 = vpack.c.b16 %v6282, %v6281
    %v6340 = vpack.c.b16 %v6284, %v6283
    %v6341 = vpack.c.b16 %v6286, %v6285
    %v6342 = vpack.c.b16 %v6288, %v6287
    %v6343 = vpack.c.b16 %v6290, %v6289
    %v6344 = vpack.c.b16 %v6292, %v6291
    %v6345 = vpack.c.b16 %v6294, %v6293
    %v6346 = vpack.c.b16 %v6296, %v6295
    %v6347 = vpack.c.b16 %v6298, %v6297
    %v6348 = vpack.c.b16 %v6300, %v6299
    %v6349 = vpack.c.b16 %v6302, %v6301
    %v6350 = vpack.c.b16 %v6304, %v6303
    %v6351 = vpack.c.b16 %v6306, %v6305
    %v6352 = vpack.c.b16 %v6308, %v6307
    %v6353 = vpack.c.b16 %v6310, %v6309
    %v6354 = vpack.c.b16 %v6312, %v6311
    %v6355 = vpack.c.b16 %v6314, %v6313
    %v6356 = vpack.c.b16 %v6316, %v6315
    %v6357 = vpack.c.b16 %v6318, %v6317
    %v6358 = vpack.c.b16 %v6320, %v6319
    %v6359 = vpack.c.b16 %v6322, %v6321
    %v6360 = vpack.c.b16 %v6324, %v6323
    %v6361 = vpack.c.b16 %v6326, %v6325
    %v6362 = vpack.c.b16 %v6328, %v6327
    %v6363 = vpack.c.b16 %v6330, %v6329
    %v6364 = vpack.c.b16 %v6332, %v6331
    %6397 = vmatprep.subr.bf16.mxu0 0
    %6398 = vmatpush1.bf16.msra.mxu0 %v6340
    %6399 = vmatprep.subr.bf16.mxu0 0
    %6400 = vmatpush1.bf16.msra.mxu0 %v6339
    %6401 = vmatprep.subr.bf16.mxu0 0
    %6402 = vmatpush1.bf16.msra.mxu0 %v6338
    %6403 = vmatprep.subr.bf16.mxu0 0
    %6404 = vmatpush1.bf16.msra.mxu0 %v6337
    %6405 = vmatprep.subr.bf16.mxu0 0
    %6406 = vmatpush1.bf16.msra.mxu0 %v6336
    %6407 = vmatprep.subr.bf16.mxu0 0
    %6408 = vmatpush1.bf16.msra.mxu0 %v6335
    %6409 = vmatprep.subr.bf16.mxu0 0
    %6410 = vmatpush1.bf16.msra.mxu0 %v6334
    %6411 = vmatprep.subr.bf16.mxu0 0
    %6412 = vmatpush1.bf16.msra.mxu0 %v6333
    %6413 = vmatprep.subr.bf16.mxu0 0
    %6414 = vmatpush2.bf16.msra.mxu0 %v6348
    %6415 = vmatprep.subr.bf16.mxu0 0
    %6416 = vmatpush2.bf16.msra.mxu0 %v6347
    %6417 = vmatprep.subr.bf16.mxu0 0
    %6418 = vmatpush2.bf16.msra.mxu0 %v6346
    %6419 = vmatprep.subr.bf16.mxu0 0
    %6420 = vmatpush2.bf16.msra.mxu0 %v6345
    %6421 = vmatprep.subr.bf16.mxu0 0
    %6422 = vmatpush2.bf16.msra.mxu0 %v6344
    %6423 = vmatprep.subr.bf16.mxu0 0
    %6424 = vmatpush2.bf16.msra.mxu0 %v6343
    %6425 = vmatprep.subr.bf16.mxu0 0
    %6426 = vmatpush2.bf16.msra.mxu0 %v6342
    %6427 = vmatprep.subr.bf16.mxu0 0
    %6428 = vmatpush2.bf16.msra.mxu0 %v6341
    %6429 = vmatprep.mubr.bf16.mxu0 %v6131
    %6430 = vmatmul.mubr.bf16.gmra.mxu0 %v6130
    %v6431 = vpop.f32.mrf.mxu0
    %v6432 = vadd.f32 %v6203, %v6431
    %v6433 = vpop.f32.mrf.mxu0
    %v6434 = vpop.f32.mrf.mxu0
    %v6435 = vpop.f32.mrf.mxu0
    %6436 = vdwg.mxu0
    %6437 = vmatprep.subr.bf16.mxu0 0
    %6438 = vmatpush1.bf16.msra.mxu0 %v6356
    %6439 = vmatprep.subr.bf16.mxu0 0
    %6440 = vmatpush1.bf16.msra.mxu0 %v6355
    %6441 = vmatprep.subr.bf16.mxu0 0
    %6442 = vmatpush1.bf16.msra.mxu0 %v6354
    %6443 = vmatprep.subr.bf16.mxu0 0
    %6444 = vmatpush1.bf16.msra.mxu0 %v6353
    %6445 = vmatprep.subr.bf16.mxu0 0
    %6446 = vmatpush1.bf16.msra.mxu0 %v6352
    %6447 = vmatprep.subr.bf16.mxu0 0
    %6448 = vmatpush1.bf16.msra.mxu0 %v6351
    %6449 = vmatprep.subr.bf16.mxu0 0
    %6450 = vmatpush1.bf16.msra.mxu0 %v6350
    %6451 = vmatprep.subr.bf16.mxu0 0
    %6452 = vmatpush1.bf16.msra.mxu0 %v6349
    %6453 = vmatprep.subr.bf16.mxu0 0
    %6454 = vmatpush2.bf16.msra.mxu0 %v6364
    %6455 = vmatprep.subr.bf16.mxu0 0
    %6456 = vmatpush2.bf16.msra.mxu0 %v6363
    %6457 = vmatprep.subr.bf16.mxu0 0
    %6458 = vmatpush2.bf16.msra.mxu0 %v6362
    %6459 = vmatprep.subr.bf16.mxu0 0
    %6460 = vmatpush2.bf16.msra.mxu0 %v6361
    %6461 = vmatprep.subr.bf16.mxu0 0
    %6462 = vmatpush2.bf16.msra.mxu0 %v6360
    %6463 = vmatprep.subr.bf16.mxu0 0
    %6464 = vmatpush2.bf16.msra.mxu0 %v6359
    %6465 = vmatprep.subr.bf16.mxu0 0
    %6466 = vmatpush2.bf16.msra.mxu0 %v6358
    %6467 = vmatprep.subr.bf16.mxu0 0
    %6468 = vmatpush2.bf16.msra.mxu0 %v6357
    %6469 = vmatprep.mubr.bf16.mxu0 %v6133
    %6470 = vmatmul.mubr.bf16.gmra.mxu0 %v6132
    %v6471 = vpop.f32.mrf.mxu0
    %v6472 = vadd.f32 %v6432, %v6471
    %v6473 = vpop.f32.mrf.mxu0
    %v6474 = vpop.f32.mrf.mxu0
    %v6475 = vpop.f32.mrf.mxu0
    %6476 = vdwg.mxu0
    %vm6477 = vcmask 254976
    %6478 = vst.msk [vmem:[#allocation2] sm:$0x3] %vm6477, %v6472
    // Predicated region
    $region38: #{lenet_forward.5} parent=1 // pred_check
      _
    $region39: #{lenet_forward.5} parent=1 // pred_check_branch
      %6480 = sbr.rel (0) target = $region41
    $region40: #{lenet_forward.5} parent=1 // pred_region
      %s6482 = ssub.s32 32, 32
      %6483 = vsyncadd [#allocation3], %s6482
      %s6485 = sshll.u32 [#allocation2], 4
      %s6486 = int_to_ptr.vmem [resolvable:$true] %s6485
      %6488 = dma.vmem_to_hbm [thread:$0]  %s6486, 32, %s9, [#allocation3]
    $region41: #{lenet_forward.5} parent=1 // pred_fallthru
      _
    // Predicated region
    $region42: #{lenet_forward.5} parent=1 // pred_check
      _
    $region43: #{lenet_forward.5} parent=1 // pred_check_branch
      %6490 = sbr.rel (0) target = $region45
    $region44: #{lenet_forward.5} parent=1 // pred_region
      %6491 = dma.done [#allocation3], 32
    $region45: #{lenet_forward.5} parent=1 // pred_fallthru
      _
    %6492 = vsyncpa [#allocation3], 1

</llo_original>
